<compile_context>
chip_gen: v6e
topology: v6e:2x2x1
jax: 0.10.0
libtpu: 0.0.40
codegen_flags: <defaults>
</compile_context>

<pallas_src>
import jax
import jax.numpy as jnp
from jax.experimental import pallas as pl
from jax.experimental.pallas import tpu as pltpu

B = 16       # self.bs in the PyTorch module
C_IN = 5
L_IN = 30    # implied by Linear(662,128): 662 - 512 = 150 = 5 * 30
C_OUT = 32
L1 = 15      # conv positions per block (Block3 after MaxPool1d(2))
L_CAT = 45   # 15 + 15 + 15
EPS = 1e-5


# ----------------------------------------------------------------------------- glue helpers
def _im2col(xp, K, stride):
    """xp: (B, C, L_pad) -> patches (B, L_out, C*K), patch element index = c*K + k."""
    b, c, lp = xp.shape
    l_out = (lp - K) // stride + 1
    idx = jnp.arange(l_out)[:, None] * stride + jnp.arange(K)[None, :]   # (L_out, K)
    patches = xp[:, :, idx]                                               # (B, C, L_out, K)
    return jnp.transpose(patches, (0, 2, 1, 3)).reshape(b, l_out, c * K)


def _conv_mat(w):
    """torch Conv1d weight (O, I, K) -> matmul matrix (I*K, O), rows ordered i*K + k."""
    return jnp.transpose(w, (1, 2, 0)).reshape(-1, w.shape[0])


def _bn_fuse(conv_bias, gamma, beta, mean, var):
    """Fuse conv bias + eval-mode BatchNorm into y = (patches @ W) * s + t."""
    s = gamma / jnp.sqrt(var + EPS)
    t = (conv_bias - mean) * s + beta
    return s.reshape(1, -1), t.reshape(1, -1)


# ----------------------------------------------------------------------------- fused kernel
def _vimsnet_kernel(p1_ref, p2_ref, p3_ref, xflat_ref,
                    w1_ref, s1_ref, t1_ref,
                    w2_ref, s2_ref, t2_ref,
                    w3_ref, s3_ref, t3_ref,
                    we1_ref, be1_ref, we2_ref, be2_ref,
                    wd1_ref, bd1_ref, wd2a_ref, wd2b_ref, bd2_ref,
                    wo_ref, bo_ref,
                    out_ref,
                    tall_ref, se_ref, flat_ref):
    f32 = jnp.float32
    bf16 = jnp.bfloat16
    nb = xflat_ref.shape[0]            # batch (16)
    rows = nb * L1                     # 240 rows per conv block, row = position*nb + batch

    relu = lambda v: jnp.maximum(v, 0.0)

    # ---- three Conv1d blocks as batched im2col matmuls + fused BN + ReLU ----
    y1 = relu(jnp.dot(p1_ref[...], w1_ref[...], preferred_element_type=f32)
              * s1_ref[...] + t1_ref[...])                       # (240, 32)
    y2 = relu(jnp.dot(p2_ref[...], w2_ref[...], preferred_element_type=f32)
              * s2_ref[...] + t2_ref[...])                       # (240, 32)
    y3f = relu(jnp.dot(p3_ref[...], w3_ref[...], preferred_element_type=f32)
               * s3_ref[...] + t3_ref[...])                      # (480, 32): even rows then odd
    y3 = jnp.maximum(y3f[:rows, :], y3f[rows:, :])               # MaxPool1d(2) -> (240, 32)

    # x_cat in "tall" layout: row = global_position*nb + batch, 32 channels on lanes
    tall_ref[0 * rows:1 * rows, :] = y1
    tall_ref[1 * rows:2 * rows, :] = y2
    tall_ref[2 * rows:3 * rows, :] = y3

    # ---- squeeze: AdaptiveMaxPool1d(1) over the 32 channels -> (B, 45) ----
    for l in range(L_CAT):
        chunk = tall_ref[l * nb:(l + 1) * nb, :]                 # (16, 32)
        se_ref[:, l:l + 1] = jnp.max(chunk, axis=1, keepdims=True)

    # ---- excitation, batched over B ----
    sq = se_ref[...]                                             # (16, 45)
    e1 = relu(jnp.dot(sq, we1_ref[...], preferred_element_type=f32) + be1_ref[...])   # (16, 5)
    e2 = jax.nn.sigmoid(jnp.dot(e1, we2_ref[...], preferred_element_type=f32)
                        + be2_ref[...])                          # (16, 45)
    se_ref[...] = e2                                             # reuse scratch for e2

    # ---- scale + in-kernel relayout into a lane-dense (B, 1440) flat activation ----
    # flat lane index = l*32 + c  (dense_1's weight rows are pre-permuted to match).
    for l in range(L_CAT):
        chunk = tall_ref[l * nb:(l + 1) * nb, :]                 # (16, 32)
        flat_ref[:, l * C_OUT:(l + 1) * C_OUT] = chunk * se_ref[:, l:l + 1]

    # ---- FC head: dense_1 -> ReLU, [concat with x_flat as a split matmul], dense_2 -> ReLU, out
    flat = flat_ref[...].astype(bf16)                            # (16, 1440)
    h1 = relu(jnp.dot(flat, wd1_ref[...], preferred_element_type=f32) + bd1_ref[...])   # (16, 512)
    h2 = relu(jnp.dot(h1.astype(bf16), wd2a_ref[...], preferred_element_type=f32)
              + jnp.dot(xflat_ref[...].astype(bf16), wd2b_ref[...], preferred_element_type=f32)
              + bd2_ref[...])                                    # (16, 128)
    out_ref[...] = jnp.dot(h2, wo_ref[...], preferred_element_type=f32) + bo_ref[...]   # (16, 2)


# ----------------------------------------------------------------------------- weight prep (once)
def prepare_params(p):
    """One-time host-side weight prep (outside jit): BN fusion, transposes, dense_1 row
    permutation matching the kernel's (l*32+c) flat order, bf16 storage of the big head weights."""
    bf16 = jnp.bfloat16
    q = {}
    q['w1m'] = _conv_mat(p['w1'])
    q['s1'], q['t1'] = _bn_fuse(p['b1'], p['bn1_gamma'], p['bn1_beta'], p['bn1_mean'], p['bn1_var'])
    q['w2m'] = _conv_mat(p['w2'])
    q['s2'], q['t2'] = _bn_fuse(p['b2'], p['bn2_gamma'], p['bn2_beta'], p['bn2_mean'], p['bn2_var'])
    q['w3m'] = _conv_mat(p['w3'])
    q['s3'], q['t3'] = _bn_fuse(p['b3'], p['bn3_gamma'], p['bn3_beta'], p['bn3_mean'], p['bn3_var'])
    q['we1m'] = p['we1'].T                      # (45, 5)
    q['be1'] = p['be1'].reshape(1, -1)
    q['we2m'] = p['we2'].T                      # (5, 45)
    q['be2'] = p['be2'].reshape(1, -1)
    # dense_1: PyTorch flattens scale (B,32,45) as c*45+l; kernel emits l*32+c -> permute rows.
    perm = (jnp.arange(L_CAT)[:, None] + L_CAT * jnp.arange(C_OUT)[None, :]).reshape(-1)
    q['wd1p'] = p['wd1'].T[perm].astype(bf16)   # (1440, 512)
    q['bd1'] = p['bd1'].reshape(1, -1)
    q['wd2a'] = p['wd2'][:, :512].T.astype(bf16)    # (512, 128)
    q['wd2b'] = p['wd2'][:, 512:].T.astype(bf16)    # (150, 128)
    q['bd2'] = p['bd2'].reshape(1, -1)
    q['wo'] = p['wo'].T                         # (128, 2)
    q['bo'] = p['bo'].reshape(1, -1)
    return q


# ----------------------------------------------------------------------------- forward wrapper
def vimsnet_forward(x, q):
    b = x.shape[0]

    def to_tall(a):  # (B, L, F) -> (L*B, F), rows ordered position-major (pos*B + batch)
        return jnp.transpose(a, (1, 0, 2)).reshape(-1, a.shape[-1])

    # im2col patches for the three Conv1d blocks (PyTorch NCL input, zero padding)
    p1 = _im2col(jnp.pad(x, ((0, 0), (0, 0), (1, 1))), K=4, stride=2)   # (B, 15, 20)
    p2 = _im2col(jnp.pad(x, ((0, 0), (0, 0), (2, 2))), K=6, stride=2)   # (B, 15, 30)
    p3 = _im2col(jnp.pad(x, ((0, 0), (0, 0), (1, 1))), K=2, stride=1)   # (B, 31, 10)
    p1t = to_tall(p1)                                                    # (240, 20)
    p2t = to_tall(p2)                                                    # (240, 30)
    p3t = jnp.concatenate([to_tall(p3[:, 0:30:2, :]),                    # even conv positions
                           to_tall(p3[:, 1:31:2, :])], axis=0)           # odd -> (480, 10)
    xflat = x.reshape(b, -1)                                             # (B, 150)

    vmem = pltpu.MemorySpace.VMEM
    out = pl.pallas_call(
        _vimsnet_kernel,
        out_shape=jax.ShapeDtypeStruct((b, 2), jnp.float32),
        in_specs=[pl.BlockSpec(memory_space=vmem)] * 24,
        out_specs=pl.BlockSpec(memory_space=vmem),
        scratch_shapes=[
            pltpu.VMEM((3 * L1 * b, C_OUT), jnp.float32),   # (720, 32)  x_cat in tall layout
            pltpu.VMEM((b, L_CAT), jnp.float32),            # (16, 45)   squeeze / excitation
            pltpu.VMEM((b, L_CAT * C_OUT), jnp.float32),    # (16, 1440) lane-dense scale
        ],
    )(p1t, p2t, p3t, xflat,
      q['w1m'], q['s1'], q['t1'],
      q['w2m'], q['s2'], q['t2'],
      q['w3m'], q['s3'], q['t3'],
      q['we1m'], q['be1'], q['we2m'], q['be2'],
      q['wd1p'], q['bd1'], q['wd2a'], q['wd2b'], q['bd2'],
      q['wo'], q['bo'])
    return out


# ----------------------------------------------------------------------------- parameters
def init_params(key):
    ks = jax.random.split(key, 32)
    it = iter(range(32))
    nrm = lambda k, shape, std: std * jax.random.normal(k, shape, jnp.float32)
    p = {}
    p['w1'] = nrm(ks[next(it)], (32, 5, 4), 0.2); p['b1'] = nrm(ks[next(it)], (32,), 0.05)
    p['w2'] = nrm(ks[next(it)], (32, 5, 6), 0.2); p['b2'] = nrm(ks[next(it)], (32,), 0.05)
    p['w3'] = nrm(ks[next(it)], (32, 5, 2), 0.2); p['b3'] = nrm(ks[next(it)], (32,), 0.05)
    for n in ('1', '2', '3'):
        p[f'bn{n}_gamma'] = 1.0 + nrm(ks[next(it)], (32,), 0.05)
        p[f'bn{n}_beta'] = nrm(ks[next(it)], (32,), 0.05)
        p[f'bn{n}_mean'] = nrm(ks[next(it)], (32,), 0.05)
        p[f'bn{n}_var'] = 1.0 + jnp.abs(nrm(ks[next(it)], (32,), 0.1))
    p['we1'] = nrm(ks[next(it)], (5, 45), 0.2);   p['be1'] = nrm(ks[next(it)], (5,), 0.05)
    p['we2'] = nrm(ks[next(it)], (45, 5), 0.2);   p['be2'] = nrm(ks[next(it)], (45,), 0.05)
    p['wd1'] = nrm(ks[next(it)], (512, 1440), 0.02); p['bd1'] = nrm(ks[next(it)], (512,), 0.05)
    p['wd2'] = nrm(ks[next(it)], (128, 662), 0.05);  p['bd2'] = nrm(ks[next(it)], (128,), 0.05)
    # nn.Linear(128, 2): kaiming-normal weight, constant 0.1 bias (as in the module __init__)
    p['wo'] = jnp.sqrt(2.0 / 128.0) * jax.random.normal(ks[next(it)], (2, 128), jnp.float32)
    p['bo'] = jnp.full((2,), 0.1, jnp.float32)
    return p


# ----------------------------------------------------------------------------- pure-JAX reference
def vimsnet_reference(x, p):
    prec = jax.lax.Precision.HIGHEST

    def block(xx, w, bias, g, beta, mean, var, stride, pad):
        y = jax.lax.conv_general_dilated(
            xx, w, window_strides=(stride,), padding=[(pad, pad)],
            dimension_numbers=('NCH', 'OIH', 'NCH'), precision=prec)
        y = y + bias[None, :, None]
        y = (y - mean[None, :, None]) / jnp.sqrt(var[None, :, None] + EPS)
        y = y * g[None, :, None] + beta[None, :, None]
        return jnp.maximum(y, 0.0)

    x1 = block(x, p['w1'], p['b1'], p['bn1_gamma'], p['bn1_beta'], p['bn1_mean'], p['bn1_var'], 2, 1)
    x2 = block(x, p['w2'], p['b2'], p['bn2_gamma'], p['bn2_beta'], p['bn2_mean'], p['bn2_var'], 2, 2)
    x3 = block(x, p['w3'], p['b3'], p['bn3_gamma'], p['bn3_beta'], p['bn3_mean'], p['bn3_var'], 1, 1)
    x3 = jnp.maximum(x3[:, :, 0:30:2], x3[:, :, 1:31:2])            # MaxPool1d(2)
    xcat = jnp.concatenate([x1, x2, x3], axis=2)                    # (B, 32, 45)
    sq = jnp.max(xcat, axis=1)                                      # (B, 45)
    e1 = jnp.maximum(jnp.dot(sq, p['we1'].T, precision=prec) + p['be1'], 0.0)
    e2 = jax.nn.sigmoid(jnp.dot(e1, p['we2'].T, precision=prec) + p['be2'])
    scale = xcat * e2[:, None, :]
    flat = scale.reshape(x.shape[0], -1)
    h1 = jnp.maximum(jnp.dot(flat, p['wd1'].T, precision=prec) + p['bd1'], 0.0)
    cat = jnp.concatenate([h1, x.reshape(x.shape[0], -1)], axis=1)
    h2 = jnp.maximum(jnp.dot(cat, p['wd2'].T, precision=prec) + p['bd2'], 0.0)
    return jnp.dot(h2, p['wo'].T, precision=prec) + p['bo']


# ----------------------------------------------------------------------------- main
if __name__ == "__main__":
    key = jax.random.PRNGKey(0)
    kp, kx = jax.random.split(key)
    params = init_params(kp)
    # x is the post-DE_PSD feature tensor, already transposed to (bs, channels=5, features=30)
    x = jax.random.normal(kx, (B, C_IN, L_IN), jnp.float32)

    prepped = prepare_params(params)       # one-time weight prep, outside jit
    fwd = jax.jit(vimsnet_forward)
    out = jax.block_until_ready(fwd(x, prepped))

    assert out.shape == (B, 2), out.shape
    assert bool(jnp.all(jnp.isfinite(out)))

    ref = vimsnet_reference(x, params)
    if not jnp.allclose(out, ref, atol=1e-2, rtol=1e-2):
        raise AssertionError(
            f"kernel/reference mismatch, max abs err = {float(jnp.max(jnp.abs(out - ref)))}")

    print("KERNEL_OK")
</pallas_src>

<mosaic_0001>
module attributes {stable_mosaic.version = 11 : i64} {
  func.func @_vimsnet_kernel(%arg0: memref<240x20xf32, #tpu.memory_space<vmem>>, %arg1: memref<240x30xf32, #tpu.memory_space<vmem>>, %arg2: memref<480x10xf32, #tpu.memory_space<vmem>>, %arg3: memref<16x150xf32, #tpu.memory_space<vmem>>, %arg4: memref<20x32xf32, #tpu.memory_space<vmem>>, %arg5: memref<1x32xf32, #tpu.memory_space<vmem>>, %arg6: memref<1x32xf32, #tpu.memory_space<vmem>>, %arg7: memref<30x32xf32, #tpu.memory_space<vmem>>, %arg8: memref<1x32xf32, #tpu.memory_space<vmem>>, %arg9: memref<1x32xf32, #tpu.memory_space<vmem>>, %arg10: memref<10x32xf32, #tpu.memory_space<vmem>>, %arg11: memref<1x32xf32, #tpu.memory_space<vmem>>, %arg12: memref<1x32xf32, #tpu.memory_space<vmem>>, %arg13: memref<45x5xf32, #tpu.memory_space<vmem>>, %arg14: memref<1x5xf32, #tpu.memory_space<vmem>>, %arg15: memref<5x45xf32, #tpu.memory_space<vmem>>, %arg16: memref<1x45xf32, #tpu.memory_space<vmem>>, %arg17: memref<1440x512xbf16, #tpu.memory_space<vmem>>, %arg18: memref<1x512xf32, #tpu.memory_space<vmem>>, %arg19: memref<512x128xbf16, #tpu.memory_space<vmem>>, %arg20: memref<150x128xbf16, #tpu.memory_space<vmem>>, %arg21: memref<1x128xf32, #tpu.memory_space<vmem>>, %arg22: memref<128x2xf32, #tpu.memory_space<vmem>>, %arg23: memref<1x2xf32, #tpu.memory_space<vmem>>, %arg24: memref<16x2xf32, #tpu.memory_space<vmem>>, %arg25: memref<720x32xf32, #tpu.memory_space<vmem>>, %arg26: memref<16x45xf32, #tpu.memory_space<vmem>>, %arg27: memref<16x1440xf32, #tpu.memory_space<vmem>>) attributes {dimension_semantics = [], scalar_prefetch = 0 : i64, scratch_operands = 3 : i64, tpu.core_type = #tpu.core_type<tc>} {
    %c0 = arith.constant 0 : index
    %c0_0 = arith.constant 0 : index
    %0 = vector.load %arg0[%c0, %c0_0] : memref<240x20xf32, #tpu.memory_space<vmem>>, vector<240x20xf32>
    %c0_1 = arith.constant 0 : index
    %c0_2 = arith.constant 0 : index
    %1 = vector.load %arg4[%c0_1, %c0_2] : memref<20x32xf32, #tpu.memory_space<vmem>>, vector<20x32xf32>
    %cst = arith.constant dense<0.000000e+00> : vector<240x32xf32>
    %2 = tpu.matmul %0, %1, %cst {dimension_numbers = #tpu.dot_dimension_numbers<[1], [0], [0], [1], [0, 0, 1, 1], [], []>} : vector<240x20xf32>, vector<20x32xf32>, vector<240x32xf32> -> vector<240x32xf32>
    %c0_3 = arith.constant 0 : index
    %c0_4 = arith.constant 0 : index
    %3 = vector.load %arg5[%c0_3, %c0_4] : memref<1x32xf32, #tpu.memory_space<vmem>>, vector<1x32xf32>
    %4 = vector.broadcast %3 : vector<1x32xf32> to vector<240x32xf32>
    %5 = arith.mulf %2, %4 : vector<240x32xf32>
    %c0_5 = arith.constant 0 : index
    %c0_6 = arith.constant 0 : index
    %6 = vector.load %arg6[%c0_5, %c0_6] : memref<1x32xf32, #tpu.memory_space<vmem>>, vector<1x32xf32>
    %7 = vector.broadcast %6 : vector<1x32xf32> to vector<240x32xf32>
    %8 = arith.addf %5, %7 : vector<240x32xf32>
    %cst_7 = arith.constant 0.000000e+00 : f32
    %9 = vector.broadcast %cst_7 : f32 to vector<240x32xf32>
    %10 = arith.maximumf %8, %9 : vector<240x32xf32>
    %c0_8 = arith.constant 0 : index
    %c0_9 = arith.constant 0 : index
    %11 = vector.load %arg1[%c0_8, %c0_9] : memref<240x30xf32, #tpu.memory_space<vmem>>, vector<240x30xf32>
    %c0_10 = arith.constant 0 : index
    %c0_11 = arith.constant 0 : index
    %12 = vector.load %arg7[%c0_10, %c0_11] : memref<30x32xf32, #tpu.memory_space<vmem>>, vector<30x32xf32>
    %cst_12 = arith.constant dense<0.000000e+00> : vector<240x32xf32>
    %13 = tpu.matmul %11, %12, %cst_12 {dimension_numbers = #tpu.dot_dimension_numbers<[1], [0], [0], [1], [0, 0, 1, 1], [], []>} : vector<240x30xf32>, vector<30x32xf32>, vector<240x32xf32> -> vector<240x32xf32>
    %c0_13 = arith.constant 0 : index
    %c0_14 = arith.constant 0 : index
    %14 = vector.load %arg8[%c0_13, %c0_14] : memref<1x32xf32, #tpu.memory_space<vmem>>, vector<1x32xf32>
    %15 = vector.broadcast %14 : vector<1x32xf32> to vector<240x32xf32>
    %16 = arith.mulf %13, %15 : vector<240x32xf32>
    %c0_15 = arith.constant 0 : index
    %c0_16 = arith.constant 0 : index
    %17 = vector.load %arg9[%c0_15, %c0_16] : memref<1x32xf32, #tpu.memory_space<vmem>>, vector<1x32xf32>
    %18 = vector.broadcast %17 : vector<1x32xf32> to vector<240x32xf32>
    %19 = arith.addf %16, %18 : vector<240x32xf32>
    %cst_17 = arith.constant 0.000000e+00 : f32
    %20 = vector.broadcast %cst_17 : f32 to vector<240x32xf32>
    %21 = arith.maximumf %19, %20 : vector<240x32xf32>
    %c0_18 = arith.constant 0 : index
    %c0_19 = arith.constant 0 : index
    %22 = vector.load %arg2[%c0_18, %c0_19] : memref<480x10xf32, #tpu.memory_space<vmem>>, vector<480x10xf32>
    %c0_20 = arith.constant 0 : index
    %c0_21 = arith.constant 0 : index
    %23 = vector.load %arg10[%c0_20, %c0_21] : memref<10x32xf32, #tpu.memory_space<vmem>>, vector<10x32xf32>
    %cst_22 = arith.constant dense<0.000000e+00> : vector<480x32xf32>
    %24 = tpu.matmul %22, %23, %cst_22 {dimension_numbers = #tpu.dot_dimension_numbers<[1], [0], [0], [1], [0, 0, 1, 1], [], []>} : vector<480x10xf32>, vector<10x32xf32>, vector<480x32xf32> -> vector<480x32xf32>
    %c0_23 = arith.constant 0 : index
    %c0_24 = arith.constant 0 : index
    %25 = vector.load %arg11[%c0_23, %c0_24] : memref<1x32xf32, #tpu.memory_space<vmem>>, vector<1x32xf32>
    %26 = vector.broadcast %25 : vector<1x32xf32> to vector<480x32xf32>
    %27 = arith.mulf %24, %26 : vector<480x32xf32>
    %c0_25 = arith.constant 0 : index
    %c0_26 = arith.constant 0 : index
    %28 = vector.load %arg12[%c0_25, %c0_26] : memref<1x32xf32, #tpu.memory_space<vmem>>, vector<1x32xf32>
    %29 = vector.broadcast %28 : vector<1x32xf32> to vector<480x32xf32>
    %30 = arith.addf %27, %29 : vector<480x32xf32>
    %cst_27 = arith.constant 0.000000e+00 : f32
    %31 = vector.broadcast %cst_27 : f32 to vector<480x32xf32>
    %32 = arith.maximumf %30, %31 : vector<480x32xf32>
    %33 = vector.extract_strided_slice %32 {offsets = [0, 0], sizes = [240, 32], strides = [1, 1]} : vector<480x32xf32> to vector<240x32xf32>
    %34 = vector.extract_strided_slice %32 {offsets = [240, 0], sizes = [240, 32], strides = [1, 1]} : vector<480x32xf32> to vector<240x32xf32>
    %35 = arith.maximumf %33, %34 : vector<240x32xf32>
    %c0_28 = arith.constant 0 : index
    %c0_29 = arith.constant 0 : index
    %36 = vector.load %arg25[%c0_28, %c0_29] : memref<720x32xf32, #tpu.memory_space<vmem>>, vector<240x32xf32>
    tpu.vector_store %arg25[%c0_28, %c0_29], %10 {strides = array<i32>} : memref<720x32xf32, #tpu.memory_space<vmem>>, vector<240x32xf32>,
    %c240 = arith.constant 240 : index
    %c0_30 = arith.constant 0 : index
    %37 = vector.load %arg25[%c240, %c0_30] : memref<720x32xf32, #tpu.memory_space<vmem>>, vector<240x32xf32>
    tpu.vector_store %arg25[%c240, %c0_30], %21 {strides = array<i32>} : memref<720x32xf32, #tpu.memory_space<vmem>>, vector<240x32xf32>,
    %c480 = arith.constant 480 : index
    %c0_31 = arith.constant 0 : index
    %38 = vector.load %arg25[%c480, %c0_31] : memref<720x32xf32, #tpu.memory_space<vmem>>, vector<240x32xf32>
    tpu.vector_store %arg25[%c480, %c0_31], %35 {strides = array<i32>} : memref<720x32xf32, #tpu.memory_space<vmem>>, vector<240x32xf32>,
    %c0_32 = arith.constant 0 : index
    %c0_33 = arith.constant 0 : index
    %39 = vector.load %arg25[%c0_32, %c0_33] : memref<720x32xf32, #tpu.memory_space<vmem>>, vector<16x32xf32>
    %cst_34 = arith.constant dense<0xFF800000> : vector<16xf32>
    %40 = vector.multi_reduction <maximumf>, %39, %cst_34 [1] : vector<16x32xf32> to vector<16xf32>
    %41 = vector.shape_cast %40 : vector<16xf32> to vector<16x1xf32>
    %c0_35 = arith.constant 0 : index
    %c0_36 = arith.constant 0 : index
    %42 = vector.load %arg26[%c0_35, %c0_36] : memref<16x45xf32, #tpu.memory_space<vmem>>, vector<16x1xf32>
    tpu.vector_store %arg26[%c0_35, %c0_36], %41 {strides = array<i32>} : memref<16x45xf32, #tpu.memory_space<vmem>>, vector<16x1xf32>,
    %c16 = arith.constant 16 : index
    %c0_37 = arith.constant 0 : index
    %43 = vector.load %arg25[%c16, %c0_37] : memref<720x32xf32, #tpu.memory_space<vmem>>, vector<16x32xf32>
    %cst_38 = arith.constant dense<0xFF800000> : vector<16xf32>
    %44 = vector.multi_reduction <maximumf>, %43, %cst_38 [1] : vector<16x32xf32> to vector<16xf32>
    %45 = vector.shape_cast %44 : vector<16xf32> to vector<16x1xf32>
    %c0_39 = arith.constant 0 : index
    %c1 = arith.constant 1 : index
    %46 = vector.load %arg26[%c0_39, %c1] : memref<16x45xf32, #tpu.memory_space<vmem>>, vector<16x1xf32>
    tpu.vector_store %arg26[%c0_39, %c1], %45 {strides = array<i32>} : memref<16x45xf32, #tpu.memory_space<vmem>>, vector<16x1xf32>,
    %c32 = arith.constant 32 : index
    %c0_40 = arith.constant 0 : index
    %47 = vector.load %arg25[%c32, %c0_40] : memref<720x32xf32, #tpu.memory_space<vmem>>, vector<16x32xf32>
    %cst_41 = arith.constant dense<0xFF800000> : vector<16xf32>
    %48 = vector.multi_reduction <maximumf>, %47, %cst_41 [1] : vector<16x32xf32> to vector<16xf32>
    %49 = vector.shape_cast %48 : vector<16xf32> to vector<16x1xf32>
    %c0_42 = arith.constant 0 : index
    %c2 = arith.constant 2 : index
    %50 = vector.load %arg26[%c0_42, %c2] : memref<16x45xf32, #tpu.memory_space<vmem>>, vector<16x1xf32>
    tpu.vector_store %arg26[%c0_42, %c2], %49 {strides = array<i32>} : memref<16x45xf32, #tpu.memory_space<vmem>>, vector<16x1xf32>,
    %c48 = arith.constant 48 : index
    %c0_43 = arith.constant 0 : index
    %51 = vector.load %arg25[%c48, %c0_43] : memref<720x32xf32, #tpu.memory_space<vmem>>, vector<16x32xf32>
    %cst_44 = arith.constant dense<0xFF800000> : vector<16xf32>
    %52 = vector.multi_reduction <maximumf>, %51, %cst_44 [1] : vector<16x32xf32> to vector<16xf32>
    %53 = vector.shape_cast %52 : vector<16xf32> to vector<16x1xf32>
    %c0_45 = arith.constant 0 : index
    %c3 = arith.constant 3 : index
    %54 = vector.load %arg26[%c0_45, %c3] : memref<16x45xf32, #tpu.memory_space<vmem>>, vector<16x1xf32>
    tpu.vector_store %arg26[%c0_45, %c3], %53 {strides = array<i32>} : memref<16x45xf32, #tpu.memory_space<vmem>>, vector<16x1xf32>,
    %c64 = arith.constant 64 : index
    %c0_46 = arith.constant 0 : index
    %55 = vector.load %arg25[%c64, %c0_46] : memref<720x32xf32, #tpu.memory_space<vmem>>, vector<16x32xf32>
    %cst_47 = arith.constant dense<0xFF800000> : vector<16xf32>
    %56 = vector.multi_reduction <maximumf>, %55, %cst_47 [1] : vector<16x32xf32> to vector<16xf32>
    %57 = vector.shape_cast %56 : vector<16xf32> to vector<16x1xf32>
    %c0_48 = arith.constant 0 : index
    %c4 = arith.constant 4 : index
    %58 = vector.load %arg26[%c0_48, %c4] : memref<16x45xf32, #tpu.memory_space<vmem>>, vector<16x1xf32>
    tpu.vector_store %arg26[%c0_48, %c4], %57 {strides = array<i32>} : memref<16x45xf32, #tpu.memory_space<vmem>>, vector<16x1xf32>,
    %c80 = arith.constant 80 : index
    %c0_49 = arith.constant 0 : index
    %59 = vector.load %arg25[%c80, %c0_49] : memref<720x32xf32, #tpu.memory_space<vmem>>, vector<16x32xf32>
    %cst_50 = arith.constant dense<0xFF800000> : vector<16xf32>
    %60 = vector.multi_reduction <maximumf>, %59, %cst_50 [1] : vector<16x32xf32> to vector<16xf32>
    %61 = vector.shape_cast %60 : vector<16xf32> to vector<16x1xf32>
    %c0_51 = arith.constant 0 : index
    %c5 = arith.constant 5 : index
    %62 = vector.load %arg26[%c0_51, %c5] : memref<16x45xf32, #tpu.memory_space<vmem>>, vector<16x1xf32>
    tpu.vector_store %arg26[%c0_51, %c5], %61 {strides = array<i32>} : memref<16x45xf32, #tpu.memory_space<vmem>>, vector<16x1xf32>,
    %c96 = arith.constant 96 : index
    %c0_52 = arith.constant 0 : index
    %63 = vector.load %arg25[%c96, %c0_52] : memref<720x32xf32, #tpu.memory_space<vmem>>, vector<16x32xf32>
    %cst_53 = arith.constant dense<0xFF800000> : vector<16xf32>
    %64 = vector.multi_reduction <maximumf>, %63, %cst_53 [1] : vector<16x32xf32> to vector<16xf32>
    %65 = vector.shape_cast %64 : vector<16xf32> to vector<16x1xf32>
    %c0_54 = arith.constant 0 : index
    %c6 = arith.constant 6 : index
    %66 = vector.load %arg26[%c0_54, %c6] : memref<16x45xf32, #tpu.memory_space<vmem>>, vector<16x1xf32>
    tpu.vector_store %arg26[%c0_54, %c6], %65 {strides = array<i32>} : memref<16x45xf32, #tpu.memory_space<vmem>>, vector<16x1xf32>,
    %c112 = arith.constant 112 : index
    %c0_55 = arith.constant 0 : index
    %67 = vector.load %arg25[%c112, %c0_55] : memref<720x32xf32, #tpu.memory_space<vmem>>, vector<16x32xf32>
    %cst_56 = arith.constant dense<0xFF800000> : vector<16xf32>
    %68 = vector.multi_reduction <maximumf>, %67, %cst_56 [1] : vector<16x32xf32> to vector<16xf32>
    %69 = vector.shape_cast %68 : vector<16xf32> to vector<16x1xf32>
    %c0_57 = arith.constant 0 : index
    %c7 = arith.constant 7 : index
    %70 = vector.load %arg26[%c0_57, %c7] : memref<16x45xf32, #tpu.memory_space<vmem>>, vector<16x1xf32>
    tpu.vector_store %arg26[%c0_57, %c7], %69 {strides = array<i32>} : memref<16x45xf32, #tpu.memory_space<vmem>>, vector<16x1xf32>,
    %c128 = arith.constant 128 : index
    %c0_58 = arith.constant 0 : index
    %71 = vector.load %arg25[%c128, %c0_58] : memref<720x32xf32, #tpu.memory_space<vmem>>, vector<16x32xf32>
    %cst_59 = arith.constant dense<0xFF800000> : vector<16xf32>
    %72 = vector.multi_reduction <maximumf>, %71, %cst_59 [1] : vector<16x32xf32> to vector<16xf32>
    %73 = vector.shape_cast %72 : vector<16xf32> to vector<16x1xf32>
    %c0_60 = arith.constant 0 : index
    %c8 = arith.constant 8 : index
    %74 = vector.load %arg26[%c0_60, %c8] : memref<16x45xf32, #tpu.memory_space<vmem>>, vector<16x1xf32>
    tpu.vector_store %arg26[%c0_60, %c8], %73 {strides = array<i32>} : memref<16x45xf32, #tpu.memory_space<vmem>>, vector<16x1xf32>,
    %c144 = arith.constant 144 : index
    %c0_61 = arith.constant 0 : index
    %75 = vector.load %arg25[%c144, %c0_61] : memref<720x32xf32, #tpu.memory_space<vmem>>, vector<16x32xf32>
    %cst_62 = arith.constant dense<0xFF800000> : vector<16xf32>
    %76 = vector.multi_reduction <maximumf>, %75, %cst_62 [1] : vector<16x32xf32> to vector<16xf32>
    %77 = vector.shape_cast %76 : vector<16xf32> to vector<16x1xf32>
    %c0_63 = arith.constant 0 : index
    %c9 = arith.constant 9 : index
    %78 = vector.load %arg26[%c0_63, %c9] : memref<16x45xf32, #tpu.memory_space<vmem>>, vector<16x1xf32>
    tpu.vector_store %arg26[%c0_63, %c9], %77 {strides = array<i32>} : memref<16x45xf32, #tpu.memory_space<vmem>>, vector<16x1xf32>,
    %c160 = arith.constant 160 : index
    %c0_64 = arith.constant 0 : index
    %79 = vector.load %arg25[%c160, %c0_64] : memref<720x32xf32, #tpu.memory_space<vmem>>, vector<16x32xf32>
    %cst_65 = arith.constant dense<0xFF800000> : vector<16xf32>
    %80 = vector.multi_reduction <maximumf>, %79, %cst_65 [1] : vector<16x32xf32> to vector<16xf32>
    %81 = vector.shape_cast %80 : vector<16xf32> to vector<16x1xf32>
    %c0_66 = arith.constant 0 : index
    %c10 = arith.constant 10 : index
    %82 = vector.load %arg26[%c0_66, %c10] : memref<16x45xf32, #tpu.memory_space<vmem>>, vector<16x1xf32>
    tpu.vector_store %arg26[%c0_66, %c10], %81 {strides = array<i32>} : memref<16x45xf32, #tpu.memory_space<vmem>>, vector<16x1xf32>,
    %c176 = arith.constant 176 : index
    %c0_67 = arith.constant 0 : index
    %83 = vector.load %arg25[%c176, %c0_67] : memref<720x32xf32, #tpu.memory_space<vmem>>, vector<16x32xf32>
    %cst_68 = arith.constant dense<0xFF800000> : vector<16xf32>
    %84 = vector.multi_reduction <maximumf>, %83, %cst_68 [1] : vector<16x32xf32> to vector<16xf32>
    %85 = vector.shape_cast %84 : vector<16xf32> to vector<16x1xf32>
    %c0_69 = arith.constant 0 : index
    %c11 = arith.constant 11 : index
    %86 = vector.load %arg26[%c0_69, %c11] : memref<16x45xf32, #tpu.memory_space<vmem>>, vector<16x1xf32>
    tpu.vector_store %arg26[%c0_69, %c11], %85 {strides = array<i32>} : memref<16x45xf32, #tpu.memory_space<vmem>>, vector<16x1xf32>,
    %c192 = arith.constant 192 : index
    %c0_70 = arith.constant 0 : index
    %87 = vector.load %arg25[%c192, %c0_70] : memref<720x32xf32, #tpu.memory_space<vmem>>, vector<16x32xf32>
    %cst_71 = arith.constant dense<0xFF800000> : vector<16xf32>
    %88 = vector.multi_reduction <maximumf>, %87, %cst_71 [1] : vector<16x32xf32> to vector<16xf32>
    %89 = vector.shape_cast %88 : vector<16xf32> to vector<16x1xf32>
    %c0_72 = arith.constant 0 : index
    %c12 = arith.constant 12 : index
    %90 = vector.load %arg26[%c0_72, %c12] : memref<16x45xf32, #tpu.memory_space<vmem>>, vector<16x1xf32>
    tpu.vector_store %arg26[%c0_72, %c12], %89 {strides = array<i32>} : memref<16x45xf32, #tpu.memory_space<vmem>>, vector<16x1xf32>,
    %c208 = arith.constant 208 : index
    %c0_73 = arith.constant 0 : index
    %91 = vector.load %arg25[%c208, %c0_73] : memref<720x32xf32, #tpu.memory_space<vmem>>, vector<16x32xf32>
    %cst_74 = arith.constant dense<0xFF800000> : vector<16xf32>
    %92 = vector.multi_reduction <maximumf>, %91, %cst_74 [1] : vector<16x32xf32> to vector<16xf32>
    %93 = vector.shape_cast %92 : vector<16xf32> to vector<16x1xf32>
    %c0_75 = arith.constant 0 : index
    %c13 = arith.constant 13 : index
    %94 = vector.load %arg26[%c0_75, %c13] : memref<16x45xf32, #tpu.memory_space<vmem>>, vector<16x1xf32>
    tpu.vector_store %arg26[%c0_75, %c13], %93 {strides = array<i32>} : memref<16x45xf32, #tpu.memory_space<vmem>>, vector<16x1xf32>,
    %c224 = arith.constant 224 : index
    %c0_76 = arith.constant 0 : index
    %95 = vector.load %arg25[%c224, %c0_76] : memref<720x32xf32, #tpu.memory_space<vmem>>, vector<16x32xf32>
    %cst_77 = arith.constant dense<0xFF800000> : vector<16xf32>
    %96 = vector.multi_reduction <maximumf>, %95, %cst_77 [1] : vector<16x32xf32> to vector<16xf32>
    %97 = vector.shape_cast %96 : vector<16xf32> to vector<16x1xf32>
    %c0_78 = arith.constant 0 : index
    %c14 = arith.constant 14 : index
    %98 = vector.load %arg26[%c0_78, %c14] : memref<16x45xf32, #tpu.memory_space<vmem>>, vector<16x1xf32>
    tpu.vector_store %arg26[%c0_78, %c14], %97 {strides = array<i32>} : memref<16x45xf32, #tpu.memory_space<vmem>>, vector<16x1xf32>,
    %c240_79 = arith.constant 240 : index
    %c0_80 = arith.constant 0 : index
    %99 = vector.load %arg25[%c240_79, %c0_80] : memref<720x32xf32, #tpu.memory_space<vmem>>, vector<16x32xf32>
    %cst_81 = arith.constant dense<0xFF800000> : vector<16xf32>
    %100 = vector.multi_reduction <maximumf>, %99, %cst_81 [1] : vector<16x32xf32> to vector<16xf32>
    %101 = vector.shape_cast %100 : vector<16xf32> to vector<16x1xf32>
    %c0_82 = arith.constant 0 : index
    %c15 = arith.constant 15 : index
    %102 = vector.load %arg26[%c0_82, %c15] : memref<16x45xf32, #tpu.memory_space<vmem>>, vector<16x1xf32>
    tpu.vector_store %arg26[%c0_82, %c15], %101 {strides = array<i32>} : memref<16x45xf32, #tpu.memory_space<vmem>>, vector<16x1xf32>,
    %c256 = arith.constant 256 : index
    %c0_83 = arith.constant 0 : index
    %103 = vector.load %arg25[%c256, %c0_83] : memref<720x32xf32, #tpu.memory_space<vmem>>, vector<16x32xf32>
    %cst_84 = arith.constant dense<0xFF800000> : vector<16xf32>
    %104 = vector.multi_reduction <maximumf>, %103, %cst_84 [1] : vector<16x32xf32> to vector<16xf32>
    %105 = vector.shape_cast %104 : vector<16xf32> to vector<16x1xf32>
    %c0_85 = arith.constant 0 : index
    %c16_86 = arith.constant 16 : index
    %106 = vector.load %arg26[%c0_85, %c16_86] : memref<16x45xf32, #tpu.memory_space<vmem>>, vector<16x1xf32>
    tpu.vector_store %arg26[%c0_85, %c16_86], %105 {strides = array<i32>} : memref<16x45xf32, #tpu.memory_space<vmem>>, vector<16x1xf32>,
    %c272 = arith.constant 272 : index
    %c0_87 = arith.constant 0 : index
    %107 = vector.load %arg25[%c272, %c0_87] : memref<720x32xf32, #tpu.memory_space<vmem>>, vector<16x32xf32>
    %cst_88 = arith.constant dense<0xFF800000> : vector<16xf32>
    %108 = vector.multi_reduction <maximumf>, %107, %cst_88 [1] : vector<16x32xf32> to vector<16xf32>
    %109 = vector.shape_cast %108 : vector<16xf32> to vector<16x1xf32>
    %c0_89 = arith.constant 0 : index
    %c17 = arith.constant 17 : index
    %110 = vector.load %arg26[%c0_89, %c17] : memref<16x45xf32, #tpu.memory_space<vmem>>, vector<16x1xf32>
    tpu.vector_store %arg26[%c0_89, %c17], %109 {strides = array<i32>} : memref<16x45xf32, #tpu.memory_space<vmem>>, vector<16x1xf32>,
    %c288 = arith.constant 288 : index
    %c0_90 = arith.constant 0 : index
    %111 = vector.load %arg25[%c288, %c0_90] : memref<720x32xf32, #tpu.memory_space<vmem>>, vector<16x32xf32>
    %cst_91 = arith.constant dense<0xFF800000> : vector<16xf32>
    %112 = vector.multi_reduction <maximumf>, %111, %cst_91 [1] : vector<16x32xf32> to vector<16xf32>
    %113 = vector.shape_cast %112 : vector<16xf32> to vector<16x1xf32>
    %c0_92 = arith.constant 0 : index
    %c18 = arith.constant 18 : index
    %114 = vector.load %arg26[%c0_92, %c18] : memref<16x45xf32, #tpu.memory_space<vmem>>, vector<16x1xf32>
    tpu.vector_store %arg26[%c0_92, %c18], %113 {strides = array<i32>} : memref<16x45xf32, #tpu.memory_space<vmem>>, vector<16x1xf32>,
    %c304 = arith.constant 304 : index
    %c0_93 = arith.constant 0 : index
    %115 = vector.load %arg25[%c304, %c0_93] : memref<720x32xf32, #tpu.memory_space<vmem>>, vector<16x32xf32>
    %cst_94 = arith.constant dense<0xFF800000> : vector<16xf32>
    %116 = vector.multi_reduction <maximumf>, %115, %cst_94 [1] : vector<16x32xf32> to vector<16xf32>
    %117 = vector.shape_cast %116 : vector<16xf32> to vector<16x1xf32>
    %c0_95 = arith.constant 0 : index
    %c19 = arith.constant 19 : index
    %118 = vector.load %arg26[%c0_95, %c19] : memref<16x45xf32, #tpu.memory_space<vmem>>, vector<16x1xf32>
    tpu.vector_store %arg26[%c0_95, %c19], %117 {strides = array<i32>} : memref<16x45xf32, #tpu.memory_space<vmem>>, vector<16x1xf32>,
    %c320 = arith.constant 320 : index
    %c0_96 = arith.constant 0 : index
    %119 = vector.load %arg25[%c320, %c0_96] : memref<720x32xf32, #tpu.memory_space<vmem>>, vector<16x32xf32>
    %cst_97 = arith.constant dense<0xFF800000> : vector<16xf32>
    %120 = vector.multi_reduction <maximumf>, %119, %cst_97 [1] : vector<16x32xf32> to vector<16xf32>
    %121 = vector.shape_cast %120 : vector<16xf32> to vector<16x1xf32>
    %c0_98 = arith.constant 0 : index
    %c20 = arith.constant 20 : index
    %122 = vector.load %arg26[%c0_98, %c20] : memref<16x45xf32, #tpu.memory_space<vmem>>, vector<16x1xf32>
    tpu.vector_store %arg26[%c0_98, %c20], %121 {strides = array<i32>} : memref<16x45xf32, #tpu.memory_space<vmem>>, vector<16x1xf32>,
    %c336 = arith.constant 336 : index
    %c0_99 = arith.constant 0 : index
    %123 = vector.load %arg25[%c336, %c0_99] : memref<720x32xf32, #tpu.memory_space<vmem>>, vector<16x32xf32>
    %cst_100 = arith.constant dense<0xFF800000> : vector<16xf32>
    %124 = vector.multi_reduction <maximumf>, %123, %cst_100 [1] : vector<16x32xf32> to vector<16xf32>
    %125 = vector.shape_cast %124 : vector<16xf32> to vector<16x1xf32>
    %c0_101 = arith.constant 0 : index
    %c21 = arith.constant 21 : index
    %126 = vector.load %arg26[%c0_101, %c21] : memref<16x45xf32, #tpu.memory_space<vmem>>, vector<16x1xf32>
    tpu.vector_store %arg26[%c0_101, %c21], %125 {strides = array<i32>} : memref<16x45xf32, #tpu.memory_space<vmem>>, vector<16x1xf32>,
    %c352 = arith.constant 352 : index
    %c0_102 = arith.constant 0 : index
    %127 = vector.load %arg25[%c352, %c0_102] : memref<720x32xf32, #tpu.memory_space<vmem>>, vector<16x32xf32>
    %cst_103 = arith.constant dense<0xFF800000> : vector<16xf32>
    %128 = vector.multi_reduction <maximumf>, %127, %cst_103 [1] : vector<16x32xf32> to vector<16xf32>
    %129 = vector.shape_cast %128 : vector<16xf32> to vector<16x1xf32>
    %c0_104 = arith.constant 0 : index
    %c22 = arith.constant 22 : index
    %130 = vector.load %arg26[%c0_104, %c22] : memref<16x45xf32, #tpu.memory_space<vmem>>, vector<16x1xf32>
    tpu.vector_store %arg26[%c0_104, %c22], %129 {strides = array<i32>} : memref<16x45xf32, #tpu.memory_space<vmem>>, vector<16x1xf32>,
    %c368 = arith.constant 368 : index
    %c0_105 = arith.constant 0 : index
    %131 = vector.load %arg25[%c368, %c0_105] : memref<720x32xf32, #tpu.memory_space<vmem>>, vector<16x32xf32>
    %cst_106 = arith.constant dense<0xFF800000> : vector<16xf32>
    %132 = vector.multi_reduction <maximumf>, %131, %cst_106 [1] : vector<16x32xf32> to vector<16xf32>
    %133 = vector.shape_cast %132 : vector<16xf32> to vector<16x1xf32>
    %c0_107 = arith.constant 0 : index
    %c23 = arith.constant 23 : index
    %134 = vector.load %arg26[%c0_107, %c23] : memref<16x45xf32, #tpu.memory_space<vmem>>, vector<16x1xf32>
    tpu.vector_store %arg26[%c0_107, %c23], %133 {strides = array<i32>} : memref<16x45xf32, #tpu.memory_space<vmem>>, vector<16x1xf32>,
    %c384 = arith.constant 384 : index
    %c0_108 = arith.constant 0 : index
    %135 = vector.load %arg25[%c384, %c0_108] : memref<720x32xf32, #tpu.memory_space<vmem>>, vector<16x32xf32>
    %cst_109 = arith.constant dense<0xFF800000> : vector<16xf32>
    %136 = vector.multi_reduction <maximumf>, %135, %cst_109 [1] : vector<16x32xf32> to vector<16xf32>
    %137 = vector.shape_cast %136 : vector<16xf32> to vector<16x1xf32>
    %c0_110 = arith.constant 0 : index
    %c24 = arith.constant 24 : index
    %138 = vector.load %arg26[%c0_110, %c24] : memref<16x45xf32, #tpu.memory_space<vmem>>, vector<16x1xf32>
    tpu.vector_store %arg26[%c0_110, %c24], %137 {strides = array<i32>} : memref<16x45xf32, #tpu.memory_space<vmem>>, vector<16x1xf32>,
    %c400 = arith.constant 400 : index
    %c0_111 = arith.constant 0 : index
    %139 = vector.load %arg25[%c400, %c0_111] : memref<720x32xf32, #tpu.memory_space<vmem>>, vector<16x32xf32>
    %cst_112 = arith.constant dense<0xFF800000> : vector<16xf32>
    %140 = vector.multi_reduction <maximumf>, %139, %cst_112 [1] : vector<16x32xf32> to vector<16xf32>
    %141 = vector.shape_cast %140 : vector<16xf32> to vector<16x1xf32>
    %c0_113 = arith.constant 0 : index
    %c25 = arith.constant 25 : index
    %142 = vector.load %arg26[%c0_113, %c25] : memref<16x45xf32, #tpu.memory_space<vmem>>, vector<16x1xf32>
    tpu.vector_store %arg26[%c0_113, %c25], %141 {strides = array<i32>} : memref<16x45xf32, #tpu.memory_space<vmem>>, vector<16x1xf32>,
    %c416 = arith.constant 416 : index
    %c0_114 = arith.constant 0 : index
    %143 = vector.load %arg25[%c416, %c0_114] : memref<720x32xf32, #tpu.memory_space<vmem>>, vector<16x32xf32>
    %cst_115 = arith.constant dense<0xFF800000> : vector<16xf32>
    %144 = vector.multi_reduction <maximumf>, %143, %cst_115 [1] : vector<16x32xf32> to vector<16xf32>
    %145 = vector.shape_cast %144 : vector<16xf32> to vector<16x1xf32>
    %c0_116 = arith.constant 0 : index
    %c26 = arith.constant 26 : index
    %146 = vector.load %arg26[%c0_116, %c26] : memref<16x45xf32, #tpu.memory_space<vmem>>, vector<16x1xf32>
    tpu.vector_store %arg26[%c0_116, %c26], %145 {strides = array<i32>} : memref<16x45xf32, #tpu.memory_space<vmem>>, vector<16x1xf32>,
    %c432 = arith.constant 432 : index
    %c0_117 = arith.constant 0 : index
    %147 = vector.load %arg25[%c432, %c0_117] : memref<720x32xf32, #tpu.memory_space<vmem>>, vector<16x32xf32>
    %cst_118 = arith.constant dense<0xFF800000> : vector<16xf32>
    %148 = vector.multi_reduction <maximumf>, %147, %cst_118 [1] : vector<16x32xf32> to vector<16xf32>
    %149 = vector.shape_cast %148 : vector<16xf32> to vector<16x1xf32>
    %c0_119 = arith.constant 0 : index
    %c27 = arith.constant 27 : index
    %150 = vector.load %arg26[%c0_119, %c27] : memref<16x45xf32, #tpu.memory_space<vmem>>, vector<16x1xf32>
    tpu.vector_store %arg26[%c0_119, %c27], %149 {strides = array<i32>} : memref<16x45xf32, #tpu.memory_space<vmem>>, vector<16x1xf32>,
    %c448 = arith.constant 448 : index
    %c0_120 = arith.constant 0 : index
    %151 = vector.load %arg25[%c448, %c0_120] : memref<720x32xf32, #tpu.memory_space<vmem>>, vector<16x32xf32>
    %cst_121 = arith.constant dense<0xFF800000> : vector<16xf32>
    %152 = vector.multi_reduction <maximumf>, %151, %cst_121 [1] : vector<16x32xf32> to vector<16xf32>
    %153 = vector.shape_cast %152 : vector<16xf32> to vector<16x1xf32>
    %c0_122 = arith.constant 0 : index
    %c28 = arith.constant 28 : index
    %154 = vector.load %arg26[%c0_122, %c28] : memref<16x45xf32, #tpu.memory_space<vmem>>, vector<16x1xf32>
    tpu.vector_store %arg26[%c0_122, %c28], %153 {strides = array<i32>} : memref<16x45xf32, #tpu.memory_space<vmem>>, vector<16x1xf32>,
    %c464 = arith.constant 464 : index
    %c0_123 = arith.constant 0 : index
    %155 = vector.load %arg25[%c464, %c0_123] : memref<720x32xf32, #tpu.memory_space<vmem>>, vector<16x32xf32>
    %cst_124 = arith.constant dense<0xFF800000> : vector<16xf32>
    %156 = vector.multi_reduction <maximumf>, %155, %cst_124 [1] : vector<16x32xf32> to vector<16xf32>
    %157 = vector.shape_cast %156 : vector<16xf32> to vector<16x1xf32>
    %c0_125 = arith.constant 0 : index
    %c29 = arith.constant 29 : index
    %158 = vector.load %arg26[%c0_125, %c29] : memref<16x45xf32, #tpu.memory_space<vmem>>, vector<16x1xf32>
    tpu.vector_store %arg26[%c0_125, %c29], %157 {strides = array<i32>} : memref<16x45xf32, #tpu.memory_space<vmem>>, vector<16x1xf32>,
    %c480_126 = arith.constant 480 : index
    %c0_127 = arith.constant 0 : index
    %159 = vector.load %arg25[%c480_126, %c0_127] : memref<720x32xf32, #tpu.memory_space<vmem>>, vector<16x32xf32>
    %cst_128 = arith.constant dense<0xFF800000> : vector<16xf32>
    %160 = vector.multi_reduction <maximumf>, %159, %cst_128 [1] : vector<16x32xf32> to vector<16xf32>
    %161 = vector.shape_cast %160 : vector<16xf32> to vector<16x1xf32>
    %c0_129 = arith.constant 0 : index
    %c30 = arith.constant 30 : index
    %162 = vector.load %arg26[%c0_129, %c30] : memref<16x45xf32, #tpu.memory_space<vmem>>, vector<16x1xf32>
    tpu.vector_store %arg26[%c0_129, %c30], %161 {strides = array<i32>} : memref<16x45xf32, #tpu.memory_space<vmem>>, vector<16x1xf32>,
    %c496 = arith.constant 496 : index
    %c0_130 = arith.constant 0 : index
    %163 = vector.load %arg25[%c496, %c0_130] : memref<720x32xf32, #tpu.memory_space<vmem>>, vector<16x32xf32>
    %cst_131 = arith.constant dense<0xFF800000> : vector<16xf32>
    %164 = vector.multi_reduction <maximumf>, %163, %cst_131 [1] : vector<16x32xf32> to vector<16xf32>
    %165 = vector.shape_cast %164 : vector<16xf32> to vector<16x1xf32>
    %c0_132 = arith.constant 0 : index
    %c31 = arith.constant 31 : index
    %166 = vector.load %arg26[%c0_132, %c31] : memref<16x45xf32, #tpu.memory_space<vmem>>, vector<16x1xf32>
    tpu.vector_store %arg26[%c0_132, %c31], %165 {strides = array<i32>} : memref<16x45xf32, #tpu.memory_space<vmem>>, vector<16x1xf32>,
    %c512 = arith.constant 512 : index
    %c0_133 = arith.constant 0 : index
    %167 = vector.load %arg25[%c512, %c0_133] : memref<720x32xf32, #tpu.memory_space<vmem>>, vector<16x32xf32>
    %cst_134 = arith.constant dense<0xFF800000> : vector<16xf32>
    %168 = vector.multi_reduction <maximumf>, %167, %cst_134 [1] : vector<16x32xf32> to vector<16xf32>
    %169 = vector.shape_cast %168 : vector<16xf32> to vector<16x1xf32>
    %c0_135 = arith.constant 0 : index
    %c32_136 = arith.constant 32 : index
    %170 = vector.load %arg26[%c0_135, %c32_136] : memref<16x45xf32, #tpu.memory_space<vmem>>, vector<16x1xf32>
    tpu.vector_store %arg26[%c0_135, %c32_136], %169 {strides = array<i32>} : memref<16x45xf32, #tpu.memory_space<vmem>>, vector<16x1xf32>,
    %c528 = arith.constant 528 : index
    %c0_137 = arith.constant 0 : index
    %171 = vector.load %arg25[%c528, %c0_137] : memref<720x32xf32, #tpu.memory_space<vmem>>, vector<16x32xf32>
    %cst_138 = arith.constant dense<0xFF800000> : vector<16xf32>
    %172 = vector.multi_reduction <maximumf>, %171, %cst_138 [1] : vector<16x32xf32> to vector<16xf32>
    %173 = vector.shape_cast %172 : vector<16xf32> to vector<16x1xf32>
    %c0_139 = arith.constant 0 : index
    %c33 = arith.constant 33 : index
    %174 = vector.load %arg26[%c0_139, %c33] : memref<16x45xf32, #tpu.memory_space<vmem>>, vector<16x1xf32>
    tpu.vector_store %arg26[%c0_139, %c33], %173 {strides = array<i32>} : memref<16x45xf32, #tpu.memory_space<vmem>>, vector<16x1xf32>,
    %c544 = arith.constant 544 : index
    %c0_140 = arith.constant 0 : index
    %175 = vector.load %arg25[%c544, %c0_140] : memref<720x32xf32, #tpu.memory_space<vmem>>, vector<16x32xf32>
    %cst_141 = arith.constant dense<0xFF800000> : vector<16xf32>
    %176 = vector.multi_reduction <maximumf>, %175, %cst_141 [1] : vector<16x32xf32> to vector<16xf32>
    %177 = vector.shape_cast %176 : vector<16xf32> to vector<16x1xf32>
    %c0_142 = arith.constant 0 : index
    %c34 = arith.constant 34 : index
    %178 = vector.load %arg26[%c0_142, %c34] : memref<16x45xf32, #tpu.memory_space<vmem>>, vector<16x1xf32>
    tpu.vector_store %arg26[%c0_142, %c34], %177 {strides = array<i32>} : memref<16x45xf32, #tpu.memory_space<vmem>>, vector<16x1xf32>,
    %c560 = arith.constant 560 : index
    %c0_143 = arith.constant 0 : index
    %179 = vector.load %arg25[%c560, %c0_143] : memref<720x32xf32, #tpu.memory_space<vmem>>, vector<16x32xf32>
    %cst_144 = arith.constant dense<0xFF800000> : vector<16xf32>
    %180 = vector.multi_reduction <maximumf>, %179, %cst_144 [1] : vector<16x32xf32> to vector<16xf32>
    %181 = vector.shape_cast %180 : vector<16xf32> to vector<16x1xf32>
    %c0_145 = arith.constant 0 : index
    %c35 = arith.constant 35 : index
    %182 = vector.load %arg26[%c0_145, %c35] : memref<16x45xf32, #tpu.memory_space<vmem>>, vector<16x1xf32>
    tpu.vector_store %arg26[%c0_145, %c35], %181 {strides = array<i32>} : memref<16x45xf32, #tpu.memory_space<vmem>>, vector<16x1xf32>,
    %c576 = arith.constant 576 : index
    %c0_146 = arith.constant 0 : index
    %183 = vector.load %arg25[%c576, %c0_146] : memref<720x32xf32, #tpu.memory_space<vmem>>, vector<16x32xf32>
    %cst_147 = arith.constant dense<0xFF800000> : vector<16xf32>
    %184 = vector.multi_reduction <maximumf>, %183, %cst_147 [1] : vector<16x32xf32> to vector<16xf32>
    %185 = vector.shape_cast %184 : vector<16xf32> to vector<16x1xf32>
    %c0_148 = arith.constant 0 : index
    %c36 = arith.constant 36 : index
    %186 = vector.load %arg26[%c0_148, %c36] : memref<16x45xf32, #tpu.memory_space<vmem>>, vector<16x1xf32>
    tpu.vector_store %arg26[%c0_148, %c36], %185 {strides = array<i32>} : memref<16x45xf32, #tpu.memory_space<vmem>>, vector<16x1xf32>,
    %c592 = arith.constant 592 : index
    %c0_149 = arith.constant 0 : index
    %187 = vector.load %arg25[%c592, %c0_149] : memref<720x32xf32, #tpu.memory_space<vmem>>, vector<16x32xf32>
    %cst_150 = arith.constant dense<0xFF800000> : vector<16xf32>
    %188 = vector.multi_reduction <maximumf>, %187, %cst_150 [1] : vector<16x32xf32> to vector<16xf32>
    %189 = vector.shape_cast %188 : vector<16xf32> to vector<16x1xf32>
    %c0_151 = arith.constant 0 : index
    %c37 = arith.constant 37 : index
    %190 = vector.load %arg26[%c0_151, %c37] : memref<16x45xf32, #tpu.memory_space<vmem>>, vector<16x1xf32>
    tpu.vector_store %arg26[%c0_151, %c37], %189 {strides = array<i32>} : memref<16x45xf32, #tpu.memory_space<vmem>>, vector<16x1xf32>,
    %c608 = arith.constant 608 : index
    %c0_152 = arith.constant 0 : index
    %191 = vector.load %arg25[%c608, %c0_152] : memref<720x32xf32, #tpu.memory_space<vmem>>, vector<16x32xf32>
    %cst_153 = arith.constant dense<0xFF800000> : vector<16xf32>
    %192 = vector.multi_reduction <maximumf>, %191, %cst_153 [1] : vector<16x32xf32> to vector<16xf32>
    %193 = vector.shape_cast %192 : vector<16xf32> to vector<16x1xf32>
    %c0_154 = arith.constant 0 : index
    %c38 = arith.constant 38 : index
    %194 = vector.load %arg26[%c0_154, %c38] : memref<16x45xf32, #tpu.memory_space<vmem>>, vector<16x1xf32>
    tpu.vector_store %arg26[%c0_154, %c38], %193 {strides = array<i32>} : memref<16x45xf32, #tpu.memory_space<vmem>>, vector<16x1xf32>,
    %c624 = arith.constant 624 : index
    %c0_155 = arith.constant 0 : index
    %195 = vector.load %arg25[%c624, %c0_155] : memref<720x32xf32, #tpu.memory_space<vmem>>, vector<16x32xf32>
    %cst_156 = arith.constant dense<0xFF800000> : vector<16xf32>
    %196 = vector.multi_reduction <maximumf>, %195, %cst_156 [1] : vector<16x32xf32> to vector<16xf32>
    %197 = vector.shape_cast %196 : vector<16xf32> to vector<16x1xf32>
    %c0_157 = arith.constant 0 : index
    %c39 = arith.constant 39 : index
    %198 = vector.load %arg26[%c0_157, %c39] : memref<16x45xf32, #tpu.memory_space<vmem>>, vector<16x1xf32>
    tpu.vector_store %arg26[%c0_157, %c39], %197 {strides = array<i32>} : memref<16x45xf32, #tpu.memory_space<vmem>>, vector<16x1xf32>,
    %c640 = arith.constant 640 : index
    %c0_158 = arith.constant 0 : index
    %199 = vector.load %arg25[%c640, %c0_158] : memref<720x32xf32, #tpu.memory_space<vmem>>, vector<16x32xf32>
    %cst_159 = arith.constant dense<0xFF800000> : vector<16xf32>
    %200 = vector.multi_reduction <maximumf>, %199, %cst_159 [1] : vector<16x32xf32> to vector<16xf32>
    %201 = vector.shape_cast %200 : vector<16xf32> to vector<16x1xf32>
    %c0_160 = arith.constant 0 : index
    %c40 = arith.constant 40 : index
    %202 = vector.load %arg26[%c0_160, %c40] : memref<16x45xf32, #tpu.memory_space<vmem>>, vector<16x1xf32>
    tpu.vector_store %arg26[%c0_160, %c40], %201 {strides = array<i32>} : memref<16x45xf32, #tpu.memory_space<vmem>>, vector<16x1xf32>,
    %c656 = arith.constant 656 : index
    %c0_161 = arith.constant 0 : index
    %203 = vector.load %arg25[%c656, %c0_161] : memref<720x32xf32, #tpu.memory_space<vmem>>, vector<16x32xf32>
    %cst_162 = arith.constant dense<0xFF800000> : vector<16xf32>
    %204 = vector.multi_reduction <maximumf>, %203, %cst_162 [1] : vector<16x32xf32> to vector<16xf32>
    %205 = vector.shape_cast %204 : vector<16xf32> to vector<16x1xf32>
    %c0_163 = arith.constant 0 : index
    %c41 = arith.constant 41 : index
    %206 = vector.load %arg26[%c0_163, %c41] : memref<16x45xf32, #tpu.memory_space<vmem>>, vector<16x1xf32>
    tpu.vector_store %arg26[%c0_163, %c41], %205 {strides = array<i32>} : memref<16x45xf32, #tpu.memory_space<vmem>>, vector<16x1xf32>,
    %c672 = arith.constant 672 : index
    %c0_164 = arith.constant 0 : index
    %207 = vector.load %arg25[%c672, %c0_164] : memref<720x32xf32, #tpu.memory_space<vmem>>, vector<16x32xf32>
    %cst_165 = arith.constant dense<0xFF800000> : vector<16xf32>
    %208 = vector.multi_reduction <maximumf>, %207, %cst_165 [1] : vector<16x32xf32> to vector<16xf32>
    %209 = vector.shape_cast %208 : vector<16xf32> to vector<16x1xf32>
    %c0_166 = arith.constant 0 : index
    %c42 = arith.constant 42 : index
    %210 = vector.load %arg26[%c0_166, %c42] : memref<16x45xf32, #tpu.memory_space<vmem>>, vector<16x1xf32>
    tpu.vector_store %arg26[%c0_166, %c42], %209 {strides = array<i32>} : memref<16x45xf32, #tpu.memory_space<vmem>>, vector<16x1xf32>,
    %c688 = arith.constant 688 : index
    %c0_167 = arith.constant 0 : index
    %211 = vector.load %arg25[%c688, %c0_167] : memref<720x32xf32, #tpu.memory_space<vmem>>, vector<16x32xf32>
    %cst_168 = arith.constant dense<0xFF800000> : vector<16xf32>
    %212 = vector.multi_reduction <maximumf>, %211, %cst_168 [1] : vector<16x32xf32> to vector<16xf32>
    %213 = vector.shape_cast %212 : vector<16xf32> to vector<16x1xf32>
    %c0_169 = arith.constant 0 : index
    %c43 = arith.constant 43 : index
    %214 = vector.load %arg26[%c0_169, %c43] : memref<16x45xf32, #tpu.memory_space<vmem>>, vector<16x1xf32>
    tpu.vector_store %arg26[%c0_169, %c43], %213 {strides = array<i32>} : memref<16x45xf32, #tpu.memory_space<vmem>>, vector<16x1xf32>,
    %c704 = arith.constant 704 : index
    %c0_170 = arith.constant 0 : index
    %215 = vector.load %arg25[%c704, %c0_170] : memref<720x32xf32, #tpu.memory_space<vmem>>, vector<16x32xf32>
    %cst_171 = arith.constant dense<0xFF800000> : vector<16xf32>
    %216 = vector.multi_reduction <maximumf>, %215, %cst_171 [1] : vector<16x32xf32> to vector<16xf32>
    %217 = vector.shape_cast %216 : vector<16xf32> to vector<16x1xf32>
    %c0_172 = arith.constant 0 : index
    %c44 = arith.constant 44 : index
    %218 = vector.load %arg26[%c0_172, %c44] : memref<16x45xf32, #tpu.memory_space<vmem>>, vector<16x1xf32>
    tpu.vector_store %arg26[%c0_172, %c44], %217 {strides = array<i32>} : memref<16x45xf32, #tpu.memory_space<vmem>>, vector<16x1xf32>,
    %c0_173 = arith.constant 0 : index
    %c0_174 = arith.constant 0 : index
    %219 = vector.load %arg26[%c0_173, %c0_174] : memref<16x45xf32, #tpu.memory_space<vmem>>, vector<16x45xf32>
    %c0_175 = arith.constant 0 : index
    %c0_176 = arith.constant 0 : index
    %220 = vector.load %arg13[%c0_175, %c0_176] : memref<45x5xf32, #tpu.memory_space<vmem>>, vector<45x5xf32>
    %cst_177 = arith.constant dense<0.000000e+00> : vector<16x5xf32>
    %221 = tpu.matmul %219, %220, %cst_177 {dimension_numbers = #tpu.dot_dimension_numbers<[1], [0], [0], [1], [0, 0, 1, 1], [], []>} : vector<16x45xf32>, vector<45x5xf32>, vector<16x5xf32> -> vector<16x5xf32>
    %c0_178 = arith.constant 0 : index
    %c0_179 = arith.constant 0 : index
    %222 = vector.load %arg14[%c0_178, %c0_179] : memref<1x5xf32, #tpu.memory_space<vmem>>, vector<1x5xf32>
    %223 = vector.broadcast %222 : vector<1x5xf32> to vector<16x5xf32>
    %224 = arith.addf %221, %223 : vector<16x5xf32>
    %cst_180 = arith.constant 0.000000e+00 : f32
    %225 = vector.broadcast %cst_180 : f32 to vector<16x5xf32>
    %226 = arith.maximumf %224, %225 : vector<16x5xf32>
    %c0_181 = arith.constant 0 : index
    %c0_182 = arith.constant 0 : index
    %227 = vector.load %arg15[%c0_181, %c0_182] : memref<5x45xf32, #tpu.memory_space<vmem>>, vector<5x45xf32>
    %cst_183 = arith.constant dense<0.000000e+00> : vector<16x45xf32>
    %228 = tpu.matmul %226, %227, %cst_183 {dimension_numbers = #tpu.dot_dimension_numbers<[1], [0], [0], [1], [0, 0, 1, 1], [], []>} : vector<16x5xf32>, vector<5x45xf32>, vector<16x45xf32> -> vector<16x45xf32>
    %c0_184 = arith.constant 0 : index
    %c0_185 = arith.constant 0 : index
    %229 = vector.load %arg16[%c0_184, %c0_185] : memref<1x45xf32, #tpu.memory_space<vmem>>, vector<1x45xf32>
    %230 = vector.broadcast %229 : vector<1x45xf32> to vector<16x45xf32>
    %231 = arith.addf %228, %230 : vector<16x45xf32>
    %232 = arith.negf %231 : vector<16x45xf32>
    %233 = math.exp %232 : vector<16x45xf32>
    %cst_186 = arith.constant 1.000000e+00 : f32
    %234 = vector.broadcast %cst_186 : f32 to vector<16x45xf32>
    %235 = arith.addf %234, %233 : vector<16x45xf32>
    %236 = arith.divf %234, %235 : vector<16x45xf32>
    %c0_187 = arith.constant 0 : index
    %c0_188 = arith.constant 0 : index
    %237 = vector.load %arg26[%c0_187, %c0_188] : memref<16x45xf32, #tpu.memory_space<vmem>>, vector<16x45xf32>
    tpu.vector_store %arg26[%c0_187, %c0_188], %236 {strides = array<i32>} : memref<16x45xf32, #tpu.memory_space<vmem>>, vector<16x45xf32>,
    %c0_189 = arith.constant 0 : index
    %c0_190 = arith.constant 0 : index
    %238 = vector.load %arg25[%c0_189, %c0_190] : memref<720x32xf32, #tpu.memory_space<vmem>>, vector<16x32xf32>
    %c0_191 = arith.constant 0 : index
    %c0_192 = arith.constant 0 : index
    %239 = vector.load %arg26[%c0_191, %c0_192] : memref<16x45xf32, #tpu.memory_space<vmem>>, vector<16x1xf32>
    %240 = vector.broadcast %239 : vector<16x1xf32> to vector<16x32xf32>
    %241 = arith.mulf %238, %240 : vector<16x32xf32>
    %c0_193 = arith.constant 0 : index
    %c0_194 = arith.constant 0 : index
    %242 = vector.load %arg27[%c0_193, %c0_194] : memref<16x1440xf32, #tpu.memory_space<vmem>>, vector<16x32xf32>
    tpu.vector_store %arg27[%c0_193, %c0_194], %241 {strides = array<i32>} : memref<16x1440xf32, #tpu.memory_space<vmem>>, vector<16x32xf32>,
    %c16_195 = arith.constant 16 : index
    %c0_196 = arith.constant 0 : index
    %243 = vector.load %arg25[%c16_195, %c0_196] : memref<720x32xf32, #tpu.memory_space<vmem>>, vector<16x32xf32>
    %c0_197 = arith.constant 0 : index
    %c1_198 = arith.constant 1 : index
    %244 = vector.load %arg26[%c0_197, %c1_198] : memref<16x45xf32, #tpu.memory_space<vmem>>, vector<16x1xf32>
    %245 = vector.broadcast %244 : vector<16x1xf32> to vector<16x32xf32>
    %246 = arith.mulf %243, %245 : vector<16x32xf32>
    %c0_199 = arith.constant 0 : index
    %c32_200 = arith.constant 32 : index
    %247 = vector.load %arg27[%c0_199, %c32_200] : memref<16x1440xf32, #tpu.memory_space<vmem>>, vector<16x32xf32>
    tpu.vector_store %arg27[%c0_199, %c32_200], %246 {strides = array<i32>} : memref<16x1440xf32, #tpu.memory_space<vmem>>, vector<16x32xf32>,
    %c32_201 = arith.constant 32 : index
    %c0_202 = arith.constant 0 : index
    %248 = vector.load %arg25[%c32_201, %c0_202] : memref<720x32xf32, #tpu.memory_space<vmem>>, vector<16x32xf32>
    %c0_203 = arith.constant 0 : index
    %c2_204 = arith.constant 2 : index
    %249 = vector.load %arg26[%c0_203, %c2_204] : memref<16x45xf32, #tpu.memory_space<vmem>>, vector<16x1xf32>
    %250 = vector.broadcast %249 : vector<16x1xf32> to vector<16x32xf32>
    %251 = arith.mulf %248, %250 : vector<16x32xf32>
    %c0_205 = arith.constant 0 : index
    %c64_206 = arith.constant 64 : index
    %252 = vector.load %arg27[%c0_205, %c64_206] : memref<16x1440xf32, #tpu.memory_space<vmem>>, vector<16x32xf32>
    tpu.vector_store %arg27[%c0_205, %c64_206], %251 {strides = array<i32>} : memref<16x1440xf32, #tpu.memory_space<vmem>>, vector<16x32xf32>,
    %c48_207 = arith.constant 48 : index
    %c0_208 = arith.constant 0 : index
    %253 = vector.load %arg25[%c48_207, %c0_208] : memref<720x32xf32, #tpu.memory_space<vmem>>, vector<16x32xf32>
    %c0_209 = arith.constant 0 : index
    %c3_210 = arith.constant 3 : index
    %254 = vector.load %arg26[%c0_209, %c3_210] : memref<16x45xf32, #tpu.memory_space<vmem>>, vector<16x1xf32>
    %255 = vector.broadcast %254 : vector<16x1xf32> to vector<16x32xf32>
    %256 = arith.mulf %253, %255 : vector<16x32xf32>
    %c0_211 = arith.constant 0 : index
    %c96_212 = arith.constant 96 : index
    %257 = vector.load %arg27[%c0_211, %c96_212] : memref<16x1440xf32, #tpu.memory_space<vmem>>, vector<16x32xf32>
    tpu.vector_store %arg27[%c0_211, %c96_212], %256 {strides = array<i32>} : memref<16x1440xf32, #tpu.memory_space<vmem>>, vector<16x32xf32>,
    %c64_213 = arith.constant 64 : index
    %c0_214 = arith.constant 0 : index
    %258 = vector.load %arg25[%c64_213, %c0_214] : memref<720x32xf32, #tpu.memory_space<vmem>>, vector<16x32xf32>
    %c0_215 = arith.constant 0 : index
    %c4_216 = arith.constant 4 : index
    %259 = vector.load %arg26[%c0_215, %c4_216] : memref<16x45xf32, #tpu.memory_space<vmem>>, vector<16x1xf32>
    %260 = vector.broadcast %259 : vector<16x1xf32> to vector<16x32xf32>
    %261 = arith.mulf %258, %260 : vector<16x32xf32>
    %c0_217 = arith.constant 0 : index
    %c128_218 = arith.constant 128 : index
    %262 = vector.load %arg27[%c0_217, %c128_218] : memref<16x1440xf32, #tpu.memory_space<vmem>>, vector<16x32xf32>
    tpu.vector_store %arg27[%c0_217, %c128_218], %261 {strides = array<i32>} : memref<16x1440xf32, #tpu.memory_space<vmem>>, vector<16x32xf32>,
    %c80_219 = arith.constant 80 : index
    %c0_220 = arith.constant 0 : index
    %263 = vector.load %arg25[%c80_219, %c0_220] : memref<720x32xf32, #tpu.memory_space<vmem>>, vector<16x32xf32>
    %c0_221 = arith.constant 0 : index
    %c5_222 = arith.constant 5 : index
    %264 = vector.load %arg26[%c0_221, %c5_222] : memref<16x45xf32, #tpu.memory_space<vmem>>, vector<16x1xf32>
    %265 = vector.broadcast %264 : vector<16x1xf32> to vector<16x32xf32>
    %266 = arith.mulf %263, %265 : vector<16x32xf32>
    %c0_223 = arith.constant 0 : index
    %c160_224 = arith.constant 160 : index
    %267 = vector.load %arg27[%c0_223, %c160_224] : memref<16x1440xf32, #tpu.memory_space<vmem>>, vector<16x32xf32>
    tpu.vector_store %arg27[%c0_223, %c160_224], %266 {strides = array<i32>} : memref<16x1440xf32, #tpu.memory_space<vmem>>, vector<16x32xf32>,
    %c96_225 = arith.constant 96 : index
    %c0_226 = arith.constant 0 : index
    %268 = vector.load %arg25[%c96_225, %c0_226] : memref<720x32xf32, #tpu.memory_space<vmem>>, vector<16x32xf32>
    %c0_227 = arith.constant 0 : index
    %c6_228 = arith.constant 6 : index
    %269 = vector.load %arg26[%c0_227, %c6_228] : memref<16x45xf32, #tpu.memory_space<vmem>>, vector<16x1xf32>
    %270 = vector.broadcast %269 : vector<16x1xf32> to vector<16x32xf32>
    %271 = arith.mulf %268, %270 : vector<16x32xf32>
    %c0_229 = arith.constant 0 : index
    %c192_230 = arith.constant 192 : index
    %272 = vector.load %arg27[%c0_229, %c192_230] : memref<16x1440xf32, #tpu.memory_space<vmem>>, vector<16x32xf32>
    tpu.vector_store %arg27[%c0_229, %c192_230], %271 {strides = array<i32>} : memref<16x1440xf32, #tpu.memory_space<vmem>>, vector<16x32xf32>,
    %c112_231 = arith.constant 112 : index
    %c0_232 = arith.constant 0 : index
    %273 = vector.load %arg25[%c112_231, %c0_232] : memref<720x32xf32, #tpu.memory_space<vmem>>, vector<16x32xf32>
    %c0_233 = arith.constant 0 : index
    %c7_234 = arith.constant 7 : index
    %274 = vector.load %arg26[%c0_233, %c7_234] : memref<16x45xf32, #tpu.memory_space<vmem>>, vector<16x1xf32>
    %275 = vector.broadcast %274 : vector<16x1xf32> to vector<16x32xf32>
    %276 = arith.mulf %273, %275 : vector<16x32xf32>
    %c0_235 = arith.constant 0 : index
    %c224_236 = arith.constant 224 : index
    %277 = vector.load %arg27[%c0_235, %c224_236] : memref<16x1440xf32, #tpu.memory_space<vmem>>, vector<16x32xf32>
    tpu.vector_store %arg27[%c0_235, %c224_236], %276 {strides = array<i32>} : memref<16x1440xf32, #tpu.memory_space<vmem>>, vector<16x32xf32>,
    %c128_237 = arith.constant 128 : index
    %c0_238 = arith.constant 0 : index
    %278 = vector.load %arg25[%c128_237, %c0_238] : memref<720x32xf32, #tpu.memory_space<vmem>>, vector<16x32xf32>
    %c0_239 = arith.constant 0 : index
    %c8_240 = arith.constant 8 : index
    %279 = vector.load %arg26[%c0_239, %c8_240] : memref<16x45xf32, #tpu.memory_space<vmem>>, vector<16x1xf32>
    %280 = vector.broadcast %279 : vector<16x1xf32> to vector<16x32xf32>
    %281 = arith.mulf %278, %280 : vector<16x32xf32>
    %c0_241 = arith.constant 0 : index
    %c256_242 = arith.constant 256 : index
    %282 = vector.load %arg27[%c0_241, %c256_242] : memref<16x1440xf32, #tpu.memory_space<vmem>>, vector<16x32xf32>
    tpu.vector_store %arg27[%c0_241, %c256_242], %281 {strides = array<i32>} : memref<16x1440xf32, #tpu.memory_space<vmem>>, vector<16x32xf32>,
    %c144_243 = arith.constant 144 : index
    %c0_244 = arith.constant 0 : index
    %283 = vector.load %arg25[%c144_243, %c0_244] : memref<720x32xf32, #tpu.memory_space<vmem>>, vector<16x32xf32>
    %c0_245 = arith.constant 0 : index
    %c9_246 = arith.constant 9 : index
    %284 = vector.load %arg26[%c0_245, %c9_246] : memref<16x45xf32, #tpu.memory_space<vmem>>, vector<16x1xf32>
    %285 = vector.broadcast %284 : vector<16x1xf32> to vector<16x32xf32>
    %286 = arith.mulf %283, %285 : vector<16x32xf32>
    %c0_247 = arith.constant 0 : index
    %c288_248 = arith.constant 288 : index
    %287 = vector.load %arg27[%c0_247, %c288_248] : memref<16x1440xf32, #tpu.memory_space<vmem>>, vector<16x32xf32>
    tpu.vector_store %arg27[%c0_247, %c288_248], %286 {strides = array<i32>} : memref<16x1440xf32, #tpu.memory_space<vmem>>, vector<16x32xf32>,
    %c160_249 = arith.constant 160 : index
    %c0_250 = arith.constant 0 : index
    %288 = vector.load %arg25[%c160_249, %c0_250] : memref<720x32xf32, #tpu.memory_space<vmem>>, vector<16x32xf32>
    %c0_251 = arith.constant 0 : index
    %c10_252 = arith.constant 10 : index
    %289 = vector.load %arg26[%c0_251, %c10_252] : memref<16x45xf32, #tpu.memory_space<vmem>>, vector<16x1xf32>
    %290 = vector.broadcast %289 : vector<16x1xf32> to vector<16x32xf32>
    %291 = arith.mulf %288, %290 : vector<16x32xf32>
    %c0_253 = arith.constant 0 : index
    %c320_254 = arith.constant 320 : index
    %292 = vector.load %arg27[%c0_253, %c320_254] : memref<16x1440xf32, #tpu.memory_space<vmem>>, vector<16x32xf32>
    tpu.vector_store %arg27[%c0_253, %c320_254], %291 {strides = array<i32>} : memref<16x1440xf32, #tpu.memory_space<vmem>>, vector<16x32xf32>,
    %c176_255 = arith.constant 176 : index
    %c0_256 = arith.constant 0 : index
    %293 = vector.load %arg25[%c176_255, %c0_256] : memref<720x32xf32, #tpu.memory_space<vmem>>, vector<16x32xf32>
    %c0_257 = arith.constant 0 : index
    %c11_258 = arith.constant 11 : index
    %294 = vector.load %arg26[%c0_257, %c11_258] : memref<16x45xf32, #tpu.memory_space<vmem>>, vector<16x1xf32>
    %295 = vector.broadcast %294 : vector<16x1xf32> to vector<16x32xf32>
    %296 = arith.mulf %293, %295 : vector<16x32xf32>
    %c0_259 = arith.constant 0 : index
    %c352_260 = arith.constant 352 : index
    %297 = vector.load %arg27[%c0_259, %c352_260] : memref<16x1440xf32, #tpu.memory_space<vmem>>, vector<16x32xf32>
    tpu.vector_store %arg27[%c0_259, %c352_260], %296 {strides = array<i32>} : memref<16x1440xf32, #tpu.memory_space<vmem>>, vector<16x32xf32>,
    %c192_261 = arith.constant 192 : index
    %c0_262 = arith.constant 0 : index
    %298 = vector.load %arg25[%c192_261, %c0_262] : memref<720x32xf32, #tpu.memory_space<vmem>>, vector<16x32xf32>
    %c0_263 = arith.constant 0 : index
    %c12_264 = arith.constant 12 : index
    %299 = vector.load %arg26[%c0_263, %c12_264] : memref<16x45xf32, #tpu.memory_space<vmem>>, vector<16x1xf32>
    %300 = vector.broadcast %299 : vector<16x1xf32> to vector<16x32xf32>
    %301 = arith.mulf %298, %300 : vector<16x32xf32>
    %c0_265 = arith.constant 0 : index
    %c384_266 = arith.constant 384 : index
    %302 = vector.load %arg27[%c0_265, %c384_266] : memref<16x1440xf32, #tpu.memory_space<vmem>>, vector<16x32xf32>
    tpu.vector_store %arg27[%c0_265, %c384_266], %301 {strides = array<i32>} : memref<16x1440xf32, #tpu.memory_space<vmem>>, vector<16x32xf32>,
    %c208_267 = arith.constant 208 : index
    %c0_268 = arith.constant 0 : index
    %303 = vector.load %arg25[%c208_267, %c0_268] : memref<720x32xf32, #tpu.memory_space<vmem>>, vector<16x32xf32>
    %c0_269 = arith.constant 0 : index
    %c13_270 = arith.constant 13 : index
    %304 = vector.load %arg26[%c0_269, %c13_270] : memref<16x45xf32, #tpu.memory_space<vmem>>, vector<16x1xf32>
    %305 = vector.broadcast %304 : vector<16x1xf32> to vector<16x32xf32>
    %306 = arith.mulf %303, %305 : vector<16x32xf32>
    %c0_271 = arith.constant 0 : index
    %c416_272 = arith.constant 416 : index
    %307 = vector.load %arg27[%c0_271, %c416_272] : memref<16x1440xf32, #tpu.memory_space<vmem>>, vector<16x32xf32>
    tpu.vector_store %arg27[%c0_271, %c416_272], %306 {strides = array<i32>} : memref<16x1440xf32, #tpu.memory_space<vmem>>, vector<16x32xf32>,
    %c224_273 = arith.constant 224 : index
    %c0_274 = arith.constant 0 : index
    %308 = vector.load %arg25[%c224_273, %c0_274] : memref<720x32xf32, #tpu.memory_space<vmem>>, vector<16x32xf32>
    %c0_275 = arith.constant 0 : index
    %c14_276 = arith.constant 14 : index
    %309 = vector.load %arg26[%c0_275, %c14_276] : memref<16x45xf32, #tpu.memory_space<vmem>>, vector<16x1xf32>
    %310 = vector.broadcast %309 : vector<16x1xf32> to vector<16x32xf32>
    %311 = arith.mulf %308, %310 : vector<16x32xf32>
    %c0_277 = arith.constant 0 : index
    %c448_278 = arith.constant 448 : index
    %312 = vector.load %arg27[%c0_277, %c448_278] : memref<16x1440xf32, #tpu.memory_space<vmem>>, vector<16x32xf32>
    tpu.vector_store %arg27[%c0_277, %c448_278], %311 {strides = array<i32>} : memref<16x1440xf32, #tpu.memory_space<vmem>>, vector<16x32xf32>,
    %c240_279 = arith.constant 240 : index
    %c0_280 = arith.constant 0 : index
    %313 = vector.load %arg25[%c240_279, %c0_280] : memref<720x32xf32, #tpu.memory_space<vmem>>, vector<16x32xf32>
    %c0_281 = arith.constant 0 : index
    %c15_282 = arith.constant 15 : index
    %314 = vector.load %arg26[%c0_281, %c15_282] : memref<16x45xf32, #tpu.memory_space<vmem>>, vector<16x1xf32>
    %315 = vector.broadcast %314 : vector<16x1xf32> to vector<16x32xf32>
    %316 = arith.mulf %313, %315 : vector<16x32xf32>
    %c0_283 = arith.constant 0 : index
    %c480_284 = arith.constant 480 : index
    %317 = vector.load %arg27[%c0_283, %c480_284] : memref<16x1440xf32, #tpu.memory_space<vmem>>, vector<16x32xf32>
    tpu.vector_store %arg27[%c0_283, %c480_284], %316 {strides = array<i32>} : memref<16x1440xf32, #tpu.memory_space<vmem>>, vector<16x32xf32>,
    %c256_285 = arith.constant 256 : index
    %c0_286 = arith.constant 0 : index
    %318 = vector.load %arg25[%c256_285, %c0_286] : memref<720x32xf32, #tpu.memory_space<vmem>>, vector<16x32xf32>
    %c0_287 = arith.constant 0 : index
    %c16_288 = arith.constant 16 : index
    %319 = vector.load %arg26[%c0_287, %c16_288] : memref<16x45xf32, #tpu.memory_space<vmem>>, vector<16x1xf32>
    %320 = vector.broadcast %319 : vector<16x1xf32> to vector<16x32xf32>
    %321 = arith.mulf %318, %320 : vector<16x32xf32>
    %c0_289 = arith.constant 0 : index
    %c512_290 = arith.constant 512 : index
    %322 = vector.load %arg27[%c0_289, %c512_290] : memref<16x1440xf32, #tpu.memory_space<vmem>>, vector<16x32xf32>
    tpu.vector_store %arg27[%c0_289, %c512_290], %321 {strides = array<i32>} : memref<16x1440xf32, #tpu.memory_space<vmem>>, vector<16x32xf32>,
    %c272_291 = arith.constant 272 : index
    %c0_292 = arith.constant 0 : index
    %323 = vector.load %arg25[%c272_291, %c0_292] : memref<720x32xf32, #tpu.memory_space<vmem>>, vector<16x32xf32>
    %c0_293 = arith.constant 0 : index
    %c17_294 = arith.constant 17 : index
    %324 = vector.load %arg26[%c0_293, %c17_294] : memref<16x45xf32, #tpu.memory_space<vmem>>, vector<16x1xf32>
    %325 = vector.broadcast %324 : vector<16x1xf32> to vector<16x32xf32>
    %326 = arith.mulf %323, %325 : vector<16x32xf32>
    %c0_295 = arith.constant 0 : index
    %c544_296 = arith.constant 544 : index
    %327 = vector.load %arg27[%c0_295, %c544_296] : memref<16x1440xf32, #tpu.memory_space<vmem>>, vector<16x32xf32>
    tpu.vector_store %arg27[%c0_295, %c544_296], %326 {strides = array<i32>} : memref<16x1440xf32, #tpu.memory_space<vmem>>, vector<16x32xf32>,
    %c288_297 = arith.constant 288 : index
    %c0_298 = arith.constant 0 : index
    %328 = vector.load %arg25[%c288_297, %c0_298] : memref<720x32xf32, #tpu.memory_space<vmem>>, vector<16x32xf32>
    %c0_299 = arith.constant 0 : index
    %c18_300 = arith.constant 18 : index
    %329 = vector.load %arg26[%c0_299, %c18_300] : memref<16x45xf32, #tpu.memory_space<vmem>>, vector<16x1xf32>
    %330 = vector.broadcast %329 : vector<16x1xf32> to vector<16x32xf32>
    %331 = arith.mulf %328, %330 : vector<16x32xf32>
    %c0_301 = arith.constant 0 : index
    %c576_302 = arith.constant 576 : index
    %332 = vector.load %arg27[%c0_301, %c576_302] : memref<16x1440xf32, #tpu.memory_space<vmem>>, vector<16x32xf32>
    tpu.vector_store %arg27[%c0_301, %c576_302], %331 {strides = array<i32>} : memref<16x1440xf32, #tpu.memory_space<vmem>>, vector<16x32xf32>,
    %c304_303 = arith.constant 304 : index
    %c0_304 = arith.constant 0 : index
    %333 = vector.load %arg25[%c304_303, %c0_304] : memref<720x32xf32, #tpu.memory_space<vmem>>, vector<16x32xf32>
    %c0_305 = arith.constant 0 : index
    %c19_306 = arith.constant 19 : index
    %334 = vector.load %arg26[%c0_305, %c19_306] : memref<16x45xf32, #tpu.memory_space<vmem>>, vector<16x1xf32>
    %335 = vector.broadcast %334 : vector<16x1xf32> to vector<16x32xf32>
    %336 = arith.mulf %333, %335 : vector<16x32xf32>
    %c0_307 = arith.constant 0 : index
    %c608_308 = arith.constant 608 : index
    %337 = vector.load %arg27[%c0_307, %c608_308] : memref<16x1440xf32, #tpu.memory_space<vmem>>, vector<16x32xf32>
    tpu.vector_store %arg27[%c0_307, %c608_308], %336 {strides = array<i32>} : memref<16x1440xf32, #tpu.memory_space<vmem>>, vector<16x32xf32>,
    %c320_309 = arith.constant 320 : index
    %c0_310 = arith.constant 0 : index
    %338 = vector.load %arg25[%c320_309, %c0_310] : memref<720x32xf32, #tpu.memory_space<vmem>>, vector<16x32xf32>
    %c0_311 = arith.constant 0 : index
    %c20_312 = arith.constant 20 : index
    %339 = vector.load %arg26[%c0_311, %c20_312] : memref<16x45xf32, #tpu.memory_space<vmem>>, vector<16x1xf32>
    %340 = vector.broadcast %339 : vector<16x1xf32> to vector<16x32xf32>
    %341 = arith.mulf %338, %340 : vector<16x32xf32>
    %c0_313 = arith.constant 0 : index
    %c640_314 = arith.constant 640 : index
    %342 = vector.load %arg27[%c0_313, %c640_314] : memref<16x1440xf32, #tpu.memory_space<vmem>>, vector<16x32xf32>
    tpu.vector_store %arg27[%c0_313, %c640_314], %341 {strides = array<i32>} : memref<16x1440xf32, #tpu.memory_space<vmem>>, vector<16x32xf32>,
    %c336_315 = arith.constant 336 : index
    %c0_316 = arith.constant 0 : index
    %343 = vector.load %arg25[%c336_315, %c0_316] : memref<720x32xf32, #tpu.memory_space<vmem>>, vector<16x32xf32>
    %c0_317 = arith.constant 0 : index
    %c21_318 = arith.constant 21 : index
    %344 = vector.load %arg26[%c0_317, %c21_318] : memref<16x45xf32, #tpu.memory_space<vmem>>, vector<16x1xf32>
    %345 = vector.broadcast %344 : vector<16x1xf32> to vector<16x32xf32>
    %346 = arith.mulf %343, %345 : vector<16x32xf32>
    %c0_319 = arith.constant 0 : index
    %c672_320 = arith.constant 672 : index
    %347 = vector.load %arg27[%c0_319, %c672_320] : memref<16x1440xf32, #tpu.memory_space<vmem>>, vector<16x32xf32>
    tpu.vector_store %arg27[%c0_319, %c672_320], %346 {strides = array<i32>} : memref<16x1440xf32, #tpu.memory_space<vmem>>, vector<16x32xf32>,
    %c352_321 = arith.constant 352 : index
    %c0_322 = arith.constant 0 : index
    %348 = vector.load %arg25[%c352_321, %c0_322] : memref<720x32xf32, #tpu.memory_space<vmem>>, vector<16x32xf32>
    %c0_323 = arith.constant 0 : index
    %c22_324 = arith.constant 22 : index
    %349 = vector.load %arg26[%c0_323, %c22_324] : memref<16x45xf32, #tpu.memory_space<vmem>>, vector<16x1xf32>
    %350 = vector.broadcast %349 : vector<16x1xf32> to vector<16x32xf32>
    %351 = arith.mulf %348, %350 : vector<16x32xf32>
    %c0_325 = arith.constant 0 : index
    %c704_326 = arith.constant 704 : index
    %352 = vector.load %arg27[%c0_325, %c704_326] : memref<16x1440xf32, #tpu.memory_space<vmem>>, vector<16x32xf32>
    tpu.vector_store %arg27[%c0_325, %c704_326], %351 {strides = array<i32>} : memref<16x1440xf32, #tpu.memory_space<vmem>>, vector<16x32xf32>,
    %c368_327 = arith.constant 368 : index
    %c0_328 = arith.constant 0 : index
    %353 = vector.load %arg25[%c368_327, %c0_328] : memref<720x32xf32, #tpu.memory_space<vmem>>, vector<16x32xf32>
    %c0_329 = arith.constant 0 : index
    %c23_330 = arith.constant 23 : index
    %354 = vector.load %arg26[%c0_329, %c23_330] : memref<16x45xf32, #tpu.memory_space<vmem>>, vector<16x1xf32>
    %355 = vector.broadcast %354 : vector<16x1xf32> to vector<16x32xf32>
    %356 = arith.mulf %353, %355 : vector<16x32xf32>
    %c0_331 = arith.constant 0 : index
    %c736 = arith.constant 736 : index
    %357 = vector.load %arg27[%c0_331, %c736] : memref<16x1440xf32, #tpu.memory_space<vmem>>, vector<16x32xf32>
    tpu.vector_store %arg27[%c0_331, %c736], %356 {strides = array<i32>} : memref<16x1440xf32, #tpu.memory_space<vmem>>, vector<16x32xf32>,
    %c384_332 = arith.constant 384 : index
    %c0_333 = arith.constant 0 : index
    %358 = vector.load %arg25[%c384_332, %c0_333] : memref<720x32xf32, #tpu.memory_space<vmem>>, vector<16x32xf32>
    %c0_334 = arith.constant 0 : index
    %c24_335 = arith.constant 24 : index
    %359 = vector.load %arg26[%c0_334, %c24_335] : memref<16x45xf32, #tpu.memory_space<vmem>>, vector<16x1xf32>
    %360 = vector.broadcast %359 : vector<16x1xf32> to vector<16x32xf32>
    %361 = arith.mulf %358, %360 : vector<16x32xf32>
    %c0_336 = arith.constant 0 : index
    %c768 = arith.constant 768 : index
    %362 = vector.load %arg27[%c0_336, %c768] : memref<16x1440xf32, #tpu.memory_space<vmem>>, vector<16x32xf32>
    tpu.vector_store %arg27[%c0_336, %c768], %361 {strides = array<i32>} : memref<16x1440xf32, #tpu.memory_space<vmem>>, vector<16x32xf32>,
    %c400_337 = arith.constant 400 : index
    %c0_338 = arith.constant 0 : index
    %363 = vector.load %arg25[%c400_337, %c0_338] : memref<720x32xf32, #tpu.memory_space<vmem>>, vector<16x32xf32>
    %c0_339 = arith.constant 0 : index
    %c25_340 = arith.constant 25 : index
    %364 = vector.load %arg26[%c0_339, %c25_340] : memref<16x45xf32, #tpu.memory_space<vmem>>, vector<16x1xf32>
    %365 = vector.broadcast %364 : vector<16x1xf32> to vector<16x32xf32>
    %366 = arith.mulf %363, %365 : vector<16x32xf32>
    %c0_341 = arith.constant 0 : index
    %c800 = arith.constant 800 : index
    %367 = vector.load %arg27[%c0_341, %c800] : memref<16x1440xf32, #tpu.memory_space<vmem>>, vector<16x32xf32>
    tpu.vector_store %arg27[%c0_341, %c800], %366 {strides = array<i32>} : memref<16x1440xf32, #tpu.memory_space<vmem>>, vector<16x32xf32>,
    %c416_342 = arith.constant 416 : index
    %c0_343 = arith.constant 0 : index
    %368 = vector.load %arg25[%c416_342, %c0_343] : memref<720x32xf32, #tpu.memory_space<vmem>>, vector<16x32xf32>
    %c0_344 = arith.constant 0 : index
    %c26_345 = arith.constant 26 : index
    %369 = vector.load %arg26[%c0_344, %c26_345] : memref<16x45xf32, #tpu.memory_space<vmem>>, vector<16x1xf32>
    %370 = vector.broadcast %369 : vector<16x1xf32> to vector<16x32xf32>
    %371 = arith.mulf %368, %370 : vector<16x32xf32>
    %c0_346 = arith.constant 0 : index
    %c832 = arith.constant 832 : index
    %372 = vector.load %arg27[%c0_346, %c832] : memref<16x1440xf32, #tpu.memory_space<vmem>>, vector<16x32xf32>
    tpu.vector_store %arg27[%c0_346, %c832], %371 {strides = array<i32>} : memref<16x1440xf32, #tpu.memory_space<vmem>>, vector<16x32xf32>,
    %c432_347 = arith.constant 432 : index
    %c0_348 = arith.constant 0 : index
    %373 = vector.load %arg25[%c432_347, %c0_348] : memref<720x32xf32, #tpu.memory_space<vmem>>, vector<16x32xf32>
    %c0_349 = arith.constant 0 : index
    %c27_350 = arith.constant 27 : index
    %374 = vector.load %arg26[%c0_349, %c27_350] : memref<16x45xf32, #tpu.memory_space<vmem>>, vector<16x1xf32>
    %375 = vector.broadcast %374 : vector<16x1xf32> to vector<16x32xf32>
    %376 = arith.mulf %373, %375 : vector<16x32xf32>
    %c0_351 = arith.constant 0 : index
    %c864 = arith.constant 864 : index
    %377 = vector.load %arg27[%c0_351, %c864] : memref<16x1440xf32, #tpu.memory_space<vmem>>, vector<16x32xf32>
    tpu.vector_store %arg27[%c0_351, %c864], %376 {strides = array<i32>} : memref<16x1440xf32, #tpu.memory_space<vmem>>, vector<16x32xf32>,
    %c448_352 = arith.constant 448 : index
    %c0_353 = arith.constant 0 : index
    %378 = vector.load %arg25[%c448_352, %c0_353] : memref<720x32xf32, #tpu.memory_space<vmem>>, vector<16x32xf32>
    %c0_354 = arith.constant 0 : index
    %c28_355 = arith.constant 28 : index
    %379 = vector.load %arg26[%c0_354, %c28_355] : memref<16x45xf32, #tpu.memory_space<vmem>>, vector<16x1xf32>
    %380 = vector.broadcast %379 : vector<16x1xf32> to vector<16x32xf32>
    %381 = arith.mulf %378, %380 : vector<16x32xf32>
    %c0_356 = arith.constant 0 : index
    %c896 = arith.constant 896 : index
    %382 = vector.load %arg27[%c0_356, %c896] : memref<16x1440xf32, #tpu.memory_space<vmem>>, vector<16x32xf32>
    tpu.vector_store %arg27[%c0_356, %c896], %381 {strides = array<i32>} : memref<16x1440xf32, #tpu.memory_space<vmem>>, vector<16x32xf32>,
    %c464_357 = arith.constant 464 : index
    %c0_358 = arith.constant 0 : index
    %383 = vector.load %arg25[%c464_357, %c0_358] : memref<720x32xf32, #tpu.memory_space<vmem>>, vector<16x32xf32>
    %c0_359 = arith.constant 0 : index
    %c29_360 = arith.constant 29 : index
    %384 = vector.load %arg26[%c0_359, %c29_360] : memref<16x45xf32, #tpu.memory_space<vmem>>, vector<16x1xf32>
    %385 = vector.broadcast %384 : vector<16x1xf32> to vector<16x32xf32>
    %386 = arith.mulf %383, %385 : vector<16x32xf32>
    %c0_361 = arith.constant 0 : index
    %c928 = arith.constant 928 : index
    %387 = vector.load %arg27[%c0_361, %c928] : memref<16x1440xf32, #tpu.memory_space<vmem>>, vector<16x32xf32>
    tpu.vector_store %arg27[%c0_361, %c928], %386 {strides = array<i32>} : memref<16x1440xf32, #tpu.memory_space<vmem>>, vector<16x32xf32>,
    %c480_362 = arith.constant 480 : index
    %c0_363 = arith.constant 0 : index
    %388 = vector.load %arg25[%c480_362, %c0_363] : memref<720x32xf32, #tpu.memory_space<vmem>>, vector<16x32xf32>
    %c0_364 = arith.constant 0 : index
    %c30_365 = arith.constant 30 : index
    %389 = vector.load %arg26[%c0_364, %c30_365] : memref<16x45xf32, #tpu.memory_space<vmem>>, vector<16x1xf32>
    %390 = vector.broadcast %389 : vector<16x1xf32> to vector<16x32xf32>
    %391 = arith.mulf %388, %390 : vector<16x32xf32>
    %c0_366 = arith.constant 0 : index
    %c960 = arith.constant 960 : index
    %392 = vector.load %arg27[%c0_366, %c960] : memref<16x1440xf32, #tpu.memory_space<vmem>>, vector<16x32xf32>
    tpu.vector_store %arg27[%c0_366, %c960], %391 {strides = array<i32>} : memref<16x1440xf32, #tpu.memory_space<vmem>>, vector<16x32xf32>,
    %c496_367 = arith.constant 496 : index
    %c0_368 = arith.constant 0 : index
    %393 = vector.load %arg25[%c496_367, %c0_368] : memref<720x32xf32, #tpu.memory_space<vmem>>, vector<16x32xf32>
    %c0_369 = arith.constant 0 : index
    %c31_370 = arith.constant 31 : index
    %394 = vector.load %arg26[%c0_369, %c31_370] : memref<16x45xf32, #tpu.memory_space<vmem>>, vector<16x1xf32>
    %395 = vector.broadcast %394 : vector<16x1xf32> to vector<16x32xf32>
    %396 = arith.mulf %393, %395 : vector<16x32xf32>
    %c0_371 = arith.constant 0 : index
    %c992 = arith.constant 992 : index
    %397 = vector.load %arg27[%c0_371, %c992] : memref<16x1440xf32, #tpu.memory_space<vmem>>, vector<16x32xf32>
    tpu.vector_store %arg27[%c0_371, %c992], %396 {strides = array<i32>} : memref<16x1440xf32, #tpu.memory_space<vmem>>, vector<16x32xf32>,
    %c512_372 = arith.constant 512 : index
    %c0_373 = arith.constant 0 : index
    %398 = vector.load %arg25[%c512_372, %c0_373] : memref<720x32xf32, #tpu.memory_space<vmem>>, vector<16x32xf32>
    %c0_374 = arith.constant 0 : index
    %c32_375 = arith.constant 32 : index
    %399 = vector.load %arg26[%c0_374, %c32_375] : memref<16x45xf32, #tpu.memory_space<vmem>>, vector<16x1xf32>
    %400 = vector.broadcast %399 : vector<16x1xf32> to vector<16x32xf32>
    %401 = arith.mulf %398, %400 : vector<16x32xf32>
    %c0_376 = arith.constant 0 : index
    %c1024 = arith.constant 1024 : index
    %402 = vector.load %arg27[%c0_376, %c1024] : memref<16x1440xf32, #tpu.memory_space<vmem>>, vector<16x32xf32>
    tpu.vector_store %arg27[%c0_376, %c1024], %401 {strides = array<i32>} : memref<16x1440xf32, #tpu.memory_space<vmem>>, vector<16x32xf32>,
    %c528_377 = arith.constant 528 : index
    %c0_378 = arith.constant 0 : index
    %403 = vector.load %arg25[%c528_377, %c0_378] : memref<720x32xf32, #tpu.memory_space<vmem>>, vector<16x32xf32>
    %c0_379 = arith.constant 0 : index
    %c33_380 = arith.constant 33 : index
    %404 = vector.load %arg26[%c0_379, %c33_380] : memref<16x45xf32, #tpu.memory_space<vmem>>, vector<16x1xf32>
    %405 = vector.broadcast %404 : vector<16x1xf32> to vector<16x32xf32>
    %406 = arith.mulf %403, %405 : vector<16x32xf32>
    %c0_381 = arith.constant 0 : index
    %c1056 = arith.constant 1056 : index
    %407 = vector.load %arg27[%c0_381, %c1056] : memref<16x1440xf32, #tpu.memory_space<vmem>>, vector<16x32xf32>
    tpu.vector_store %arg27[%c0_381, %c1056], %406 {strides = array<i32>} : memref<16x1440xf32, #tpu.memory_space<vmem>>, vector<16x32xf32>,
    %c544_382 = arith.constant 544 : index
    %c0_383 = arith.constant 0 : index
    %408 = vector.load %arg25[%c544_382, %c0_383] : memref<720x32xf32, #tpu.memory_space<vmem>>, vector<16x32xf32>
    %c0_384 = arith.constant 0 : index
    %c34_385 = arith.constant 34 : index
    %409 = vector.load %arg26[%c0_384, %c34_385] : memref<16x45xf32, #tpu.memory_space<vmem>>, vector<16x1xf32>
    %410 = vector.broadcast %409 : vector<16x1xf32> to vector<16x32xf32>
    %411 = arith.mulf %408, %410 : vector<16x32xf32>
    %c0_386 = arith.constant 0 : index
    %c1088 = arith.constant 1088 : index
    %412 = vector.load %arg27[%c0_386, %c1088] : memref<16x1440xf32, #tpu.memory_space<vmem>>, vector<16x32xf32>
    tpu.vector_store %arg27[%c0_386, %c1088], %411 {strides = array<i32>} : memref<16x1440xf32, #tpu.memory_space<vmem>>, vector<16x32xf32>,
    %c560_387 = arith.constant 560 : index
    %c0_388 = arith.constant 0 : index
    %413 = vector.load %arg25[%c560_387, %c0_388] : memref<720x32xf32, #tpu.memory_space<vmem>>, vector<16x32xf32>
    %c0_389 = arith.constant 0 : index
    %c35_390 = arith.constant 35 : index
    %414 = vector.load %arg26[%c0_389, %c35_390] : memref<16x45xf32, #tpu.memory_space<vmem>>, vector<16x1xf32>
    %415 = vector.broadcast %414 : vector<16x1xf32> to vector<16x32xf32>
    %416 = arith.mulf %413, %415 : vector<16x32xf32>
    %c0_391 = arith.constant 0 : index
    %c1120 = arith.constant 1120 : index
    %417 = vector.load %arg27[%c0_391, %c1120] : memref<16x1440xf32, #tpu.memory_space<vmem>>, vector<16x32xf32>
    tpu.vector_store %arg27[%c0_391, %c1120], %416 {strides = array<i32>} : memref<16x1440xf32, #tpu.memory_space<vmem>>, vector<16x32xf32>,
    %c576_392 = arith.constant 576 : index
    %c0_393 = arith.constant 0 : index
    %418 = vector.load %arg25[%c576_392, %c0_393] : memref<720x32xf32, #tpu.memory_space<vmem>>, vector<16x32xf32>
    %c0_394 = arith.constant 0 : index
    %c36_395 = arith.constant 36 : index
    %419 = vector.load %arg26[%c0_394, %c36_395] : memref<16x45xf32, #tpu.memory_space<vmem>>, vector<16x1xf32>
    %420 = vector.broadcast %419 : vector<16x1xf32> to vector<16x32xf32>
    %421 = arith.mulf %418, %420 : vector<16x32xf32>
    %c0_396 = arith.constant 0 : index
    %c1152 = arith.constant 1152 : index
    %422 = vector.load %arg27[%c0_396, %c1152] : memref<16x1440xf32, #tpu.memory_space<vmem>>, vector<16x32xf32>
    tpu.vector_store %arg27[%c0_396, %c1152], %421 {strides = array<i32>} : memref<16x1440xf32, #tpu.memory_space<vmem>>, vector<16x32xf32>,
    %c592_397 = arith.constant 592 : index
    %c0_398 = arith.constant 0 : index
    %423 = vector.load %arg25[%c592_397, %c0_398] : memref<720x32xf32, #tpu.memory_space<vmem>>, vector<16x32xf32>
    %c0_399 = arith.constant 0 : index
    %c37_400 = arith.constant 37 : index
    %424 = vector.load %arg26[%c0_399, %c37_400] : memref<16x45xf32, #tpu.memory_space<vmem>>, vector<16x1xf32>
    %425 = vector.broadcast %424 : vector<16x1xf32> to vector<16x32xf32>
    %426 = arith.mulf %423, %425 : vector<16x32xf32>
    %c0_401 = arith.constant 0 : index
    %c1184 = arith.constant 1184 : index
    %427 = vector.load %arg27[%c0_401, %c1184] : memref<16x1440xf32, #tpu.memory_space<vmem>>, vector<16x32xf32>
    tpu.vector_store %arg27[%c0_401, %c1184], %426 {strides = array<i32>} : memref<16x1440xf32, #tpu.memory_space<vmem>>, vector<16x32xf32>,
    %c608_402 = arith.constant 608 : index
    %c0_403 = arith.constant 0 : index
    %428 = vector.load %arg25[%c608_402, %c0_403] : memref<720x32xf32, #tpu.memory_space<vmem>>, vector<16x32xf32>
    %c0_404 = arith.constant 0 : index
    %c38_405 = arith.constant 38 : index
    %429 = vector.load %arg26[%c0_404, %c38_405] : memref<16x45xf32, #tpu.memory_space<vmem>>, vector<16x1xf32>
    %430 = vector.broadcast %429 : vector<16x1xf32> to vector<16x32xf32>
    %431 = arith.mulf %428, %430 : vector<16x32xf32>
    %c0_406 = arith.constant 0 : index
    %c1216 = arith.constant 1216 : index
    %432 = vector.load %arg27[%c0_406, %c1216] : memref<16x1440xf32, #tpu.memory_space<vmem>>, vector<16x32xf32>
    tpu.vector_store %arg27[%c0_406, %c1216], %431 {strides = array<i32>} : memref<16x1440xf32, #tpu.memory_space<vmem>>, vector<16x32xf32>,
    %c624_407 = arith.constant 624 : index
    %c0_408 = arith.constant 0 : index
    %433 = vector.load %arg25[%c624_407, %c0_408] : memref<720x32xf32, #tpu.memory_space<vmem>>, vector<16x32xf32>
    %c0_409 = arith.constant 0 : index
    %c39_410 = arith.constant 39 : index
    %434 = vector.load %arg26[%c0_409, %c39_410] : memref<16x45xf32, #tpu.memory_space<vmem>>, vector<16x1xf32>
    %435 = vector.broadcast %434 : vector<16x1xf32> to vector<16x32xf32>
    %436 = arith.mulf %433, %435 : vector<16x32xf32>
    %c0_411 = arith.constant 0 : index
    %c1248 = arith.constant 1248 : index
    %437 = vector.load %arg27[%c0_411, %c1248] : memref<16x1440xf32, #tpu.memory_space<vmem>>, vector<16x32xf32>
    tpu.vector_store %arg27[%c0_411, %c1248], %436 {strides = array<i32>} : memref<16x1440xf32, #tpu.memory_space<vmem>>, vector<16x32xf32>,
    %c640_412 = arith.constant 640 : index
    %c0_413 = arith.constant 0 : index
    %438 = vector.load %arg25[%c640_412, %c0_413] : memref<720x32xf32, #tpu.memory_space<vmem>>, vector<16x32xf32>
    %c0_414 = arith.constant 0 : index
    %c40_415 = arith.constant 40 : index
    %439 = vector.load %arg26[%c0_414, %c40_415] : memref<16x45xf32, #tpu.memory_space<vmem>>, vector<16x1xf32>
    %440 = vector.broadcast %439 : vector<16x1xf32> to vector<16x32xf32>
    %441 = arith.mulf %438, %440 : vector<16x32xf32>
    %c0_416 = arith.constant 0 : index
    %c1280 = arith.constant 1280 : index
    %442 = vector.load %arg27[%c0_416, %c1280] : memref<16x1440xf32, #tpu.memory_space<vmem>>, vector<16x32xf32>
    tpu.vector_store %arg27[%c0_416, %c1280], %441 {strides = array<i32>} : memref<16x1440xf32, #tpu.memory_space<vmem>>, vector<16x32xf32>,
    %c656_417 = arith.constant 656 : index
    %c0_418 = arith.constant 0 : index
    %443 = vector.load %arg25[%c656_417, %c0_418] : memref<720x32xf32, #tpu.memory_space<vmem>>, vector<16x32xf32>
    %c0_419 = arith.constant 0 : index
    %c41_420 = arith.constant 41 : index
    %444 = vector.load %arg26[%c0_419, %c41_420] : memref<16x45xf32, #tpu.memory_space<vmem>>, vector<16x1xf32>
    %445 = vector.broadcast %444 : vector<16x1xf32> to vector<16x32xf32>
    %446 = arith.mulf %443, %445 : vector<16x32xf32>
    %c0_421 = arith.constant 0 : index
    %c1312 = arith.constant 1312 : index
    %447 = vector.load %arg27[%c0_421, %c1312] : memref<16x1440xf32, #tpu.memory_space<vmem>>, vector<16x32xf32>
    tpu.vector_store %arg27[%c0_421, %c1312], %446 {strides = array<i32>} : memref<16x1440xf32, #tpu.memory_space<vmem>>, vector<16x32xf32>,
    %c672_422 = arith.constant 672 : index
    %c0_423 = arith.constant 0 : index
    %448 = vector.load %arg25[%c672_422, %c0_423] : memref<720x32xf32, #tpu.memory_space<vmem>>, vector<16x32xf32>
    %c0_424 = arith.constant 0 : index
    %c42_425 = arith.constant 42 : index
    %449 = vector.load %arg26[%c0_424, %c42_425] : memref<16x45xf32, #tpu.memory_space<vmem>>, vector<16x1xf32>
    %450 = vector.broadcast %449 : vector<16x1xf32> to vector<16x32xf32>
    %451 = arith.mulf %448, %450 : vector<16x32xf32>
    %c0_426 = arith.constant 0 : index
    %c1344 = arith.constant 1344 : index
    %452 = vector.load %arg27[%c0_426, %c1344] : memref<16x1440xf32, #tpu.memory_space<vmem>>, vector<16x32xf32>
    tpu.vector_store %arg27[%c0_426, %c1344], %451 {strides = array<i32>} : memref<16x1440xf32, #tpu.memory_space<vmem>>, vector<16x32xf32>,
    %c688_427 = arith.constant 688 : index
    %c0_428 = arith.constant 0 : index
    %453 = vector.load %arg25[%c688_427, %c0_428] : memref<720x32xf32, #tpu.memory_space<vmem>>, vector<16x32xf32>
    %c0_429 = arith.constant 0 : index
    %c43_430 = arith.constant 43 : index
    %454 = vector.load %arg26[%c0_429, %c43_430] : memref<16x45xf32, #tpu.memory_space<vmem>>, vector<16x1xf32>
    %455 = vector.broadcast %454 : vector<16x1xf32> to vector<16x32xf32>
    %456 = arith.mulf %453, %455 : vector<16x32xf32>
    %c0_431 = arith.constant 0 : index
    %c1376 = arith.constant 1376 : index
    %457 = vector.load %arg27[%c0_431, %c1376] : memref<16x1440xf32, #tpu.memory_space<vmem>>, vector<16x32xf32>
    tpu.vector_store %arg27[%c0_431, %c1376], %456 {strides = array<i32>} : memref<16x1440xf32, #tpu.memory_space<vmem>>, vector<16x32xf32>,
    %c704_432 = arith.constant 704 : index
    %c0_433 = arith.constant 0 : index
    %458 = vector.load %arg25[%c704_432, %c0_433] : memref<720x32xf32, #tpu.memory_space<vmem>>, vector<16x32xf32>
    %c0_434 = arith.constant 0 : index
    %c44_435 = arith.constant 44 : index
    %459 = vector.load %arg26[%c0_434, %c44_435] : memref<16x45xf32, #tpu.memory_space<vmem>>, vector<16x1xf32>
    %460 = vector.broadcast %459 : vector<16x1xf32> to vector<16x32xf32>
    %461 = arith.mulf %458, %460 : vector<16x32xf32>
    %c0_436 = arith.constant 0 : index
    %c1408 = arith.constant 1408 : index
    %462 = vector.load %arg27[%c0_436, %c1408] : memref<16x1440xf32, #tpu.memory_space<vmem>>, vector<16x32xf32>
    tpu.vector_store %arg27[%c0_436, %c1408], %461 {strides = array<i32>} : memref<16x1440xf32, #tpu.memory_space<vmem>>, vector<16x32xf32>,
    %c0_437 = arith.constant 0 : index
    %c0_438 = arith.constant 0 : index
    %463 = vector.load %arg27[%c0_437, %c0_438] : memref<16x1440xf32, #tpu.memory_space<vmem>>, vector<16x1440xf32>
    %464 = arith.truncf %463 : vector<16x1440xf32> to vector<16x1440xbf16>
    %c0_439 = arith.constant 0 : index
    %c0_440 = arith.constant 0 : index
    %465 = vector.load %arg17[%c0_439, %c0_440] : memref<1440x512xbf16, #tpu.memory_space<vmem>>, vector<1440x512xbf16>
    %cst_441 = arith.constant dense<0.000000e+00> : vector<16x512xf32>
    %466 = tpu.matmul %464, %465, %cst_441 {dimension_numbers = #tpu.dot_dimension_numbers<[1], [0], [0], [1], [0, 0, 1, 1], [], []>} : vector<16x1440xbf16>, vector<1440x512xbf16>, vector<16x512xf32> -> vector<16x512xf32>
    %c0_442 = arith.constant 0 : index
    %c0_443 = arith.constant 0 : index
    %467 = vector.load %arg18[%c0_442, %c0_443] : memref<1x512xf32, #tpu.memory_space<vmem>>, vector<1x512xf32>
    %468 = vector.broadcast %467 : vector<1x512xf32> to vector<16x512xf32>
    %469 = arith.addf %466, %468 : vector<16x512xf32>
    %cst_444 = arith.constant 0.000000e+00 : f32
    %470 = vector.broadcast %cst_444 : f32 to vector<16x512xf32>
    %471 = arith.maximumf %469, %470 : vector<16x512xf32>
    %472 = arith.truncf %471 : vector<16x512xf32> to vector<16x512xbf16>
    %c0_445 = arith.constant 0 : index
    %c0_446 = arith.constant 0 : index
    %473 = vector.load %arg19[%c0_445, %c0_446] : memref<512x128xbf16, #tpu.memory_space<vmem>>, vector<512x128xbf16>
    %cst_447 = arith.constant dense<0.000000e+00> : vector<16x128xf32>
    %474 = tpu.matmul %472, %473, %cst_447 {dimension_numbers = #tpu.dot_dimension_numbers<[1], [0], [0], [1], [0, 0, 1, 1], [], []>} : vector<16x512xbf16>, vector<512x128xbf16>, vector<16x128xf32> -> vector<16x128xf32>
    %c0_448 = arith.constant 0 : index
    %c0_449 = arith.constant 0 : index
    %475 = vector.load %arg3[%c0_448, %c0_449] : memref<16x150xf32, #tpu.memory_space<vmem>>, vector<16x150xf32>
    %476 = arith.truncf %475 : vector<16x150xf32> to vector<16x150xbf16>
    %c0_450 = arith.constant 0 : index
    %c0_451 = arith.constant 0 : index
    %477 = vector.load %arg20[%c0_450, %c0_451] : memref<150x128xbf16, #tpu.memory_space<vmem>>, vector<150x128xbf16>
    %cst_452 = arith.constant dense<0.000000e+00> : vector<16x128xf32>
    %478 = tpu.matmul %476, %477, %cst_452 {dimension_numbers = #tpu.dot_dimension_numbers<[1], [0], [0], [1], [0, 0, 1, 1], [], []>} : vector<16x150xbf16>, vector<150x128xbf16>, vector<16x128xf32> -> vector<16x128xf32>
    %479 = arith.addf %474, %478 : vector<16x128xf32>
    %c0_453 = arith.constant 0 : index
    %c0_454 = arith.constant 0 : index
    %480 = vector.load %arg21[%c0_453, %c0_454] : memref<1x128xf32, #tpu.memory_space<vmem>>, vector<1x128xf32>
    %481 = vector.broadcast %480 : vector<1x128xf32> to vector<16x128xf32>
    %482 = arith.addf %479, %481 : vector<16x128xf32>
    %cst_455 = arith.constant 0.000000e+00 : f32
    %483 = vector.broadcast %cst_455 : f32 to vector<16x128xf32>
    %484 = arith.maximumf %482, %483 : vector<16x128xf32>
    %c0_456 = arith.constant 0 : index
    %c0_457 = arith.constant 0 : index
    %485 = vector.load %arg22[%c0_456, %c0_457] : memref<128x2xf32, #tpu.memory_space<vmem>>, vector<128x2xf32>
    %cst_458 = arith.constant dense<0.000000e+00> : vector<16x2xf32>
    %486 = tpu.matmul %484, %485, %cst_458 {dimension_numbers = #tpu.dot_dimension_numbers<[1], [0], [0], [1], [0, 0, 1, 1], [], []>} : vector<16x128xf32>, vector<128x2xf32>, vector<16x2xf32> -> vector<16x2xf32>
    %c0_459 = arith.constant 0 : index
    %c0_460 = arith.constant 0 : index
    %487 = vector.load %arg23[%c0_459, %c0_460] : memref<1x2xf32, #tpu.memory_space<vmem>>, vector<1x2xf32>
    %488 = vector.broadcast %487 : vector<1x2xf32> to vector<16x2xf32>
    %489 = arith.addf %486, %488 : vector<16x2xf32>
    %c0_461 = arith.constant 0 : index
    %c0_462 = arith.constant 0 : index
    %490 = vector.load %arg24[%c0_461, %c0_462] : memref<16x2xf32, #tpu.memory_space<vmem>>, vector<16x2xf32>
    tpu.vector_store %arg24[%c0_461, %c0_462], %489 {strides = array<i32>} : memref<16x2xf32, #tpu.memory_space<vmem>>, vector<16x2xf32>,
    return
  }
}

</mosaic_0001>

<llo_original>
// kernel: vimsnet_forward.1
$region0: #{vimsnet_forward.1}
  #allocation0 [shape = 'u32[]', space=smem, size = 0x4, offset = 0x4, fixed_abs, tag = 'smem constant byte address 0x4 - core index']
  #allocation1 [shape = 'u32[144,128]{1,0:T(1,128)}', space=vmem, size = 0x12000, scoped, tag = 'internal scratch']
  #allocation2 [shape = 'f32[720,32]{1,0:T(8,128)}', space=vmem, size = 0x5a000, scoped, tag = 'scratch operand']
  #allocation3 [shape = 'f32[16,45]{1,0:T(8,128)}', space=vmem, size = 0x2000, scoped, tag = 'scratch operand']
  #allocation4 [shape = 'f32[16,1440]{1,0:T(8,128)}', space=vmem, size = 0x18000, scoped, tag = 'scratch operand']
  %s0 = inlined_call_operand.vmem [shape: f32[240,20], index: 0, kind: input, shape index: {}]
  %s1 = inlined_call_operand.vmem [shape: f32[240,30], index: 1, kind: input, shape index: {}]
  %s2 = inlined_call_operand.vmem [shape: f32[480,10], index: 2, kind: input, shape index: {}]
  %s3 = inlined_call_operand.vmem [shape: f32[16,150], index: 3, kind: input, shape index: {}]
  %s4 = inlined_call_operand.vmem [shape: f32[20,32], index: 4, kind: input, shape index: {}]
  %s5 = inlined_call_operand.vmem [shape: f32[1,32], index: 5, kind: input, shape index: {}]
  %s6 = inlined_call_operand.vmem [shape: f32[1,32], index: 6, kind: input, shape index: {}]
  %s7 = inlined_call_operand.vmem [shape: f32[30,32], index: 7, kind: input, shape index: {}]
  %s8 = inlined_call_operand.vmem [shape: f32[1,32], index: 8, kind: input, shape index: {}]
  %s9 = inlined_call_operand.vmem [shape: f32[1,32], index: 9, kind: input, shape index: {}]
  %s10 = inlined_call_operand.vmem [shape: f32[10,32], index: 10, kind: input, shape index: {}]
  %s11 = inlined_call_operand.vmem [shape: f32[1,32], index: 11, kind: input, shape index: {}]
  %s12 = inlined_call_operand.vmem [shape: f32[1,32], index: 12, kind: input, shape index: {}]
  %s13 = inlined_call_operand.vmem [shape: f32[45,5], index: 13, kind: input, shape index: {}]
  %s14 = inlined_call_operand.vmem [shape: f32[1,5], index: 14, kind: input, shape index: {}]
  %s15 = inlined_call_operand.vmem [shape: f32[5,45], index: 15, kind: input, shape index: {}]
  %s16 = inlined_call_operand.vmem [shape: f32[1,45], index: 16, kind: input, shape index: {}]
  %s17 = inlined_call_operand.vmem [shape: bf16[1440,512], index: 17, kind: input, shape index: {}]
  %s18 = inlined_call_operand.vmem [shape: f32[1,512], index: 18, kind: input, shape index: {}]
  %s19 = inlined_call_operand.vmem [shape: bf16[512,128], index: 19, kind: input, shape index: {}]
  %s20 = inlined_call_operand.vmem [shape: bf16[150,128], index: 20, kind: input, shape index: {}]
  %s21 = inlined_call_operand.vmem [shape: f32[1,128], index: 21, kind: input, shape index: {}]
  %s22 = inlined_call_operand.vmem [shape: f32[128,2], index: 22, kind: input, shape index: {}]
  %s23 = inlined_call_operand.vmem [shape: f32[1,2], index: 23, kind: input, shape index: {}]
  %s24 = inlined_call_operand.vmem [shape: f32[16,2], index: 24, kind: output, shape index: {}]
  %s25 = sld [smem:[#allocation0]]
  $region106: #{vimsnet_forward.1} parent=0
    _
  %s27 = ssub.s32 1, %s25
  %s28 = scalar_select 0, %s27, %s25
  // Predicated region
  $region2: #{vimsnet_forward.1} parent=0 // pred_check
    _
  $region3: #{vimsnet_forward.1} parent=0 // pred_check_branch
    %30 = sbr.rel (0) target = $region5
  $region4: #{vimsnet_forward.1} parent=0 // pred_region
    _
  $region5: #{vimsnet_forward.1} parent=0 // pred_fallthru
    _
  // Predicated region
  $region6: #{vimsnet_forward.1} parent=0 // pred_check
    _
  $region7: #{vimsnet_forward.1} parent=0 // pred_check_branch
    %32 = sbr.rel (0) target = $region9
  $region8: #{vimsnet_forward.1} parent=0 // pred_region
    _
  $region9: #{vimsnet_forward.1} parent=0 // pred_fallthru
    _
  // Predicated region
  $region10: #{vimsnet_forward.1} parent=0 // pred_check
    _
  $region11: #{vimsnet_forward.1} parent=0 // pred_check_branch
    %34 = sbr.rel (0) target = $region13
  $region12: #{vimsnet_forward.1} parent=0 // pred_region
    _
  $region13: #{vimsnet_forward.1} parent=0 // pred_fallthru
    _
  // Predicated region
  $region14: #{vimsnet_forward.1} parent=0 // pred_check
    _
  $region15: #{vimsnet_forward.1} parent=0 // pred_check_branch
    %36 = sbr.rel (0) target = $region17
  $region16: #{vimsnet_forward.1} parent=0 // pred_region
    _
  $region17: #{vimsnet_forward.1} parent=0 // pred_fallthru
    _
  // Predicated region
  $region18: #{vimsnet_forward.1} parent=0 // pred_check
    _
  $region19: #{vimsnet_forward.1} parent=0 // pred_check_branch
    %38 = sbr.rel (0) target = $region21
  $region20: #{vimsnet_forward.1} parent=0 // pred_region
    _
  $region21: #{vimsnet_forward.1} parent=0 // pred_fallthru
    _
  // Predicated region
  $region22: #{vimsnet_forward.1} parent=0 // pred_check
    _
  $region23: #{vimsnet_forward.1} parent=0 // pred_check_branch
    %40 = sbr.rel (0) target = $region25
  $region24: #{vimsnet_forward.1} parent=0 // pred_region
    _
  $region25: #{vimsnet_forward.1} parent=0 // pred_fallthru
    _
  // Predicated region
  $region26: #{vimsnet_forward.1} parent=0 // pred_check
    _
  $region27: #{vimsnet_forward.1} parent=0 // pred_check_branch
    %42 = sbr.rel (0) target = $region29
  $region28: #{vimsnet_forward.1} parent=0 // pred_region
    _
  $region29: #{vimsnet_forward.1} parent=0 // pred_fallthru
    _
  // Predicated region
  $region30: #{vimsnet_forward.1} parent=0 // pred_check
    _
  $region31: #{vimsnet_forward.1} parent=0 // pred_check_branch
    %44 = sbr.rel (0) target = $region33
  $region32: #{vimsnet_forward.1} parent=0 // pred_region
    _
  $region33: #{vimsnet_forward.1} parent=0 // pred_fallthru
    _
  // Predicated region
  $region34: #{vimsnet_forward.1} parent=0 // pred_check
    _
  $region35: #{vimsnet_forward.1} parent=0 // pred_check_branch
    %46 = sbr.rel (0) target = $region37
  $region36: #{vimsnet_forward.1} parent=0 // pred_region
    _
  $region37: #{vimsnet_forward.1} parent=0 // pred_fallthru
    _
  // Predicated region
  $region38: #{vimsnet_forward.1} parent=0 // pred_check
    _
  $region39: #{vimsnet_forward.1} parent=0 // pred_check_branch
    %48 = sbr.rel (0) target = $region41
  $region40: #{vimsnet_forward.1} parent=0 // pred_region
    _
  $region41: #{vimsnet_forward.1} parent=0 // pred_fallthru
    _
  // Predicated region
  $region42: #{vimsnet_forward.1} parent=0 // pred_check
    _
  $region43: #{vimsnet_forward.1} parent=0 // pred_check_branch
    %50 = sbr.rel (0) target = $region45
  $region44: #{vimsnet_forward.1} parent=0 // pred_region
    _
  $region45: #{vimsnet_forward.1} parent=0 // pred_fallthru
    _
  // Predicated region
  $region46: #{vimsnet_forward.1} parent=0 // pred_check
    _
  $region47: #{vimsnet_forward.1} parent=0 // pred_check_branch
    %52 = sbr.rel (0) target = $region49
  $region48: #{vimsnet_forward.1} parent=0 // pred_region
    _
  $region49: #{vimsnet_forward.1} parent=0 // pred_fallthru
    _
  // Predicated region
  $region50: #{vimsnet_forward.1} parent=0 // pred_check
    _
  $region51: #{vimsnet_forward.1} parent=0 // pred_check_branch
    %54 = sbr.rel (0) target = $region53
  $region52: #{vimsnet_forward.1} parent=0 // pred_region
    _
  $region53: #{vimsnet_forward.1} parent=0 // pred_fallthru
    _
  // Predicated region
  $region54: #{vimsnet_forward.1} parent=0 // pred_check
    _
  $region55: #{vimsnet_forward.1} parent=0 // pred_check_branch
    %56 = sbr.rel (0) target = $region57
  $region56: #{vimsnet_forward.1} parent=0 // pred_region
    _
  $region57: #{vimsnet_forward.1} parent=0 // pred_fallthru
    _
  // Predicated region
  $region58: #{vimsnet_forward.1} parent=0 // pred_check
    _
  $region59: #{vimsnet_forward.1} parent=0 // pred_check_branch
    %58 = sbr.rel (0) target = $region61
  $region60: #{vimsnet_forward.1} parent=0 // pred_region
    _
  $region61: #{vimsnet_forward.1} parent=0 // pred_fallthru
    _
  // Predicated region
  $region62: #{vimsnet_forward.1} parent=0 // pred_check
    _
  $region63: #{vimsnet_forward.1} parent=0 // pred_check_branch
    %60 = sbr.rel (0) target = $region65
  $region64: #{vimsnet_forward.1} parent=0 // pred_region
    _
  $region65: #{vimsnet_forward.1} parent=0 // pred_fallthru
    _
  // Predicated region
  $region66: #{vimsnet_forward.1} parent=0 // pred_check
    _
  $region67: #{vimsnet_forward.1} parent=0 // pred_check_branch
    %62 = sbr.rel (0) target = $region69
  $region68: #{vimsnet_forward.1} parent=0 // pred_region
    _
  $region69: #{vimsnet_forward.1} parent=0 // pred_fallthru
    _
  // Predicated region
  $region70: #{vimsnet_forward.1} parent=0 // pred_check
    _
  $region71: #{vimsnet_forward.1} parent=0 // pred_check_branch
    %64 = sbr.rel (0) target = $region73
  $region72: #{vimsnet_forward.1} parent=0 // pred_region
    _
  $region73: #{vimsnet_forward.1} parent=0 // pred_fallthru
    _
  // Predicated region
  $region74: #{vimsnet_forward.1} parent=0 // pred_check
    _
  $region75: #{vimsnet_forward.1} parent=0 // pred_check_branch
    %66 = sbr.rel (0) target = $region77
  $region76: #{vimsnet_forward.1} parent=0 // pred_region
    _
  $region77: #{vimsnet_forward.1} parent=0 // pred_fallthru
    _
  // Predicated region
  $region78: #{vimsnet_forward.1} parent=0 // pred_check
    _
  $region79: #{vimsnet_forward.1} parent=0 // pred_check_branch
    %68 = sbr.rel (0) target = $region81
  $region80: #{vimsnet_forward.1} parent=0 // pred_region
    _
  $region81: #{vimsnet_forward.1} parent=0 // pred_fallthru
    _
  // Predicated region
  $region82: #{vimsnet_forward.1} parent=0 // pred_check
    _
  $region83: #{vimsnet_forward.1} parent=0 // pred_check_branch
    %70 = sbr.rel (0) target = $region85
  $region84: #{vimsnet_forward.1} parent=0 // pred_region
    _
  $region85: #{vimsnet_forward.1} parent=0 // pred_fallthru
    _
  // Predicated region
  $region86: #{vimsnet_forward.1} parent=0 // pred_check
    _
  $region87: #{vimsnet_forward.1} parent=0 // pred_check_branch
    %72 = sbr.rel (0) target = $region89
  $region88: #{vimsnet_forward.1} parent=0 // pred_region
    _
  $region89: #{vimsnet_forward.1} parent=0 // pred_fallthru
    _
  // Predicated region
  $region90: #{vimsnet_forward.1} parent=0 // pred_check
    _
  $region91: #{vimsnet_forward.1} parent=0 // pred_check_branch
    %74 = sbr.rel (0) target = $region93
  $region92: #{vimsnet_forward.1} parent=0 // pred_region
    _
  $region93: #{vimsnet_forward.1} parent=0 // pred_fallthru
    _
  // Predicated region
  $region94: #{vimsnet_forward.1} parent=0 // pred_check
    _
  $region95: #{vimsnet_forward.1} parent=0 // pred_check_branch
    %76 = sbr.rel (0) target = $region97
  $region96: #{vimsnet_forward.1} parent=0 // pred_region
    _
  $region97: #{vimsnet_forward.1} parent=0 // pred_fallthru
    _
  %v78 = vld [vmem:[%s0] sm:$0xff]
  %v79 = vld [vmem:[%s0 + $0x8] sm:$0xff]
  %v80 = vld [vmem:[%s0 + $0x10] sm:$0xff]
  %v81 = vld [vmem:[%s0 + $0x18] sm:$0xff]
  %v82 = vld [vmem:[%s0 + $0x20] sm:$0xff]
  %v83 = vld [vmem:[%s0 + $0x28] sm:$0xff]
  %v84 = vld [vmem:[%s0 + $0x30] sm:$0xff]
  %v85 = vld [vmem:[%s0 + $0x38] sm:$0xff]
  %v86 = vld [vmem:[%s0 + $0x40] sm:$0xff]
  %v87 = vld [vmem:[%s0 + $0x48] sm:$0xff]
  %v88 = vld [vmem:[%s0 + $0x50] sm:$0xff]
  %v89 = vld [vmem:[%s0 + $0x58] sm:$0xff]
  %v90 = vld [vmem:[%s0 + $0x60] sm:$0xff]
  %v91 = vld [vmem:[%s0 + $0x68] sm:$0xff]
  %v92 = vld [vmem:[%s0 + $0x70] sm:$0xff]
  %v93 = vld [vmem:[%s0 + $0x78] sm:$0xff]
  %v94 = vld [vmem:[%s0 + $0x80] sm:$0xff]
  %v95 = vld [vmem:[%s0 + $0x88] sm:$0xff]
  %v96 = vld [vmem:[%s0 + $0x90] sm:$0xff]
  %v97 = vld [vmem:[%s0 + $0x98] sm:$0xff]
  %v98 = vld [vmem:[%s0 + $0xa0] sm:$0xff]
  %v99 = vld [vmem:[%s0 + $0xa8] sm:$0xff]
  %v100 = vld [vmem:[%s0 + $0xb0] sm:$0xff]
  %v101 = vld [vmem:[%s0 + $0xb8] sm:$0xff]
  %v102 = vld [vmem:[%s0 + $0xc0] sm:$0xff]
  %v103 = vld [vmem:[%s0 + $0xc8] sm:$0xff]
  %v104 = vld [vmem:[%s0 + $0xd0] sm:$0xff]
  %v105 = vld [vmem:[%s0 + $0xd8] sm:$0xff]
  %v106 = vld [vmem:[%s0 + $0xe0] sm:$0xff]
  %v107 = vld [vmem:[%s0 + $0xe8] sm:$0xff]
  %v108 = vld [vmem:[%s4] sm:$0xff]
  %v109 = vld [vmem:[%s4 + $0x8] sm:$0xff]
  %v110 = vld [vmem:[%s4 + $0x10] sm:$0xf]
  %vm111 = vcmask 162816
  %v113 = vsel %vm111, %v78, 0
  %v116 = vsel %vm111, %v79, 0
  %v119 = vsel %vm111, %v80, 0
  %v122 = vsel %vm111, %v81, 0
  %v125 = vsel %vm111, %v82, 0
  %v128 = vsel %vm111, %v83, 0
  %v131 = vsel %vm111, %v84, 0
  %v134 = vsel %vm111, %v85, 0
  %v137 = vsel %vm111, %v86, 0
  %v140 = vsel %vm111, %v87, 0
  %v143 = vsel %vm111, %v88, 0
  %v146 = vsel %vm111, %v89, 0
  %v149 = vsel %vm111, %v90, 0
  %v152 = vsel %vm111, %v91, 0
  %v155 = vsel %vm111, %v92, 0
  %v158 = vsel %vm111, %v93, 0
  %v161 = vsel %vm111, %v94, 0
  %v164 = vsel %vm111, %v95, 0
  %v167 = vsel %vm111, %v96, 0
  %v170 = vsel %vm111, %v97, 0
  %v173 = vsel %vm111, %v98, 0
  %v176 = vsel %vm111, %v99, 0
  %v179 = vsel %vm111, %v100, 0
  %v182 = vsel %vm111, %v101, 0
  %v185 = vsel %vm111, %v102, 0
  %v188 = vsel %vm111, %v103, 0
  %v191 = vsel %vm111, %v104, 0
  %v194 = vsel %vm111, %v105, 0
  %v197 = vsel %vm111, %v106, 0
  %v200 = vsel %vm111, %v107, 0
  %vm202 = vcmask 1043456
  %v204 = vsel %vm202, %v110, 0
  %206 = vmatprep.subr.mxu0 0.0
  %207 = vmatpush1.msra.mxu0 0.0
  %208 = vmatprep.subr.mxu0 0.0
  %209 = vmatpush1.msra.mxu0 0.0
  %210 = vmatprep.subr.mxu0 0.0
  %211 = vmatpush1.msra.mxu0 0.0
  %212 = vmatprep.subr.mxu0 0.0
  %213 = vmatpush1.msra.mxu0 0.0
  %214 = vmatprep.subr.mxu0 0.0
  %215 = vmatpush1.msra.mxu0 0.0
  %216 = vmatprep.subr.mxu0 0.0
  %217 = vmatpush1.msra.mxu0 0.0
  %218 = vmatprep.subr.mxu0 0.0
  %219 = vmatpush1.msra.mxu0 0.0
  %220 = vmatprep.subr.mxu0 0.0
  %221 = vmatpush1.msra.mxu0 0.0
  %222 = vmatprep.subr.mxu0 0.0
  %223 = vmatpush1.msra.mxu0 0.0
  %224 = vmatprep.subr.mxu0 0.0
  %225 = vmatpush1.msra.mxu0 0.0
  %226 = vmatprep.subr.mxu0 0.0
  %227 = vmatpush1.msra.mxu0 0.0
  %228 = vmatprep.subr.mxu0 0.0
  %229 = vmatpush1.msra.mxu0 0.0
  %230 = vmatprep.subr.mxu0 0.0
  %231 = vmatpush1.msra.mxu0 0.0
  %232 = vmatprep.subr.mxu0 0.0
  %233 = vmatpush1.msra.mxu0 %v204
  %234 = vmatprep.subr.mxu0 0.0
  %235 = vmatpush1.msra.mxu0 %v109
  %236 = vmatprep.subr.mxu0 0.0
  %237 = vmatpush1.msra.mxu0 %v108
  %238 = vmatprep.subr.mxu0 0.0
  %239 = vmatpush2.msra.mxu0 0.0
  %240 = vmatprep.subr.mxu0 0.0
  %241 = vmatpush2.msra.mxu0 0.0
  %242 = vmatprep.subr.mxu0 0.0
  %243 = vmatpush2.msra.mxu0 0.0
  %244 = vmatprep.subr.mxu0 0.0
  %245 = vmatpush2.msra.mxu0 0.0
  %246 = vmatprep.subr.mxu0 0.0
  %247 = vmatpush2.msra.mxu0 0.0
  %248 = vmatprep.subr.mxu0 0.0
  %249 = vmatpush2.msra.mxu0 0.0
  %250 = vmatprep.subr.mxu0 0.0
  %251 = vmatpush2.msra.mxu0 0.0
  %252 = vmatprep.subr.mxu0 0.0
  %253 = vmatpush2.msra.mxu0 0.0
  %254 = vmatprep.subr.mxu0 0.0
  %255 = vmatpush2.msra.mxu0 0.0
  %256 = vmatprep.subr.mxu0 0.0
  %257 = vmatpush2.msra.mxu0 0.0
  %258 = vmatprep.subr.mxu0 0.0
  %259 = vmatpush2.msra.mxu0 0.0
  %260 = vmatprep.subr.mxu0 0.0
  %261 = vmatpush2.msra.mxu0 0.0
  %262 = vmatprep.subr.mxu0 0.0
  %263 = vmatpush2.msra.mxu0 0.0
  %264 = vmatprep.subr.mxu0 0.0
  %265 = vmatpush2.msra.mxu0 0.0
  %266 = vmatprep.subr.mxu0 0.0
  %267 = vmatpush2.msra.mxu0 0.0
  %268 = vmatprep.subr.mxu0 0.0
  %269 = vmatpush2.msra.mxu0 0.0
  %270 = vmatprep.mubr.f32.mxu0 0.0
  %271 = vmatmul.mubr.f32.gmra.mxu0 %v113
  %v272 = vpop.f32.mrf.mxu0
  %v273 = vadd.f32 0.0, %v272
  %v274 = vpop.f32.mrf.mxu0
  %275 = vmatprep.mubr.f32.mxu0 0.0
  %276 = vmatmul.mubr.f32.gmra.mxu0 %v116
  %v277 = vpop.f32.mrf.mxu0
  %v278 = vadd.f32 0.0, %v277
  %v279 = vpop.f32.mrf.mxu0
  %280 = vmatprep.mubr.f32.mxu0 0.0
  %281 = vmatmul.mubr.f32.gmra.mxu0 %v119
  %v282 = vpop.f32.mrf.mxu0
  %v283 = vadd.f32 0.0, %v282
  %v284 = vpop.f32.mrf.mxu0
  %285 = vmatprep.mubr.f32.mxu0 0.0
  %286 = vmatmul.mubr.f32.gmra.mxu0 %v122
  %v287 = vpop.f32.mrf.mxu0
  %v288 = vadd.f32 0.0, %v287
  %v289 = vpop.f32.mrf.mxu0
  %290 = vmatprep.mubr.f32.mxu0 0.0
  %291 = vmatmul.mubr.f32.gmra.mxu0 %v125
  %v292 = vpop.f32.mrf.mxu0
  %v293 = vadd.f32 0.0, %v292
  %v294 = vpop.f32.mrf.mxu0
  %295 = vmatprep.mubr.f32.mxu0 0.0
  %296 = vmatmul.mubr.f32.gmra.mxu0 %v128
  %v297 = vpop.f32.mrf.mxu0
  %v298 = vadd.f32 0.0, %v297
  %v299 = vpop.f32.mrf.mxu0
  %300 = vmatprep.mubr.f32.mxu0 0.0
  %301 = vmatmul.mubr.f32.gmra.mxu0 %v131
  %v302 = vpop.f32.mrf.mxu0
  %v303 = vadd.f32 0.0, %v302
  %v304 = vpop.f32.mrf.mxu0
  %305 = vmatprep.mubr.f32.mxu0 0.0
  %306 = vmatmul.mubr.f32.gmra.mxu0 %v134
  %v307 = vpop.f32.mrf.mxu0
  %v308 = vadd.f32 0.0, %v307
  %v309 = vpop.f32.mrf.mxu0
  %310 = vmatprep.mubr.f32.mxu0 0.0
  %311 = vmatmul.mubr.f32.gmra.mxu0 %v137
  %v312 = vpop.f32.mrf.mxu0
  %v313 = vadd.f32 0.0, %v312
  %v314 = vpop.f32.mrf.mxu0
  %315 = vmatprep.mubr.f32.mxu0 0.0
  %316 = vmatmul.mubr.f32.gmra.mxu0 %v140
  %v317 = vpop.f32.mrf.mxu0
  %v318 = vadd.f32 0.0, %v317
  %v319 = vpop.f32.mrf.mxu0
  %320 = vmatprep.mubr.f32.mxu0 0.0
  %321 = vmatmul.mubr.f32.gmra.mxu0 %v143
  %v322 = vpop.f32.mrf.mxu0
  %v323 = vadd.f32 0.0, %v322
  %v324 = vpop.f32.mrf.mxu0
  %325 = vmatprep.mubr.f32.mxu0 0.0
  %326 = vmatmul.mubr.f32.gmra.mxu0 %v146
  %v327 = vpop.f32.mrf.mxu0
  %v328 = vadd.f32 0.0, %v327
  %v329 = vpop.f32.mrf.mxu0
  %330 = vmatprep.mubr.f32.mxu0 0.0
  %331 = vmatmul.mubr.f32.gmra.mxu0 %v149
  %v332 = vpop.f32.mrf.mxu0
  %v333 = vadd.f32 0.0, %v332
  %v334 = vpop.f32.mrf.mxu0
  %335 = vmatprep.mubr.f32.mxu0 0.0
  %336 = vmatmul.mubr.f32.gmra.mxu0 %v152
  %v337 = vpop.f32.mrf.mxu0
  %v338 = vadd.f32 0.0, %v337
  %v339 = vpop.f32.mrf.mxu0
  %340 = vmatprep.mubr.f32.mxu0 0.0
  %341 = vmatmul.mubr.f32.gmra.mxu0 %v155
  %v342 = vpop.f32.mrf.mxu0
  %v343 = vadd.f32 0.0, %v342
  %v344 = vpop.f32.mrf.mxu0
  %345 = vmatprep.mubr.f32.mxu0 0.0
  %346 = vmatmul.mubr.f32.gmra.mxu0 %v158
  %v347 = vpop.f32.mrf.mxu0
  %v348 = vadd.f32 0.0, %v347
  %v349 = vpop.f32.mrf.mxu0
  %350 = vmatprep.mubr.f32.mxu0 0.0
  %351 = vmatmul.mubr.f32.gmra.mxu0 %v161
  %v352 = vpop.f32.mrf.mxu0
  %v353 = vadd.f32 0.0, %v352
  %v354 = vpop.f32.mrf.mxu0
  %355 = vmatprep.mubr.f32.mxu0 0.0
  %356 = vmatmul.mubr.f32.gmra.mxu0 %v164
  %v357 = vpop.f32.mrf.mxu0
  %v358 = vadd.f32 0.0, %v357
  %v359 = vpop.f32.mrf.mxu0
  %360 = vmatprep.mubr.f32.mxu0 0.0
  %361 = vmatmul.mubr.f32.gmra.mxu0 %v167
  %v362 = vpop.f32.mrf.mxu0
  %v363 = vadd.f32 0.0, %v362
  %v364 = vpop.f32.mrf.mxu0
  %365 = vmatprep.mubr.f32.mxu0 0.0
  %366 = vmatmul.mubr.f32.gmra.mxu0 %v170
  %v367 = vpop.f32.mrf.mxu0
  %v368 = vadd.f32 0.0, %v367
  %v369 = vpop.f32.mrf.mxu0
  %370 = vmatprep.mubr.f32.mxu0 0.0
  %371 = vmatmul.mubr.f32.gmra.mxu0 %v173
  %v372 = vpop.f32.mrf.mxu0
  %v373 = vadd.f32 0.0, %v372
  %v374 = vpop.f32.mrf.mxu0
  %375 = vmatprep.mubr.f32.mxu0 0.0
  %376 = vmatmul.mubr.f32.gmra.mxu0 %v176
  %v377 = vpop.f32.mrf.mxu0
  %v378 = vadd.f32 0.0, %v377
  %v379 = vpop.f32.mrf.mxu0
  %380 = vmatprep.mubr.f32.mxu0 0.0
  %381 = vmatmul.mubr.f32.gmra.mxu0 %v179
  %v382 = vpop.f32.mrf.mxu0
  %v383 = vadd.f32 0.0, %v382
  %v384 = vpop.f32.mrf.mxu0
  %385 = vmatprep.mubr.f32.mxu0 0.0
  %386 = vmatmul.mubr.f32.gmra.mxu0 %v182
  %v387 = vpop.f32.mrf.mxu0
  %v388 = vadd.f32 0.0, %v387
  %v389 = vpop.f32.mrf.mxu0
  %390 = vmatprep.mubr.f32.mxu0 0.0
  %391 = vmatmul.mubr.f32.gmra.mxu0 %v185
  %v392 = vpop.f32.mrf.mxu0
  %v393 = vadd.f32 0.0, %v392
  %v394 = vpop.f32.mrf.mxu0
  %395 = vmatprep.mubr.f32.mxu0 0.0
  %396 = vmatmul.mubr.f32.gmra.mxu0 %v188
  %v397 = vpop.f32.mrf.mxu0
  %v398 = vadd.f32 0.0, %v397
  %v399 = vpop.f32.mrf.mxu0
  %400 = vmatprep.mubr.f32.mxu0 0.0
  %401 = vmatmul.mubr.f32.gmra.mxu0 %v191
  %v402 = vpop.f32.mrf.mxu0
  %v403 = vadd.f32 0.0, %v402
  %v404 = vpop.f32.mrf.mxu0
  %405 = vmatprep.mubr.f32.mxu0 0.0
  %406 = vmatmul.mubr.f32.gmra.mxu0 %v194
  %v407 = vpop.f32.mrf.mxu0
  %v408 = vadd.f32 0.0, %v407
  %v409 = vpop.f32.mrf.mxu0
  %410 = vmatprep.mubr.f32.mxu0 0.0
  %411 = vmatmul.mubr.f32.gmra.mxu0 %v197
  %v412 = vpop.f32.mrf.mxu0
  %v413 = vadd.f32 0.0, %v412
  %v414 = vpop.f32.mrf.mxu0
  %415 = vmatprep.mubr.f32.mxu0 0.0
  %416 = vmatmul.mubr.f32.gmra.mxu0 %v200
  %v417 = vpop.f32.mrf.mxu0
  %v418 = vadd.f32 0.0, %v417
  %v419 = vpop.f32.mrf.mxu0
  %420 = vdwg.mxu0
  %v421 = vld [vmem:[%s5] sm:$0x1]
  %v423 = vlaneseq
  %v424 = vshrl.u32 %v423, 7
  %v425 = vsub.s32 0, %v424
  %v426 = vrot.slane %v421, %v425
  %v428 = vmul.f32 %v273, %v426
  %v429 = vmul.f32 %v278, %v426
  %v430 = vmul.f32 %v283, %v426
  %v431 = vmul.f32 %v288, %v426
  %v432 = vmul.f32 %v293, %v426
  %v433 = vmul.f32 %v298, %v426
  %v434 = vmul.f32 %v303, %v426
  %v435 = vmul.f32 %v308, %v426
  %v436 = vmul.f32 %v313, %v426
  %v437 = vmul.f32 %v318, %v426
  %v438 = vmul.f32 %v323, %v426
  %v439 = vmul.f32 %v328, %v426
  %v440 = vmul.f32 %v333, %v426
  %v441 = vmul.f32 %v338, %v426
  %v442 = vmul.f32 %v343, %v426
  %v443 = vmul.f32 %v348, %v426
  %v444 = vmul.f32 %v353, %v426
  %v445 = vmul.f32 %v358, %v426
  %v446 = vmul.f32 %v363, %v426
  %v447 = vmul.f32 %v368, %v426
  %v448 = vmul.f32 %v373, %v426
  %v449 = vmul.f32 %v378, %v426
  %v450 = vmul.f32 %v383, %v426
  %v451 = vmul.f32 %v388, %v426
  %v452 = vmul.f32 %v393, %v426
  %v453 = vmul.f32 %v398, %v426
  %v454 = vmul.f32 %v403, %v426
  %v455 = vmul.f32 %v408, %v426
  %v456 = vmul.f32 %v413, %v426
  %v457 = vmul.f32 %v418, %v426
  %v458 = vld [vmem:[%s6] sm:$0x1]
  %v460 = vlaneseq
  %v461 = vshrl.u32 %v460, 7
  %v462 = vsub.s32 0, %v461
  %v463 = vrot.slane %v458, %v462
  %v465 = vadd.f32 %v428, %v463
  %v466 = vadd.f32 %v429, %v463
  %v467 = vadd.f32 %v430, %v463
  %v468 = vadd.f32 %v431, %v463
  %v469 = vadd.f32 %v432, %v463
  %v470 = vadd.f32 %v433, %v463
  %v471 = vadd.f32 %v434, %v463
  %v472 = vadd.f32 %v435, %v463
  %v473 = vadd.f32 %v436, %v463
  %v474 = vadd.f32 %v437, %v463
  %v475 = vadd.f32 %v438, %v463
  %v476 = vadd.f32 %v439, %v463
  %v477 = vadd.f32 %v440, %v463
  %v478 = vadd.f32 %v441, %v463
  %v479 = vadd.f32 %v442, %v463
  %v480 = vadd.f32 %v443, %v463
  %v481 = vadd.f32 %v444, %v463
  %v482 = vadd.f32 %v445, %v463
  %v483 = vadd.f32 %v446, %v463
  %v484 = vadd.f32 %v447, %v463
  %v485 = vadd.f32 %v448, %v463
  %v486 = vadd.f32 %v449, %v463
  %v487 = vadd.f32 %v450, %v463
  %v488 = vadd.f32 %v451, %v463
  %v489 = vadd.f32 %v452, %v463
  %v490 = vadd.f32 %v453, %v463
  %v491 = vadd.f32 %v454, %v463
  %v492 = vadd.f32 %v455, %v463
  %v493 = vadd.f32 %v456, %v463
  %v494 = vadd.f32 %v457, %v463
  %v495 = vmax.f32 %v465, 0.0
  %v496 = vmax.f32 %v466, 0.0
  %v497 = vmax.f32 %v467, 0.0
  %v498 = vmax.f32 %v468, 0.0
  %v499 = vmax.f32 %v469, 0.0
  %v500 = vmax.f32 %v470, 0.0
  %v501 = vmax.f32 %v471, 0.0
  %v502 = vmax.f32 %v472, 0.0
  %v503 = vmax.f32 %v473, 0.0
  %v504 = vmax.f32 %v474, 0.0
  %v505 = vmax.f32 %v475, 0.0
  %v506 = vmax.f32 %v476, 0.0
  %v507 = vmax.f32 %v477, 0.0
  %v508 = vmax.f32 %v478, 0.0
  %v509 = vmax.f32 %v479, 0.0
  %v510 = vmax.f32 %v480, 0.0
  %v511 = vmax.f32 %v481, 0.0
  %v512 = vmax.f32 %v482, 0.0
  %v513 = vmax.f32 %v483, 0.0
  %v514 = vmax.f32 %v484, 0.0
  %v515 = vmax.f32 %v485, 0.0
  %v516 = vmax.f32 %v486, 0.0
  %v517 = vmax.f32 %v487, 0.0
  %v518 = vmax.f32 %v488, 0.0
  %v519 = vmax.f32 %v489, 0.0
  %v520 = vmax.f32 %v490, 0.0
  %v521 = vmax.f32 %v491, 0.0
  %v522 = vmax.f32 %v492, 0.0
  %v523 = vmax.f32 %v493, 0.0
  %v524 = vmax.f32 %v494, 0.0
  %v525 = vld [vmem:[%s1] sm:$0xff]
  %v526 = vld [vmem:[%s1 + $0x8] sm:$0xff]
  %v527 = vld [vmem:[%s1 + $0x10] sm:$0xff]
  %v528 = vld [vmem:[%s1 + $0x18] sm:$0xff]
  %v529 = vld [vmem:[%s1 + $0x20] sm:$0xff]
  %v530 = vld [vmem:[%s1 + $0x28] sm:$0xff]
  %v531 = vld [vmem:[%s1 + $0x30] sm:$0xff]
  %v532 = vld [vmem:[%s1 + $0x38] sm:$0xff]
  %v533 = vld [vmem:[%s1 + $0x40] sm:$0xff]
  %v534 = vld [vmem:[%s1 + $0x48] sm:$0xff]
  %v535 = vld [vmem:[%s1 + $0x50] sm:$0xff]
  %v536 = vld [vmem:[%s1 + $0x58] sm:$0xff]
  %v537 = vld [vmem:[%s1 + $0x60] sm:$0xff]
  %v538 = vld [vmem:[%s1 + $0x68] sm:$0xff]
  %v539 = vld [vmem:[%s1 + $0x70] sm:$0xff]
  %v540 = vld [vmem:[%s1 + $0x78] sm:$0xff]
  %v541 = vld [vmem:[%s1 + $0x80] sm:$0xff]
  %v542 = vld [vmem:[%s1 + $0x88] sm:$0xff]
  %v543 = vld [vmem:[%s1 + $0x90] sm:$0xff]
  %v544 = vld [vmem:[%s1 + $0x98] sm:$0xff]
  %v545 = vld [vmem:[%s1 + $0xa0] sm:$0xff]
  %v546 = vld [vmem:[%s1 + $0xa8] sm:$0xff]
  %v547 = vld [vmem:[%s1 + $0xb0] sm:$0xff]
  %v548 = vld [vmem:[%s1 + $0xb8] sm:$0xff]
  %v549 = vld [vmem:[%s1 + $0xc0] sm:$0xff]
  %v550 = vld [vmem:[%s1 + $0xc8] sm:$0xff]
  %v551 = vld [vmem:[%s1 + $0xd0] sm:$0xff]
  %v552 = vld [vmem:[%s1 + $0xd8] sm:$0xff]
  %v553 = vld [vmem:[%s1 + $0xe0] sm:$0xff]
  %v554 = vld [vmem:[%s1 + $0xe8] sm:$0xff]
  %v555 = vld [vmem:[%s7] sm:$0xff]
  %v556 = vld [vmem:[%s7 + $0x8] sm:$0xff]
  %v557 = vld [vmem:[%s7 + $0x10] sm:$0xff]
  %v558 = vld [vmem:[%s7 + $0x18] sm:$0x3f]
  %vm559 = vcmask 244736
  %v561 = vsel %vm559, %v525, 0
  %v564 = vsel %vm559, %v526, 0
  %v567 = vsel %vm559, %v527, 0
  %v570 = vsel %vm559, %v528, 0
  %v573 = vsel %vm559, %v529, 0
  %v576 = vsel %vm559, %v530, 0
  %v579 = vsel %vm559, %v531, 0
  %v582 = vsel %vm559, %v532, 0
  %v585 = vsel %vm559, %v533, 0
  %v588 = vsel %vm559, %v534, 0
  %v591 = vsel %vm559, %v535, 0
  %v594 = vsel %vm559, %v536, 0
  %v597 = vsel %vm559, %v537, 0
  %v600 = vsel %vm559, %v538, 0
  %v603 = vsel %vm559, %v539, 0
  %v606 = vsel %vm559, %v540, 0
  %v609 = vsel %vm559, %v541, 0
  %v612 = vsel %vm559, %v542, 0
  %v615 = vsel %vm559, %v543, 0
  %v618 = vsel %vm559, %v544, 0
  %v621 = vsel %vm559, %v545, 0
  %v624 = vsel %vm559, %v546, 0
  %v627 = vsel %vm559, %v547, 0
  %v630 = vsel %vm559, %v548, 0
  %v633 = vsel %vm559, %v549, 0
  %v636 = vsel %vm559, %v550, 0
  %v639 = vsel %vm559, %v551, 0
  %v642 = vsel %vm559, %v552, 0
  %v645 = vsel %vm559, %v553, 0
  %v648 = vsel %vm559, %v554, 0
  %vm650 = vcmask 1045504
  %v652 = vsel %vm650, %v558, 0
  %654 = vmatprep.subr.mxu0 0.0
  %655 = vmatpush1.msra.mxu0 0.0
  %656 = vmatprep.subr.mxu0 0.0
  %657 = vmatpush1.msra.mxu0 0.0
  %658 = vmatprep.subr.mxu0 0.0
  %659 = vmatpush1.msra.mxu0 0.0
  %660 = vmatprep.subr.mxu0 0.0
  %661 = vmatpush1.msra.mxu0 0.0
  %662 = vmatprep.subr.mxu0 0.0
  %663 = vmatpush1.msra.mxu0 0.0
  %664 = vmatprep.subr.mxu0 0.0
  %665 = vmatpush1.msra.mxu0 0.0
  %666 = vmatprep.subr.mxu0 0.0
  %667 = vmatpush1.msra.mxu0 0.0
  %668 = vmatprep.subr.mxu0 0.0
  %669 = vmatpush1.msra.mxu0 0.0
  %670 = vmatprep.subr.mxu0 0.0
  %671 = vmatpush1.msra.mxu0 0.0
  %672 = vmatprep.subr.mxu0 0.0
  %673 = vmatpush1.msra.mxu0 0.0
  %674 = vmatprep.subr.mxu0 0.0
  %675 = vmatpush1.msra.mxu0 0.0
  %676 = vmatprep.subr.mxu0 0.0
  %677 = vmatpush1.msra.mxu0 0.0
  %678 = vmatprep.subr.mxu0 0.0
  %679 = vmatpush1.msra.mxu0 %v652
  %680 = vmatprep.subr.mxu0 0.0
  %681 = vmatpush1.msra.mxu0 %v557
  %682 = vmatprep.subr.mxu0 0.0
  %683 = vmatpush1.msra.mxu0 %v556
  %684 = vmatprep.subr.mxu0 0.0
  %685 = vmatpush1.msra.mxu0 %v555
  %686 = vmatprep.subr.mxu0 0.0
  %687 = vmatpush2.msra.mxu0 0.0
  %688 = vmatprep.subr.mxu0 0.0
  %689 = vmatpush2.msra.mxu0 0.0
  %690 = vmatprep.subr.mxu0 0.0
  %691 = vmatpush2.msra.mxu0 0.0
  %692 = vmatprep.subr.mxu0 0.0
  %693 = vmatpush2.msra.mxu0 0.0
  %694 = vmatprep.subr.mxu0 0.0
  %695 = vmatpush2.msra.mxu0 0.0
  %696 = vmatprep.subr.mxu0 0.0
  %697 = vmatpush2.msra.mxu0 0.0
  %698 = vmatprep.subr.mxu0 0.0
  %699 = vmatpush2.msra.mxu0 0.0
  %700 = vmatprep.subr.mxu0 0.0
  %701 = vmatpush2.msra.mxu0 0.0
  %702 = vmatprep.subr.mxu0 0.0
  %703 = vmatpush2.msra.mxu0 0.0
  %704 = vmatprep.subr.mxu0 0.0
  %705 = vmatpush2.msra.mxu0 0.0
  %706 = vmatprep.subr.mxu0 0.0
  %707 = vmatpush2.msra.mxu0 0.0
  %708 = vmatprep.subr.mxu0 0.0
  %709 = vmatpush2.msra.mxu0 0.0
  %710 = vmatprep.subr.mxu0 0.0
  %711 = vmatpush2.msra.mxu0 0.0
  %712 = vmatprep.subr.mxu0 0.0
  %713 = vmatpush2.msra.mxu0 0.0
  %714 = vmatprep.subr.mxu0 0.0
  %715 = vmatpush2.msra.mxu0 0.0
  %716 = vmatprep.subr.mxu0 0.0
  %717 = vmatpush2.msra.mxu0 0.0
  %718 = vmatprep.mubr.f32.mxu0 0.0
  %719 = vmatmul.mubr.f32.gmra.mxu0 %v561
  %v720 = vpop.f32.mrf.mxu0
  %v721 = vadd.f32 0.0, %v720
  %v722 = vpop.f32.mrf.mxu0
  %723 = vmatprep.mubr.f32.mxu0 0.0
  %724 = vmatmul.mubr.f32.gmra.mxu0 %v564
  %v725 = vpop.f32.mrf.mxu0
  %v726 = vadd.f32 0.0, %v725
  %v727 = vpop.f32.mrf.mxu0
  %728 = vmatprep.mubr.f32.mxu0 0.0
  %729 = vmatmul.mubr.f32.gmra.mxu0 %v567
  %v730 = vpop.f32.mrf.mxu0
  %v731 = vadd.f32 0.0, %v730
  %v732 = vpop.f32.mrf.mxu0
  %733 = vmatprep.mubr.f32.mxu0 0.0
  %734 = vmatmul.mubr.f32.gmra.mxu0 %v570
  %v735 = vpop.f32.mrf.mxu0
  %v736 = vadd.f32 0.0, %v735
  %v737 = vpop.f32.mrf.mxu0
  %738 = vmatprep.mubr.f32.mxu0 0.0
  %739 = vmatmul.mubr.f32.gmra.mxu0 %v573
  %v740 = vpop.f32.mrf.mxu0
  %v741 = vadd.f32 0.0, %v740
  %v742 = vpop.f32.mrf.mxu0
  %743 = vmatprep.mubr.f32.mxu0 0.0
  %744 = vmatmul.mubr.f32.gmra.mxu0 %v576
  %v745 = vpop.f32.mrf.mxu0
  %v746 = vadd.f32 0.0, %v745
  %v747 = vpop.f32.mrf.mxu0
  %748 = vmatprep.mubr.f32.mxu0 0.0
  %749 = vmatmul.mubr.f32.gmra.mxu0 %v579
  %v750 = vpop.f32.mrf.mxu0
  %v751 = vadd.f32 0.0, %v750
  %v752 = vpop.f32.mrf.mxu0
  %753 = vmatprep.mubr.f32.mxu0 0.0
  %754 = vmatmul.mubr.f32.gmra.mxu0 %v582
  %v755 = vpop.f32.mrf.mxu0
  %v756 = vadd.f32 0.0, %v755
  %v757 = vpop.f32.mrf.mxu0
  %758 = vmatprep.mubr.f32.mxu0 0.0
  %759 = vmatmul.mubr.f32.gmra.mxu0 %v585
  %v760 = vpop.f32.mrf.mxu0
  %v761 = vadd.f32 0.0, %v760
  %v762 = vpop.f32.mrf.mxu0
  %763 = vmatprep.mubr.f32.mxu0 0.0
  %764 = vmatmul.mubr.f32.gmra.mxu0 %v588
  %v765 = vpop.f32.mrf.mxu0
  %v766 = vadd.f32 0.0, %v765
  %v767 = vpop.f32.mrf.mxu0
  %768 = vmatprep.mubr.f32.mxu0 0.0
  %769 = vmatmul.mubr.f32.gmra.mxu0 %v591
  %v770 = vpop.f32.mrf.mxu0
  %v771 = vadd.f32 0.0, %v770
  %v772 = vpop.f32.mrf.mxu0
  %773 = vmatprep.mubr.f32.mxu0 0.0
  %774 = vmatmul.mubr.f32.gmra.mxu0 %v594
  %v775 = vpop.f32.mrf.mxu0
  %v776 = vadd.f32 0.0, %v775
  %v777 = vpop.f32.mrf.mxu0
  %778 = vmatprep.mubr.f32.mxu0 0.0
  %779 = vmatmul.mubr.f32.gmra.mxu0 %v597
  %v780 = vpop.f32.mrf.mxu0
  %v781 = vadd.f32 0.0, %v780
  %v782 = vpop.f32.mrf.mxu0
  %783 = vmatprep.mubr.f32.mxu0 0.0
  %784 = vmatmul.mubr.f32.gmra.mxu0 %v600
  %v785 = vpop.f32.mrf.mxu0
  %v786 = vadd.f32 0.0, %v785
  %v787 = vpop.f32.mrf.mxu0
  %788 = vmatprep.mubr.f32.mxu0 0.0
  %789 = vmatmul.mubr.f32.gmra.mxu0 %v603
  %v790 = vpop.f32.mrf.mxu0
  %v791 = vadd.f32 0.0, %v790
  %v792 = vpop.f32.mrf.mxu0
  %793 = vmatprep.mubr.f32.mxu0 0.0
  %794 = vmatmul.mubr.f32.gmra.mxu0 %v606
  %v795 = vpop.f32.mrf.mxu0
  %v796 = vadd.f32 0.0, %v795
  %v797 = vpop.f32.mrf.mxu0
  %798 = vmatprep.mubr.f32.mxu0 0.0
  %799 = vmatmul.mubr.f32.gmra.mxu0 %v609
  %v800 = vpop.f32.mrf.mxu0
  %v801 = vadd.f32 0.0, %v800
  %v802 = vpop.f32.mrf.mxu0
  %803 = vmatprep.mubr.f32.mxu0 0.0
  %804 = vmatmul.mubr.f32.gmra.mxu0 %v612
  %v805 = vpop.f32.mrf.mxu0
  %v806 = vadd.f32 0.0, %v805
  %v807 = vpop.f32.mrf.mxu0
  %808 = vmatprep.mubr.f32.mxu0 0.0
  %809 = vmatmul.mubr.f32.gmra.mxu0 %v615
  %v810 = vpop.f32.mrf.mxu0
  %v811 = vadd.f32 0.0, %v810
  %v812 = vpop.f32.mrf.mxu0
  %813 = vmatprep.mubr.f32.mxu0 0.0
  %814 = vmatmul.mubr.f32.gmra.mxu0 %v618
  %v815 = vpop.f32.mrf.mxu0
  %v816 = vadd.f32 0.0, %v815
  %v817 = vpop.f32.mrf.mxu0
  %818 = vmatprep.mubr.f32.mxu0 0.0
  %819 = vmatmul.mubr.f32.gmra.mxu0 %v621
  %v820 = vpop.f32.mrf.mxu0
  %v821 = vadd.f32 0.0, %v820
  %v822 = vpop.f32.mrf.mxu0
  %823 = vmatprep.mubr.f32.mxu0 0.0
  %824 = vmatmul.mubr.f32.gmra.mxu0 %v624
  %v825 = vpop.f32.mrf.mxu0
  %v826 = vadd.f32 0.0, %v825
  %v827 = vpop.f32.mrf.mxu0
  %828 = vmatprep.mubr.f32.mxu0 0.0
  %829 = vmatmul.mubr.f32.gmra.mxu0 %v627
  %v830 = vpop.f32.mrf.mxu0
  %v831 = vadd.f32 0.0, %v830
  %v832 = vpop.f32.mrf.mxu0
  %833 = vmatprep.mubr.f32.mxu0 0.0
  %834 = vmatmul.mubr.f32.gmra.mxu0 %v630
  %v835 = vpop.f32.mrf.mxu0
  %v836 = vadd.f32 0.0, %v835
  %v837 = vpop.f32.mrf.mxu0
  %838 = vmatprep.mubr.f32.mxu0 0.0
  %839 = vmatmul.mubr.f32.gmra.mxu0 %v633
  %v840 = vpop.f32.mrf.mxu0
  %v841 = vadd.f32 0.0, %v840
  %v842 = vpop.f32.mrf.mxu0
  %843 = vmatprep.mubr.f32.mxu0 0.0
  %844 = vmatmul.mubr.f32.gmra.mxu0 %v636
  %v845 = vpop.f32.mrf.mxu0
  %v846 = vadd.f32 0.0, %v845
  %v847 = vpop.f32.mrf.mxu0
  %848 = vmatprep.mubr.f32.mxu0 0.0
  %849 = vmatmul.mubr.f32.gmra.mxu0 %v639
  %v850 = vpop.f32.mrf.mxu0
  %v851 = vadd.f32 0.0, %v850
  %v852 = vpop.f32.mrf.mxu0
  %853 = vmatprep.mubr.f32.mxu0 0.0
  %854 = vmatmul.mubr.f32.gmra.mxu0 %v642
  %v855 = vpop.f32.mrf.mxu0
  %v856 = vadd.f32 0.0, %v855
  %v857 = vpop.f32.mrf.mxu0
  %858 = vmatprep.mubr.f32.mxu0 0.0
  %859 = vmatmul.mubr.f32.gmra.mxu0 %v645
  %v860 = vpop.f32.mrf.mxu0
  %v861 = vadd.f32 0.0, %v860
  %v862 = vpop.f32.mrf.mxu0
  %863 = vmatprep.mubr.f32.mxu0 0.0
  %864 = vmatmul.mubr.f32.gmra.mxu0 %v648
  %v865 = vpop.f32.mrf.mxu0
  %v866 = vadd.f32 0.0, %v865
  %v867 = vpop.f32.mrf.mxu0
  %868 = vdwg.mxu0
  %v869 = vld [vmem:[%s8] sm:$0x1]
  %v871 = vlaneseq
  %v872 = vshrl.u32 %v871, 7
  %v873 = vsub.s32 0, %v872
  %v874 = vrot.slane %v869, %v873
  %v876 = vmul.f32 %v721, %v874
  %v877 = vmul.f32 %v726, %v874
  %v878 = vmul.f32 %v731, %v874
  %v879 = vmul.f32 %v736, %v874
  %v880 = vmul.f32 %v741, %v874
  %v881 = vmul.f32 %v746, %v874
  %v882 = vmul.f32 %v751, %v874
  %v883 = vmul.f32 %v756, %v874
  %v884 = vmul.f32 %v761, %v874
  %v885 = vmul.f32 %v766, %v874
  %v886 = vmul.f32 %v771, %v874
  %v887 = vmul.f32 %v776, %v874
  %v888 = vmul.f32 %v781, %v874
  %v889 = vmul.f32 %v786, %v874
  %v890 = vmul.f32 %v791, %v874
  %v891 = vmul.f32 %v796, %v874
  %v892 = vmul.f32 %v801, %v874
  %v893 = vmul.f32 %v806, %v874
  %v894 = vmul.f32 %v811, %v874
  %v895 = vmul.f32 %v816, %v874
  %v896 = vmul.f32 %v821, %v874
  %v897 = vmul.f32 %v826, %v874
  %v898 = vmul.f32 %v831, %v874
  %v899 = vmul.f32 %v836, %v874
  %v900 = vmul.f32 %v841, %v874
  %v901 = vmul.f32 %v846, %v874
  %v902 = vmul.f32 %v851, %v874
  %v903 = vmul.f32 %v856, %v874
  %v904 = vmul.f32 %v861, %v874
  %v905 = vmul.f32 %v866, %v874
  %v906 = vld [vmem:[%s9] sm:$0x1]
  %v908 = vlaneseq
  %v909 = vshrl.u32 %v908, 7
  %v910 = vsub.s32 0, %v909
  %v911 = vrot.slane %v906, %v910
  %v913 = vadd.f32 %v876, %v911
  %v914 = vadd.f32 %v877, %v911
  %v915 = vadd.f32 %v878, %v911
  %v916 = vadd.f32 %v879, %v911
  %v917 = vadd.f32 %v880, %v911
  %v918 = vadd.f32 %v881, %v911
  %v919 = vadd.f32 %v882, %v911
  %v920 = vadd.f32 %v883, %v911
  %v921 = vadd.f32 %v884, %v911
  %v922 = vadd.f32 %v885, %v911
  %v923 = vadd.f32 %v886, %v911
  %v924 = vadd.f32 %v887, %v911
  %v925 = vadd.f32 %v888, %v911
  %v926 = vadd.f32 %v889, %v911
  %v927 = vadd.f32 %v890, %v911
  %v928 = vadd.f32 %v891, %v911
  %v929 = vadd.f32 %v892, %v911
  %v930 = vadd.f32 %v893, %v911
  %v931 = vadd.f32 %v894, %v911
  %v932 = vadd.f32 %v895, %v911
  %v933 = vadd.f32 %v896, %v911
  %v934 = vadd.f32 %v897, %v911
  %v935 = vadd.f32 %v898, %v911
  %v936 = vadd.f32 %v899, %v911
  %v937 = vadd.f32 %v900, %v911
  %v938 = vadd.f32 %v901, %v911
  %v939 = vadd.f32 %v902, %v911
  %v940 = vadd.f32 %v903, %v911
  %v941 = vadd.f32 %v904, %v911
  %v942 = vadd.f32 %v905, %v911
  %v943 = vmax.f32 %v913, 0.0
  %v944 = vmax.f32 %v914, 0.0
  %v945 = vmax.f32 %v915, 0.0
  %v946 = vmax.f32 %v916, 0.0
  %v947 = vmax.f32 %v917, 0.0
  %v948 = vmax.f32 %v918, 0.0
  %v949 = vmax.f32 %v919, 0.0
  %v950 = vmax.f32 %v920, 0.0
  %v951 = vmax.f32 %v921, 0.0
  %v952 = vmax.f32 %v922, 0.0
  %v953 = vmax.f32 %v923, 0.0
  %v954 = vmax.f32 %v924, 0.0
  %v955 = vmax.f32 %v925, 0.0
  %v956 = vmax.f32 %v926, 0.0
  %v957 = vmax.f32 %v927, 0.0
  %v958 = vmax.f32 %v928, 0.0
  %v959 = vmax.f32 %v929, 0.0
  %v960 = vmax.f32 %v930, 0.0
  %v961 = vmax.f32 %v931, 0.0
  %v962 = vmax.f32 %v932, 0.0
  %v963 = vmax.f32 %v933, 0.0
  %v964 = vmax.f32 %v934, 0.0
  %v965 = vmax.f32 %v935, 0.0
  %v966 = vmax.f32 %v936, 0.0
  %v967 = vmax.f32 %v937, 0.0
  %v968 = vmax.f32 %v938, 0.0
  %v969 = vmax.f32 %v939, 0.0
  %v970 = vmax.f32 %v940, 0.0
  %v971 = vmax.f32 %v941, 0.0
  %v972 = vmax.f32 %v942, 0.0
  %v973 = vld [vmem:[%s2] sm:$0xff]
  %v974 = vld [vmem:[%s2 + $0x8] sm:$0xff]
  %v975 = vld [vmem:[%s2 + $0x10] sm:$0xff]
  %v976 = vld [vmem:[%s2 + $0x18] sm:$0xff]
  %v977 = vld [vmem:[%s2 + $0x20] sm:$0xff]
  %v978 = vld [vmem:[%s2 + $0x28] sm:$0xff]
  %v979 = vld [vmem:[%s2 + $0x30] sm:$0xff]
  %v980 = vld [vmem:[%s2 + $0x38] sm:$0xff]
  %v981 = vld [vmem:[%s2 + $0x40] sm:$0xff]
  %v982 = vld [vmem:[%s2 + $0x48] sm:$0xff]
  %v983 = vld [vmem:[%s2 + $0x50] sm:$0xff]
  %v984 = vld [vmem:[%s2 + $0x58] sm:$0xff]
  %v985 = vld [vmem:[%s2 + $0x60] sm:$0xff]
  %v986 = vld [vmem:[%s2 + $0x68] sm:$0xff]
  %v987 = vld [vmem:[%s2 + $0x70] sm:$0xff]
  %v988 = vld [vmem:[%s2 + $0x78] sm:$0xff]
  %v989 = vld [vmem:[%s2 + $0x80] sm:$0xff]
  %v990 = vld [vmem:[%s2 + $0x88] sm:$0xff]
  %v991 = vld [vmem:[%s2 + $0x90] sm:$0xff]
  %v992 = vld [vmem:[%s2 + $0x98] sm:$0xff]
  %v993 = vld [vmem:[%s2 + $0xa0] sm:$0xff]
  %v994 = vld [vmem:[%s2 + $0xa8] sm:$0xff]
  %v995 = vld [vmem:[%s2 + $0xb0] sm:$0xff]
  %v996 = vld [vmem:[%s2 + $0xb8] sm:$0xff]
  %v997 = vld [vmem:[%s2 + $0xc0] sm:$0xff]
  %v998 = vld [vmem:[%s2 + $0xc8] sm:$0xff]
  %v999 = vld [vmem:[%s2 + $0xd0] sm:$0xff]
  %v1000 = vld [vmem:[%s2 + $0xd8] sm:$0xff]
  %v1001 = vld [vmem:[%s2 + $0xe0] sm:$0xff]
  %v1002 = vld [vmem:[%s2 + $0xe8] sm:$0xff]
  %v1003 = vld [vmem:[%s2 + $0xf0] sm:$0xff]
  %v1004 = vld [vmem:[%s2 + $0xf8] sm:$0xff]
  %v1005 = vld [vmem:[%s2 + $0x100] sm:$0xff]
  %v1006 = vld [vmem:[%s2 + $0x108] sm:$0xff]
  %v1007 = vld [vmem:[%s2 + $0x110] sm:$0xff]
  %v1008 = vld [vmem:[%s2 + $0x118] sm:$0xff]
  %v1009 = vld [vmem:[%s2 + $0x120] sm:$0xff]
  %v1010 = vld [vmem:[%s2 + $0x128] sm:$0xff]
  %v1011 = vld [vmem:[%s2 + $0x130] sm:$0xff]
  %v1012 = vld [vmem:[%s2 + $0x138] sm:$0xff]
  %v1013 = vld [vmem:[%s2 + $0x140] sm:$0xff]
  %v1014 = vld [vmem:[%s2 + $0x148] sm:$0xff]
  %v1015 = vld [vmem:[%s2 + $0x150] sm:$0xff]
  %v1016 = vld [vmem:[%s2 + $0x158] sm:$0xff]
  %v1017 = vld [vmem:[%s2 + $0x160] sm:$0xff]
  %v1018 = vld [vmem:[%s2 + $0x168] sm:$0xff]
  %v1019 = vld [vmem:[%s2 + $0x170] sm:$0xff]
  %v1020 = vld [vmem:[%s2 + $0x178] sm:$0xff]
  %v1021 = vld [vmem:[%s2 + $0x180] sm:$0xff]
  %v1022 = vld [vmem:[%s2 + $0x188] sm:$0xff]
  %v1023 = vld [vmem:[%s2 + $0x190] sm:$0xff]
  %v1024 = vld [vmem:[%s2 + $0x198] sm:$0xff]
  %v1025 = vld [vmem:[%s2 + $0x1a0] sm:$0xff]
  %v1026 = vld [vmem:[%s2 + $0x1a8] sm:$0xff]
  %v1027 = vld [vmem:[%s2 + $0x1b0] sm:$0xff]
  %v1028 = vld [vmem:[%s2 + $0x1b8] sm:$0xff]
  %v1029 = vld [vmem:[%s2 + $0x1c0] sm:$0xff]
  %v1030 = vld [vmem:[%s2 + $0x1c8] sm:$0xff]
  %v1031 = vld [vmem:[%s2 + $0x1d0] sm:$0xff]
  %v1032 = vld [vmem:[%s2 + $0x1d8] sm:$0xff]
  %v1033 = vld [vmem:[%s10] sm:$0xff]
  %v1034 = vld [vmem:[%s10 + $0x8] sm:$0x3]
  %vm1035 = vcmask 80896
  %v1037 = vsel %vm1035, %v973, 0
  %v1040 = vsel %vm1035, %v974, 0
  %v1043 = vsel %vm1035, %v975, 0
  %v1046 = vsel %vm1035, %v976, 0
  %v1049 = vsel %vm1035, %v977, 0
  %v1052 = vsel %vm1035, %v978, 0
  %v1055 = vsel %vm1035, %v979, 0
  %v1058 = vsel %vm1035, %v980, 0
  %v1061 = vsel %vm1035, %v981, 0
  %v1064 = vsel %vm1035, %v982, 0
  %v1067 = vsel %vm1035, %v983, 0
  %v1070 = vsel %vm1035, %v984, 0
  %v1073 = vsel %vm1035, %v985, 0
  %v1076 = vsel %vm1035, %v986, 0
  %v1079 = vsel %vm1035, %v987, 0
  %v1082 = vsel %vm1035, %v988, 0
  %v1085 = vsel %vm1035, %v989, 0
  %v1088 = vsel %vm1035, %v990, 0
  %v1091 = vsel %vm1035, %v991, 0
  %v1094 = vsel %vm1035, %v992, 0
  %v1097 = vsel %vm1035, %v993, 0
  %v1100 = vsel %vm1035, %v994, 0
  %v1103 = vsel %vm1035, %v995, 0
  %v1106 = vsel %vm1035, %v996, 0
  %v1109 = vsel %vm1035, %v997, 0
  %v1112 = vsel %vm1035, %v998, 0
  %v1115 = vsel %vm1035, %v999, 0
  %v1118 = vsel %vm1035, %v1000, 0
  %v1121 = vsel %vm1035, %v1001, 0
  %v1124 = vsel %vm1035, %v1002, 0
  %v1127 = vsel %vm1035, %v1003, 0
  %v1130 = vsel %vm1035, %v1004, 0
  %v1133 = vsel %vm1035, %v1005, 0
  %v1136 = vsel %vm1035, %v1006, 0
  %v1139 = vsel %vm1035, %v1007, 0
  %v1142 = vsel %vm1035, %v1008, 0
  %v1145 = vsel %vm1035, %v1009, 0
  %v1148 = vsel %vm1035, %v1010, 0
  %v1151 = vsel %vm1035, %v1011, 0
  %v1154 = vsel %vm1035, %v1012, 0
  %v1157 = vsel %vm1035, %v1013, 0
  %v1160 = vsel %vm1035, %v1014, 0
  %v1163 = vsel %vm1035, %v1015, 0
  %v1166 = vsel %vm1035, %v1016, 0
  %v1169 = vsel %vm1035, %v1017, 0
  %v1172 = vsel %vm1035, %v1018, 0
  %v1175 = vsel %vm1035, %v1019, 0
  %v1178 = vsel %vm1035, %v1020, 0
  %v1181 = vsel %vm1035, %v1021, 0
  %v1184 = vsel %vm1035, %v1022, 0
  %v1187 = vsel %vm1035, %v1023, 0
  %v1190 = vsel %vm1035, %v1024, 0
  %v1193 = vsel %vm1035, %v1025, 0
  %v1196 = vsel %vm1035, %v1026, 0
  %v1199 = vsel %vm1035, %v1027, 0
  %v1202 = vsel %vm1035, %v1028, 0
  %v1205 = vsel %vm1035, %v1029, 0
  %v1208 = vsel %vm1035, %v1030, 0
  %v1211 = vsel %vm1035, %v1031, 0
  %v1214 = vsel %vm1035, %v1032, 0
  %vm1216 = vcmask 1041408
  %v1218 = vsel %vm1216, %v1034, 0
  %1220 = vmatprep.subr.mxu0 0.0
  %1221 = vmatpush1.msra.mxu0 0.0
  %1222 = vmatprep.subr.mxu0 0.0
  %1223 = vmatpush1.msra.mxu0 0.0
  %1224 = vmatprep.subr.mxu0 0.0
  %1225 = vmatpush1.msra.mxu0 0.0
  %1226 = vmatprep.subr.mxu0 0.0
  %1227 = vmatpush1.msra.mxu0 0.0
  %1228 = vmatprep.subr.mxu0 0.0
  %1229 = vmatpush1.msra.mxu0 0.0
  %1230 = vmatprep.subr.mxu0 0.0
  %1231 = vmatpush1.msra.mxu0 0.0
  %1232 = vmatprep.subr.mxu0 0.0
  %1233 = vmatpush1.msra.mxu0 0.0
  %1234 = vmatprep.subr.mxu0 0.0
  %1235 = vmatpush1.msra.mxu0 0.0
  %1236 = vmatprep.subr.mxu0 0.0
  %1237 = vmatpush1.msra.mxu0 0.0
  %1238 = vmatprep.subr.mxu0 0.0
  %1239 = vmatpush1.msra.mxu0 0.0
  %1240 = vmatprep.subr.mxu0 0.0
  %1241 = vmatpush1.msra.mxu0 0.0
  %1242 = vmatprep.subr.mxu0 0.0
  %1243 = vmatpush1.msra.mxu0 0.0
  %1244 = vmatprep.subr.mxu0 0.0
  %1245 = vmatpush1.msra.mxu0 0.0
  %1246 = vmatprep.subr.mxu0 0.0
  %1247 = vmatpush1.msra.mxu0 0.0
  %1248 = vmatprep.subr.mxu0 0.0
  %1249 = vmatpush1.msra.mxu0 %v1218
  %1250 = vmatprep.subr.mxu0 0.0
  %1251 = vmatpush1.msra.mxu0 %v1033
  %1252 = vmatprep.subr.mxu0 0.0
  %1253 = vmatpush2.msra.mxu0 0.0
  %1254 = vmatprep.subr.mxu0 0.0
  %1255 = vmatpush2.msra.mxu0 0.0
  %1256 = vmatprep.subr.mxu0 0.0
  %1257 = vmatpush2.msra.mxu0 0.0
  %1258 = vmatprep.subr.mxu0 0.0
  %1259 = vmatpush2.msra.mxu0 0.0
  %1260 = vmatprep.subr.mxu0 0.0
  %1261 = vmatpush2.msra.mxu0 0.0
  %1262 = vmatprep.subr.mxu0 0.0
  %1263 = vmatpush2.msra.mxu0 0.0
  %1264 = vmatprep.subr.mxu0 0.0
  %1265 = vmatpush2.msra.mxu0 0.0
  %1266 = vmatprep.subr.mxu0 0.0
  %1267 = vmatpush2.msra.mxu0 0.0
  %1268 = vmatprep.subr.mxu0 0.0
  %1269 = vmatpush2.msra.mxu0 0.0
  %1270 = vmatprep.subr.mxu0 0.0
  %1271 = vmatpush2.msra.mxu0 0.0
  %1272 = vmatprep.subr.mxu0 0.0
  %1273 = vmatpush2.msra.mxu0 0.0
  %1274 = vmatprep.subr.mxu0 0.0
  %1275 = vmatpush2.msra.mxu0 0.0
  %1276 = vmatprep.subr.mxu0 0.0
  %1277 = vmatpush2.msra.mxu0 0.0
  %1278 = vmatprep.subr.mxu0 0.0
  %1279 = vmatpush2.msra.mxu0 0.0
  %1280 = vmatprep.subr.mxu0 0.0
  %1281 = vmatpush2.msra.mxu0 0.0
  %1282 = vmatprep.subr.mxu0 0.0
  %1283 = vmatpush2.msra.mxu0 0.0
  %1284 = vmatprep.mubr.f32.mxu0 0.0
  %1285 = vmatmul.mubr.f32.gmra.mxu0 %v1037
  %v1286 = vpop.f32.mrf.mxu0
  %v1287 = vadd.f32 0.0, %v1286
  %v1288 = vpop.f32.mrf.mxu0
  %1289 = vmatprep.mubr.f32.mxu0 0.0
  %1290 = vmatmul.mubr.f32.gmra.mxu0 %v1040
  %v1291 = vpop.f32.mrf.mxu0
  %v1292 = vadd.f32 0.0, %v1291
  %v1293 = vpop.f32.mrf.mxu0
  %1294 = vmatprep.mubr.f32.mxu0 0.0
  %1295 = vmatmul.mubr.f32.gmra.mxu0 %v1043
  %v1296 = vpop.f32.mrf.mxu0
  %v1297 = vadd.f32 0.0, %v1296
  %v1298 = vpop.f32.mrf.mxu0
  %1299 = vmatprep.mubr.f32.mxu0 0.0
  %1300 = vmatmul.mubr.f32.gmra.mxu0 %v1046
  %v1301 = vpop.f32.mrf.mxu0
  %v1302 = vadd.f32 0.0, %v1301
  %v1303 = vpop.f32.mrf.mxu0
  %1304 = vmatprep.mubr.f32.mxu0 0.0
  %1305 = vmatmul.mubr.f32.gmra.mxu0 %v1049
  %v1306 = vpop.f32.mrf.mxu0
  %v1307 = vadd.f32 0.0, %v1306
  %v1308 = vpop.f32.mrf.mxu0
  %1309 = vmatprep.mubr.f32.mxu0 0.0
  %1310 = vmatmul.mubr.f32.gmra.mxu0 %v1052
  %v1311 = vpop.f32.mrf.mxu0
  %v1312 = vadd.f32 0.0, %v1311
  %v1313 = vpop.f32.mrf.mxu0
  %1314 = vmatprep.mubr.f32.mxu0 0.0
  %1315 = vmatmul.mubr.f32.gmra.mxu0 %v1055
  %v1316 = vpop.f32.mrf.mxu0
  %v1317 = vadd.f32 0.0, %v1316
  %v1318 = vpop.f32.mrf.mxu0
  %1319 = vmatprep.mubr.f32.mxu0 0.0
  %1320 = vmatmul.mubr.f32.gmra.mxu0 %v1058
  %v1321 = vpop.f32.mrf.mxu0
  %v1322 = vadd.f32 0.0, %v1321
  %v1323 = vpop.f32.mrf.mxu0
  %1324 = vmatprep.mubr.f32.mxu0 0.0
  %1325 = vmatmul.mubr.f32.gmra.mxu0 %v1061
  %v1326 = vpop.f32.mrf.mxu0
  %v1327 = vadd.f32 0.0, %v1326
  %v1328 = vpop.f32.mrf.mxu0
  %1329 = vmatprep.mubr.f32.mxu0 0.0
  %1330 = vmatmul.mubr.f32.gmra.mxu0 %v1064
  %v1331 = vpop.f32.mrf.mxu0
  %v1332 = vadd.f32 0.0, %v1331
  %v1333 = vpop.f32.mrf.mxu0
  %1334 = vmatprep.mubr.f32.mxu0 0.0
  %1335 = vmatmul.mubr.f32.gmra.mxu0 %v1067
  %v1336 = vpop.f32.mrf.mxu0
  %v1337 = vadd.f32 0.0, %v1336
  %v1338 = vpop.f32.mrf.mxu0
  %1339 = vmatprep.mubr.f32.mxu0 0.0
  %1340 = vmatmul.mubr.f32.gmra.mxu0 %v1070
  %v1341 = vpop.f32.mrf.mxu0
  %v1342 = vadd.f32 0.0, %v1341
  %v1343 = vpop.f32.mrf.mxu0
  %1344 = vmatprep.mubr.f32.mxu0 0.0
  %1345 = vmatmul.mubr.f32.gmra.mxu0 %v1073
  %v1346 = vpop.f32.mrf.mxu0
  %v1347 = vadd.f32 0.0, %v1346
  %v1348 = vpop.f32.mrf.mxu0
  %1349 = vmatprep.mubr.f32.mxu0 0.0
  %1350 = vmatmul.mubr.f32.gmra.mxu0 %v1076
  %v1351 = vpop.f32.mrf.mxu0
  %v1352 = vadd.f32 0.0, %v1351
  %v1353 = vpop.f32.mrf.mxu0
  %1354 = vmatprep.mubr.f32.mxu0 0.0
  %1355 = vmatmul.mubr.f32.gmra.mxu0 %v1079
  %v1356 = vpop.f32.mrf.mxu0
  %v1357 = vadd.f32 0.0, %v1356
  %v1358 = vpop.f32.mrf.mxu0
  %1359 = vmatprep.mubr.f32.mxu0 0.0
  %1360 = vmatmul.mubr.f32.gmra.mxu0 %v1082
  %v1361 = vpop.f32.mrf.mxu0
  %v1362 = vadd.f32 0.0, %v1361
  %v1363 = vpop.f32.mrf.mxu0
  %1364 = vmatprep.mubr.f32.mxu0 0.0
  %1365 = vmatmul.mubr.f32.gmra.mxu0 %v1085
  %v1366 = vpop.f32.mrf.mxu0
  %v1367 = vadd.f32 0.0, %v1366
  %v1368 = vpop.f32.mrf.mxu0
  %1369 = vmatprep.mubr.f32.mxu0 0.0
  %1370 = vmatmul.mubr.f32.gmra.mxu0 %v1088
  %v1371 = vpop.f32.mrf.mxu0
  %v1372 = vadd.f32 0.0, %v1371
  %v1373 = vpop.f32.mrf.mxu0
  %1374 = vmatprep.mubr.f32.mxu0 0.0
  %1375 = vmatmul.mubr.f32.gmra.mxu0 %v1091
  %v1376 = vpop.f32.mrf.mxu0
  %v1377 = vadd.f32 0.0, %v1376
  %v1378 = vpop.f32.mrf.mxu0
  %1379 = vmatprep.mubr.f32.mxu0 0.0
  %1380 = vmatmul.mubr.f32.gmra.mxu0 %v1094
  %v1381 = vpop.f32.mrf.mxu0
  %v1382 = vadd.f32 0.0, %v1381
  %v1383 = vpop.f32.mrf.mxu0
  %1384 = vmatprep.mubr.f32.mxu0 0.0
  %1385 = vmatmul.mubr.f32.gmra.mxu0 %v1097
  %v1386 = vpop.f32.mrf.mxu0
  %v1387 = vadd.f32 0.0, %v1386
  %v1388 = vpop.f32.mrf.mxu0
  %1389 = vmatprep.mubr.f32.mxu0 0.0
  %1390 = vmatmul.mubr.f32.gmra.mxu0 %v1100
  %v1391 = vpop.f32.mrf.mxu0
  %v1392 = vadd.f32 0.0, %v1391
  %v1393 = vpop.f32.mrf.mxu0
  %1394 = vmatprep.mubr.f32.mxu0 0.0
  %1395 = vmatmul.mubr.f32.gmra.mxu0 %v1103
  %v1396 = vpop.f32.mrf.mxu0
  %v1397 = vadd.f32 0.0, %v1396
  %v1398 = vpop.f32.mrf.mxu0
  %1399 = vmatprep.mubr.f32.mxu0 0.0
  %1400 = vmatmul.mubr.f32.gmra.mxu0 %v1106
  %v1401 = vpop.f32.mrf.mxu0
  %v1402 = vadd.f32 0.0, %v1401
  %v1403 = vpop.f32.mrf.mxu0
  %1404 = vmatprep.mubr.f32.mxu0 0.0
  %1405 = vmatmul.mubr.f32.gmra.mxu0 %v1109
  %v1406 = vpop.f32.mrf.mxu0
  %v1407 = vadd.f32 0.0, %v1406
  %v1408 = vpop.f32.mrf.mxu0
  %1409 = vmatprep.mubr.f32.mxu0 0.0
  %1410 = vmatmul.mubr.f32.gmra.mxu0 %v1112
  %v1411 = vpop.f32.mrf.mxu0
  %v1412 = vadd.f32 0.0, %v1411
  %v1413 = vpop.f32.mrf.mxu0
  %1414 = vmatprep.mubr.f32.mxu0 0.0
  %1415 = vmatmul.mubr.f32.gmra.mxu0 %v1115
  %v1416 = vpop.f32.mrf.mxu0
  %v1417 = vadd.f32 0.0, %v1416
  %v1418 = vpop.f32.mrf.mxu0
  %1419 = vmatprep.mubr.f32.mxu0 0.0
  %1420 = vmatmul.mubr.f32.gmra.mxu0 %v1118
  %v1421 = vpop.f32.mrf.mxu0
  %v1422 = vadd.f32 0.0, %v1421
  %v1423 = vpop.f32.mrf.mxu0
  %1424 = vmatprep.mubr.f32.mxu0 0.0
  %1425 = vmatmul.mubr.f32.gmra.mxu0 %v1121
  %v1426 = vpop.f32.mrf.mxu0
  %v1427 = vadd.f32 0.0, %v1426
  %v1428 = vpop.f32.mrf.mxu0
  %1429 = vmatprep.mubr.f32.mxu0 0.0
  %1430 = vmatmul.mubr.f32.gmra.mxu0 %v1124
  %v1431 = vpop.f32.mrf.mxu0
  %v1432 = vadd.f32 0.0, %v1431
  %v1433 = vpop.f32.mrf.mxu0
  %1434 = vmatprep.mubr.f32.mxu0 0.0
  %1435 = vmatmul.mubr.f32.gmra.mxu0 %v1127
  %v1436 = vpop.f32.mrf.mxu0
  %v1437 = vadd.f32 0.0, %v1436
  %v1438 = vpop.f32.mrf.mxu0
  %1439 = vmatprep.mubr.f32.mxu0 0.0
  %1440 = vmatmul.mubr.f32.gmra.mxu0 %v1130
  %v1441 = vpop.f32.mrf.mxu0
  %v1442 = vadd.f32 0.0, %v1441
  %v1443 = vpop.f32.mrf.mxu0
  %1444 = vmatprep.mubr.f32.mxu0 0.0
  %1445 = vmatmul.mubr.f32.gmra.mxu0 %v1133
  %v1446 = vpop.f32.mrf.mxu0
  %v1447 = vadd.f32 0.0, %v1446
  %v1448 = vpop.f32.mrf.mxu0
  %1449 = vmatprep.mubr.f32.mxu0 0.0
  %1450 = vmatmul.mubr.f32.gmra.mxu0 %v1136
  %v1451 = vpop.f32.mrf.mxu0
  %v1452 = vadd.f32 0.0, %v1451
  %v1453 = vpop.f32.mrf.mxu0
  %1454 = vmatprep.mubr.f32.mxu0 0.0
  %1455 = vmatmul.mubr.f32.gmra.mxu0 %v1139
  %v1456 = vpop.f32.mrf.mxu0
  %v1457 = vadd.f32 0.0, %v1456
  %v1458 = vpop.f32.mrf.mxu0
  %1459 = vmatprep.mubr.f32.mxu0 0.0
  %1460 = vmatmul.mubr.f32.gmra.mxu0 %v1142
  %v1461 = vpop.f32.mrf.mxu0
  %v1462 = vadd.f32 0.0, %v1461
  %v1463 = vpop.f32.mrf.mxu0
  %1464 = vmatprep.mubr.f32.mxu0 0.0
  %1465 = vmatmul.mubr.f32.gmra.mxu0 %v1145
  %v1466 = vpop.f32.mrf.mxu0
  %v1467 = vadd.f32 0.0, %v1466
  %v1468 = vpop.f32.mrf.mxu0
  %1469 = vmatprep.mubr.f32.mxu0 0.0
  %1470 = vmatmul.mubr.f32.gmra.mxu0 %v1148
  %v1471 = vpop.f32.mrf.mxu0
  %v1472 = vadd.f32 0.0, %v1471
  %v1473 = vpop.f32.mrf.mxu0
  %1474 = vmatprep.mubr.f32.mxu0 0.0
  %1475 = vmatmul.mubr.f32.gmra.mxu0 %v1151
  %v1476 = vpop.f32.mrf.mxu0
  %v1477 = vadd.f32 0.0, %v1476
  %v1478 = vpop.f32.mrf.mxu0
  %1479 = vmatprep.mubr.f32.mxu0 0.0
  %1480 = vmatmul.mubr.f32.gmra.mxu0 %v1154
  %v1481 = vpop.f32.mrf.mxu0
  %v1482 = vadd.f32 0.0, %v1481
  %v1483 = vpop.f32.mrf.mxu0
  %1484 = vmatprep.mubr.f32.mxu0 0.0
  %1485 = vmatmul.mubr.f32.gmra.mxu0 %v1157
  %v1486 = vpop.f32.mrf.mxu0
  %v1487 = vadd.f32 0.0, %v1486
  %v1488 = vpop.f32.mrf.mxu0
  %1489 = vmatprep.mubr.f32.mxu0 0.0
  %1490 = vmatmul.mubr.f32.gmra.mxu0 %v1160
  %v1491 = vpop.f32.mrf.mxu0
  %v1492 = vadd.f32 0.0, %v1491
  %v1493 = vpop.f32.mrf.mxu0
  %1494 = vmatprep.mubr.f32.mxu0 0.0
  %1495 = vmatmul.mubr.f32.gmra.mxu0 %v1163
  %v1496 = vpop.f32.mrf.mxu0
  %v1497 = vadd.f32 0.0, %v1496
  %v1498 = vpop.f32.mrf.mxu0
  %1499 = vmatprep.mubr.f32.mxu0 0.0
  %1500 = vmatmul.mubr.f32.gmra.mxu0 %v1166
  %v1501 = vpop.f32.mrf.mxu0
  %v1502 = vadd.f32 0.0, %v1501
  %v1503 = vpop.f32.mrf.mxu0
  %1504 = vmatprep.mubr.f32.mxu0 0.0
  %1505 = vmatmul.mubr.f32.gmra.mxu0 %v1169
  %v1506 = vpop.f32.mrf.mxu0
  %v1507 = vadd.f32 0.0, %v1506
  %v1508 = vpop.f32.mrf.mxu0
  %1509 = vmatprep.mubr.f32.mxu0 0.0
  %1510 = vmatmul.mubr.f32.gmra.mxu0 %v1172
  %v1511 = vpop.f32.mrf.mxu0
  %v1512 = vadd.f32 0.0, %v1511
  %v1513 = vpop.f32.mrf.mxu0
  %1514 = vmatprep.mubr.f32.mxu0 0.0
  %1515 = vmatmul.mubr.f32.gmra.mxu0 %v1175
  %v1516 = vpop.f32.mrf.mxu0
  %v1517 = vadd.f32 0.0, %v1516
  %v1518 = vpop.f32.mrf.mxu0
  %1519 = vmatprep.mubr.f32.mxu0 0.0
  %1520 = vmatmul.mubr.f32.gmra.mxu0 %v1178
  %v1521 = vpop.f32.mrf.mxu0
  %v1522 = vadd.f32 0.0, %v1521
  %v1523 = vpop.f32.mrf.mxu0
  %1524 = vmatprep.mubr.f32.mxu0 0.0
  %1525 = vmatmul.mubr.f32.gmra.mxu0 %v1181
  %v1526 = vpop.f32.mrf.mxu0
  %v1527 = vadd.f32 0.0, %v1526
  %v1528 = vpop.f32.mrf.mxu0
  %1529 = vmatprep.mubr.f32.mxu0 0.0
  %1530 = vmatmul.mubr.f32.gmra.mxu0 %v1184
  %v1531 = vpop.f32.mrf.mxu0
  %v1532 = vadd.f32 0.0, %v1531
  %v1533 = vpop.f32.mrf.mxu0
  %1534 = vmatprep.mubr.f32.mxu0 0.0
  %1535 = vmatmul.mubr.f32.gmra.mxu0 %v1187
  %v1536 = vpop.f32.mrf.mxu0
  %v1537 = vadd.f32 0.0, %v1536
  %v1538 = vpop.f32.mrf.mxu0
  %1539 = vmatprep.mubr.f32.mxu0 0.0
  %1540 = vmatmul.mubr.f32.gmra.mxu0 %v1190
  %v1541 = vpop.f32.mrf.mxu0
  %v1542 = vadd.f32 0.0, %v1541
  %v1543 = vpop.f32.mrf.mxu0
  %1544 = vmatprep.mubr.f32.mxu0 0.0
  %1545 = vmatmul.mubr.f32.gmra.mxu0 %v1193
  %v1546 = vpop.f32.mrf.mxu0
  %v1547 = vadd.f32 0.0, %v1546
  %v1548 = vpop.f32.mrf.mxu0
  %1549 = vmatprep.mubr.f32.mxu0 0.0
  %1550 = vmatmul.mubr.f32.gmra.mxu0 %v1196
  %v1551 = vpop.f32.mrf.mxu0
  %v1552 = vadd.f32 0.0, %v1551
  %v1553 = vpop.f32.mrf.mxu0
  %1554 = vmatprep.mubr.f32.mxu0 0.0
  %1555 = vmatmul.mubr.f32.gmra.mxu0 %v1199
  %v1556 = vpop.f32.mrf.mxu0
  %v1557 = vadd.f32 0.0, %v1556
  %v1558 = vpop.f32.mrf.mxu0
  %1559 = vmatprep.mubr.f32.mxu0 0.0
  %1560 = vmatmul.mubr.f32.gmra.mxu0 %v1202
  %v1561 = vpop.f32.mrf.mxu0
  %v1562 = vadd.f32 0.0, %v1561
  %v1563 = vpop.f32.mrf.mxu0
  %1564 = vmatprep.mubr.f32.mxu0 0.0
  %1565 = vmatmul.mubr.f32.gmra.mxu0 %v1205
  %v1566 = vpop.f32.mrf.mxu0
  %v1567 = vadd.f32 0.0, %v1566
  %v1568 = vpop.f32.mrf.mxu0
  %1569 = vmatprep.mubr.f32.mxu0 0.0
  %1570 = vmatmul.mubr.f32.gmra.mxu0 %v1208
  %v1571 = vpop.f32.mrf.mxu0
  %v1572 = vadd.f32 0.0, %v1571
  %v1573 = vpop.f32.mrf.mxu0
  %1574 = vmatprep.mubr.f32.mxu0 0.0
  %1575 = vmatmul.mubr.f32.gmra.mxu0 %v1211
  %v1576 = vpop.f32.mrf.mxu0
  %v1577 = vadd.f32 0.0, %v1576
  %v1578 = vpop.f32.mrf.mxu0
  %1579 = vmatprep.mubr.f32.mxu0 0.0
  %1580 = vmatmul.mubr.f32.gmra.mxu0 %v1214
  %v1581 = vpop.f32.mrf.mxu0
  %v1582 = vadd.f32 0.0, %v1581
  %v1583 = vpop.f32.mrf.mxu0
  %1584 = vdwg.mxu0
  %v1585 = vld [vmem:[%s11] sm:$0x1]
  %v1587 = vlaneseq
  %v1588 = vshrl.u32 %v1587, 7
  %v1589 = vsub.s32 0, %v1588
  %v1590 = vrot.slane %v1585, %v1589
  %v1592 = vmul.f32 %v1287, %v1590
  %v1593 = vmul.f32 %v1292, %v1590
  %v1594 = vmul.f32 %v1297, %v1590
  %v1595 = vmul.f32 %v1302, %v1590
  %v1596 = vmul.f32 %v1307, %v1590
  %v1597 = vmul.f32 %v1312, %v1590
  %v1598 = vmul.f32 %v1317, %v1590
  %v1599 = vmul.f32 %v1322, %v1590
  %v1600 = vmul.f32 %v1327, %v1590
  %v1601 = vmul.f32 %v1332, %v1590
  %v1602 = vmul.f32 %v1337, %v1590
  %v1603 = vmul.f32 %v1342, %v1590
  %v1604 = vmul.f32 %v1347, %v1590
  %v1605 = vmul.f32 %v1352, %v1590
  %v1606 = vmul.f32 %v1357, %v1590
  %v1607 = vmul.f32 %v1362, %v1590
  %v1608 = vmul.f32 %v1367, %v1590
  %v1609 = vmul.f32 %v1372, %v1590
  %v1610 = vmul.f32 %v1377, %v1590
  %v1611 = vmul.f32 %v1382, %v1590
  %v1612 = vmul.f32 %v1387, %v1590
  %v1613 = vmul.f32 %v1392, %v1590
  %v1614 = vmul.f32 %v1397, %v1590
  %v1615 = vmul.f32 %v1402, %v1590
  %v1616 = vmul.f32 %v1407, %v1590
  %v1617 = vmul.f32 %v1412, %v1590
  %v1618 = vmul.f32 %v1417, %v1590
  %v1619 = vmul.f32 %v1422, %v1590
  %v1620 = vmul.f32 %v1427, %v1590
  %v1621 = vmul.f32 %v1432, %v1590
  %v1622 = vmul.f32 %v1437, %v1590
  %v1623 = vmul.f32 %v1442, %v1590
  %v1624 = vmul.f32 %v1447, %v1590
  %v1625 = vmul.f32 %v1452, %v1590
  %v1626 = vmul.f32 %v1457, %v1590
  %v1627 = vmul.f32 %v1462, %v1590
  %v1628 = vmul.f32 %v1467, %v1590
  %v1629 = vmul.f32 %v1472, %v1590
  %v1630 = vmul.f32 %v1477, %v1590
  %v1631 = vmul.f32 %v1482, %v1590
  %v1632 = vmul.f32 %v1487, %v1590
  %v1633 = vmul.f32 %v1492, %v1590
  %v1634 = vmul.f32 %v1497, %v1590
  %v1635 = vmul.f32 %v1502, %v1590
  %v1636 = vmul.f32 %v1507, %v1590
  %v1637 = vmul.f32 %v1512, %v1590
  %v1638 = vmul.f32 %v1517, %v1590
  %v1639 = vmul.f32 %v1522, %v1590
  %v1640 = vmul.f32 %v1527, %v1590
  %v1641 = vmul.f32 %v1532, %v1590
  %v1642 = vmul.f32 %v1537, %v1590
  %v1643 = vmul.f32 %v1542, %v1590
  %v1644 = vmul.f32 %v1547, %v1590
  %v1645 = vmul.f32 %v1552, %v1590
  %v1646 = vmul.f32 %v1557, %v1590
  %v1647 = vmul.f32 %v1562, %v1590
  %v1648 = vmul.f32 %v1567, %v1590
  %v1649 = vmul.f32 %v1572, %v1590
  %v1650 = vmul.f32 %v1577, %v1590
  %v1651 = vmul.f32 %v1582, %v1590
  %v1652 = vld [vmem:[%s12] sm:$0x1]
  %v1654 = vlaneseq
  %v1655 = vshrl.u32 %v1654, 7
  %v1656 = vsub.s32 0, %v1655
  %v1657 = vrot.slane %v1652, %v1656
  %v1659 = vadd.f32 %v1592, %v1657
  %v1660 = vadd.f32 %v1593, %v1657
  %v1661 = vadd.f32 %v1594, %v1657
  %v1662 = vadd.f32 %v1595, %v1657
  %v1663 = vadd.f32 %v1596, %v1657
  %v1664 = vadd.f32 %v1597, %v1657
  %v1665 = vadd.f32 %v1598, %v1657
  %v1666 = vadd.f32 %v1599, %v1657
  %v1667 = vadd.f32 %v1600, %v1657
  %v1668 = vadd.f32 %v1601, %v1657
  %v1669 = vadd.f32 %v1602, %v1657
  %v1670 = vadd.f32 %v1603, %v1657
  %v1671 = vadd.f32 %v1604, %v1657
  %v1672 = vadd.f32 %v1605, %v1657
  %v1673 = vadd.f32 %v1606, %v1657
  %v1674 = vadd.f32 %v1607, %v1657
  %v1675 = vadd.f32 %v1608, %v1657
  %v1676 = vadd.f32 %v1609, %v1657
  %v1677 = vadd.f32 %v1610, %v1657
  %v1678 = vadd.f32 %v1611, %v1657
  %v1679 = vadd.f32 %v1612, %v1657
  %v1680 = vadd.f32 %v1613, %v1657
  %v1681 = vadd.f32 %v1614, %v1657
  %v1682 = vadd.f32 %v1615, %v1657
  %v1683 = vadd.f32 %v1616, %v1657
  %v1684 = vadd.f32 %v1617, %v1657
  %v1685 = vadd.f32 %v1618, %v1657
  %v1686 = vadd.f32 %v1619, %v1657
  %v1687 = vadd.f32 %v1620, %v1657
  %v1688 = vadd.f32 %v1621, %v1657
  %v1689 = vadd.f32 %v1622, %v1657
  %v1690 = vadd.f32 %v1623, %v1657
  %v1691 = vadd.f32 %v1624, %v1657
  %v1692 = vadd.f32 %v1625, %v1657
  %v1693 = vadd.f32 %v1626, %v1657
  %v1694 = vadd.f32 %v1627, %v1657
  %v1695 = vadd.f32 %v1628, %v1657
  %v1696 = vadd.f32 %v1629, %v1657
  %v1697 = vadd.f32 %v1630, %v1657
  %v1698 = vadd.f32 %v1631, %v1657
  %v1699 = vadd.f32 %v1632, %v1657
  %v1700 = vadd.f32 %v1633, %v1657
  %v1701 = vadd.f32 %v1634, %v1657
  %v1702 = vadd.f32 %v1635, %v1657
  %v1703 = vadd.f32 %v1636, %v1657
  %v1704 = vadd.f32 %v1637, %v1657
  %v1705 = vadd.f32 %v1638, %v1657
  %v1706 = vadd.f32 %v1639, %v1657
  %v1707 = vadd.f32 %v1640, %v1657
  %v1708 = vadd.f32 %v1641, %v1657
  %v1709 = vadd.f32 %v1642, %v1657
  %v1710 = vadd.f32 %v1643, %v1657
  %v1711 = vadd.f32 %v1644, %v1657
  %v1712 = vadd.f32 %v1645, %v1657
  %v1713 = vadd.f32 %v1646, %v1657
  %v1714 = vadd.f32 %v1647, %v1657
  %v1715 = vadd.f32 %v1648, %v1657
  %v1716 = vadd.f32 %v1649, %v1657
  %v1717 = vadd.f32 %v1650, %v1657
  %v1718 = vadd.f32 %v1651, %v1657
  %v1719 = vmax.f32 %v1659, 0.0
  %v1720 = vmax.f32 %v1660, 0.0
  %v1721 = vmax.f32 %v1661, 0.0
  %v1722 = vmax.f32 %v1662, 0.0
  %v1723 = vmax.f32 %v1663, 0.0
  %v1724 = vmax.f32 %v1664, 0.0
  %v1725 = vmax.f32 %v1665, 0.0
  %v1726 = vmax.f32 %v1666, 0.0
  %v1727 = vmax.f32 %v1667, 0.0
  %v1728 = vmax.f32 %v1668, 0.0
  %v1729 = vmax.f32 %v1669, 0.0
  %v1730 = vmax.f32 %v1670, 0.0
  %v1731 = vmax.f32 %v1671, 0.0
  %v1732 = vmax.f32 %v1672, 0.0
  %v1733 = vmax.f32 %v1673, 0.0
  %v1734 = vmax.f32 %v1674, 0.0
  %v1735 = vmax.f32 %v1675, 0.0
  %v1736 = vmax.f32 %v1676, 0.0
  %v1737 = vmax.f32 %v1677, 0.0
  %v1738 = vmax.f32 %v1678, 0.0
  %v1739 = vmax.f32 %v1679, 0.0
  %v1740 = vmax.f32 %v1680, 0.0
  %v1741 = vmax.f32 %v1681, 0.0
  %v1742 = vmax.f32 %v1682, 0.0
  %v1743 = vmax.f32 %v1683, 0.0
  %v1744 = vmax.f32 %v1684, 0.0
  %v1745 = vmax.f32 %v1685, 0.0
  %v1746 = vmax.f32 %v1686, 0.0
  %v1747 = vmax.f32 %v1687, 0.0
  %v1748 = vmax.f32 %v1688, 0.0
  %v1749 = vmax.f32 %v1689, 0.0
  %v1750 = vmax.f32 %v1690, 0.0
  %v1751 = vmax.f32 %v1691, 0.0
  %v1752 = vmax.f32 %v1692, 0.0
  %v1753 = vmax.f32 %v1693, 0.0
  %v1754 = vmax.f32 %v1694, 0.0
  %v1755 = vmax.f32 %v1695, 0.0
  %v1756 = vmax.f32 %v1696, 0.0
  %v1757 = vmax.f32 %v1697, 0.0
  %v1758 = vmax.f32 %v1698, 0.0
  %v1759 = vmax.f32 %v1699, 0.0
  %v1760 = vmax.f32 %v1700, 0.0
  %v1761 = vmax.f32 %v1701, 0.0
  %v1762 = vmax.f32 %v1702, 0.0
  %v1763 = vmax.f32 %v1703, 0.0
  %v1764 = vmax.f32 %v1704, 0.0
  %v1765 = vmax.f32 %v1705, 0.0
  %v1766 = vmax.f32 %v1706, 0.0
  %v1767 = vmax.f32 %v1707, 0.0
  %v1768 = vmax.f32 %v1708, 0.0
  %v1769 = vmax.f32 %v1709, 0.0
  %v1770 = vmax.f32 %v1710, 0.0
  %v1771 = vmax.f32 %v1711, 0.0
  %v1772 = vmax.f32 %v1712, 0.0
  %v1773 = vmax.f32 %v1713, 0.0
  %v1774 = vmax.f32 %v1714, 0.0
  %v1775 = vmax.f32 %v1715, 0.0
  %v1776 = vmax.f32 %v1716, 0.0
  %v1777 = vmax.f32 %v1717, 0.0
  %v1778 = vmax.f32 %v1718, 0.0
  %v1779 = vmax.f32 %v1719, %v1749
  %v1780 = vmax.f32 %v1720, %v1750
  %v1781 = vmax.f32 %v1721, %v1751
  %v1782 = vmax.f32 %v1722, %v1752
  %v1783 = vmax.f32 %v1723, %v1753
  %v1784 = vmax.f32 %v1724, %v1754
  %v1785 = vmax.f32 %v1725, %v1755
  %v1786 = vmax.f32 %v1726, %v1756
  %v1787 = vmax.f32 %v1727, %v1757
  %v1788 = vmax.f32 %v1728, %v1758
  %v1789 = vmax.f32 %v1729, %v1759
  %v1790 = vmax.f32 %v1730, %v1760
  %v1791 = vmax.f32 %v1731, %v1761
  %v1792 = vmax.f32 %v1732, %v1762
  %v1793 = vmax.f32 %v1733, %v1763
  %v1794 = vmax.f32 %v1734, %v1764
  %v1795 = vmax.f32 %v1735, %v1765
  %v1796 = vmax.f32 %v1736, %v1766
  %v1797 = vmax.f32 %v1737, %v1767
  %v1798 = vmax.f32 %v1738, %v1768
  %v1799 = vmax.f32 %v1739, %v1769
  %v1800 = vmax.f32 %v1740, %v1770
  %v1801 = vmax.f32 %v1741, %v1771
  %v1802 = vmax.f32 %v1742, %v1772
  %v1803 = vmax.f32 %v1743, %v1773
  %v1804 = vmax.f32 %v1744, %v1774
  %v1805 = vmax.f32 %v1745, %v1775
  %v1806 = vmax.f32 %v1746, %v1776
  %v1807 = vmax.f32 %v1747, %v1777
  %v1808 = vmax.f32 %v1748, %v1778
  %vm1809 = vcmask 261120
  %1810 = vst.msk [vmem:[#allocation2] sm:$0xff] %vm1809, %v495
  %1811 = vst.msk [vmem:[#allocation2 + $0x8] sm:$0xff] %vm1809, %v496
  %1812 = vst.msk [vmem:[#allocation2 + $0x10] sm:$0xff] %vm1809, %v497
  %1813 = vst.msk [vmem:[#allocation2 + $0x18] sm:$0xff] %vm1809, %v498
  %1814 = vst.msk [vmem:[#allocation2 + $0x20] sm:$0xff] %vm1809, %v499
  %1815 = vst.msk [vmem:[#allocation2 + $0x28] sm:$0xff] %vm1809, %v500
  %1816 = vst.msk [vmem:[#allocation2 + $0x30] sm:$0xff] %vm1809, %v501
  %1817 = vst.msk [vmem:[#allocation2 + $0x38] sm:$0xff] %vm1809, %v502
  %1818 = vst.msk [vmem:[#allocation2 + $0x40] sm:$0xff] %vm1809, %v503
  %1819 = vst.msk [vmem:[#allocation2 + $0x48] sm:$0xff] %vm1809, %v504
  %1820 = vst.msk [vmem:[#allocation2 + $0x50] sm:$0xff] %vm1809, %v505
  %1821 = vst.msk [vmem:[#allocation2 + $0x58] sm:$0xff] %vm1809, %v506
  %1822 = vst.msk [vmem:[#allocation2 + $0x60] sm:$0xff] %vm1809, %v507
  %1823 = vst.msk [vmem:[#allocation2 + $0x68] sm:$0xff] %vm1809, %v508
  %1824 = vst.msk [vmem:[#allocation2 + $0x70] sm:$0xff] %vm1809, %v509
  %1825 = vst.msk [vmem:[#allocation2 + $0x78] sm:$0xff] %vm1809, %v510
  %1826 = vst.msk [vmem:[#allocation2 + $0x80] sm:$0xff] %vm1809, %v511
  %1827 = vst.msk [vmem:[#allocation2 + $0x88] sm:$0xff] %vm1809, %v512
  %1828 = vst.msk [vmem:[#allocation2 + $0x90] sm:$0xff] %vm1809, %v513
  %1829 = vst.msk [vmem:[#allocation2 + $0x98] sm:$0xff] %vm1809, %v514
  %1830 = vst.msk [vmem:[#allocation2 + $0xa0] sm:$0xff] %vm1809, %v515
  %1831 = vst.msk [vmem:[#allocation2 + $0xa8] sm:$0xff] %vm1809, %v516
  %1832 = vst.msk [vmem:[#allocation2 + $0xb0] sm:$0xff] %vm1809, %v517
  %1833 = vst.msk [vmem:[#allocation2 + $0xb8] sm:$0xff] %vm1809, %v518
  %1834 = vst.msk [vmem:[#allocation2 + $0xc0] sm:$0xff] %vm1809, %v519
  %1835 = vst.msk [vmem:[#allocation2 + $0xc8] sm:$0xff] %vm1809, %v520
  %1836 = vst.msk [vmem:[#allocation2 + $0xd0] sm:$0xff] %vm1809, %v521
  %1837 = vst.msk [vmem:[#allocation2 + $0xd8] sm:$0xff] %vm1809, %v522
  %1838 = vst.msk [vmem:[#allocation2 + $0xe0] sm:$0xff] %vm1809, %v523
  %1839 = vst.msk [vmem:[#allocation2 + $0xe8] sm:$0xff] %vm1809, %v524
  %1840 = vst.msk [vmem:[#allocation2 + $0xf0] sm:$0xff] %vm1809, %v943
  %1841 = vst.msk [vmem:[#allocation2 + $0xf8] sm:$0xff] %vm1809, %v944
  %1842 = vst.msk [vmem:[#allocation2 + $0x100] sm:$0xff] %vm1809, %v945
  %1843 = vst.msk [vmem:[#allocation2 + $0x108] sm:$0xff] %vm1809, %v946
  %1844 = vst.msk [vmem:[#allocation2 + $0x110] sm:$0xff] %vm1809, %v947
  %1845 = vst.msk [vmem:[#allocation2 + $0x118] sm:$0xff] %vm1809, %v948
  %1846 = vst.msk [vmem:[#allocation2 + $0x120] sm:$0xff] %vm1809, %v949
  %1847 = vst.msk [vmem:[#allocation2 + $0x128] sm:$0xff] %vm1809, %v950
  %1848 = vst.msk [vmem:[#allocation2 + $0x130] sm:$0xff] %vm1809, %v951
  %1849 = vst.msk [vmem:[#allocation2 + $0x138] sm:$0xff] %vm1809, %v952
  %1850 = vst.msk [vmem:[#allocation2 + $0x140] sm:$0xff] %vm1809, %v953
  %1851 = vst.msk [vmem:[#allocation2 + $0x148] sm:$0xff] %vm1809, %v954
  %1852 = vst.msk [vmem:[#allocation2 + $0x150] sm:$0xff] %vm1809, %v955
  %1853 = vst.msk [vmem:[#allocation2 + $0x158] sm:$0xff] %vm1809, %v956
  %1854 = vst.msk [vmem:[#allocation2 + $0x160] sm:$0xff] %vm1809, %v957
  %1855 = vst.msk [vmem:[#allocation2 + $0x168] sm:$0xff] %vm1809, %v958
  %1856 = vst.msk [vmem:[#allocation2 + $0x170] sm:$0xff] %vm1809, %v959
  %1857 = vst.msk [vmem:[#allocation2 + $0x178] sm:$0xff] %vm1809, %v960
  %1858 = vst.msk [vmem:[#allocation2 + $0x180] sm:$0xff] %vm1809, %v961
  %1859 = vst.msk [vmem:[#allocation2 + $0x188] sm:$0xff] %vm1809, %v962
  %1860 = vst.msk [vmem:[#allocation2 + $0x190] sm:$0xff] %vm1809, %v963
  %1861 = vst.msk [vmem:[#allocation2 + $0x198] sm:$0xff] %vm1809, %v964
  %1862 = vst.msk [vmem:[#allocation2 + $0x1a0] sm:$0xff] %vm1809, %v965
  %1863 = vst.msk [vmem:[#allocation2 + $0x1a8] sm:$0xff] %vm1809, %v966
  %1864 = vst.msk [vmem:[#allocation2 + $0x1b0] sm:$0xff] %vm1809, %v967
  %1865 = vst.msk [vmem:[#allocation2 + $0x1b8] sm:$0xff] %vm1809, %v968
  %1866 = vst.msk [vmem:[#allocation2 + $0x1c0] sm:$0xff] %vm1809, %v969
  %1867 = vst.msk [vmem:[#allocation2 + $0x1c8] sm:$0xff] %vm1809, %v970
  %1868 = vst.msk [vmem:[#allocation2 + $0x1d0] sm:$0xff] %vm1809, %v971
  %1869 = vst.msk [vmem:[#allocation2 + $0x1d8] sm:$0xff] %vm1809, %v972
  %1870 = vst.msk [vmem:[#allocation2 + $0x1e0] sm:$0xff] %vm1809, %v1779
  %1871 = vst.msk [vmem:[#allocation2 + $0x1e8] sm:$0xff] %vm1809, %v1780
  %1872 = vst.msk [vmem:[#allocation2 + $0x1f0] sm:$0xff] %vm1809, %v1781
  %1873 = vst.msk [vmem:[#allocation2 + $0x1f8] sm:$0xff] %vm1809, %v1782
  %1874 = vst.msk [vmem:[#allocation2 + $0x200] sm:$0xff] %vm1809, %v1783
  %1875 = vst.msk [vmem:[#allocation2 + $0x208] sm:$0xff] %vm1809, %v1784
  %1876 = vst.msk [vmem:[#allocation2 + $0x210] sm:$0xff] %vm1809, %v1785
  %1877 = vst.msk [vmem:[#allocation2 + $0x218] sm:$0xff] %vm1809, %v1786
  %1878 = vst.msk [vmem:[#allocation2 + $0x220] sm:$0xff] %vm1809, %v1787
  %1879 = vst.msk [vmem:[#allocation2 + $0x228] sm:$0xff] %vm1809, %v1788
  %1880 = vst.msk [vmem:[#allocation2 + $0x230] sm:$0xff] %vm1809, %v1789
  %1881 = vst.msk [vmem:[#allocation2 + $0x238] sm:$0xff] %vm1809, %v1790
  %1882 = vst.msk [vmem:[#allocation2 + $0x240] sm:$0xff] %vm1809, %v1791
  %1883 = vst.msk [vmem:[#allocation2 + $0x248] sm:$0xff] %vm1809, %v1792
  %1884 = vst.msk [vmem:[#allocation2 + $0x250] sm:$0xff] %vm1809, %v1793
  %1885 = vst.msk [vmem:[#allocation2 + $0x258] sm:$0xff] %vm1809, %v1794
  %1886 = vst.msk [vmem:[#allocation2 + $0x260] sm:$0xff] %vm1809, %v1795
  %1887 = vst.msk [vmem:[#allocation2 + $0x268] sm:$0xff] %vm1809, %v1796
  %1888 = vst.msk [vmem:[#allocation2 + $0x270] sm:$0xff] %vm1809, %v1797
  %1889 = vst.msk [vmem:[#allocation2 + $0x278] sm:$0xff] %vm1809, %v1798
  %1890 = vst.msk [vmem:[#allocation2 + $0x280] sm:$0xff] %vm1809, %v1799
  %1891 = vst.msk [vmem:[#allocation2 + $0x288] sm:$0xff] %vm1809, %v1800
  %1892 = vst.msk [vmem:[#allocation2 + $0x290] sm:$0xff] %vm1809, %v1801
  %1893 = vst.msk [vmem:[#allocation2 + $0x298] sm:$0xff] %vm1809, %v1802
  %1894 = vst.msk [vmem:[#allocation2 + $0x2a0] sm:$0xff] %vm1809, %v1803
  %1895 = vst.msk [vmem:[#allocation2 + $0x2a8] sm:$0xff] %vm1809, %v1804
  %1896 = vst.msk [vmem:[#allocation2 + $0x2b0] sm:$0xff] %vm1809, %v1805
  %1897 = vst.msk [vmem:[#allocation2 + $0x2b8] sm:$0xff] %vm1809, %v1806
  %1898 = vst.msk [vmem:[#allocation2 + $0x2c0] sm:$0xff] %vm1809, %v1807
  %1899 = vst.msk [vmem:[#allocation2 + $0x2c8] sm:$0xff] %vm1809, %v1808
  %v1900 = vld [vmem:[#allocation2] sm:$0xff]
  %v1901 = vld [vmem:[#allocation2 + $0x8] sm:$0xff]
  %v1902 = vsel %vm1809, %v1900, -inf
  %1903 = vmax.xlane.f32.xlu0 %v1902
  %v1904 = vpop.xlane.xlu0 %1903
  %v1905 = vsel %vm1809, %v1901, -inf
  %1906 = vmax.xlane.f32.xlu0 %v1905
  %v1907 = vpop.xlane.xlu0 %1906
  %vm1908 = vcmask 7168
  %1909 = vst.msk [vmem:[#allocation3] sm:$0xff] %vm1908, %v1904
  %1910 = vst.msk [vmem:[#allocation3 + $0x8] sm:$0xff] %vm1908, %v1907
  %v1911 = vld [vmem:[#allocation2 + $0x10] sm:$0xff]
  %v1912 = vld [vmem:[#allocation2 + $0x18] sm:$0xff]
  %v1913 = vsel %vm1809, %v1911, -inf
  %1914 = vmax.xlane.f32.xlu0 %v1913
  %v1915 = vpop.xlane.xlu0 %1914
  %v1916 = vsel %vm1809, %v1912, -inf
  %1917 = vmax.xlane.f32.xlu0 %v1916
  %v1918 = vpop.xlane.xlu0 %1917
  %vm1919 = vcmask 15368
  %1920 = vst.msk [vmem:[#allocation3] sm:$0xff] %vm1919, %v1915
  %1921 = vst.msk [vmem:[#allocation3 + $0x8] sm:$0xff] %vm1919, %v1918
  %v1922 = vld [vmem:[#allocation2 + $0x20] sm:$0xff]
  %v1923 = vld [vmem:[#allocation2 + $0x28] sm:$0xff]
  %v1924 = vsel %vm1809, %v1922, -inf
  %1925 = vmax.xlane.f32.xlu0 %v1924
  %v1926 = vpop.xlane.xlu0 %1925
  %v1927 = vsel %vm1809, %v1923, -inf
  %1928 = vmax.xlane.f32.xlu0 %v1927
  %v1929 = vpop.xlane.xlu0 %1928
  %vm1930 = vcmask 23568
  %1931 = vst.msk [vmem:[#allocation3] sm:$0xff] %vm1930, %v1926
  %1932 = vst.msk [vmem:[#allocation3 + $0x8] sm:$0xff] %vm1930, %v1929
  %v1933 = vld [vmem:[#allocation2 + $0x30] sm:$0xff]
  %v1934 = vld [vmem:[#allocation2 + $0x38] sm:$0xff]
  %v1935 = vsel %vm1809, %v1933, -inf
  %1936 = vmax.xlane.f32.xlu0 %v1935
  %v1937 = vpop.xlane.xlu0 %1936
  %v1938 = vsel %vm1809, %v1934, -inf
  %1939 = vmax.xlane.f32.xlu0 %v1938
  %v1940 = vpop.xlane.xlu0 %1939
  %vm1941 = vcmask 31768
  %1942 = vst.msk [vmem:[#allocation3] sm:$0xff] %vm1941, %v1937
  %1943 = vst.msk [vmem:[#allocation3 + $0x8] sm:$0xff] %vm1941, %v1940
  %v1944 = vld [vmem:[#allocation2 + $0x40] sm:$0xff]
  %v1945 = vld [vmem:[#allocation2 + $0x48] sm:$0xff]
  %v1946 = vsel %vm1809, %v1944, -inf
  %1947 = vmax.xlane.f32.xlu0 %v1946
  %v1948 = vpop.xlane.xlu0 %1947
  %v1949 = vsel %vm1809, %v1945, -inf
  %1950 = vmax.xlane.f32.xlu0 %v1949
  %v1951 = vpop.xlane.xlu0 %1950
  %vm1952 = vcmask 39968
  %1953 = vst.msk [vmem:[#allocation3] sm:$0xff] %vm1952, %v1948
  %1954 = vst.msk [vmem:[#allocation3 + $0x8] sm:$0xff] %vm1952, %v1951
  %v1955 = vld [vmem:[#allocation2 + $0x50] sm:$0xff]
  %v1956 = vld [vmem:[#allocation2 + $0x58] sm:$0xff]
  %v1957 = vsel %vm1809, %v1955, -inf
  %1958 = vmax.xlane.f32.xlu0 %v1957
  %v1959 = vpop.xlane.xlu0 %1958
  %v1960 = vsel %vm1809, %v1956, -inf
  %1961 = vmax.xlane.f32.xlu0 %v1960
  %v1962 = vpop.xlane.xlu0 %1961
  %vm1963 = vcmask 48168
  %1964 = vst.msk [vmem:[#allocation3] sm:$0xff] %vm1963, %v1959
  %1965 = vst.msk [vmem:[#allocation3 + $0x8] sm:$0xff] %vm1963, %v1962
  %v1966 = vld [vmem:[#allocation2 + $0x60] sm:$0xff]
  %v1967 = vld [vmem:[#allocation2 + $0x68] sm:$0xff]
  %v1968 = vsel %vm1809, %v1966, -inf
  %1969 = vmax.xlane.f32.xlu0 %v1968
  %v1970 = vpop.xlane.xlu0 %1969
  %v1971 = vsel %vm1809, %v1967, -inf
  %1972 = vmax.xlane.f32.xlu0 %v1971
  %v1973 = vpop.xlane.xlu0 %1972
  %vm1974 = vcmask 56368
  %1975 = vst.msk [vmem:[#allocation3] sm:$0xff] %vm1974, %v1970
  %1976 = vst.msk [vmem:[#allocation3 + $0x8] sm:$0xff] %vm1974, %v1973
  %v1977 = vld [vmem:[#allocation2 + $0x70] sm:$0xff]
  %v1978 = vld [vmem:[#allocation2 + $0x78] sm:$0xff]
  %v1979 = vsel %vm1809, %v1977, -inf
  %1980 = vmax.xlane.f32.xlu0 %v1979
  %v1981 = vpop.xlane.xlu0 %1980
  %v1982 = vsel %vm1809, %v1978, -inf
  %1983 = vmax.xlane.f32.xlu0 %v1982
  %v1984 = vpop.xlane.xlu0 %1983
  %vm1985 = vcmask 64568
  %1986 = vst.msk [vmem:[#allocation3] sm:$0xff] %vm1985, %v1981
  %1987 = vst.msk [vmem:[#allocation3 + $0x8] sm:$0xff] %vm1985, %v1984
  %v1988 = vld [vmem:[#allocation2 + $0x80] sm:$0xff]
  %v1989 = vld [vmem:[#allocation2 + $0x88] sm:$0xff]
  %v1990 = vsel %vm1809, %v1988, -inf
  %1991 = vmax.xlane.f32.xlu0 %v1990
  %v1992 = vpop.xlane.xlu0 %1991
  %v1993 = vsel %vm1809, %v1989, -inf
  %1994 = vmax.xlane.f32.xlu0 %v1993
  %v1995 = vpop.xlane.xlu0 %1994
  %vm1996 = vcmask 72768
  %1997 = vst.msk [vmem:[#allocation3] sm:$0xff] %vm1996, %v1992
  %1998 = vst.msk [vmem:[#allocation3 + $0x8] sm:$0xff] %vm1996, %v1995
  %v1999 = vld [vmem:[#allocation2 + $0x90] sm:$0xff]
  %v2000 = vld [vmem:[#allocation2 + $0x98] sm:$0xff]
  %v2001 = vsel %vm1809, %v1999, -inf
  %2002 = vmax.xlane.f32.xlu0 %v2001
  %v2003 = vpop.xlane.xlu0 %2002
  %v2004 = vsel %vm1809, %v2000, -inf
  %2005 = vmax.xlane.f32.xlu0 %v2004
  %v2006 = vpop.xlane.xlu0 %2005
  %vm2007 = vcmask 80968
  %2008 = vst.msk [vmem:[#allocation3] sm:$0xff] %vm2007, %v2003
  %2009 = vst.msk [vmem:[#allocation3 + $0x8] sm:$0xff] %vm2007, %v2006
  %v2010 = vld [vmem:[#allocation2 + $0xa0] sm:$0xff]
  %v2011 = vld [vmem:[#allocation2 + $0xa8] sm:$0xff]
  %v2012 = vsel %vm1809, %v2010, -inf
  %2013 = vmax.xlane.f32.xlu0 %v2012
  %v2014 = vpop.xlane.xlu0 %2013
  %v2015 = vsel %vm1809, %v2011, -inf
  %2016 = vmax.xlane.f32.xlu0 %v2015
  %v2017 = vpop.xlane.xlu0 %2016
  %vm2018 = vcmask 89168
  %2019 = vst.msk [vmem:[#allocation3] sm:$0xff] %vm2018, %v2014
  %2020 = vst.msk [vmem:[#allocation3 + $0x8] sm:$0xff] %vm2018, %v2017
  %v2021 = vld [vmem:[#allocation2 + $0xb0] sm:$0xff]
  %v2022 = vld [vmem:[#allocation2 + $0xb8] sm:$0xff]
  %v2023 = vsel %vm1809, %v2021, -inf
  %2024 = vmax.xlane.f32.xlu0 %v2023
  %v2025 = vpop.xlane.xlu0 %2024
  %v2026 = vsel %vm1809, %v2022, -inf
  %2027 = vmax.xlane.f32.xlu0 %v2026
  %v2028 = vpop.xlane.xlu0 %2027
  %vm2029 = vcmask 97368
  %2030 = vst.msk [vmem:[#allocation3] sm:$0xff] %vm2029, %v2025
  %2031 = vst.msk [vmem:[#allocation3 + $0x8] sm:$0xff] %vm2029, %v2028
  %v2032 = vld [vmem:[#allocation2 + $0xc0] sm:$0xff]
  %v2033 = vld [vmem:[#allocation2 + $0xc8] sm:$0xff]
  %v2034 = vsel %vm1809, %v2032, -inf
  %2035 = vmax.xlane.f32.xlu0 %v2034
  %v2036 = vpop.xlane.xlu0 %2035
  %v2037 = vsel %vm1809, %v2033, -inf
  %2038 = vmax.xlane.f32.xlu0 %v2037
  %v2039 = vpop.xlane.xlu0 %2038
  %vm2040 = vcmask 105568
  %2041 = vst.msk [vmem:[#allocation3] sm:$0xff] %vm2040, %v2036
  %2042 = vst.msk [vmem:[#allocation3 + $0x8] sm:$0xff] %vm2040, %v2039
  %v2043 = vld [vmem:[#allocation2 + $0xd0] sm:$0xff]
  %v2044 = vld [vmem:[#allocation2 + $0xd8] sm:$0xff]
  %v2045 = vsel %vm1809, %v2043, -inf
  %2046 = vmax.xlane.f32.xlu0 %v2045
  %v2047 = vpop.xlane.xlu0 %2046
  %v2048 = vsel %vm1809, %v2044, -inf
  %2049 = vmax.xlane.f32.xlu0 %v2048
  %v2050 = vpop.xlane.xlu0 %2049
  %vm2051 = vcmask 113768
  %2052 = vst.msk [vmem:[#allocation3] sm:$0xff] %vm2051, %v2047
  %2053 = vst.msk [vmem:[#allocation3 + $0x8] sm:$0xff] %vm2051, %v2050
  %v2054 = vld [vmem:[#allocation2 + $0xe0] sm:$0xff]
  %v2055 = vld [vmem:[#allocation2 + $0xe8] sm:$0xff]
  %v2056 = vsel %vm1809, %v2054, -inf
  %2057 = vmax.xlane.f32.xlu0 %v2056
  %v2058 = vpop.xlane.xlu0 %2057
  %v2059 = vsel %vm1809, %v2055, -inf
  %2060 = vmax.xlane.f32.xlu0 %v2059
  %v2061 = vpop.xlane.xlu0 %2060
  %vm2062 = vcmask 121968
  %2063 = vst.msk [vmem:[#allocation3] sm:$0xff] %vm2062, %v2058
  %2064 = vst.msk [vmem:[#allocation3 + $0x8] sm:$0xff] %vm2062, %v2061
  %v2065 = vld [vmem:[#allocation2 + $0xf0] sm:$0xff]
  %v2066 = vld [vmem:[#allocation2 + $0xf8] sm:$0xff]
  %v2067 = vsel %vm1809, %v2065, -inf
  %2068 = vmax.xlane.f32.xlu0 %v2067
  %v2069 = vpop.xlane.xlu0 %2068
  %v2070 = vsel %vm1809, %v2066, -inf
  %2071 = vmax.xlane.f32.xlu0 %v2070
  %v2072 = vpop.xlane.xlu0 %2071
  %vm2073 = vcmask 130168
  %2074 = vst.msk [vmem:[#allocation3] sm:$0xff] %vm2073, %v2069
  %2075 = vst.msk [vmem:[#allocation3 + $0x8] sm:$0xff] %vm2073, %v2072
  %v2076 = vld [vmem:[#allocation2 + $0x100] sm:$0xff]
  %v2077 = vld [vmem:[#allocation2 + $0x108] sm:$0xff]
  %v2078 = vsel %vm1809, %v2076, -inf
  %2079 = vmax.xlane.f32.xlu0 %v2078
  %v2080 = vpop.xlane.xlu0 %2079
  %v2081 = vsel %vm1809, %v2077, -inf
  %2082 = vmax.xlane.f32.xlu0 %v2081
  %v2083 = vpop.xlane.xlu0 %2082
  %vm2084 = vcmask 138368
  %2085 = vst.msk [vmem:[#allocation3] sm:$0xff] %vm2084, %v2080
  %2086 = vst.msk [vmem:[#allocation3 + $0x8] sm:$0xff] %vm2084, %v2083
  %v2087 = vld [vmem:[#allocation2 + $0x110] sm:$0xff]
  %v2088 = vld [vmem:[#allocation2 + $0x118] sm:$0xff]
  %v2089 = vsel %vm1809, %v2087, -inf
  %2090 = vmax.xlane.f32.xlu0 %v2089
  %v2091 = vpop.xlane.xlu0 %2090
  %v2092 = vsel %vm1809, %v2088, -inf
  %2093 = vmax.xlane.f32.xlu0 %v2092
  %v2094 = vpop.xlane.xlu0 %2093
  %vm2095 = vcmask 146568
  %2096 = vst.msk [vmem:[#allocation3] sm:$0xff] %vm2095, %v2091
  %2097 = vst.msk [vmem:[#allocation3 + $0x8] sm:$0xff] %vm2095, %v2094
  %v2098 = vld [vmem:[#allocation2 + $0x120] sm:$0xff]
  %v2099 = vld [vmem:[#allocation2 + $0x128] sm:$0xff]
  %v2100 = vsel %vm1809, %v2098, -inf
  %2101 = vmax.xlane.f32.xlu0 %v2100
  %v2102 = vpop.xlane.xlu0 %2101
  %v2103 = vsel %vm1809, %v2099, -inf
  %2104 = vmax.xlane.f32.xlu0 %v2103
  %v2105 = vpop.xlane.xlu0 %2104
  %vm2106 = vcmask 154768
  %2107 = vst.msk [vmem:[#allocation3] sm:$0xff] %vm2106, %v2102
  %2108 = vst.msk [vmem:[#allocation3 + $0x8] sm:$0xff] %vm2106, %v2105
  %v2109 = vld [vmem:[#allocation2 + $0x130] sm:$0xff]
  %v2110 = vld [vmem:[#allocation2 + $0x138] sm:$0xff]
  %v2111 = vsel %vm1809, %v2109, -inf
  %2112 = vmax.xlane.f32.xlu0 %v2111
  %v2113 = vpop.xlane.xlu0 %2112
  %v2114 = vsel %vm1809, %v2110, -inf
  %2115 = vmax.xlane.f32.xlu0 %v2114
  %v2116 = vpop.xlane.xlu0 %2115
  %vm2117 = vcmask 162968
  %2118 = vst.msk [vmem:[#allocation3] sm:$0xff] %vm2117, %v2113
  %2119 = vst.msk [vmem:[#allocation3 + $0x8] sm:$0xff] %vm2117, %v2116
  %v2120 = vld [vmem:[#allocation2 + $0x140] sm:$0xff]
  %v2121 = vld [vmem:[#allocation2 + $0x148] sm:$0xff]
  %v2122 = vsel %vm1809, %v2120, -inf
  %2123 = vmax.xlane.f32.xlu0 %v2122
  %v2124 = vpop.xlane.xlu0 %2123
  %v2125 = vsel %vm1809, %v2121, -inf
  %2126 = vmax.xlane.f32.xlu0 %v2125
  %v2127 = vpop.xlane.xlu0 %2126
  %vm2128 = vcmask 171168
  %2129 = vst.msk [vmem:[#allocation3] sm:$0xff] %vm2128, %v2124
  %2130 = vst.msk [vmem:[#allocation3 + $0x8] sm:$0xff] %vm2128, %v2127
  %v2131 = vld [vmem:[#allocation2 + $0x150] sm:$0xff]
  %v2132 = vld [vmem:[#allocation2 + $0x158] sm:$0xff]
  %v2133 = vsel %vm1809, %v2131, -inf
  %2134 = vmax.xlane.f32.xlu0 %v2133
  %v2135 = vpop.xlane.xlu0 %2134
  %v2136 = vsel %vm1809, %v2132, -inf
  %2137 = vmax.xlane.f32.xlu0 %v2136
  %v2138 = vpop.xlane.xlu0 %2137
  %vm2139 = vcmask 179368
  %2140 = vst.msk [vmem:[#allocation3] sm:$0xff] %vm2139, %v2135
  %2141 = vst.msk [vmem:[#allocation3 + $0x8] sm:$0xff] %vm2139, %v2138
  %v2142 = vld [vmem:[#allocation2 + $0x160] sm:$0xff]
  %v2143 = vld [vmem:[#allocation2 + $0x168] sm:$0xff]
  %v2144 = vsel %vm1809, %v2142, -inf
  %2145 = vmax.xlane.f32.xlu0 %v2144
  %v2146 = vpop.xlane.xlu0 %2145
  %v2147 = vsel %vm1809, %v2143, -inf
  %2148 = vmax.xlane.f32.xlu0 %v2147
  %v2149 = vpop.xlane.xlu0 %2148
  %vm2150 = vcmask 187568
  %2151 = vst.msk [vmem:[#allocation3] sm:$0xff] %vm2150, %v2146
  %2152 = vst.msk [vmem:[#allocation3 + $0x8] sm:$0xff] %vm2150, %v2149
  %v2153 = vld [vmem:[#allocation2 + $0x170] sm:$0xff]
  %v2154 = vld [vmem:[#allocation2 + $0x178] sm:$0xff]
  %v2155 = vsel %vm1809, %v2153, -inf
  %2156 = vmax.xlane.f32.xlu0 %v2155
  %v2157 = vpop.xlane.xlu0 %2156
  %v2158 = vsel %vm1809, %v2154, -inf
  %2159 = vmax.xlane.f32.xlu0 %v2158
  %v2160 = vpop.xlane.xlu0 %2159
  %vm2161 = vcmask 195768
  %2162 = vst.msk [vmem:[#allocation3] sm:$0xff] %vm2161, %v2157
  %2163 = vst.msk [vmem:[#allocation3 + $0x8] sm:$0xff] %vm2161, %v2160
  %v2164 = vld [vmem:[#allocation2 + $0x180] sm:$0xff]
  %v2165 = vld [vmem:[#allocation2 + $0x188] sm:$0xff]
  %v2166 = vsel %vm1809, %v2164, -inf
  %2167 = vmax.xlane.f32.xlu0 %v2166
  %v2168 = vpop.xlane.xlu0 %2167
  %v2169 = vsel %vm1809, %v2165, -inf
  %2170 = vmax.xlane.f32.xlu0 %v2169
  %v2171 = vpop.xlane.xlu0 %2170
  %vm2172 = vcmask 203968
  %2173 = vst.msk [vmem:[#allocation3] sm:$0xff] %vm2172, %v2168
  %2174 = vst.msk [vmem:[#allocation3 + $0x8] sm:$0xff] %vm2172, %v2171
  %v2175 = vld [vmem:[#allocation2 + $0x190] sm:$0xff]
  %v2176 = vld [vmem:[#allocation2 + $0x198] sm:$0xff]
  %v2177 = vsel %vm1809, %v2175, -inf
  %2178 = vmax.xlane.f32.xlu0 %v2177
  %v2179 = vpop.xlane.xlu0 %2178
  %v2180 = vsel %vm1809, %v2176, -inf
  %2181 = vmax.xlane.f32.xlu0 %v2180
  %v2182 = vpop.xlane.xlu0 %2181
  %vm2183 = vcmask 212168
  %2184 = vst.msk [vmem:[#allocation3] sm:$0xff] %vm2183, %v2179
  %2185 = vst.msk [vmem:[#allocation3 + $0x8] sm:$0xff] %vm2183, %v2182
  %v2186 = vld [vmem:[#allocation2 + $0x1a0] sm:$0xff]
  %v2187 = vld [vmem:[#allocation2 + $0x1a8] sm:$0xff]
  %v2188 = vsel %vm1809, %v2186, -inf
  %2189 = vmax.xlane.f32.xlu0 %v2188
  %v2190 = vpop.xlane.xlu0 %2189
  %v2191 = vsel %vm1809, %v2187, -inf
  %2192 = vmax.xlane.f32.xlu0 %v2191
  %v2193 = vpop.xlane.xlu0 %2192
  %vm2194 = vcmask 220368
  %2195 = vst.msk [vmem:[#allocation3] sm:$0xff] %vm2194, %v2190
  %2196 = vst.msk [vmem:[#allocation3 + $0x8] sm:$0xff] %vm2194, %v2193
  %v2197 = vld [vmem:[#allocation2 + $0x1b0] sm:$0xff]
  %v2198 = vld [vmem:[#allocation2 + $0x1b8] sm:$0xff]
  %v2199 = vsel %vm1809, %v2197, -inf
  %2200 = vmax.xlane.f32.xlu0 %v2199
  %v2201 = vpop.xlane.xlu0 %2200
  %v2202 = vsel %vm1809, %v2198, -inf
  %2203 = vmax.xlane.f32.xlu0 %v2202
  %v2204 = vpop.xlane.xlu0 %2203
  %vm2205 = vcmask 228568
  %2206 = vst.msk [vmem:[#allocation3] sm:$0xff] %vm2205, %v2201
  %2207 = vst.msk [vmem:[#allocation3 + $0x8] sm:$0xff] %vm2205, %v2204
  %v2208 = vld [vmem:[#allocation2 + $0x1c0] sm:$0xff]
  %v2209 = vld [vmem:[#allocation2 + $0x1c8] sm:$0xff]
  %v2210 = vsel %vm1809, %v2208, -inf
  %2211 = vmax.xlane.f32.xlu0 %v2210
  %v2212 = vpop.xlane.xlu0 %2211
  %v2213 = vsel %vm1809, %v2209, -inf
  %2214 = vmax.xlane.f32.xlu0 %v2213
  %v2215 = vpop.xlane.xlu0 %2214
  %vm2216 = vcmask 236768
  %2217 = vst.msk [vmem:[#allocation3] sm:$0xff] %vm2216, %v2212
  %2218 = vst.msk [vmem:[#allocation3 + $0x8] sm:$0xff] %vm2216, %v2215
  %v2219 = vld [vmem:[#allocation2 + $0x1d0] sm:$0xff]
  %v2220 = vld [vmem:[#allocation2 + $0x1d8] sm:$0xff]
  %v2221 = vsel %vm1809, %v2219, -inf
  %2222 = vmax.xlane.f32.xlu0 %v2221
  %v2223 = vpop.xlane.xlu0 %2222
  %v2224 = vsel %vm1809, %v2220, -inf
  %2225 = vmax.xlane.f32.xlu0 %v2224
  %v2226 = vpop.xlane.xlu0 %2225
  %vm2227 = vcmask 244968
  %2228 = vst.msk [vmem:[#allocation3] sm:$0xff] %vm2227, %v2223
  %2229 = vst.msk [vmem:[#allocation3 + $0x8] sm:$0xff] %vm2227, %v2226
  %v2230 = vld [vmem:[#allocation2 + $0x1e0] sm:$0xff]
  %v2231 = vld [vmem:[#allocation2 + $0x1e8] sm:$0xff]
  %v2232 = vsel %vm1809, %v2230, -inf
  %2233 = vmax.xlane.f32.xlu0 %v2232
  %v2234 = vpop.xlane.xlu0 %2233
  %v2235 = vsel %vm1809, %v2231, -inf
  %2236 = vmax.xlane.f32.xlu0 %v2235
  %v2237 = vpop.xlane.xlu0 %2236
  %vm2238 = vcmask 253168
  %2239 = vst.msk [vmem:[#allocation3] sm:$0xff] %vm2238, %v2234
  %2240 = vst.msk [vmem:[#allocation3 + $0x8] sm:$0xff] %vm2238, %v2237
  %v2241 = vld [vmem:[#allocation2 + $0x1f0] sm:$0xff]
  %v2242 = vld [vmem:[#allocation2 + $0x1f8] sm:$0xff]
  %v2243 = vsel %vm1809, %v2241, -inf
  %2244 = vmax.xlane.f32.xlu0 %v2243
  %v2245 = vpop.xlane.xlu0 %2244
  %v2246 = vsel %vm1809, %v2242, -inf
  %2247 = vmax.xlane.f32.xlu0 %v2246
  %v2248 = vpop.xlane.xlu0 %2247
  %vm2249 = vcmask 261368
  %2250 = vst.msk [vmem:[#allocation3] sm:$0xff] %vm2249, %v2245
  %2251 = vst.msk [vmem:[#allocation3 + $0x8] sm:$0xff] %vm2249, %v2248
  %v2252 = vld [vmem:[#allocation2 + $0x200] sm:$0xff]
  %v2253 = vld [vmem:[#allocation2 + $0x208] sm:$0xff]
  %v2254 = vsel %vm1809, %v2252, -inf
  %2255 = vmax.xlane.f32.xlu0 %v2254
  %v2256 = vpop.xlane.xlu0 %2255
  %v2257 = vsel %vm1809, %v2253, -inf
  %2258 = vmax.xlane.f32.xlu0 %v2257
  %v2259 = vpop.xlane.xlu0 %2258
  %vm2260 = vcmask 269568
  %2261 = vst.msk [vmem:[#allocation3] sm:$0xff] %vm2260, %v2256
  %2262 = vst.msk [vmem:[#allocation3 + $0x8] sm:$0xff] %vm2260, %v2259
  %v2263 = vld [vmem:[#allocation2 + $0x210] sm:$0xff]
  %v2264 = vld [vmem:[#allocation2 + $0x218] sm:$0xff]
  %v2265 = vsel %vm1809, %v2263, -inf
  %2266 = vmax.xlane.f32.xlu0 %v2265
  %v2267 = vpop.xlane.xlu0 %2266
  %v2268 = vsel %vm1809, %v2264, -inf
  %2269 = vmax.xlane.f32.xlu0 %v2268
  %v2270 = vpop.xlane.xlu0 %2269
  %vm2271 = vcmask 277768
  %2272 = vst.msk [vmem:[#allocation3] sm:$0xff] %vm2271, %v2267
  %2273 = vst.msk [vmem:[#allocation3 + $0x8] sm:$0xff] %vm2271, %v2270
  %v2274 = vld [vmem:[#allocation2 + $0x220] sm:$0xff]
  %v2275 = vld [vmem:[#allocation2 + $0x228] sm:$0xff]
  %v2276 = vsel %vm1809, %v2274, -inf
  %2277 = vmax.xlane.f32.xlu0 %v2276
  %v2278 = vpop.xlane.xlu0 %2277
  %v2279 = vsel %vm1809, %v2275, -inf
  %2280 = vmax.xlane.f32.xlu0 %v2279
  %v2281 = vpop.xlane.xlu0 %2280
  %vm2282 = vcmask 285968
  %2283 = vst.msk [vmem:[#allocation3] sm:$0xff] %vm2282, %v2278
  %2284 = vst.msk [vmem:[#allocation3 + $0x8] sm:$0xff] %vm2282, %v2281
  %v2285 = vld [vmem:[#allocation2 + $0x230] sm:$0xff]
  %v2286 = vld [vmem:[#allocation2 + $0x238] sm:$0xff]
  %v2287 = vsel %vm1809, %v2285, -inf
  %2288 = vmax.xlane.f32.xlu0 %v2287
  %v2289 = vpop.xlane.xlu0 %2288
  %v2290 = vsel %vm1809, %v2286, -inf
  %2291 = vmax.xlane.f32.xlu0 %v2290
  %v2292 = vpop.xlane.xlu0 %2291
  %vm2293 = vcmask 294168
  %2294 = vst.msk [vmem:[#allocation3] sm:$0xff] %vm2293, %v2289
  %2295 = vst.msk [vmem:[#allocation3 + $0x8] sm:$0xff] %vm2293, %v2292
  %v2296 = vld [vmem:[#allocation2 + $0x240] sm:$0xff]
  %v2297 = vld [vmem:[#allocation2 + $0x248] sm:$0xff]
  %v2298 = vsel %vm1809, %v2296, -inf
  %2299 = vmax.xlane.f32.xlu0 %v2298
  %v2300 = vpop.xlane.xlu0 %2299
  %v2301 = vsel %vm1809, %v2297, -inf
  %2302 = vmax.xlane.f32.xlu0 %v2301
  %v2303 = vpop.xlane.xlu0 %2302
  %vm2304 = vcmask 302368
  %2305 = vst.msk [vmem:[#allocation3] sm:$0xff] %vm2304, %v2300
  %2306 = vst.msk [vmem:[#allocation3 + $0x8] sm:$0xff] %vm2304, %v2303
  %v2307 = vld [vmem:[#allocation2 + $0x250] sm:$0xff]
  %v2308 = vld [vmem:[#allocation2 + $0x258] sm:$0xff]
  %v2309 = vsel %vm1809, %v2307, -inf
  %2310 = vmax.xlane.f32.xlu0 %v2309
  %v2311 = vpop.xlane.xlu0 %2310
  %v2312 = vsel %vm1809, %v2308, -inf
  %2313 = vmax.xlane.f32.xlu0 %v2312
  %v2314 = vpop.xlane.xlu0 %2313
  %vm2315 = vcmask 310568
  %2316 = vst.msk [vmem:[#allocation3] sm:$0xff] %vm2315, %v2311
  %2317 = vst.msk [vmem:[#allocation3 + $0x8] sm:$0xff] %vm2315, %v2314
  %v2318 = vld [vmem:[#allocation2 + $0x260] sm:$0xff]
  %v2319 = vld [vmem:[#allocation2 + $0x268] sm:$0xff]
  %v2320 = vsel %vm1809, %v2318, -inf
  %2321 = vmax.xlane.f32.xlu0 %v2320
  %v2322 = vpop.xlane.xlu0 %2321
  %v2323 = vsel %vm1809, %v2319, -inf
  %2324 = vmax.xlane.f32.xlu0 %v2323
  %v2325 = vpop.xlane.xlu0 %2324
  %vm2326 = vcmask 318768
  %2327 = vst.msk [vmem:[#allocation3] sm:$0xff] %vm2326, %v2322
  %2328 = vst.msk [vmem:[#allocation3 + $0x8] sm:$0xff] %vm2326, %v2325
  %v2329 = vld [vmem:[#allocation2 + $0x270] sm:$0xff]
  %v2330 = vld [vmem:[#allocation2 + $0x278] sm:$0xff]
  %v2331 = vsel %vm1809, %v2329, -inf
  %2332 = vmax.xlane.f32.xlu0 %v2331
  %v2333 = vpop.xlane.xlu0 %2332
  %v2334 = vsel %vm1809, %v2330, -inf
  %2335 = vmax.xlane.f32.xlu0 %v2334
  %v2336 = vpop.xlane.xlu0 %2335
  %vm2337 = vcmask 326968
  %2338 = vst.msk [vmem:[#allocation3] sm:$0xff] %vm2337, %v2333
  %2339 = vst.msk [vmem:[#allocation3 + $0x8] sm:$0xff] %vm2337, %v2336
  %v2340 = vld [vmem:[#allocation2 + $0x280] sm:$0xff]
  %v2341 = vld [vmem:[#allocation2 + $0x288] sm:$0xff]
  %v2342 = vsel %vm1809, %v2340, -inf
  %2343 = vmax.xlane.f32.xlu0 %v2342
  %v2344 = vpop.xlane.xlu0 %2343
  %v2345 = vsel %vm1809, %v2341, -inf
  %2346 = vmax.xlane.f32.xlu0 %v2345
  %v2347 = vpop.xlane.xlu0 %2346
  %vm2348 = vcmask 335168
  %2349 = vst.msk [vmem:[#allocation3] sm:$0xff] %vm2348, %v2344
  %2350 = vst.msk [vmem:[#allocation3 + $0x8] sm:$0xff] %vm2348, %v2347
  %v2351 = vld [vmem:[#allocation2 + $0x290] sm:$0xff]
  %v2352 = vld [vmem:[#allocation2 + $0x298] sm:$0xff]
  %v2353 = vsel %vm1809, %v2351, -inf
  %2354 = vmax.xlane.f32.xlu0 %v2353
  %v2355 = vpop.xlane.xlu0 %2354
  %v2356 = vsel %vm1809, %v2352, -inf
  %2357 = vmax.xlane.f32.xlu0 %v2356
  %v2358 = vpop.xlane.xlu0 %2357
  %vm2359 = vcmask 343368
  %2360 = vst.msk [vmem:[#allocation3] sm:$0xff] %vm2359, %v2355
  %2361 = vst.msk [vmem:[#allocation3 + $0x8] sm:$0xff] %vm2359, %v2358
  %v2362 = vld [vmem:[#allocation2 + $0x2a0] sm:$0xff]
  %v2363 = vld [vmem:[#allocation2 + $0x2a8] sm:$0xff]
  %v2364 = vsel %vm1809, %v2362, -inf
  %2365 = vmax.xlane.f32.xlu0 %v2364
  %v2366 = vpop.xlane.xlu0 %2365
  %v2367 = vsel %vm1809, %v2363, -inf
  %2368 = vmax.xlane.f32.xlu0 %v2367
  %v2369 = vpop.xlane.xlu0 %2368
  %vm2370 = vcmask 351568
  %2371 = vst.msk [vmem:[#allocation3] sm:$0xff] %vm2370, %v2366
  %2372 = vst.msk [vmem:[#allocation3 + $0x8] sm:$0xff] %vm2370, %v2369
  %v2373 = vld [vmem:[#allocation2 + $0x2b0] sm:$0xff]
  %v2374 = vld [vmem:[#allocation2 + $0x2b8] sm:$0xff]
  %v2375 = vsel %vm1809, %v2373, -inf
  %2376 = vmax.xlane.f32.xlu0 %v2375
  %v2377 = vpop.xlane.xlu0 %2376
  %v2378 = vsel %vm1809, %v2374, -inf
  %2379 = vmax.xlane.f32.xlu0 %v2378
  %v2380 = vpop.xlane.xlu0 %2379
  %vm2381 = vcmask 359768
  %2382 = vst.msk [vmem:[#allocation3] sm:$0xff] %vm2381, %v2377
  %2383 = vst.msk [vmem:[#allocation3 + $0x8] sm:$0xff] %vm2381, %v2380
  %v2384 = vld [vmem:[#allocation2 + $0x2c0] sm:$0xff]
  %v2385 = vld [vmem:[#allocation2 + $0x2c8] sm:$0xff]
  %v2386 = vsel %vm1809, %v2384, -inf
  %2387 = vmax.xlane.f32.xlu0 %v2386
  %v2388 = vpop.xlane.xlu0 %2387
  %v2389 = vsel %vm1809, %v2385, -inf
  %2390 = vmax.xlane.f32.xlu0 %v2389
  %v2391 = vpop.xlane.xlu0 %2390
  %vm2392 = vcmask 367968
  %2393 = vst.msk [vmem:[#allocation3] sm:$0xff] %vm2392, %v2388
  %2394 = vst.msk [vmem:[#allocation3 + $0x8] sm:$0xff] %vm2392, %v2391
  %v2395 = vld [vmem:[#allocation3] sm:$0xff]
  %v2396 = vld [vmem:[#allocation3 + $0x8] sm:$0xff]
  %v2397 = vld [vmem:[%s13] sm:$0xff]
  %v2398 = vld [vmem:[%s13 + $0x8] sm:$0xff]
  %v2399 = vld [vmem:[%s13 + $0x10] sm:$0xff]
  %v2400 = vld [vmem:[%s13 + $0x18] sm:$0xff]
  %v2401 = vld [vmem:[%s13 + $0x20] sm:$0xff]
  %v2402 = vld [vmem:[%s13 + $0x28] sm:$0x1f]
  %v2403 = vld [vmem:[%s14] sm:$0x1]
  %v2405 = vlaneseq
  %v2406 = vshrl.u32 %v2405, 7
  %v2407 = vsub.s32 0, %v2406
  %v2408 = vrot.slane %v2403, %v2407
  %vm2410 = vcmask 367616
  %v2412 = vsel %vm2410, %v2395, 0
  %v2415 = vsel %vm2410, %v2396, 0
  %vm2417 = vcmask 1044480
  %v2419 = vsel %vm2417, %v2402, 0
  %2421 = vmatprep.subr.mxu0 0.0
  %2422 = vmatpush1.msra.mxu0 0.0
  %2423 = vmatprep.subr.mxu0 0.0
  %2424 = vmatpush1.msra.mxu0 0.0
  %2425 = vmatprep.subr.mxu0 0.0
  %2426 = vmatpush1.msra.mxu0 0.0
  %2427 = vmatprep.subr.mxu0 0.0
  %2428 = vmatpush1.msra.mxu0 0.0
  %2429 = vmatprep.subr.mxu0 0.0
  %2430 = vmatpush1.msra.mxu0 0.0
  %2431 = vmatprep.subr.mxu0 0.0
  %2432 = vmatpush1.msra.mxu0 0.0
  %2433 = vmatprep.subr.mxu0 0.0
  %2434 = vmatpush1.msra.mxu0 0.0
  %2435 = vmatprep.subr.mxu0 0.0
  %2436 = vmatpush1.msra.mxu0 0.0
  %2437 = vmatprep.subr.mxu0 0.0
  %2438 = vmatpush1.msra.mxu0 0.0
  %2439 = vmatprep.subr.mxu0 0.0
  %2440 = vmatpush1.msra.mxu0 0.0
  %2441 = vmatprep.subr.mxu0 0.0
  %2442 = vmatpush1.msra.mxu0 %v2419
  %2443 = vmatprep.subr.mxu0 0.0
  %2444 = vmatpush1.msra.mxu0 %v2401
  %2445 = vmatprep.subr.mxu0 0.0
  %2446 = vmatpush1.msra.mxu0 %v2400
  %2447 = vmatprep.subr.mxu0 0.0
  %2448 = vmatpush1.msra.mxu0 %v2399
  %2449 = vmatprep.subr.mxu0 0.0
  %2450 = vmatpush1.msra.mxu0 %v2398
  %2451 = vmatprep.subr.mxu0 0.0
  %2452 = vmatpush1.msra.mxu0 %v2397
  %2453 = vmatprep.subr.mxu0 0.0
  %2454 = vmatpush2.msra.mxu0 0.0
  %2455 = vmatprep.subr.mxu0 0.0
  %2456 = vmatpush2.msra.mxu0 0.0
  %2457 = vmatprep.subr.mxu0 0.0
  %2458 = vmatpush2.msra.mxu0 0.0
  %2459 = vmatprep.subr.mxu0 0.0
  %2460 = vmatpush2.msra.mxu0 0.0
  %2461 = vmatprep.subr.mxu0 0.0
  %2462 = vmatpush2.msra.mxu0 0.0
  %2463 = vmatprep.subr.mxu0 0.0
  %2464 = vmatpush2.msra.mxu0 0.0
  %2465 = vmatprep.subr.mxu0 0.0
  %2466 = vmatpush2.msra.mxu0 0.0
  %2467 = vmatprep.subr.mxu0 0.0
  %2468 = vmatpush2.msra.mxu0 0.0
  %2469 = vmatprep.subr.mxu0 0.0
  %2470 = vmatpush2.msra.mxu0 0.0
  %2471 = vmatprep.subr.mxu0 0.0
  %2472 = vmatpush2.msra.mxu0 0.0
  %2473 = vmatprep.subr.mxu0 0.0
  %2474 = vmatpush2.msra.mxu0 0.0
  %2475 = vmatprep.subr.mxu0 0.0
  %2476 = vmatpush2.msra.mxu0 0.0
  %2477 = vmatprep.subr.mxu0 0.0
  %2478 = vmatpush2.msra.mxu0 0.0
  %2479 = vmatprep.subr.mxu0 0.0
  %2480 = vmatpush2.msra.mxu0 0.0
  %2481 = vmatprep.subr.mxu0 0.0
  %2482 = vmatpush2.msra.mxu0 0.0
  %2483 = vmatprep.subr.mxu0 0.0
  %2484 = vmatpush2.msra.mxu0 0.0
  %2485 = vmatprep.mubr.f32.mxu0 0.0
  %2486 = vmatmul.mubr.f32.gmra.mxu0 %v2412
  %v2487 = vpop.f32.mrf.mxu0
  %v2488 = vadd.f32 %v2408, %v2487
  %v2489 = vpop.f32.mrf.mxu0
  %2490 = vmatprep.mubr.f32.mxu0 0.0
  %2491 = vmatmul.mubr.f32.gmra.mxu0 %v2415
  %v2492 = vpop.f32.mrf.mxu0
  %v2493 = vadd.f32 %v2408, %v2492
  %v2494 = vpop.f32.mrf.mxu0
  %2495 = vdwg.mxu0
  %v2496 = vmax.f32 %v2488, 0.0
  %v2497 = vmax.f32 %v2493, 0.0
  %v2498 = vld [vmem:[%s15] sm:$0x1f]
  %v2499 = vld [vmem:[%s16] sm:$0x1]
  %v2501 = vlaneseq
  %v2502 = vshrl.u32 %v2501, 7
  %v2503 = vsub.s32 0, %v2502
  %v2504 = vrot.slane %v2499, %v2503
  %vm2506 = vcmask 39936
  %v2508 = vsel %vm2506, %v2496, 0
  %v2511 = vsel %vm2506, %v2497, 0
  %v2514 = vsel %vm2417, %v2498, 0
  %2516 = vmatprep.subr.mxu0 0.0
  %2517 = vmatpush1.msra.mxu0 0.0
  %2518 = vmatprep.subr.mxu0 0.0
  %2519 = vmatpush1.msra.mxu0 0.0
  %2520 = vmatprep.subr.mxu0 0.0
  %2521 = vmatpush1.msra.mxu0 0.0
  %2522 = vmatprep.subr.mxu0 0.0
  %2523 = vmatpush1.msra.mxu0 0.0
  %2524 = vmatprep.subr.mxu0 0.0
  %2525 = vmatpush1.msra.mxu0 0.0
  %2526 = vmatprep.subr.mxu0 0.0
  %2527 = vmatpush1.msra.mxu0 0.0
  %2528 = vmatprep.subr.mxu0 0.0
  %2529 = vmatpush1.msra.mxu0 0.0
  %2530 = vmatprep.subr.mxu0 0.0
  %2531 = vmatpush1.msra.mxu0 0.0
  %2532 = vmatprep.subr.mxu0 0.0
  %2533 = vmatpush1.msra.mxu0 0.0
  %2534 = vmatprep.subr.mxu0 0.0
  %2535 = vmatpush1.msra.mxu0 0.0
  %2536 = vmatprep.subr.mxu0 0.0
  %2537 = vmatpush1.msra.mxu0 0.0
  %2538 = vmatprep.subr.mxu0 0.0
  %2539 = vmatpush1.msra.mxu0 0.0
  %2540 = vmatprep.subr.mxu0 0.0
  %2541 = vmatpush1.msra.mxu0 0.0
  %2542 = vmatprep.subr.mxu0 0.0
  %2543 = vmatpush1.msra.mxu0 0.0
  %2544 = vmatprep.subr.mxu0 0.0
  %2545 = vmatpush1.msra.mxu0 0.0
  %2546 = vmatprep.subr.mxu0 0.0
  %2547 = vmatpush1.msra.mxu0 %v2514
  %2548 = vmatprep.subr.mxu0 0.0
  %2549 = vmatpush2.msra.mxu0 0.0
  %2550 = vmatprep.subr.mxu0 0.0
  %2551 = vmatpush2.msra.mxu0 0.0
  %2552 = vmatprep.subr.mxu0 0.0
  %2553 = vmatpush2.msra.mxu0 0.0
  %2554 = vmatprep.subr.mxu0 0.0
  %2555 = vmatpush2.msra.mxu0 0.0
  %2556 = vmatprep.subr.mxu0 0.0
  %2557 = vmatpush2.msra.mxu0 0.0
  %2558 = vmatprep.subr.mxu0 0.0
  %2559 = vmatpush2.msra.mxu0 0.0
  %2560 = vmatprep.subr.mxu0 0.0
  %2561 = vmatpush2.msra.mxu0 0.0
  %2562 = vmatprep.subr.mxu0 0.0
  %2563 = vmatpush2.msra.mxu0 0.0
  %2564 = vmatprep.subr.mxu0 0.0
  %2565 = vmatpush2.msra.mxu0 0.0
  %2566 = vmatprep.subr.mxu0 0.0
  %2567 = vmatpush2.msra.mxu0 0.0
  %2568 = vmatprep.subr.mxu0 0.0
  %2569 = vmatpush2.msra.mxu0 0.0
  %2570 = vmatprep.subr.mxu0 0.0
  %2571 = vmatpush2.msra.mxu0 0.0
  %2572 = vmatprep.subr.mxu0 0.0
  %2573 = vmatpush2.msra.mxu0 0.0
  %2574 = vmatprep.subr.mxu0 0.0
  %2575 = vmatpush2.msra.mxu0 0.0
  %2576 = vmatprep.subr.mxu0 0.0
  %2577 = vmatpush2.msra.mxu0 0.0
  %2578 = vmatprep.subr.mxu0 0.0
  %2579 = vmatpush2.msra.mxu0 0.0
  %2580 = vmatprep.mubr.f32.mxu0 0.0
  %2581 = vmatmul.mubr.f32.gmra.mxu0 %v2508
  %v2582 = vpop.f32.mrf.mxu0
  %v2583 = vadd.f32 %v2504, %v2582
  %v2584 = vpop.f32.mrf.mxu0
  %2585 = vmatprep.mubr.f32.mxu0 0.0
  %2586 = vmatmul.mubr.f32.gmra.mxu0 %v2511
  %v2587 = vpop.f32.mrf.mxu0
  %v2588 = vadd.f32 %v2504, %v2587
  %v2589 = vpop.f32.mrf.mxu0
  %2590 = vdwg.mxu0
  %v2591 = vxor.u32 %v2583, 2147483648
  %v2592 = vxor.u32 %v2588, 2147483648
  %v2593 = vmul.f32 %v2591, 1.442695
  %v2594 = vpow.pop %v2593
  %v2595 = vmul.f32 %v2592, 1.442695
  %v2596 = vpow.pop %v2595
  %v2597 = vadd.f32 %v2594, 1.0
  %v2598 = vadd.f32 %v2596, 1.0
  %v2599 = vrcp.pop %v2597
  %v2600 = vmul.f32 1.0, %v2599
  %v2601 = vrcp.pop %v2598
  %v2602 = vmul.f32 1.0, %v2601
  %2603 = vst.msk [vmem:[#allocation3] sm:$0xff] %vm2410, %v2600
  %2604 = vst.msk [vmem:[#allocation3 + $0x8] sm:$0xff] %vm2410, %v2602
  %v2605 = vld [vmem:[#allocation2] sm:$0xff]
  %v2606 = vld [vmem:[#allocation2 + $0x8] sm:$0xff]
  %v2607 = vld [vmem:[#allocation3] sm:$0xff]
  %v2608 = vld [vmem:[#allocation3 + $0x8] sm:$0xff]
  %2610 = vset.pattern.permute.xlu0 0
  %2611 = vperm.xlu0 %2610, %v2607
  %v2612 = vpop.permute.xlu0 %2611
  %2615 = vset.pattern.permute.xlu0 0
  %2616 = vperm.xlu0 %2615, %v2608
  %v2617 = vpop.permute.xlu0 %2616
  %v2619 = vmul.f32 %v2605, %v2612
  %v2620 = vmul.f32 %v2606, %v2617
  %2621 = vst.msk [vmem:[#allocation4] sm:$0xff] %vm1809, %v2619
  %2622 = vst.msk [vmem:[#allocation4 + $0x60] sm:$0xff] %vm1809, %v2620
  %v2623 = vld [vmem:[#allocation2 + $0x10] sm:$0xff]
  %v2624 = vld [vmem:[#allocation2 + $0x18] sm:$0xff]
  %v2625 = vld [vmem:[#allocation3] sm:$0xff]
  %v2626 = vld [vmem:[#allocation3 + $0x8] sm:$0xff]
  %2628 = vset.pattern.permute.xlu0 1
  %2629 = vperm.xlu0 %2628, %v2625
  %v2630 = vpop.permute.xlu0 %2629
  %2633 = vset.pattern.permute.xlu0 1
  %2634 = vperm.xlu0 %2633, %v2626
  %v2635 = vpop.permute.xlu0 %2634
  %v2637 = vmul.f32 %v2623, %v2630
  %v2638 = vmul.f32 %v2624, %v2635
  %2641 = vrot.lane.b32.xlu0 %v2637, 32
  %v2642 = vpop.permute.xlu0 %2641
  %2643 = vrot.lane.b32.xlu0 %v2638, 32
  %v2644 = vpop.permute.xlu0 %2643
  %vm2647 = vcmask 523520
  %2648 = vst.msk [vmem:[#allocation4] sm:$0xff] %vm2647, %v2642
  %2649 = vst.msk [vmem:[#allocation4 + $0x60] sm:$0xff] %vm2647, %v2644
  %v2650 = vld [vmem:[#allocation2 + $0x20] sm:$0xff]
  %v2651 = vld [vmem:[#allocation2 + $0x28] sm:$0xff]
  %v2652 = vld [vmem:[#allocation3] sm:$0xff]
  %v2653 = vld [vmem:[#allocation3 + $0x8] sm:$0xff]
  %2655 = vset.pattern.permute.xlu0 2
  %2656 = vperm.xlu0 %2655, %v2652
  %v2657 = vpop.permute.xlu0 %2656
  %2660 = vset.pattern.permute.xlu0 2
  %2661 = vperm.xlu0 %2660, %v2653
  %v2662 = vpop.permute.xlu0 %2661
  %v2664 = vmul.f32 %v2650, %v2657
  %v2665 = vmul.f32 %v2651, %v2662
  %2668 = vrot.lane.b32.xlu0 %v2664, 64
  %v2669 = vpop.permute.xlu0 %2668
  %2670 = vrot.lane.b32.xlu0 %v2665, 64
  %v2671 = vpop.permute.xlu0 %2670
  %vm2674 = vcmask 785920
  %2675 = vst.msk [vmem:[#allocation4] sm:$0xff] %vm2674, %v2669
  %2676 = vst.msk [vmem:[#allocation4 + $0x60] sm:$0xff] %vm2674, %v2671
  %v2677 = vld [vmem:[#allocation2 + $0x30] sm:$0xff]
  %v2678 = vld [vmem:[#allocation2 + $0x38] sm:$0xff]
  %v2679 = vld [vmem:[#allocation3] sm:$0xff]
  %v2680 = vld [vmem:[#allocation3 + $0x8] sm:$0xff]
  %2682 = vset.pattern.permute.xlu0 3
  %2683 = vperm.xlu0 %2682, %v2679
  %v2684 = vpop.permute.xlu0 %2683
  %2687 = vset.pattern.permute.xlu0 3
  %2688 = vperm.xlu0 %2687, %v2680
  %v2689 = vpop.permute.xlu0 %2688
  %v2691 = vmul.f32 %v2677, %v2684
  %v2692 = vmul.f32 %v2678, %v2689
  %2695 = vrot.lane.b32.xlu0 %v2691, 96
  %v2696 = vpop.permute.xlu0 %2695
  %2697 = vrot.lane.b32.xlu0 %v2692, 96
  %v2698 = vpop.permute.xlu0 %2697
  %vm2701 = vcmask 1048320
  %2702 = vst.msk [vmem:[#allocation4] sm:$0xff] %vm2701, %v2696
  %2703 = vst.msk [vmem:[#allocation4 + $0x60] sm:$0xff] %vm2701, %v2698
  %v2704 = vld [vmem:[#allocation2 + $0x40] sm:$0xff]
  %v2705 = vld [vmem:[#allocation2 + $0x48] sm:$0xff]
  %v2706 = vld [vmem:[#allocation3] sm:$0xff]
  %v2707 = vld [vmem:[#allocation3 + $0x8] sm:$0xff]
  %2709 = vset.pattern.permute.xlu0 4
  %2710 = vperm.xlu0 %2709, %v2706
  %v2711 = vpop.permute.xlu0 %2710
  %2714 = vset.pattern.permute.xlu0 4
  %2715 = vperm.xlu0 %2714, %v2707
  %v2716 = vpop.permute.xlu0 %2715
  %v2718 = vmul.f32 %v2704, %v2711
  %v2719 = vmul.f32 %v2705, %v2716
  %2720 = vst.msk [vmem:[#allocation4 + $0x8] sm:$0xff] %vm1809, %v2718
  %2721 = vst.msk [vmem:[#allocation4 + $0x68] sm:$0xff] %vm1809, %v2719
  %v2722 = vld [vmem:[#allocation2 + $0x50] sm:$0xff]
  %v2723 = vld [vmem:[#allocation2 + $0x58] sm:$0xff]
  %v2724 = vld [vmem:[#allocation3] sm:$0xff]
  %v2725 = vld [vmem:[#allocation3 + $0x8] sm:$0xff]
  %2727 = vset.pattern.permute.xlu0 5
  %2728 = vperm.xlu0 %2727, %v2724
  %v2729 = vpop.permute.xlu0 %2728
  %2732 = vset.pattern.permute.xlu0 5
  %2733 = vperm.xlu0 %2732, %v2725
  %v2734 = vpop.permute.xlu0 %2733
  %v2736 = vmul.f32 %v2722, %v2729
  %v2737 = vmul.f32 %v2723, %v2734
  %2740 = vrot.lane.b32.xlu0 %v2736, 32
  %v2741 = vpop.permute.xlu0 %2740
  %2742 = vrot.lane.b32.xlu0 %v2737, 32
  %v2743 = vpop.permute.xlu0 %2742
  %2746 = vst.msk [vmem:[#allocation4 + $0x8] sm:$0xff] %vm2647, %v2741
  %2747 = vst.msk [vmem:[#allocation4 + $0x68] sm:$0xff] %vm2647, %v2743
  %v2748 = vld [vmem:[#allocation2 + $0x60] sm:$0xff]
  %v2749 = vld [vmem:[#allocation2 + $0x68] sm:$0xff]
  %v2750 = vld [vmem:[#allocation3] sm:$0xff]
  %v2751 = vld [vmem:[#allocation3 + $0x8] sm:$0xff]
  %2753 = vset.pattern.permute.xlu0 6
  %2754 = vperm.xlu0 %2753, %v2750
  %v2755 = vpop.permute.xlu0 %2754
  %2758 = vset.pattern.permute.xlu0 6
  %2759 = vperm.xlu0 %2758, %v2751
  %v2760 = vpop.permute.xlu0 %2759
  %v2762 = vmul.f32 %v2748, %v2755
  %v2763 = vmul.f32 %v2749, %v2760
  %2766 = vrot.lane.b32.xlu0 %v2762, 64
  %v2767 = vpop.permute.xlu0 %2766
  %2768 = vrot.lane.b32.xlu0 %v2763, 64
  %v2769 = vpop.permute.xlu0 %2768
  %2772 = vst.msk [vmem:[#allocation4 + $0x8] sm:$0xff] %vm2674, %v2767
  %2773 = vst.msk [vmem:[#allocation4 + $0x68] sm:$0xff] %vm2674, %v2769
  %v2774 = vld [vmem:[#allocation2 + $0x70] sm:$0xff]
  %v2775 = vld [vmem:[#allocation2 + $0x78] sm:$0xff]
  %v2776 = vld [vmem:[#allocation3] sm:$0xff]
  %v2777 = vld [vmem:[#allocation3 + $0x8] sm:$0xff]
  %2779 = vset.pattern.permute.xlu0 7
  %2780 = vperm.xlu0 %2779, %v2776
  %v2781 = vpop.permute.xlu0 %2780
  %2784 = vset.pattern.permute.xlu0 7
  %2785 = vperm.xlu0 %2784, %v2777
  %v2786 = vpop.permute.xlu0 %2785
  %v2788 = vmul.f32 %v2774, %v2781
  %v2789 = vmul.f32 %v2775, %v2786
  %2792 = vrot.lane.b32.xlu0 %v2788, 96
  %v2793 = vpop.permute.xlu0 %2792
  %2794 = vrot.lane.b32.xlu0 %v2789, 96
  %v2795 = vpop.permute.xlu0 %2794
  %2798 = vst.msk [vmem:[#allocation4 + $0x8] sm:$0xff] %vm2701, %v2793
  %2799 = vst.msk [vmem:[#allocation4 + $0x68] sm:$0xff] %vm2701, %v2795
  %v2800 = vld [vmem:[#allocation2 + $0x80] sm:$0xff]
  %v2801 = vld [vmem:[#allocation2 + $0x88] sm:$0xff]
  %v2802 = vld [vmem:[#allocation3] sm:$0xff]
  %v2803 = vld [vmem:[#allocation3 + $0x8] sm:$0xff]
  %2805 = vset.pattern.permute.xlu0 8
  %2806 = vperm.xlu0 %2805, %v2802
  %v2807 = vpop.permute.xlu0 %2806
  %2810 = vset.pattern.permute.xlu0 8
  %2811 = vperm.xlu0 %2810, %v2803
  %v2812 = vpop.permute.xlu0 %2811
  %v2814 = vmul.f32 %v2800, %v2807
  %v2815 = vmul.f32 %v2801, %v2812
  %2816 = vst.msk [vmem:[#allocation4 + $0x10] sm:$0xff] %vm1809, %v2814
  %2817 = vst.msk [vmem:[#allocation4 + $0x70] sm:$0xff] %vm1809, %v2815
  %v2818 = vld [vmem:[#allocation2 + $0x90] sm:$0xff]
  %v2819 = vld [vmem:[#allocation2 + $0x98] sm:$0xff]
  %v2820 = vld [vmem:[#allocation3] sm:$0xff]
  %v2821 = vld [vmem:[#allocation3 + $0x8] sm:$0xff]
  %2823 = vset.pattern.permute.xlu0 9
  %2824 = vperm.xlu0 %2823, %v2820
  %v2825 = vpop.permute.xlu0 %2824
  %2828 = vset.pattern.permute.xlu0 9
  %2829 = vperm.xlu0 %2828, %v2821
  %v2830 = vpop.permute.xlu0 %2829
  %v2832 = vmul.f32 %v2818, %v2825
  %v2833 = vmul.f32 %v2819, %v2830
  %2836 = vrot.lane.b32.xlu0 %v2832, 32
  %v2837 = vpop.permute.xlu0 %2836
  %2838 = vrot.lane.b32.xlu0 %v2833, 32
  %v2839 = vpop.permute.xlu0 %2838
  %2842 = vst.msk [vmem:[#allocation4 + $0x10] sm:$0xff] %vm2647, %v2837
  %2843 = vst.msk [vmem:[#allocation4 + $0x70] sm:$0xff] %vm2647, %v2839
  %v2844 = vld [vmem:[#allocation2 + $0xa0] sm:$0xff]
  %v2845 = vld [vmem:[#allocation2 + $0xa8] sm:$0xff]
  %v2846 = vld [vmem:[#allocation3] sm:$0xff]
  %v2847 = vld [vmem:[#allocation3 + $0x8] sm:$0xff]
  %2849 = vset.pattern.permute.xlu0 10
  %2850 = vperm.xlu0 %2849, %v2846
  %v2851 = vpop.permute.xlu0 %2850
  %2854 = vset.pattern.permute.xlu0 10
  %2855 = vperm.xlu0 %2854, %v2847
  %v2856 = vpop.permute.xlu0 %2855
  %v2858 = vmul.f32 %v2844, %v2851
  %v2859 = vmul.f32 %v2845, %v2856
  %2862 = vrot.lane.b32.xlu0 %v2858, 64
  %v2863 = vpop.permute.xlu0 %2862
  %2864 = vrot.lane.b32.xlu0 %v2859, 64
  %v2865 = vpop.permute.xlu0 %2864
  %2868 = vst.msk [vmem:[#allocation4 + $0x10] sm:$0xff] %vm2674, %v2863
  %2869 = vst.msk [vmem:[#allocation4 + $0x70] sm:$0xff] %vm2674, %v2865
  %v2870 = vld [vmem:[#allocation2 + $0xb0] sm:$0xff]
  %v2871 = vld [vmem:[#allocation2 + $0xb8] sm:$0xff]
  %v2872 = vld [vmem:[#allocation3] sm:$0xff]
  %v2873 = vld [vmem:[#allocation3 + $0x8] sm:$0xff]
  %2875 = vset.pattern.permute.xlu0 11
  %2876 = vperm.xlu0 %2875, %v2872
  %v2877 = vpop.permute.xlu0 %2876
  %2880 = vset.pattern.permute.xlu0 11
  %2881 = vperm.xlu0 %2880, %v2873
  %v2882 = vpop.permute.xlu0 %2881
  %v2884 = vmul.f32 %v2870, %v2877
  %v2885 = vmul.f32 %v2871, %v2882
  %2888 = vrot.lane.b32.xlu0 %v2884, 96
  %v2889 = vpop.permute.xlu0 %2888
  %2890 = vrot.lane.b32.xlu0 %v2885, 96
  %v2891 = vpop.permute.xlu0 %2890
  %2894 = vst.msk [vmem:[#allocation4 + $0x10] sm:$0xff] %vm2701, %v2889
  %2895 = vst.msk [vmem:[#allocation4 + $0x70] sm:$0xff] %vm2701, %v2891
  %v2896 = vld [vmem:[#allocation2 + $0xc0] sm:$0xff]
  %v2897 = vld [vmem:[#allocation2 + $0xc8] sm:$0xff]
  %v2898 = vld [vmem:[#allocation3] sm:$0xff]
  %v2899 = vld [vmem:[#allocation3 + $0x8] sm:$0xff]
  %2901 = vset.pattern.permute.xlu0 12
  %2902 = vperm.xlu0 %2901, %v2898
  %v2903 = vpop.permute.xlu0 %2902
  %2906 = vset.pattern.permute.xlu0 12
  %2907 = vperm.xlu0 %2906, %v2899
  %v2908 = vpop.permute.xlu0 %2907
  %v2910 = vmul.f32 %v2896, %v2903
  %v2911 = vmul.f32 %v2897, %v2908
  %2912 = vst.msk [vmem:[#allocation4 + $0x18] sm:$0xff] %vm1809, %v2910
  %2913 = vst.msk [vmem:[#allocation4 + $0x78] sm:$0xff] %vm1809, %v2911
  %v2914 = vld [vmem:[#allocation2 + $0xd0] sm:$0xff]
  %v2915 = vld [vmem:[#allocation2 + $0xd8] sm:$0xff]
  %v2916 = vld [vmem:[#allocation3] sm:$0xff]
  %v2917 = vld [vmem:[#allocation3 + $0x8] sm:$0xff]
  %2919 = vset.pattern.permute.xlu0 13
  %2920 = vperm.xlu0 %2919, %v2916
  %v2921 = vpop.permute.xlu0 %2920
  %2924 = vset.pattern.permute.xlu0 13
  %2925 = vperm.xlu0 %2924, %v2917
  %v2926 = vpop.permute.xlu0 %2925
  %v2928 = vmul.f32 %v2914, %v2921
  %v2929 = vmul.f32 %v2915, %v2926
  %2932 = vrot.lane.b32.xlu0 %v2928, 32
  %v2933 = vpop.permute.xlu0 %2932
  %2934 = vrot.lane.b32.xlu0 %v2929, 32
  %v2935 = vpop.permute.xlu0 %2934
  %2938 = vst.msk [vmem:[#allocation4 + $0x18] sm:$0xff] %vm2647, %v2933
  %2939 = vst.msk [vmem:[#allocation4 + $0x78] sm:$0xff] %vm2647, %v2935
  %v2940 = vld [vmem:[#allocation2 + $0xe0] sm:$0xff]
  %v2941 = vld [vmem:[#allocation2 + $0xe8] sm:$0xff]
  %v2942 = vld [vmem:[#allocation3] sm:$0xff]
  %v2943 = vld [vmem:[#allocation3 + $0x8] sm:$0xff]
  %2945 = vset.pattern.permute.xlu0 14
  %2946 = vperm.xlu0 %2945, %v2942
  %v2947 = vpop.permute.xlu0 %2946
  %2950 = vset.pattern.permute.xlu0 14
  %2951 = vperm.xlu0 %2950, %v2943
  %v2952 = vpop.permute.xlu0 %2951
  %v2954 = vmul.f32 %v2940, %v2947
  %v2955 = vmul.f32 %v2941, %v2952
  %2958 = vrot.lane.b32.xlu0 %v2954, 64
  %v2959 = vpop.permute.xlu0 %2958
  %2960 = vrot.lane.b32.xlu0 %v2955, 64
  %v2961 = vpop.permute.xlu0 %2960
  %2964 = vst.msk [vmem:[#allocation4 + $0x18] sm:$0xff] %vm2674, %v2959
  %2965 = vst.msk [vmem:[#allocation4 + $0x78] sm:$0xff] %vm2674, %v2961
  %v2966 = vld [vmem:[#allocation2 + $0xf0] sm:$0xff]
  %v2967 = vld [vmem:[#allocation2 + $0xf8] sm:$0xff]
  %v2968 = vld [vmem:[#allocation3] sm:$0xff]
  %v2969 = vld [vmem:[#allocation3 + $0x8] sm:$0xff]
  %2971 = vset.pattern.permute.xlu0 15
  %2972 = vperm.xlu0 %2971, %v2968
  %v2973 = vpop.permute.xlu0 %2972
  %2976 = vset.pattern.permute.xlu0 15
  %2977 = vperm.xlu0 %2976, %v2969
  %v2978 = vpop.permute.xlu0 %2977
  %v2980 = vmul.f32 %v2966, %v2973
  %v2981 = vmul.f32 %v2967, %v2978
  %2984 = vrot.lane.b32.xlu0 %v2980, 96
  %v2985 = vpop.permute.xlu0 %2984
  %2986 = vrot.lane.b32.xlu0 %v2981, 96
  %v2987 = vpop.permute.xlu0 %2986
  %2990 = vst.msk [vmem:[#allocation4 + $0x18] sm:$0xff] %vm2701, %v2985
  %2991 = vst.msk [vmem:[#allocation4 + $0x78] sm:$0xff] %vm2701, %v2987
  %v2992 = vld [vmem:[#allocation2 + $0x100] sm:$0xff]
  %v2993 = vld [vmem:[#allocation2 + $0x108] sm:$0xff]
  %v2994 = vld [vmem:[#allocation3] sm:$0xff]
  %v2995 = vld [vmem:[#allocation3 + $0x8] sm:$0xff]
  %2997 = vset.pattern.permute.xlu0 16
  %2998 = vperm.xlu0 %2997, %v2994
  %v2999 = vpop.permute.xlu0 %2998
  %3002 = vset.pattern.permute.xlu0 16
  %3003 = vperm.xlu0 %3002, %v2995
  %v3004 = vpop.permute.xlu0 %3003
  %v3006 = vmul.f32 %v2992, %v2999
  %v3007 = vmul.f32 %v2993, %v3004
  %3008 = vst.msk [vmem:[#allocation4 + $0x20] sm:$0xff] %vm1809, %v3006
  %3009 = vst.msk [vmem:[#allocation4 + $0x80] sm:$0xff] %vm1809, %v3007
  %v3010 = vld [vmem:[#allocation2 + $0x110] sm:$0xff]
  %v3011 = vld [vmem:[#allocation2 + $0x118] sm:$0xff]
  %v3012 = vld [vmem:[#allocation3] sm:$0xff]
  %v3013 = vld [vmem:[#allocation3 + $0x8] sm:$0xff]
  %3015 = vset.pattern.permute.xlu0 17
  %3016 = vperm.xlu0 %3015, %v3012
  %v3017 = vpop.permute.xlu0 %3016
  %3020 = vset.pattern.permute.xlu0 17
  %3021 = vperm.xlu0 %3020, %v3013
  %v3022 = vpop.permute.xlu0 %3021
  %v3024 = vmul.f32 %v3010, %v3017
  %v3025 = vmul.f32 %v3011, %v3022
  %3028 = vrot.lane.b32.xlu0 %v3024, 32
  %v3029 = vpop.permute.xlu0 %3028
  %3030 = vrot.lane.b32.xlu0 %v3025, 32
  %v3031 = vpop.permute.xlu0 %3030
  %3034 = vst.msk [vmem:[#allocation4 + $0x20] sm:$0xff] %vm2647, %v3029
  %3035 = vst.msk [vmem:[#allocation4 + $0x80] sm:$0xff] %vm2647, %v3031
  %v3036 = vld [vmem:[#allocation2 + $0x120] sm:$0xff]
  %v3037 = vld [vmem:[#allocation2 + $0x128] sm:$0xff]
  %v3038 = vld [vmem:[#allocation3] sm:$0xff]
  %v3039 = vld [vmem:[#allocation3 + $0x8] sm:$0xff]
  %3041 = vset.pattern.permute.xlu0 18
  %3042 = vperm.xlu0 %3041, %v3038
  %v3043 = vpop.permute.xlu0 %3042
  %3046 = vset.pattern.permute.xlu0 18
  %3047 = vperm.xlu0 %3046, %v3039
  %v3048 = vpop.permute.xlu0 %3047
  %v3050 = vmul.f32 %v3036, %v3043
  %v3051 = vmul.f32 %v3037, %v3048
  %3054 = vrot.lane.b32.xlu0 %v3050, 64
  %v3055 = vpop.permute.xlu0 %3054
  %3056 = vrot.lane.b32.xlu0 %v3051, 64
  %v3057 = vpop.permute.xlu0 %3056
  %3060 = vst.msk [vmem:[#allocation4 + $0x20] sm:$0xff] %vm2674, %v3055
  %3061 = vst.msk [vmem:[#allocation4 + $0x80] sm:$0xff] %vm2674, %v3057
  %v3062 = vld [vmem:[#allocation2 + $0x130] sm:$0xff]
  %v3063 = vld [vmem:[#allocation2 + $0x138] sm:$0xff]
  %v3064 = vld [vmem:[#allocation3] sm:$0xff]
  %v3065 = vld [vmem:[#allocation3 + $0x8] sm:$0xff]
  %3067 = vset.pattern.permute.xlu0 19
  %3068 = vperm.xlu0 %3067, %v3064
  %v3069 = vpop.permute.xlu0 %3068
  %3072 = vset.pattern.permute.xlu0 19
  %3073 = vperm.xlu0 %3072, %v3065
  %v3074 = vpop.permute.xlu0 %3073
  %v3076 = vmul.f32 %v3062, %v3069
  %v3077 = vmul.f32 %v3063, %v3074
  %3080 = vrot.lane.b32.xlu0 %v3076, 96
  %v3081 = vpop.permute.xlu0 %3080
  %3082 = vrot.lane.b32.xlu0 %v3077, 96
  %v3083 = vpop.permute.xlu0 %3082
  %3086 = vst.msk [vmem:[#allocation4 + $0x20] sm:$0xff] %vm2701, %v3081
  %3087 = vst.msk [vmem:[#allocation4 + $0x80] sm:$0xff] %vm2701, %v3083
  %v3088 = vld [vmem:[#allocation2 + $0x140] sm:$0xff]
  %v3089 = vld [vmem:[#allocation2 + $0x148] sm:$0xff]
  %v3090 = vld [vmem:[#allocation3] sm:$0xff]
  %v3091 = vld [vmem:[#allocation3 + $0x8] sm:$0xff]
  %3093 = vset.pattern.permute.xlu0 20
  %3094 = vperm.xlu0 %3093, %v3090
  %v3095 = vpop.permute.xlu0 %3094
  %3098 = vset.pattern.permute.xlu0 20
  %3099 = vperm.xlu0 %3098, %v3091
  %v3100 = vpop.permute.xlu0 %3099
  %v3102 = vmul.f32 %v3088, %v3095
  %v3103 = vmul.f32 %v3089, %v3100
  %3104 = vst.msk [vmem:[#allocation4 + $0x28] sm:$0xff] %vm1809, %v3102
  %3105 = vst.msk [vmem:[#allocation4 + $0x88] sm:$0xff] %vm1809, %v3103
  %v3106 = vld [vmem:[#allocation2 + $0x150] sm:$0xff]
  %v3107 = vld [vmem:[#allocation2 + $0x158] sm:$0xff]
  %v3108 = vld [vmem:[#allocation3] sm:$0xff]
  %v3109 = vld [vmem:[#allocation3 + $0x8] sm:$0xff]
  %3111 = vset.pattern.permute.xlu0 21
  %3112 = vperm.xlu0 %3111, %v3108
  %v3113 = vpop.permute.xlu0 %3112
  %3116 = vset.pattern.permute.xlu0 21
  %3117 = vperm.xlu0 %3116, %v3109
  %v3118 = vpop.permute.xlu0 %3117
  %v3120 = vmul.f32 %v3106, %v3113
  %v3121 = vmul.f32 %v3107, %v3118
  %3124 = vrot.lane.b32.xlu0 %v3120, 32
  %v3125 = vpop.permute.xlu0 %3124
  %3126 = vrot.lane.b32.xlu0 %v3121, 32
  %v3127 = vpop.permute.xlu0 %3126
  %3130 = vst.msk [vmem:[#allocation4 + $0x28] sm:$0xff] %vm2647, %v3125
  %3131 = vst.msk [vmem:[#allocation4 + $0x88] sm:$0xff] %vm2647, %v3127
  %v3132 = vld [vmem:[#allocation2 + $0x160] sm:$0xff]
  %v3133 = vld [vmem:[#allocation2 + $0x168] sm:$0xff]
  %v3134 = vld [vmem:[#allocation3] sm:$0xff]
  %v3135 = vld [vmem:[#allocation3 + $0x8] sm:$0xff]
  %3137 = vset.pattern.permute.xlu0 22
  %3138 = vperm.xlu0 %3137, %v3134
  %v3139 = vpop.permute.xlu0 %3138
  %3142 = vset.pattern.permute.xlu0 22
  %3143 = vperm.xlu0 %3142, %v3135
  %v3144 = vpop.permute.xlu0 %3143
  %v3146 = vmul.f32 %v3132, %v3139
  %v3147 = vmul.f32 %v3133, %v3144
  %3150 = vrot.lane.b32.xlu0 %v3146, 64
  %v3151 = vpop.permute.xlu0 %3150
  %3152 = vrot.lane.b32.xlu0 %v3147, 64
  %v3153 = vpop.permute.xlu0 %3152
  %3156 = vst.msk [vmem:[#allocation4 + $0x28] sm:$0xff] %vm2674, %v3151
  %3157 = vst.msk [vmem:[#allocation4 + $0x88] sm:$0xff] %vm2674, %v3153
  %v3158 = vld [vmem:[#allocation2 + $0x170] sm:$0xff]
  %v3159 = vld [vmem:[#allocation2 + $0x178] sm:$0xff]
  %v3160 = vld [vmem:[#allocation3] sm:$0xff]
  %v3161 = vld [vmem:[#allocation3 + $0x8] sm:$0xff]
  %3163 = vset.pattern.permute.xlu0 23
  %3164 = vperm.xlu0 %3163, %v3160
  %v3165 = vpop.permute.xlu0 %3164
  %3168 = vset.pattern.permute.xlu0 23
  %3169 = vperm.xlu0 %3168, %v3161
  %v3170 = vpop.permute.xlu0 %3169
  %v3172 = vmul.f32 %v3158, %v3165
  %v3173 = vmul.f32 %v3159, %v3170
  %3176 = vrot.lane.b32.xlu0 %v3172, 96
  %v3177 = vpop.permute.xlu0 %3176
  %3178 = vrot.lane.b32.xlu0 %v3173, 96
  %v3179 = vpop.permute.xlu0 %3178
  %3182 = vst.msk [vmem:[#allocation4 + $0x28] sm:$0xff] %vm2701, %v3177
  %3183 = vst.msk [vmem:[#allocation4 + $0x88] sm:$0xff] %vm2701, %v3179
  %v3184 = vld [vmem:[#allocation2 + $0x180] sm:$0xff]
  %v3185 = vld [vmem:[#allocation2 + $0x188] sm:$0xff]
  %v3186 = vld [vmem:[#allocation3] sm:$0xff]
  %v3187 = vld [vmem:[#allocation3 + $0x8] sm:$0xff]
  %3189 = vset.pattern.permute.xlu0 24
  %3190 = vperm.xlu0 %3189, %v3186
  %v3191 = vpop.permute.xlu0 %3190
  %3194 = vset.pattern.permute.xlu0 24
  %3195 = vperm.xlu0 %3194, %v3187
  %v3196 = vpop.permute.xlu0 %3195
  %v3198 = vmul.f32 %v3184, %v3191
  %v3199 = vmul.f32 %v3185, %v3196
  %3200 = vst.msk [vmem:[#allocation4 + $0x30] sm:$0xff] %vm1809, %v3198
  %3201 = vst.msk [vmem:[#allocation4 + $0x90] sm:$0xff] %vm1809, %v3199
  %v3202 = vld [vmem:[#allocation2 + $0x190] sm:$0xff]
  %v3203 = vld [vmem:[#allocation2 + $0x198] sm:$0xff]
  %v3204 = vld [vmem:[#allocation3] sm:$0xff]
  %v3205 = vld [vmem:[#allocation3 + $0x8] sm:$0xff]
  %3207 = vset.pattern.permute.xlu0 25
  %3208 = vperm.xlu0 %3207, %v3204
  %v3209 = vpop.permute.xlu0 %3208
  %3212 = vset.pattern.permute.xlu0 25
  %3213 = vperm.xlu0 %3212, %v3205
  %v3214 = vpop.permute.xlu0 %3213
  %v3216 = vmul.f32 %v3202, %v3209
  %v3217 = vmul.f32 %v3203, %v3214
  %3220 = vrot.lane.b32.xlu0 %v3216, 32
  %v3221 = vpop.permute.xlu0 %3220
  %3222 = vrot.lane.b32.xlu0 %v3217, 32
  %v3223 = vpop.permute.xlu0 %3222
  %3226 = vst.msk [vmem:[#allocation4 + $0x30] sm:$0xff] %vm2647, %v3221
  %3227 = vst.msk [vmem:[#allocation4 + $0x90] sm:$0xff] %vm2647, %v3223
  %v3228 = vld [vmem:[#allocation2 + $0x1a0] sm:$0xff]
  %v3229 = vld [vmem:[#allocation2 + $0x1a8] sm:$0xff]
  %v3230 = vld [vmem:[#allocation3] sm:$0xff]
  %v3231 = vld [vmem:[#allocation3 + $0x8] sm:$0xff]
  %3233 = vset.pattern.permute.xlu0 26
  %3234 = vperm.xlu0 %3233, %v3230
  %v3235 = vpop.permute.xlu0 %3234
  %3238 = vset.pattern.permute.xlu0 26
  %3239 = vperm.xlu0 %3238, %v3231
  %v3240 = vpop.permute.xlu0 %3239
  %v3242 = vmul.f32 %v3228, %v3235
  %v3243 = vmul.f32 %v3229, %v3240
  %3246 = vrot.lane.b32.xlu0 %v3242, 64
  %v3247 = vpop.permute.xlu0 %3246
  %3248 = vrot.lane.b32.xlu0 %v3243, 64
  %v3249 = vpop.permute.xlu0 %3248
  %3252 = vst.msk [vmem:[#allocation4 + $0x30] sm:$0xff] %vm2674, %v3247
  %3253 = vst.msk [vmem:[#allocation4 + $0x90] sm:$0xff] %vm2674, %v3249
  %v3254 = vld [vmem:[#allocation2 + $0x1b0] sm:$0xff]
  %v3255 = vld [vmem:[#allocation2 + $0x1b8] sm:$0xff]
  %v3256 = vld [vmem:[#allocation3] sm:$0xff]
  %v3257 = vld [vmem:[#allocation3 + $0x8] sm:$0xff]
  %3259 = vset.pattern.permute.xlu0 27
  %3260 = vperm.xlu0 %3259, %v3256
  %v3261 = vpop.permute.xlu0 %3260
  %3264 = vset.pattern.permute.xlu0 27
  %3265 = vperm.xlu0 %3264, %v3257
  %v3266 = vpop.permute.xlu0 %3265
  %v3268 = vmul.f32 %v3254, %v3261
  %v3269 = vmul.f32 %v3255, %v3266
  %3272 = vrot.lane.b32.xlu0 %v3268, 96
  %v3273 = vpop.permute.xlu0 %3272
  %3274 = vrot.lane.b32.xlu0 %v3269, 96
  %v3275 = vpop.permute.xlu0 %3274
  %3278 = vst.msk [vmem:[#allocation4 + $0x30] sm:$0xff] %vm2701, %v3273
  %3279 = vst.msk [vmem:[#allocation4 + $0x90] sm:$0xff] %vm2701, %v3275
  %v3280 = vld [vmem:[#allocation2 + $0x1c0] sm:$0xff]
  %v3281 = vld [vmem:[#allocation2 + $0x1c8] sm:$0xff]
  %v3282 = vld [vmem:[#allocation3] sm:$0xff]
  %v3283 = vld [vmem:[#allocation3 + $0x8] sm:$0xff]
  %3285 = vset.pattern.permute.xlu0 28
  %3286 = vperm.xlu0 %3285, %v3282
  %v3287 = vpop.permute.xlu0 %3286
  %3290 = vset.pattern.permute.xlu0 28
  %3291 = vperm.xlu0 %3290, %v3283
  %v3292 = vpop.permute.xlu0 %3291
  %v3294 = vmul.f32 %v3280, %v3287
  %v3295 = vmul.f32 %v3281, %v3292
  %3296 = vst.msk [vmem:[#allocation4 + $0x38] sm:$0xff] %vm1809, %v3294
  %3297 = vst.msk [vmem:[#allocation4 + $0x98] sm:$0xff] %vm1809, %v3295
  %v3298 = vld [vmem:[#allocation2 + $0x1d0] sm:$0xff]
  %v3299 = vld [vmem:[#allocation2 + $0x1d8] sm:$0xff]
  %v3300 = vld [vmem:[#allocation3] sm:$0xff]
  %v3301 = vld [vmem:[#allocation3 + $0x8] sm:$0xff]
  %3303 = vset.pattern.permute.xlu0 29
  %3304 = vperm.xlu0 %3303, %v3300
  %v3305 = vpop.permute.xlu0 %3304
  %3308 = vset.pattern.permute.xlu0 29
  %3309 = vperm.xlu0 %3308, %v3301
  %v3310 = vpop.permute.xlu0 %3309
  %v3312 = vmul.f32 %v3298, %v3305
  %v3313 = vmul.f32 %v3299, %v3310
  %3316 = vrot.lane.b32.xlu0 %v3312, 32
  %v3317 = vpop.permute.xlu0 %3316
  %3318 = vrot.lane.b32.xlu0 %v3313, 32
  %v3319 = vpop.permute.xlu0 %3318
  %3322 = vst.msk [vmem:[#allocation4 + $0x38] sm:$0xff] %vm2647, %v3317
  %3323 = vst.msk [vmem:[#allocation4 + $0x98] sm:$0xff] %vm2647, %v3319
  %v3324 = vld [vmem:[#allocation2 + $0x1e0] sm:$0xff]
  %v3325 = vld [vmem:[#allocation2 + $0x1e8] sm:$0xff]
  %v3326 = vld [vmem:[#allocation3] sm:$0xff]
  %v3327 = vld [vmem:[#allocation3 + $0x8] sm:$0xff]
  %3329 = vset.pattern.permute.xlu0 30
  %3330 = vperm.xlu0 %3329, %v3326
  %v3331 = vpop.permute.xlu0 %3330
  %3334 = vset.pattern.permute.xlu0 30
  %3335 = vperm.xlu0 %3334, %v3327
  %v3336 = vpop.permute.xlu0 %3335
  %v3338 = vmul.f32 %v3324, %v3331
  %v3339 = vmul.f32 %v3325, %v3336
  %3342 = vrot.lane.b32.xlu0 %v3338, 64
  %v3343 = vpop.permute.xlu0 %3342
  %3344 = vrot.lane.b32.xlu0 %v3339, 64
  %v3345 = vpop.permute.xlu0 %3344
  %3348 = vst.msk [vmem:[#allocation4 + $0x38] sm:$0xff] %vm2674, %v3343
  %3349 = vst.msk [vmem:[#allocation4 + $0x98] sm:$0xff] %vm2674, %v3345
  %v3350 = vld [vmem:[#allocation2 + $0x1f0] sm:$0xff]
  %v3351 = vld [vmem:[#allocation2 + $0x1f8] sm:$0xff]
  %v3352 = vld [vmem:[#allocation3] sm:$0xff]
  %v3353 = vld [vmem:[#allocation3 + $0x8] sm:$0xff]
  %3355 = vset.pattern.permute.xlu0 31
  %3356 = vperm.xlu0 %3355, %v3352
  %v3357 = vpop.permute.xlu0 %3356
  %3360 = vset.pattern.permute.xlu0 31
  %3361 = vperm.xlu0 %3360, %v3353
  %v3362 = vpop.permute.xlu0 %3361
  %v3364 = vmul.f32 %v3350, %v3357
  %v3365 = vmul.f32 %v3351, %v3362
  %3368 = vrot.lane.b32.xlu0 %v3364, 96
  %v3369 = vpop.permute.xlu0 %3368
  %3370 = vrot.lane.b32.xlu0 %v3365, 96
  %v3371 = vpop.permute.xlu0 %3370
  %3374 = vst.msk [vmem:[#allocation4 + $0x38] sm:$0xff] %vm2701, %v3369
  %3375 = vst.msk [vmem:[#allocation4 + $0x98] sm:$0xff] %vm2701, %v3371
  %v3376 = vld [vmem:[#allocation2 + $0x200] sm:$0xff]
  %v3377 = vld [vmem:[#allocation2 + $0x208] sm:$0xff]
  %v3378 = vld [vmem:[#allocation3] sm:$0xff]
  %v3379 = vld [vmem:[#allocation3 + $0x8] sm:$0xff]
  %3381 = vset.pattern.permute.xlu0 32
  %3382 = vperm.xlu0 %3381, %v3378
  %v3383 = vpop.permute.xlu0 %3382
  %3386 = vset.pattern.permute.xlu0 32
  %3387 = vperm.xlu0 %3386, %v3379
  %v3388 = vpop.permute.xlu0 %3387
  %v3390 = vmul.f32 %v3376, %v3383
  %v3391 = vmul.f32 %v3377, %v3388
  %3392 = vst.msk [vmem:[#allocation4 + $0x40] sm:$0xff] %vm1809, %v3390
  %3393 = vst.msk [vmem:[#allocation4 + $0xa0] sm:$0xff] %vm1809, %v3391
  %v3394 = vld [vmem:[#allocation2 + $0x210] sm:$0xff]
  %v3395 = vld [vmem:[#allocation2 + $0x218] sm:$0xff]
  %v3396 = vld [vmem:[#allocation3] sm:$0xff]
  %v3397 = vld [vmem:[#allocation3 + $0x8] sm:$0xff]
  %3399 = vset.pattern.permute.xlu0 33
  %3400 = vperm.xlu0 %3399, %v3396
  %v3401 = vpop.permute.xlu0 %3400
  %3404 = vset.pattern.permute.xlu0 33
  %3405 = vperm.xlu0 %3404, %v3397
  %v3406 = vpop.permute.xlu0 %3405
  %v3408 = vmul.f32 %v3394, %v3401
  %v3409 = vmul.f32 %v3395, %v3406
  %3412 = vrot.lane.b32.xlu0 %v3408, 32
  %v3413 = vpop.permute.xlu0 %3412
  %3414 = vrot.lane.b32.xlu0 %v3409, 32
  %v3415 = vpop.permute.xlu0 %3414
  %3418 = vst.msk [vmem:[#allocation4 + $0x40] sm:$0xff] %vm2647, %v3413
  %3419 = vst.msk [vmem:[#allocation4 + $0xa0] sm:$0xff] %vm2647, %v3415
  %v3420 = vld [vmem:[#allocation2 + $0x220] sm:$0xff]
  %v3421 = vld [vmem:[#allocation2 + $0x228] sm:$0xff]
  %v3422 = vld [vmem:[#allocation3] sm:$0xff]
  %v3423 = vld [vmem:[#allocation3 + $0x8] sm:$0xff]
  %3425 = vset.pattern.permute.xlu0 34
  %3426 = vperm.xlu0 %3425, %v3422
  %v3427 = vpop.permute.xlu0 %3426
  %3430 = vset.pattern.permute.xlu0 34
  %3431 = vperm.xlu0 %3430, %v3423
  %v3432 = vpop.permute.xlu0 %3431
  %v3434 = vmul.f32 %v3420, %v3427
  %v3435 = vmul.f32 %v3421, %v3432
  %3438 = vrot.lane.b32.xlu0 %v3434, 64
  %v3439 = vpop.permute.xlu0 %3438
  %3440 = vrot.lane.b32.xlu0 %v3435, 64
  %v3441 = vpop.permute.xlu0 %3440
  %3444 = vst.msk [vmem:[#allocation4 + $0x40] sm:$0xff] %vm2674, %v3439
  %3445 = vst.msk [vmem:[#allocation4 + $0xa0] sm:$0xff] %vm2674, %v3441
  %v3446 = vld [vmem:[#allocation2 + $0x230] sm:$0xff]
  %v3447 = vld [vmem:[#allocation2 + $0x238] sm:$0xff]
  %v3448 = vld [vmem:[#allocation3] sm:$0xff]
  %v3449 = vld [vmem:[#allocation3 + $0x8] sm:$0xff]
  %3451 = vset.pattern.permute.xlu0 35
  %3452 = vperm.xlu0 %3451, %v3448
  %v3453 = vpop.permute.xlu0 %3452
  %3456 = vset.pattern.permute.xlu0 35
  %3457 = vperm.xlu0 %3456, %v3449
  %v3458 = vpop.permute.xlu0 %3457
  %v3460 = vmul.f32 %v3446, %v3453
  %v3461 = vmul.f32 %v3447, %v3458
  %3464 = vrot.lane.b32.xlu0 %v3460, 96
  %v3465 = vpop.permute.xlu0 %3464
  %3466 = vrot.lane.b32.xlu0 %v3461, 96
  %v3467 = vpop.permute.xlu0 %3466
  %3470 = vst.msk [vmem:[#allocation4 + $0x40] sm:$0xff] %vm2701, %v3465
  %3471 = vst.msk [vmem:[#allocation4 + $0xa0] sm:$0xff] %vm2701, %v3467
  %v3472 = vld [vmem:[#allocation2 + $0x240] sm:$0xff]
  %v3473 = vld [vmem:[#allocation2 + $0x248] sm:$0xff]
  %v3474 = vld [vmem:[#allocation3] sm:$0xff]
  %v3475 = vld [vmem:[#allocation3 + $0x8] sm:$0xff]
  %3477 = vset.pattern.permute.xlu0 36
  %3478 = vperm.xlu0 %3477, %v3474
  %v3479 = vpop.permute.xlu0 %3478
  %3482 = vset.pattern.permute.xlu0 36
  %3483 = vperm.xlu0 %3482, %v3475
  %v3484 = vpop.permute.xlu0 %3483
  %v3486 = vmul.f32 %v3472, %v3479
  %v3487 = vmul.f32 %v3473, %v3484
  %3488 = vst.msk [vmem:[#allocation4 + $0x48] sm:$0xff] %vm1809, %v3486
  %3489 = vst.msk [vmem:[#allocation4 + $0xa8] sm:$0xff] %vm1809, %v3487
  %v3490 = vld [vmem:[#allocation2 + $0x250] sm:$0xff]
  %v3491 = vld [vmem:[#allocation2 + $0x258] sm:$0xff]
  %v3492 = vld [vmem:[#allocation3] sm:$0xff]
  %v3493 = vld [vmem:[#allocation3 + $0x8] sm:$0xff]
  %3495 = vset.pattern.permute.xlu0 37
  %3496 = vperm.xlu0 %3495, %v3492
  %v3497 = vpop.permute.xlu0 %3496
  %3500 = vset.pattern.permute.xlu0 37
  %3501 = vperm.xlu0 %3500, %v3493
  %v3502 = vpop.permute.xlu0 %3501
  %v3504 = vmul.f32 %v3490, %v3497
  %v3505 = vmul.f32 %v3491, %v3502
  %3508 = vrot.lane.b32.xlu0 %v3504, 32
  %v3509 = vpop.permute.xlu0 %3508
  %3510 = vrot.lane.b32.xlu0 %v3505, 32
  %v3511 = vpop.permute.xlu0 %3510
  %3514 = vst.msk [vmem:[#allocation4 + $0x48] sm:$0xff] %vm2647, %v3509
  %3515 = vst.msk [vmem:[#allocation4 + $0xa8] sm:$0xff] %vm2647, %v3511
  %v3516 = vld [vmem:[#allocation2 + $0x260] sm:$0xff]
  %v3517 = vld [vmem:[#allocation2 + $0x268] sm:$0xff]
  %v3518 = vld [vmem:[#allocation3] sm:$0xff]
  %v3519 = vld [vmem:[#allocation3 + $0x8] sm:$0xff]
  %3521 = vset.pattern.permute.xlu0 38
  %3522 = vperm.xlu0 %3521, %v3518
  %v3523 = vpop.permute.xlu0 %3522
  %3526 = vset.pattern.permute.xlu0 38
  %3527 = vperm.xlu0 %3526, %v3519
  %v3528 = vpop.permute.xlu0 %3527
  %v3530 = vmul.f32 %v3516, %v3523
  %v3531 = vmul.f32 %v3517, %v3528
  %3534 = vrot.lane.b32.xlu0 %v3530, 64
  %v3535 = vpop.permute.xlu0 %3534
  %3536 = vrot.lane.b32.xlu0 %v3531, 64
  %v3537 = vpop.permute.xlu0 %3536
  %3540 = vst.msk [vmem:[#allocation4 + $0x48] sm:$0xff] %vm2674, %v3535
  %3541 = vst.msk [vmem:[#allocation4 + $0xa8] sm:$0xff] %vm2674, %v3537
  %v3542 = vld [vmem:[#allocation2 + $0x270] sm:$0xff]
  %v3543 = vld [vmem:[#allocation2 + $0x278] sm:$0xff]
  %v3544 = vld [vmem:[#allocation3] sm:$0xff]
  %v3545 = vld [vmem:[#allocation3 + $0x8] sm:$0xff]
  %3547 = vset.pattern.permute.xlu0 39
  %3548 = vperm.xlu0 %3547, %v3544
  %v3549 = vpop.permute.xlu0 %3548
  %3552 = vset.pattern.permute.xlu0 39
  %3553 = vperm.xlu0 %3552, %v3545
  %v3554 = vpop.permute.xlu0 %3553
  %v3556 = vmul.f32 %v3542, %v3549
  %v3557 = vmul.f32 %v3543, %v3554
  %3560 = vrot.lane.b32.xlu0 %v3556, 96
  %v3561 = vpop.permute.xlu0 %3560
  %3562 = vrot.lane.b32.xlu0 %v3557, 96
  %v3563 = vpop.permute.xlu0 %3562
  %3566 = vst.msk [vmem:[#allocation4 + $0x48] sm:$0xff] %vm2701, %v3561
  %3567 = vst.msk [vmem:[#allocation4 + $0xa8] sm:$0xff] %vm2701, %v3563
  %v3568 = vld [vmem:[#allocation2 + $0x280] sm:$0xff]
  %v3569 = vld [vmem:[#allocation2 + $0x288] sm:$0xff]
  %v3570 = vld [vmem:[#allocation3] sm:$0xff]
  %v3571 = vld [vmem:[#allocation3 + $0x8] sm:$0xff]
  %3573 = vset.pattern.permute.xlu0 40
  %3574 = vperm.xlu0 %3573, %v3570
  %v3575 = vpop.permute.xlu0 %3574
  %3578 = vset.pattern.permute.xlu0 40
  %3579 = vperm.xlu0 %3578, %v3571
  %v3580 = vpop.permute.xlu0 %3579
  %v3582 = vmul.f32 %v3568, %v3575
  %v3583 = vmul.f32 %v3569, %v3580
  %3584 = vst.msk [vmem:[#allocation4 + $0x50] sm:$0xff] %vm1809, %v3582
  %3585 = vst.msk [vmem:[#allocation4 + $0xb0] sm:$0xff] %vm1809, %v3583
  %v3586 = vld [vmem:[#allocation2 + $0x290] sm:$0xff]
  %v3587 = vld [vmem:[#allocation2 + $0x298] sm:$0xff]
  %v3588 = vld [vmem:[#allocation3] sm:$0xff]
  %v3589 = vld [vmem:[#allocation3 + $0x8] sm:$0xff]
  %3591 = vset.pattern.permute.xlu0 41
  %3592 = vperm.xlu0 %3591, %v3588
  %v3593 = vpop.permute.xlu0 %3592
  %3596 = vset.pattern.permute.xlu0 41
  %3597 = vperm.xlu0 %3596, %v3589
  %v3598 = vpop.permute.xlu0 %3597
  %v3600 = vmul.f32 %v3586, %v3593
  %v3601 = vmul.f32 %v3587, %v3598
  %3604 = vrot.lane.b32.xlu0 %v3600, 32
  %v3605 = vpop.permute.xlu0 %3604
  %3606 = vrot.lane.b32.xlu0 %v3601, 32
  %v3607 = vpop.permute.xlu0 %3606
  %3610 = vst.msk [vmem:[#allocation4 + $0x50] sm:$0xff] %vm2647, %v3605
  %3611 = vst.msk [vmem:[#allocation4 + $0xb0] sm:$0xff] %vm2647, %v3607
  %v3612 = vld [vmem:[#allocation2 + $0x2a0] sm:$0xff]
  %v3613 = vld [vmem:[#allocation2 + $0x2a8] sm:$0xff]
  %v3614 = vld [vmem:[#allocation3] sm:$0xff]
  %v3615 = vld [vmem:[#allocation3 + $0x8] sm:$0xff]
  %3617 = vset.pattern.permute.xlu0 42
  %3618 = vperm.xlu0 %3617, %v3614
  %v3619 = vpop.permute.xlu0 %3618
  %3622 = vset.pattern.permute.xlu0 42
  %3623 = vperm.xlu0 %3622, %v3615
  %v3624 = vpop.permute.xlu0 %3623
  %v3626 = vmul.f32 %v3612, %v3619
  %v3627 = vmul.f32 %v3613, %v3624
  %3630 = vrot.lane.b32.xlu0 %v3626, 64
  %v3631 = vpop.permute.xlu0 %3630
  %3632 = vrot.lane.b32.xlu0 %v3627, 64
  %v3633 = vpop.permute.xlu0 %3632
  %3636 = vst.msk [vmem:[#allocation4 + $0x50] sm:$0xff] %vm2674, %v3631
  %3637 = vst.msk [vmem:[#allocation4 + $0xb0] sm:$0xff] %vm2674, %v3633
  %v3638 = vld [vmem:[#allocation2 + $0x2b0] sm:$0xff]
  %v3639 = vld [vmem:[#allocation2 + $0x2b8] sm:$0xff]
  %v3640 = vld [vmem:[#allocation3] sm:$0xff]
  %v3641 = vld [vmem:[#allocation3 + $0x8] sm:$0xff]
  %3643 = vset.pattern.permute.xlu0 43
  %3644 = vperm.xlu0 %3643, %v3640
  %v3645 = vpop.permute.xlu0 %3644
  %3648 = vset.pattern.permute.xlu0 43
  %3649 = vperm.xlu0 %3648, %v3641
  %v3650 = vpop.permute.xlu0 %3649
  %v3652 = vmul.f32 %v3638, %v3645
  %v3653 = vmul.f32 %v3639, %v3650
  %3656 = vrot.lane.b32.xlu0 %v3652, 96
  %v3657 = vpop.permute.xlu0 %3656
  %3658 = vrot.lane.b32.xlu0 %v3653, 96
  %v3659 = vpop.permute.xlu0 %3658
  %3662 = vst.msk [vmem:[#allocation4 + $0x50] sm:$0xff] %vm2701, %v3657
  %3663 = vst.msk [vmem:[#allocation4 + $0xb0] sm:$0xff] %vm2701, %v3659
  %v3664 = vld [vmem:[#allocation2 + $0x2c0] sm:$0xff]
  %v3665 = vld [vmem:[#allocation2 + $0x2c8] sm:$0xff]
  %v3666 = vld [vmem:[#allocation3] sm:$0xff]
  %v3667 = vld [vmem:[#allocation3 + $0x8] sm:$0xff]
  %3669 = vset.pattern.permute.xlu0 44
  %3670 = vperm.xlu0 %3669, %v3666
  %v3671 = vpop.permute.xlu0 %3670
  %3674 = vset.pattern.permute.xlu0 44
  %3675 = vperm.xlu0 %3674, %v3667
  %v3676 = vpop.permute.xlu0 %3675
  %v3678 = vmul.f32 %v3664, %v3671
  %v3679 = vmul.f32 %v3665, %v3676
  %3680 = vst.msk [vmem:[#allocation4 + $0x58] sm:$0xff] %vm1809, %v3678
  %3681 = vst.msk [vmem:[#allocation4 + $0xb8] sm:$0xff] %vm1809, %v3679
  %v3682 = vld [vmem:[#allocation4] sm:$0xff]
  %v3683 = vld [vmem:[#allocation4 + $0x8] sm:$0xff]
  %v3684 = vld [vmem:[#allocation4 + $0x10] sm:$0xff]
  %v3685 = vld [vmem:[#allocation4 + $0x18] sm:$0xff]
  %v3686 = vld [vmem:[#allocation4 + $0x20] sm:$0xff]
  %v3687 = vld [vmem:[#allocation4 + $0x28] sm:$0xff]
  %v3688 = vld [vmem:[#allocation4 + $0x30] sm:$0xff]
  %v3689 = vld [vmem:[#allocation4 + $0x38] sm:$0xff]
  %v3690 = vld [vmem:[#allocation4 + $0x40] sm:$0xff]
  %v3691 = vld [vmem:[#allocation4 + $0x48] sm:$0xff]
  %v3692 = vld [vmem:[#allocation4 + $0x50] sm:$0xff]
  %v3693 = vld [vmem:[#allocation4 + $0x58] sm:$0xff]
  %v3694 = vld [vmem:[#allocation4 + $0x60] sm:$0xff]
  %v3695 = vld [vmem:[#allocation4 + $0x68] sm:$0xff]
  %v3696 = vld [vmem:[#allocation4 + $0x70] sm:$0xff]
  %v3697 = vld [vmem:[#allocation4 + $0x78] sm:$0xff]
  %v3698 = vld [vmem:[#allocation4 + $0x80] sm:$0xff]
  %v3699 = vld [vmem:[#allocation4 + $0x88] sm:$0xff]
  %v3700 = vld [vmem:[#allocation4 + $0x90] sm:$0xff]
  %v3701 = vld [vmem:[#allocation4 + $0x98] sm:$0xff]
  %v3702 = vld [vmem:[#allocation4 + $0xa0] sm:$0xff]
  %v3703 = vld [vmem:[#allocation4 + $0xa8] sm:$0xff]
  %v3704 = vld [vmem:[#allocation4 + $0xb0] sm:$0xff]
  %v3705 = vld [vmem:[#allocation4 + $0xb8] sm:$0xff]
  %v3706 = vpack.c.bf16 %v3694, %v3682
  %v3707 = vpack.c.bf16 %v3695, %v3683
  %v3708 = vpack.c.bf16 %v3696, %v3684
  %v3709 = vpack.c.bf16 %v3697, %v3685
  %v3710 = vpack.c.bf16 %v3698, %v3686
  %v3711 = vpack.c.bf16 %v3699, %v3687
  %v3712 = vpack.c.bf16 %v3700, %v3688
  %v3713 = vpack.c.bf16 %v3701, %v3689
  %v3714 = vpack.c.bf16 %v3702, %v3690
  %v3715 = vpack.c.bf16 %v3703, %v3691
  %v3716 = vpack.c.bf16 %v3704, %v3692
  %v3717 = vpack.c.bf16 %v3705, %v3693
  %v3718 = vld [vmem:[%s17] sm:$0xff]
  %v3719 = vld [vmem:[%s17 + $0x8] sm:$0xff]
  %v3720 = vld [vmem:[%s17 + $0x10] sm:$0xff]
  %v3721 = vld [vmem:[%s17 + $0x18] sm:$0xff]
  %v3722 = vld [vmem:[%s17 + $0x20] sm:$0xff]
  %v3723 = vld [vmem:[%s17 + $0x28] sm:$0xff]
  %v3724 = vld [vmem:[%s17 + $0x30] sm:$0xff]
  %v3725 = vld [vmem:[%s17 + $0x38] sm:$0xff]
  %v3726 = vld [vmem:[%s17 + $0x40] sm:$0xff]
  %v3727 = vld [vmem:[%s17 + $0x48] sm:$0xff]
  %v3728 = vld [vmem:[%s17 + $0x50] sm:$0xff]
  %v3729 = vld [vmem:[%s17 + $0x58] sm:$0xff]
  %v3730 = vld [vmem:[%s17 + $0x60] sm:$0xff]
  %v3731 = vld [vmem:[%s17 + $0x68] sm:$0xff]
  %v3732 = vld [vmem:[%s17 + $0x70] sm:$0xff]
  %v3733 = vld [vmem:[%s17 + $0x78] sm:$0xff]
  %v3734 = vld [vmem:[%s17 + $0x80] sm:$0xff]
  %v3735 = vld [vmem:[%s17 + $0x88] sm:$0xff]
  %v3736 = vld [vmem:[%s17 + $0x90] sm:$0xff]
  %v3737 = vld [vmem:[%s17 + $0x98] sm:$0xff]
  %v3738 = vld [vmem:[%s17 + $0xa0] sm:$0xff]
  %v3739 = vld [vmem:[%s17 + $0xa8] sm:$0xff]
  %v3740 = vld [vmem:[%s17 + $0xb0] sm:$0xff]
  %v3741 = vld [vmem:[%s17 + $0xb8] sm:$0xff]
  %v3742 = vld [vmem:[%s17 + $0xc0] sm:$0xff]
  %v3743 = vld [vmem:[%s17 + $0xc8] sm:$0xff]
  %v3744 = vld [vmem:[%s17 + $0xd0] sm:$0xff]
  %v3745 = vld [vmem:[%s17 + $0xd8] sm:$0xff]
  %v3746 = vld [vmem:[%s17 + $0xe0] sm:$0xff]
  %v3747 = vld [vmem:[%s17 + $0xe8] sm:$0xff]
  %v3748 = vld [vmem:[%s17 + $0xf0] sm:$0xff]
  %v3749 = vld [vmem:[%s17 + $0xf8] sm:$0xff]
  %v3750 = vld [vmem:[%s17 + $0x100] sm:$0xff]
  %v3751 = vld [vmem:[%s17 + $0x108] sm:$0xff]
  %v3752 = vld [vmem:[%s17 + $0x110] sm:$0xff]
  %v3753 = vld [vmem:[%s17 + $0x118] sm:$0xff]
  %v3754 = vld [vmem:[%s17 + $0x120] sm:$0xff]
  %v3755 = vld [vmem:[%s17 + $0x128] sm:$0xff]
  %v3756 = vld [vmem:[%s17 + $0x130] sm:$0xff]
  %v3757 = vld [vmem:[%s17 + $0x138] sm:$0xff]
  %v3758 = vld [vmem:[%s17 + $0x140] sm:$0xff]
  %v3759 = vld [vmem:[%s17 + $0x148] sm:$0xff]
  %v3760 = vld [vmem:[%s17 + $0x150] sm:$0xff]
  %v3761 = vld [vmem:[%s17 + $0x158] sm:$0xff]
  %v3762 = vld [vmem:[%s17 + $0x160] sm:$0xff]
  %v3763 = vld [vmem:[%s17 + $0x168] sm:$0xff]
  %v3764 = vld [vmem:[%s17 + $0x170] sm:$0xff]
  %v3765 = vld [vmem:[%s17 + $0x178] sm:$0xff]
  %v3766 = vld [vmem:[%s17 + $0x180] sm:$0xff]
  %v3767 = vld [vmem:[%s17 + $0x188] sm:$0xff]
  %v3768 = vld [vmem:[%s17 + $0x190] sm:$0xff]
  %v3769 = vld [vmem:[%s17 + $0x198] sm:$0xff]
  %v3770 = vld [vmem:[%s17 + $0x1a0] sm:$0xff]
  %v3771 = vld [vmem:[%s17 + $0x1a8] sm:$0xff]
  %v3772 = vld [vmem:[%s17 + $0x1b0] sm:$0xff]
  %v3773 = vld [vmem:[%s17 + $0x1b8] sm:$0xff]
  %v3774 = vld [vmem:[%s17 + $0x1c0] sm:$0xff]
  %v3775 = vld [vmem:[%s17 + $0x1c8] sm:$0xff]
  %v3776 = vld [vmem:[%s17 + $0x1d0] sm:$0xff]
  %v3777 = vld [vmem:[%s17 + $0x1d8] sm:$0xff]
  %v3778 = vld [vmem:[%s17 + $0x1e0] sm:$0xff]
  %v3779 = vld [vmem:[%s17 + $0x1e8] sm:$0xff]
  %v3780 = vld [vmem:[%s17 + $0x1f0] sm:$0xff]
  %v3781 = vld [vmem:[%s17 + $0x1f8] sm:$0xff]
  %v3782 = vld [vmem:[%s17 + $0x200] sm:$0xff]
  %v3783 = vld [vmem:[%s17 + $0x208] sm:$0xff]
  %v3784 = vld [vmem:[%s17 + $0x210] sm:$0xff]
  %v3785 = vld [vmem:[%s17 + $0x218] sm:$0xff]
  %v3786 = vld [vmem:[%s17 + $0x220] sm:$0xff]
  %v3787 = vld [vmem:[%s17 + $0x228] sm:$0xff]
  %v3788 = vld [vmem:[%s17 + $0x230] sm:$0xff]
  %v3789 = vld [vmem:[%s17 + $0x238] sm:$0xff]
  %v3790 = vld [vmem:[%s17 + $0x240] sm:$0xff]
  %v3791 = vld [vmem:[%s17 + $0x248] sm:$0xff]
  %v3792 = vld [vmem:[%s17 + $0x250] sm:$0xff]
  %v3793 = vld [vmem:[%s17 + $0x258] sm:$0xff]
  %v3794 = vld [vmem:[%s17 + $0x260] sm:$0xff]
  %v3795 = vld [vmem:[%s17 + $0x268] sm:$0xff]
  %v3796 = vld [vmem:[%s17 + $0x270] sm:$0xff]
  %v3797 = vld [vmem:[%s17 + $0x278] sm:$0xff]
  %v3798 = vld [vmem:[%s17 + $0x280] sm:$0xff]
  %v3799 = vld [vmem:[%s17 + $0x288] sm:$0xff]
  %v3800 = vld [vmem:[%s17 + $0x290] sm:$0xff]
  %v3801 = vld [vmem:[%s17 + $0x298] sm:$0xff]
  %v3802 = vld [vmem:[%s17 + $0x2a0] sm:$0xff]
  %v3803 = vld [vmem:[%s17 + $0x2a8] sm:$0xff]
  %v3804 = vld [vmem:[%s17 + $0x2b0] sm:$0xff]
  %v3805 = vld [vmem:[%s17 + $0x2b8] sm:$0xff]
  %v3806 = vld [vmem:[%s17 + $0x2c0] sm:$0xff]
  %v3807 = vld [vmem:[%s17 + $0x2c8] sm:$0xff]
  %v3808 = vld [vmem:[%s17 + $0x2d0] sm:$0xff]
  %v3809 = vld [vmem:[%s17 + $0x2d8] sm:$0xff]
  %v3810 = vld [vmem:[%s17 + $0x2e0] sm:$0xff]
  %v3811 = vld [vmem:[%s17 + $0x2e8] sm:$0xff]
  %v3812 = vld [vmem:[%s17 + $0x2f0] sm:$0xff]
  %v3813 = vld [vmem:[%s17 + $0x2f8] sm:$0xff]
  %v3814 = vld [vmem:[%s17 + $0x300] sm:$0xff]
  %v3815 = vld [vmem:[%s17 + $0x308] sm:$0xff]
  %v3816 = vld [vmem:[%s17 + $0x310] sm:$0xff]
  %v3817 = vld [vmem:[%s17 + $0x318] sm:$0xff]
  %v3818 = vld [vmem:[%s17 + $0x320] sm:$0xff]
  %v3819 = vld [vmem:[%s17 + $0x328] sm:$0xff]
  %v3820 = vld [vmem:[%s17 + $0x330] sm:$0xff]
  %v3821 = vld [vmem:[%s17 + $0x338] sm:$0xff]
  %v3822 = vld [vmem:[%s17 + $0x340] sm:$0xff]
  %v3823 = vld [vmem:[%s17 + $0x348] sm:$0xff]
  %v3824 = vld [vmem:[%s17 + $0x350] sm:$0xff]
  %v3825 = vld [vmem:[%s17 + $0x358] sm:$0xff]
  %v3826 = vld [vmem:[%s17 + $0x360] sm:$0xff]
  %v3827 = vld [vmem:[%s17 + $0x368] sm:$0xff]
  %v3828 = vld [vmem:[%s17 + $0x370] sm:$0xff]
  %v3829 = vld [vmem:[%s17 + $0x378] sm:$0xff]
  %v3830 = vld [vmem:[%s17 + $0x380] sm:$0xff]
  %v3831 = vld [vmem:[%s17 + $0x388] sm:$0xff]
  %v3832 = vld [vmem:[%s17 + $0x390] sm:$0xff]
  %v3833 = vld [vmem:[%s17 + $0x398] sm:$0xff]
  %v3834 = vld [vmem:[%s17 + $0x3a0] sm:$0xff]
  %v3835 = vld [vmem:[%s17 + $0x3a8] sm:$0xff]
  %v3836 = vld [vmem:[%s17 + $0x3b0] sm:$0xff]
  %v3837 = vld [vmem:[%s17 + $0x3b8] sm:$0xff]
  %v3838 = vld [vmem:[%s17 + $0x3c0] sm:$0xff]
  %v3839 = vld [vmem:[%s17 + $0x3c8] sm:$0xff]
  %v3840 = vld [vmem:[%s17 + $0x3d0] sm:$0xff]
  %v3841 = vld [vmem:[%s17 + $0x3d8] sm:$0xff]
  %v3842 = vld [vmem:[%s17 + $0x3e0] sm:$0xff]
  %v3843 = vld [vmem:[%s17 + $0x3e8] sm:$0xff]
  %v3844 = vld [vmem:[%s17 + $0x3f0] sm:$0xff]
  %v3845 = vld [vmem:[%s17 + $0x3f8] sm:$0xff]
  %v3846 = vld [vmem:[%s17 + $0x400] sm:$0xff]
  %v3847 = vld [vmem:[%s17 + $0x408] sm:$0xff]
  %v3848 = vld [vmem:[%s17 + $0x410] sm:$0xff]
  %v3849 = vld [vmem:[%s17 + $0x418] sm:$0xff]
  %v3850 = vld [vmem:[%s17 + $0x420] sm:$0xff]
  %v3851 = vld [vmem:[%s17 + $0x428] sm:$0xff]
  %v3852 = vld [vmem:[%s17 + $0x430] sm:$0xff]
  %v3853 = vld [vmem:[%s17 + $0x438] sm:$0xff]
  %v3854 = vld [vmem:[%s17 + $0x440] sm:$0xff]
  %v3855 = vld [vmem:[%s17 + $0x448] sm:$0xff]
  %v3856 = vld [vmem:[%s17 + $0x450] sm:$0xff]
  %v3857 = vld [vmem:[%s17 + $0x458] sm:$0xff]
  %v3858 = vld [vmem:[%s17 + $0x460] sm:$0xff]
  %v3859 = vld [vmem:[%s17 + $0x468] sm:$0xff]
  %v3860 = vld [vmem:[%s17 + $0x470] sm:$0xff]
  %v3861 = vld [vmem:[%s17 + $0x478] sm:$0xff]
  %v3862 = vld [vmem:[%s17 + $0x480] sm:$0xff]
  %v3863 = vld [vmem:[%s17 + $0x488] sm:$0xff]
  %v3864 = vld [vmem:[%s17 + $0x490] sm:$0xff]
  %v3865 = vld [vmem:[%s17 + $0x498] sm:$0xff]
  %v3866 = vld [vmem:[%s17 + $0x4a0] sm:$0xff]
  %v3867 = vld [vmem:[%s17 + $0x4a8] sm:$0xff]
  %v3868 = vld [vmem:[%s17 + $0x4b0] sm:$0xff]
  %v3869 = vld [vmem:[%s17 + $0x4b8] sm:$0xff]
  %v3870 = vld [vmem:[%s17 + $0x4c0] sm:$0xff]
  %v3871 = vld [vmem:[%s17 + $0x4c8] sm:$0xff]
  %v3872 = vld [vmem:[%s17 + $0x4d0] sm:$0xff]
  %v3873 = vld [vmem:[%s17 + $0x4d8] sm:$0xff]
  %v3874 = vld [vmem:[%s17 + $0x4e0] sm:$0xff]
  %v3875 = vld [vmem:[%s17 + $0x4e8] sm:$0xff]
  %v3876 = vld [vmem:[%s17 + $0x4f0] sm:$0xff]
  %v3877 = vld [vmem:[%s17 + $0x4f8] sm:$0xff]
  %v3878 = vld [vmem:[%s17 + $0x500] sm:$0xff]
  %v3879 = vld [vmem:[%s17 + $0x508] sm:$0xff]
  %v3880 = vld [vmem:[%s17 + $0x510] sm:$0xff]
  %v3881 = vld [vmem:[%s17 + $0x518] sm:$0xff]
  %v3882 = vld [vmem:[%s17 + $0x520] sm:$0xff]
  %v3883 = vld [vmem:[%s17 + $0x528] sm:$0xff]
  %v3884 = vld [vmem:[%s17 + $0x530] sm:$0xff]
  %v3885 = vld [vmem:[%s17 + $0x538] sm:$0xff]
  %v3886 = vld [vmem:[%s17 + $0x540] sm:$0xff]
  %v3887 = vld [vmem:[%s17 + $0x548] sm:$0xff]
  %v3888 = vld [vmem:[%s17 + $0x550] sm:$0xff]
  %v3889 = vld [vmem:[%s17 + $0x558] sm:$0xff]
  %v3890 = vld [vmem:[%s17 + $0x560] sm:$0xff]
  %v3891 = vld [vmem:[%s17 + $0x568] sm:$0xff]
  %v3892 = vld [vmem:[%s17 + $0x570] sm:$0xff]
  %v3893 = vld [vmem:[%s17 + $0x578] sm:$0xff]
  %v3894 = vld [vmem:[%s17 + $0x580] sm:$0xff]
  %v3895 = vld [vmem:[%s17 + $0x588] sm:$0xff]
  %v3896 = vld [vmem:[%s17 + $0x590] sm:$0xff]
  %v3897 = vld [vmem:[%s17 + $0x598] sm:$0xff]
  %v3898 = vld [vmem:[%s17 + $0x5a0] sm:$0xff]
  %v3899 = vld [vmem:[%s17 + $0x5a8] sm:$0xff]
  %v3900 = vld [vmem:[%s17 + $0x5b0] sm:$0xff]
  %v3901 = vld [vmem:[%s17 + $0x5b8] sm:$0xff]
  %v3902 = vld [vmem:[%s17 + $0x5c0] sm:$0xff]
  %v3903 = vld [vmem:[%s17 + $0x5c8] sm:$0xff]
  %v3904 = vld [vmem:[%s17 + $0x5d0] sm:$0xff]
  %v3905 = vld [vmem:[%s17 + $0x5d8] sm:$0xff]
  %v3906 = vld [vmem:[%s17 + $0x5e0] sm:$0xff]
  %v3907 = vld [vmem:[%s17 + $0x5e8] sm:$0xff]
  %v3908 = vld [vmem:[%s17 + $0x5f0] sm:$0xff]
  %v3909 = vld [vmem:[%s17 + $0x5f8] sm:$0xff]
  %v3910 = vld [vmem:[%s17 + $0x600] sm:$0xff]
  %v3911 = vld [vmem:[%s17 + $0x608] sm:$0xff]
  %v3912 = vld [vmem:[%s17 + $0x610] sm:$0xff]
  %v3913 = vld [vmem:[%s17 + $0x618] sm:$0xff]
  %v3914 = vld [vmem:[%s17 + $0x620] sm:$0xff]
  %v3915 = vld [vmem:[%s17 + $0x628] sm:$0xff]
  %v3916 = vld [vmem:[%s17 + $0x630] sm:$0xff]
  %v3917 = vld [vmem:[%s17 + $0x638] sm:$0xff]
  %v3918 = vld [vmem:[%s17 + $0x640] sm:$0xff]
  %v3919 = vld [vmem:[%s17 + $0x648] sm:$0xff]
  %v3920 = vld [vmem:[%s17 + $0x650] sm:$0xff]
  %v3921 = vld [vmem:[%s17 + $0x658] sm:$0xff]
  %v3922 = vld [vmem:[%s17 + $0x660] sm:$0xff]
  %v3923 = vld [vmem:[%s17 + $0x668] sm:$0xff]
  %v3924 = vld [vmem:[%s17 + $0x670] sm:$0xff]
  %v3925 = vld [vmem:[%s17 + $0x678] sm:$0xff]
  %v3926 = vld [vmem:[%s17 + $0x680] sm:$0xff]
  %v3927 = vld [vmem:[%s17 + $0x688] sm:$0xff]
  %v3928 = vld [vmem:[%s17 + $0x690] sm:$0xff]
  %v3929 = vld [vmem:[%s17 + $0x698] sm:$0xff]
  %v3930 = vld [vmem:[%s17 + $0x6a0] sm:$0xff]
  %v3931 = vld [vmem:[%s17 + $0x6a8] sm:$0xff]
  %v3932 = vld [vmem:[%s17 + $0x6b0] sm:$0xff]
  %v3933 = vld [vmem:[%s17 + $0x6b8] sm:$0xff]
  %v3934 = vld [vmem:[%s17 + $0x6c0] sm:$0xff]
  %v3935 = vld [vmem:[%s17 + $0x6c8] sm:$0xff]
  %v3936 = vld [vmem:[%s17 + $0x6d0] sm:$0xff]
  %v3937 = vld [vmem:[%s17 + $0x6d8] sm:$0xff]
  %v3938 = vld [vmem:[%s17 + $0x6e0] sm:$0xff]
  %v3939 = vld [vmem:[%s17 + $0x6e8] sm:$0xff]
  %v3940 = vld [vmem:[%s17 + $0x6f0] sm:$0xff]
  %v3941 = vld [vmem:[%s17 + $0x6f8] sm:$0xff]
  %v3942 = vld [vmem:[%s17 + $0x700] sm:$0xff]
  %v3943 = vld [vmem:[%s17 + $0x708] sm:$0xff]
  %v3944 = vld [vmem:[%s17 + $0x710] sm:$0xff]
  %v3945 = vld [vmem:[%s17 + $0x718] sm:$0xff]
  %v3946 = vld [vmem:[%s17 + $0x720] sm:$0xff]
  %v3947 = vld [vmem:[%s17 + $0x728] sm:$0xff]
  %v3948 = vld [vmem:[%s17 + $0x730] sm:$0xff]
  %v3949 = vld [vmem:[%s17 + $0x738] sm:$0xff]
  %v3950 = vld [vmem:[%s17 + $0x740] sm:$0xff]
  %v3951 = vld [vmem:[%s17 + $0x748] sm:$0xff]
  %v3952 = vld [vmem:[%s17 + $0x750] sm:$0xff]
  %v3953 = vld [vmem:[%s17 + $0x758] sm:$0xff]
  %v3954 = vld [vmem:[%s17 + $0x760] sm:$0xff]
  %v3955 = vld [vmem:[%s17 + $0x768] sm:$0xff]
  %v3956 = vld [vmem:[%s17 + $0x770] sm:$0xff]
  %v3957 = vld [vmem:[%s17 + $0x778] sm:$0xff]
  %v3958 = vld [vmem:[%s17 + $0x780] sm:$0xff]
  %v3959 = vld [vmem:[%s17 + $0x788] sm:$0xff]
  %v3960 = vld [vmem:[%s17 + $0x790] sm:$0xff]
  %v3961 = vld [vmem:[%s17 + $0x798] sm:$0xff]
  %v3962 = vld [vmem:[%s17 + $0x7a0] sm:$0xff]
  %v3963 = vld [vmem:[%s17 + $0x7a8] sm:$0xff]
  %v3964 = vld [vmem:[%s17 + $0x7b0] sm:$0xff]
  %v3965 = vld [vmem:[%s17 + $0x7b8] sm:$0xff]
  %v3966 = vld [vmem:[%s17 + $0x7c0] sm:$0xff]
  %v3967 = vld [vmem:[%s17 + $0x7c8] sm:$0xff]
  %v3968 = vld [vmem:[%s17 + $0x7d0] sm:$0xff]
  %v3969 = vld [vmem:[%s17 + $0x7d8] sm:$0xff]
  %v3970 = vld [vmem:[%s17 + $0x7e0] sm:$0xff]
  %v3971 = vld [vmem:[%s17 + $0x7e8] sm:$0xff]
  %v3972 = vld [vmem:[%s17 + $0x7f0] sm:$0xff]
  %v3973 = vld [vmem:[%s17 + $0x7f8] sm:$0xff]
  %v3974 = vld [vmem:[%s17 + $0x800] sm:$0xff]
  %v3975 = vld [vmem:[%s17 + $0x808] sm:$0xff]
  %v3976 = vld [vmem:[%s17 + $0x810] sm:$0xff]
  %v3977 = vld [vmem:[%s17 + $0x818] sm:$0xff]
  %v3978 = vld [vmem:[%s17 + $0x820] sm:$0xff]
  %v3979 = vld [vmem:[%s17 + $0x828] sm:$0xff]
  %v3980 = vld [vmem:[%s17 + $0x830] sm:$0xff]
  %v3981 = vld [vmem:[%s17 + $0x838] sm:$0xff]
  %v3982 = vld [vmem:[%s17 + $0x840] sm:$0xff]
  %v3983 = vld [vmem:[%s17 + $0x848] sm:$0xff]
  %v3984 = vld [vmem:[%s17 + $0x850] sm:$0xff]
  %v3985 = vld [vmem:[%s17 + $0x858] sm:$0xff]
  %v3986 = vld [vmem:[%s17 + $0x860] sm:$0xff]
  %v3987 = vld [vmem:[%s17 + $0x868] sm:$0xff]
  %v3988 = vld [vmem:[%s17 + $0x870] sm:$0xff]
  %v3989 = vld [vmem:[%s17 + $0x878] sm:$0xff]
  %v3990 = vld [vmem:[%s17 + $0x880] sm:$0xff]
  %v3991 = vld [vmem:[%s17 + $0x888] sm:$0xff]
  %v3992 = vld [vmem:[%s17 + $0x890] sm:$0xff]
  %v3993 = vld [vmem:[%s17 + $0x898] sm:$0xff]
  %v3994 = vld [vmem:[%s17 + $0x8a0] sm:$0xff]
  %v3995 = vld [vmem:[%s17 + $0x8a8] sm:$0xff]
  %v3996 = vld [vmem:[%s17 + $0x8b0] sm:$0xff]
  %v3997 = vld [vmem:[%s17 + $0x8b8] sm:$0xff]
  %v3998 = vld [vmem:[%s17 + $0x8c0] sm:$0xff]
  %v3999 = vld [vmem:[%s17 + $0x8c8] sm:$0xff]
  %v4000 = vld [vmem:[%s17 + $0x8d0] sm:$0xff]
  %v4001 = vld [vmem:[%s17 + $0x8d8] sm:$0xff]
  %v4002 = vld [vmem:[%s17 + $0x8e0] sm:$0xff]
  %v4003 = vld [vmem:[%s17 + $0x8e8] sm:$0xff]
  %v4004 = vld [vmem:[%s17 + $0x8f0] sm:$0xff]
  %v4005 = vld [vmem:[%s17 + $0x8f8] sm:$0xff]
  %v4006 = vld [vmem:[%s17 + $0x900] sm:$0xff]
  %v4007 = vld [vmem:[%s17 + $0x908] sm:$0xff]
  %v4008 = vld [vmem:[%s17 + $0x910] sm:$0xff]
  %v4009 = vld [vmem:[%s17 + $0x918] sm:$0xff]
  %v4010 = vld [vmem:[%s17 + $0x920] sm:$0xff]
  %v4011 = vld [vmem:[%s17 + $0x928] sm:$0xff]
  %v4012 = vld [vmem:[%s17 + $0x930] sm:$0xff]
  %v4013 = vld [vmem:[%s17 + $0x938] sm:$0xff]
  %v4014 = vld [vmem:[%s17 + $0x940] sm:$0xff]
  %v4015 = vld [vmem:[%s17 + $0x948] sm:$0xff]
  %v4016 = vld [vmem:[%s17 + $0x950] sm:$0xff]
  %v4017 = vld [vmem:[%s17 + $0x958] sm:$0xff]
  %v4018 = vld [vmem:[%s17 + $0x960] sm:$0xff]
  %v4019 = vld [vmem:[%s17 + $0x968] sm:$0xff]
  %v4020 = vld [vmem:[%s17 + $0x970] sm:$0xff]
  %v4021 = vld [vmem:[%s17 + $0x978] sm:$0xff]
  %v4022 = vld [vmem:[%s17 + $0x980] sm:$0xff]
  %v4023 = vld [vmem:[%s17 + $0x988] sm:$0xff]
  %v4024 = vld [vmem:[%s17 + $0x990] sm:$0xff]
  %v4025 = vld [vmem:[%s17 + $0x998] sm:$0xff]
  %v4026 = vld [vmem:[%s17 + $0x9a0] sm:$0xff]
  %v4027 = vld [vmem:[%s17 + $0x9a8] sm:$0xff]
  %v4028 = vld [vmem:[%s17 + $0x9b0] sm:$0xff]
  %v4029 = vld [vmem:[%s17 + $0x9b8] sm:$0xff]
  %v4030 = vld [vmem:[%s17 + $0x9c0] sm:$0xff]
  %v4031 = vld [vmem:[%s17 + $0x9c8] sm:$0xff]
  %v4032 = vld [vmem:[%s17 + $0x9d0] sm:$0xff]
  %v4033 = vld [vmem:[%s17 + $0x9d8] sm:$0xff]
  %v4034 = vld [vmem:[%s17 + $0x9e0] sm:$0xff]
  %v4035 = vld [vmem:[%s17 + $0x9e8] sm:$0xff]
  %v4036 = vld [vmem:[%s17 + $0x9f0] sm:$0xff]
  %v4037 = vld [vmem:[%s17 + $0x9f8] sm:$0xff]
  %v4038 = vld [vmem:[%s17 + $0xa00] sm:$0xff]
  %v4039 = vld [vmem:[%s17 + $0xa08] sm:$0xff]
  %v4040 = vld [vmem:[%s17 + $0xa10] sm:$0xff]
  %v4041 = vld [vmem:[%s17 + $0xa18] sm:$0xff]
  %v4042 = vld [vmem:[%s17 + $0xa20] sm:$0xff]
  %v4043 = vld [vmem:[%s17 + $0xa28] sm:$0xff]
  %v4044 = vld [vmem:[%s17 + $0xa30] sm:$0xff]
  %v4045 = vld [vmem:[%s17 + $0xa38] sm:$0xff]
  %v4046 = vld [vmem:[%s17 + $0xa40] sm:$0xff]
  %v4047 = vld [vmem:[%s17 + $0xa48] sm:$0xff]
  %v4048 = vld [vmem:[%s17 + $0xa50] sm:$0xff]
  %v4049 = vld [vmem:[%s17 + $0xa58] sm:$0xff]
  %v4050 = vld [vmem:[%s17 + $0xa60] sm:$0xff]
  %v4051 = vld [vmem:[%s17 + $0xa68] sm:$0xff]
  %v4052 = vld [vmem:[%s17 + $0xa70] sm:$0xff]
  %v4053 = vld [vmem:[%s17 + $0xa78] sm:$0xff]
  %v4054 = vld [vmem:[%s17 + $0xa80] sm:$0xff]
  %v4055 = vld [vmem:[%s17 + $0xa88] sm:$0xff]
  %v4056 = vld [vmem:[%s17 + $0xa90] sm:$0xff]
  %v4057 = vld [vmem:[%s17 + $0xa98] sm:$0xff]
  %v4058 = vld [vmem:[%s17 + $0xaa0] sm:$0xff]
  %v4059 = vld [vmem:[%s17 + $0xaa8] sm:$0xff]
  %v4060 = vld [vmem:[%s17 + $0xab0] sm:$0xff]
  %v4061 = vld [vmem:[%s17 + $0xab8] sm:$0xff]
  %v4062 = vld [vmem:[%s17 + $0xac0] sm:$0xff]
  %v4063 = vld [vmem:[%s17 + $0xac8] sm:$0xff]
  %v4064 = vld [vmem:[%s17 + $0xad0] sm:$0xff]
  %v4065 = vld [vmem:[%s17 + $0xad8] sm:$0xff]
  %v4066 = vld [vmem:[%s17 + $0xae0] sm:$0xff]
  %v4067 = vld [vmem:[%s17 + $0xae8] sm:$0xff]
  %v4068 = vld [vmem:[%s17 + $0xaf0] sm:$0xff]
  %v4069 = vld [vmem:[%s17 + $0xaf8] sm:$0xff]
  %v4070 = vld [vmem:[%s17 + $0xb00] sm:$0xff]
  %v4071 = vld [vmem:[%s17 + $0xb08] sm:$0xff]
  %v4072 = vld [vmem:[%s17 + $0xb10] sm:$0xff]
  %v4073 = vld [vmem:[%s17 + $0xb18] sm:$0xff]
  %v4074 = vld [vmem:[%s17 + $0xb20] sm:$0xff]
  %v4075 = vld [vmem:[%s17 + $0xb28] sm:$0xff]
  %v4076 = vld [vmem:[%s17 + $0xb30] sm:$0xff]
  %v4077 = vld [vmem:[%s17 + $0xb38] sm:$0xff]
  %v4078 = vld [vmem:[%s18] sm:$0xf]
  %v4080 = vlaneseq
  %v4081 = vshrl.u32 %v4080, 7
  %v4082 = vsub.s32 0, %v4081
  %v4083 = vrot.slane %v4078, %v4082
  %v4084 = vlaneseq
  %v4085 = vshrl.u32 %v4084, 7
  %v4086 = vsub.s32 1, %v4085
  %v4087 = vrot.slane %v4078, %v4086
  %v4088 = vlaneseq
  %v4089 = vshrl.u32 %v4088, 7
  %v4090 = vsub.s32 2, %v4089
  %v4091 = vrot.slane %v4078, %v4090
  %v4092 = vlaneseq
  %v4093 = vshrl.u32 %v4092, 7
  %v4094 = vsub.s32 3, %v4093
  %v4095 = vrot.slane %v4078, %v4094
  %v4460 = vunpack.c.l.b16 %v3718
  %v4461 = vunpack.c.h.b16 %v3718
  %v4462 = vunpack.c.l.b16 %v3719
  %v4463 = vunpack.c.h.b16 %v3719
  %v4464 = vunpack.c.l.b16 %v3720
  %v4465 = vunpack.c.h.b16 %v3720
  %v4466 = vunpack.c.l.b16 %v3721
  %v4467 = vunpack.c.h.b16 %v3721
  %v4468 = vunpack.c.l.b16 %v3722
  %v4469 = vunpack.c.h.b16 %v3722
  %v4470 = vunpack.c.l.b16 %v3723
  %v4471 = vunpack.c.h.b16 %v3723
  %v4472 = vunpack.c.l.b16 %v3724
  %v4473 = vunpack.c.h.b16 %v3724
  %v4474 = vunpack.c.l.b16 %v3725
  %v4475 = vunpack.c.h.b16 %v3725
  %v4476 = vunpack.c.l.b16 %v3726
  %v4477 = vunpack.c.h.b16 %v3726
  %v4478 = vunpack.c.l.b16 %v3727
  %v4479 = vunpack.c.h.b16 %v3727
  %v4480 = vunpack.c.l.b16 %v3728
  %v4481 = vunpack.c.h.b16 %v3728
  %v4482 = vunpack.c.l.b16 %v3729
  %v4483 = vunpack.c.h.b16 %v3729
  %v4484 = vunpack.c.l.b16 %v3730
  %v4485 = vunpack.c.h.b16 %v3730
  %v4486 = vunpack.c.l.b16 %v3731
  %v4487 = vunpack.c.h.b16 %v3731
  %v4488 = vunpack.c.l.b16 %v3732
  %v4489 = vunpack.c.h.b16 %v3732
  %v4490 = vunpack.c.l.b16 %v3733
  %v4491 = vunpack.c.h.b16 %v3733
  %v4492 = vunpack.c.l.b16 %v3734
  %v4493 = vunpack.c.h.b16 %v3734
  %v4494 = vunpack.c.l.b16 %v3735
  %v4495 = vunpack.c.h.b16 %v3735
  %v4496 = vunpack.c.l.b16 %v3736
  %v4497 = vunpack.c.h.b16 %v3736
  %v4498 = vunpack.c.l.b16 %v3737
  %v4499 = vunpack.c.h.b16 %v3737
  %v4500 = vunpack.c.l.b16 %v3738
  %v4501 = vunpack.c.h.b16 %v3738
  %v4502 = vunpack.c.l.b16 %v3739
  %v4503 = vunpack.c.h.b16 %v3739
  %v4504 = vunpack.c.l.b16 %v3740
  %v4505 = vunpack.c.h.b16 %v3740
  %v4506 = vunpack.c.l.b16 %v3741
  %v4507 = vunpack.c.h.b16 %v3741
  %v4508 = vunpack.c.l.b16 %v3742
  %v4509 = vunpack.c.h.b16 %v3742
  %v4510 = vunpack.c.l.b16 %v3743
  %v4511 = vunpack.c.h.b16 %v3743
  %v4512 = vunpack.c.l.b16 %v3744
  %v4513 = vunpack.c.h.b16 %v3744
  %v4514 = vunpack.c.l.b16 %v3745
  %v4515 = vunpack.c.h.b16 %v3745
  %v4516 = vunpack.c.l.b16 %v3746
  %v4517 = vunpack.c.h.b16 %v3746
  %v4518 = vunpack.c.l.b16 %v3747
  %v4519 = vunpack.c.h.b16 %v3747
  %v4520 = vunpack.c.l.b16 %v3748
  %v4521 = vunpack.c.h.b16 %v3748
  %v4522 = vunpack.c.l.b16 %v3749
  %v4523 = vunpack.c.h.b16 %v3749
  %v4524 = vunpack.c.l.b16 %v3750
  %v4525 = vunpack.c.h.b16 %v3750
  %v4526 = vunpack.c.l.b16 %v3751
  %v4527 = vunpack.c.h.b16 %v3751
  %v4528 = vunpack.c.l.b16 %v3752
  %v4529 = vunpack.c.h.b16 %v3752
  %v4530 = vunpack.c.l.b16 %v3753
  %v4531 = vunpack.c.h.b16 %v3753
  %v4532 = vunpack.c.l.b16 %v3754
  %v4533 = vunpack.c.h.b16 %v3754
  %v4534 = vunpack.c.l.b16 %v3755
  %v4535 = vunpack.c.h.b16 %v3755
  %v4536 = vunpack.c.l.b16 %v3756
  %v4537 = vunpack.c.h.b16 %v3756
  %v4538 = vunpack.c.l.b16 %v3757
  %v4539 = vunpack.c.h.b16 %v3757
  %v4540 = vunpack.c.l.b16 %v3758
  %v4541 = vunpack.c.h.b16 %v3758
  %v4542 = vunpack.c.l.b16 %v3759
  %v4543 = vunpack.c.h.b16 %v3759
  %v4544 = vunpack.c.l.b16 %v3760
  %v4545 = vunpack.c.h.b16 %v3760
  %v4546 = vunpack.c.l.b16 %v3761
  %v4547 = vunpack.c.h.b16 %v3761
  %v4548 = vunpack.c.l.b16 %v3762
  %v4549 = vunpack.c.h.b16 %v3762
  %v4550 = vunpack.c.l.b16 %v3763
  %v4551 = vunpack.c.h.b16 %v3763
  %v4552 = vunpack.c.l.b16 %v3764
  %v4553 = vunpack.c.h.b16 %v3764
  %v4554 = vunpack.c.l.b16 %v3765
  %v4555 = vunpack.c.h.b16 %v3765
  %v4556 = vunpack.c.l.b16 %v3766
  %v4557 = vunpack.c.h.b16 %v3766
  %v4558 = vunpack.c.l.b16 %v3767
  %v4559 = vunpack.c.h.b16 %v3767
  %v4560 = vunpack.c.l.b16 %v3768
  %v4561 = vunpack.c.h.b16 %v3768
  %v4562 = vunpack.c.l.b16 %v3769
  %v4563 = vunpack.c.h.b16 %v3769
  %v4564 = vunpack.c.l.b16 %v3770
  %v4565 = vunpack.c.h.b16 %v3770
  %v4566 = vunpack.c.l.b16 %v3771
  %v4567 = vunpack.c.h.b16 %v3771
  %v4568 = vunpack.c.l.b16 %v3772
  %v4569 = vunpack.c.h.b16 %v3772
  %v4570 = vunpack.c.l.b16 %v3773
  %v4571 = vunpack.c.h.b16 %v3773
  %v4572 = vunpack.c.l.b16 %v3774
  %v4573 = vunpack.c.h.b16 %v3774
  %v4574 = vunpack.c.l.b16 %v3775
  %v4575 = vunpack.c.h.b16 %v3775
  %v4576 = vunpack.c.l.b16 %v3776
  %v4577 = vunpack.c.h.b16 %v3776
  %v4578 = vunpack.c.l.b16 %v3777
  %v4579 = vunpack.c.h.b16 %v3777
  %v4580 = vunpack.c.l.b16 %v3778
  %v4581 = vunpack.c.h.b16 %v3778
  %v4582 = vunpack.c.l.b16 %v3779
  %v4583 = vunpack.c.h.b16 %v3779
  %v4584 = vunpack.c.l.b16 %v3780
  %v4585 = vunpack.c.h.b16 %v3780
  %v4586 = vunpack.c.l.b16 %v3781
  %v4587 = vunpack.c.h.b16 %v3781
  %v4588 = vunpack.c.l.b16 %v3782
  %v4589 = vunpack.c.h.b16 %v3782
  %v4590 = vunpack.c.l.b16 %v3783
  %v4591 = vunpack.c.h.b16 %v3783
  %v4592 = vunpack.c.l.b16 %v3784
  %v4593 = vunpack.c.h.b16 %v3784
  %v4594 = vunpack.c.l.b16 %v3785
  %v4595 = vunpack.c.h.b16 %v3785
  %v4596 = vunpack.c.l.b16 %v3786
  %v4597 = vunpack.c.h.b16 %v3786
  %v4598 = vunpack.c.l.b16 %v3787
  %v4599 = vunpack.c.h.b16 %v3787
  %v4600 = vunpack.c.l.b16 %v3788
  %v4601 = vunpack.c.h.b16 %v3788
  %v4602 = vunpack.c.l.b16 %v3789
  %v4603 = vunpack.c.h.b16 %v3789
  %v4604 = vunpack.c.l.b16 %v3790
  %v4605 = vunpack.c.h.b16 %v3790
  %v4606 = vunpack.c.l.b16 %v3791
  %v4607 = vunpack.c.h.b16 %v3791
  %v4608 = vunpack.c.l.b16 %v3792
  %v4609 = vunpack.c.h.b16 %v3792
  %v4610 = vunpack.c.l.b16 %v3793
  %v4611 = vunpack.c.h.b16 %v3793
  %v4612 = vunpack.c.l.b16 %v3794
  %v4613 = vunpack.c.h.b16 %v3794
  %v4614 = vunpack.c.l.b16 %v3795
  %v4615 = vunpack.c.h.b16 %v3795
  %v4616 = vunpack.c.l.b16 %v3796
  %v4617 = vunpack.c.h.b16 %v3796
  %v4618 = vunpack.c.l.b16 %v3797
  %v4619 = vunpack.c.h.b16 %v3797
  %v4620 = vunpack.c.l.b16 %v3798
  %v4621 = vunpack.c.h.b16 %v3798
  %v4622 = vunpack.c.l.b16 %v3799
  %v4623 = vunpack.c.h.b16 %v3799
  %v4624 = vunpack.c.l.b16 %v3800
  %v4625 = vunpack.c.h.b16 %v3800
  %v4626 = vunpack.c.l.b16 %v3801
  %v4627 = vunpack.c.h.b16 %v3801
  %v4628 = vunpack.c.l.b16 %v3802
  %v4629 = vunpack.c.h.b16 %v3802
  %v4630 = vunpack.c.l.b16 %v3803
  %v4631 = vunpack.c.h.b16 %v3803
  %v4632 = vunpack.c.l.b16 %v3804
  %v4633 = vunpack.c.h.b16 %v3804
  %v4634 = vunpack.c.l.b16 %v3805
  %v4635 = vunpack.c.h.b16 %v3805
  %v4636 = vunpack.c.l.b16 %v3806
  %v4637 = vunpack.c.h.b16 %v3806
  %v4638 = vunpack.c.l.b16 %v3807
  %v4639 = vunpack.c.h.b16 %v3807
  %v4640 = vunpack.c.l.b16 %v3808
  %v4641 = vunpack.c.h.b16 %v3808
  %v4642 = vunpack.c.l.b16 %v3809
  %v4643 = vunpack.c.h.b16 %v3809
  %v4644 = vunpack.c.l.b16 %v3810
  %v4645 = vunpack.c.h.b16 %v3810
  %v4646 = vunpack.c.l.b16 %v3811
  %v4647 = vunpack.c.h.b16 %v3811
  %v4648 = vunpack.c.l.b16 %v3812
  %v4649 = vunpack.c.h.b16 %v3812
  %v4650 = vunpack.c.l.b16 %v3813
  %v4651 = vunpack.c.h.b16 %v3813
  %v4652 = vunpack.c.l.b16 %v3814
  %v4653 = vunpack.c.h.b16 %v3814
  %v4654 = vunpack.c.l.b16 %v3815
  %v4655 = vunpack.c.h.b16 %v3815
  %v4656 = vunpack.c.l.b16 %v3816
  %v4657 = vunpack.c.h.b16 %v3816
  %v4658 = vunpack.c.l.b16 %v3817
  %v4659 = vunpack.c.h.b16 %v3817
  %v4660 = vunpack.c.l.b16 %v3818
  %v4661 = vunpack.c.h.b16 %v3818
  %v4662 = vunpack.c.l.b16 %v3819
  %v4663 = vunpack.c.h.b16 %v3819
  %v4664 = vunpack.c.l.b16 %v3820
  %v4665 = vunpack.c.h.b16 %v3820
  %v4666 = vunpack.c.l.b16 %v3821
  %v4667 = vunpack.c.h.b16 %v3821
  %v4668 = vunpack.c.l.b16 %v3822
  %v4669 = vunpack.c.h.b16 %v3822
  %v4670 = vunpack.c.l.b16 %v3823
  %v4671 = vunpack.c.h.b16 %v3823
  %v4672 = vunpack.c.l.b16 %v3824
  %v4673 = vunpack.c.h.b16 %v3824
  %v4674 = vunpack.c.l.b16 %v3825
  %v4675 = vunpack.c.h.b16 %v3825
  %v4676 = vunpack.c.l.b16 %v3826
  %v4677 = vunpack.c.h.b16 %v3826
  %v4678 = vunpack.c.l.b16 %v3827
  %v4679 = vunpack.c.h.b16 %v3827
  %v4680 = vunpack.c.l.b16 %v3828
  %v4681 = vunpack.c.h.b16 %v3828
  %v4682 = vunpack.c.l.b16 %v3829
  %v4683 = vunpack.c.h.b16 %v3829
  %v4684 = vunpack.c.l.b16 %v3830
  %v4685 = vunpack.c.h.b16 %v3830
  %v4686 = vunpack.c.l.b16 %v3831
  %v4687 = vunpack.c.h.b16 %v3831
  %v4688 = vunpack.c.l.b16 %v3832
  %v4689 = vunpack.c.h.b16 %v3832
  %v4690 = vunpack.c.l.b16 %v3833
  %v4691 = vunpack.c.h.b16 %v3833
  %v4692 = vunpack.c.l.b16 %v3834
  %v4693 = vunpack.c.h.b16 %v3834
  %v4694 = vunpack.c.l.b16 %v3835
  %v4695 = vunpack.c.h.b16 %v3835
  %v4696 = vunpack.c.l.b16 %v3836
  %v4697 = vunpack.c.h.b16 %v3836
  %v4698 = vunpack.c.l.b16 %v3837
  %v4699 = vunpack.c.h.b16 %v3837
  %v4700 = vunpack.c.l.b16 %v3838
  %v4701 = vunpack.c.h.b16 %v3838
  %v4702 = vunpack.c.l.b16 %v3839
  %v4703 = vunpack.c.h.b16 %v3839
  %v4704 = vunpack.c.l.b16 %v3840
  %v4705 = vunpack.c.h.b16 %v3840
  %v4706 = vunpack.c.l.b16 %v3841
  %v4707 = vunpack.c.h.b16 %v3841
  %v4708 = vunpack.c.l.b16 %v3842
  %v4709 = vunpack.c.h.b16 %v3842
  %v4710 = vunpack.c.l.b16 %v3843
  %v4711 = vunpack.c.h.b16 %v3843
  %v4712 = vunpack.c.l.b16 %v3844
  %v4713 = vunpack.c.h.b16 %v3844
  %v4714 = vunpack.c.l.b16 %v3845
  %v4715 = vunpack.c.h.b16 %v3845
  %v4716 = vunpack.c.l.b16 %v3846
  %v4717 = vunpack.c.h.b16 %v3846
  %v4718 = vunpack.c.l.b16 %v3847
  %v4719 = vunpack.c.h.b16 %v3847
  %v4720 = vunpack.c.l.b16 %v3848
  %v4721 = vunpack.c.h.b16 %v3848
  %v4722 = vunpack.c.l.b16 %v3849
  %v4723 = vunpack.c.h.b16 %v3849
  %v4724 = vunpack.c.l.b16 %v3850
  %v4725 = vunpack.c.h.b16 %v3850
  %v4726 = vunpack.c.l.b16 %v3851
  %v4727 = vunpack.c.h.b16 %v3851
  %v4728 = vunpack.c.l.b16 %v3852
  %v4729 = vunpack.c.h.b16 %v3852
  %v4730 = vunpack.c.l.b16 %v3853
  %v4731 = vunpack.c.h.b16 %v3853
  %v4732 = vunpack.c.l.b16 %v3854
  %v4733 = vunpack.c.h.b16 %v3854
  %v4734 = vunpack.c.l.b16 %v3855
  %v4735 = vunpack.c.h.b16 %v3855
  %v4736 = vunpack.c.l.b16 %v3856
  %v4737 = vunpack.c.h.b16 %v3856
  %v4738 = vunpack.c.l.b16 %v3857
  %v4739 = vunpack.c.h.b16 %v3857
  %v4740 = vunpack.c.l.b16 %v3858
  %v4741 = vunpack.c.h.b16 %v3858
  %v4742 = vunpack.c.l.b16 %v3859
  %v4743 = vunpack.c.h.b16 %v3859
  %v4744 = vunpack.c.l.b16 %v3860
  %v4745 = vunpack.c.h.b16 %v3860
  %v4746 = vunpack.c.l.b16 %v3861
  %v4747 = vunpack.c.h.b16 %v3861
  %v4748 = vunpack.c.l.b16 %v3862
  %v4749 = vunpack.c.h.b16 %v3862
  %v4750 = vunpack.c.l.b16 %v3863
  %v4751 = vunpack.c.h.b16 %v3863
  %v4752 = vunpack.c.l.b16 %v3864
  %v4753 = vunpack.c.h.b16 %v3864
  %v4754 = vunpack.c.l.b16 %v3865
  %v4755 = vunpack.c.h.b16 %v3865
  %v4756 = vunpack.c.l.b16 %v3866
  %v4757 = vunpack.c.h.b16 %v3866
  %v4758 = vunpack.c.l.b16 %v3867
  %v4759 = vunpack.c.h.b16 %v3867
  %v4760 = vunpack.c.l.b16 %v3868
  %v4761 = vunpack.c.h.b16 %v3868
  %v4762 = vunpack.c.l.b16 %v3869
  %v4763 = vunpack.c.h.b16 %v3869
  %v4764 = vunpack.c.l.b16 %v3870
  %v4765 = vunpack.c.h.b16 %v3870
  %v4766 = vunpack.c.l.b16 %v3871
  %v4767 = vunpack.c.h.b16 %v3871
  %v4768 = vunpack.c.l.b16 %v3872
  %v4769 = vunpack.c.h.b16 %v3872
  %v4770 = vunpack.c.l.b16 %v3873
  %v4771 = vunpack.c.h.b16 %v3873
  %v4772 = vunpack.c.l.b16 %v3874
  %v4773 = vunpack.c.h.b16 %v3874
  %v4774 = vunpack.c.l.b16 %v3875
  %v4775 = vunpack.c.h.b16 %v3875
  %v4776 = vunpack.c.l.b16 %v3876
  %v4777 = vunpack.c.h.b16 %v3876
  %v4778 = vunpack.c.l.b16 %v3877
  %v4779 = vunpack.c.h.b16 %v3877
  %v4780 = vunpack.c.l.b16 %v3878
  %v4781 = vunpack.c.h.b16 %v3878
  %v4782 = vunpack.c.l.b16 %v3879
  %v4783 = vunpack.c.h.b16 %v3879
  %v4784 = vunpack.c.l.b16 %v3880
  %v4785 = vunpack.c.h.b16 %v3880
  %v4786 = vunpack.c.l.b16 %v3881
  %v4787 = vunpack.c.h.b16 %v3881
  %v4788 = vunpack.c.l.b16 %v3882
  %v4789 = vunpack.c.h.b16 %v3882
  %v4790 = vunpack.c.l.b16 %v3883
  %v4791 = vunpack.c.h.b16 %v3883
  %v4792 = vunpack.c.l.b16 %v3884
  %v4793 = vunpack.c.h.b16 %v3884
  %v4794 = vunpack.c.l.b16 %v3885
  %v4795 = vunpack.c.h.b16 %v3885
  %v4796 = vunpack.c.l.b16 %v3886
  %v4797 = vunpack.c.h.b16 %v3886
  %v4798 = vunpack.c.l.b16 %v3887
  %v4799 = vunpack.c.h.b16 %v3887
  %v4800 = vunpack.c.l.b16 %v3888
  %v4801 = vunpack.c.h.b16 %v3888
  %v4802 = vunpack.c.l.b16 %v3889
  %v4803 = vunpack.c.h.b16 %v3889
  %v4804 = vunpack.c.l.b16 %v3890
  %v4805 = vunpack.c.h.b16 %v3890
  %v4806 = vunpack.c.l.b16 %v3891
  %v4807 = vunpack.c.h.b16 %v3891
  %v4808 = vunpack.c.l.b16 %v3892
  %v4809 = vunpack.c.h.b16 %v3892
  %v4810 = vunpack.c.l.b16 %v3893
  %v4811 = vunpack.c.h.b16 %v3893
  %v4812 = vunpack.c.l.b16 %v3894
  %v4813 = vunpack.c.h.b16 %v3894
  %v4814 = vunpack.c.l.b16 %v3895
  %v4815 = vunpack.c.h.b16 %v3895
  %v4816 = vunpack.c.l.b16 %v3896
  %v4817 = vunpack.c.h.b16 %v3896
  %v4818 = vunpack.c.l.b16 %v3897
  %v4819 = vunpack.c.h.b16 %v3897
  %v4820 = vunpack.c.l.b16 %v3898
  %v4821 = vunpack.c.h.b16 %v3898
  %v4822 = vunpack.c.l.b16 %v3899
  %v4823 = vunpack.c.h.b16 %v3899
  %v4824 = vunpack.c.l.b16 %v3900
  %v4825 = vunpack.c.h.b16 %v3900
  %v4826 = vunpack.c.l.b16 %v3901
  %v4827 = vunpack.c.h.b16 %v3901
  %v4828 = vunpack.c.l.b16 %v3902
  %v4829 = vunpack.c.h.b16 %v3902
  %v4830 = vunpack.c.l.b16 %v3903
  %v4831 = vunpack.c.h.b16 %v3903
  %v4832 = vunpack.c.l.b16 %v3904
  %v4833 = vunpack.c.h.b16 %v3904
  %v4834 = vunpack.c.l.b16 %v3905
  %v4835 = vunpack.c.h.b16 %v3905
  %v4836 = vunpack.c.l.b16 %v3906
  %v4837 = vunpack.c.h.b16 %v3906
  %v4838 = vunpack.c.l.b16 %v3907
  %v4839 = vunpack.c.h.b16 %v3907
  %v4840 = vunpack.c.l.b16 %v3908
  %v4841 = vunpack.c.h.b16 %v3908
  %v4842 = vunpack.c.l.b16 %v3909
  %v4843 = vunpack.c.h.b16 %v3909
  %v4844 = vunpack.c.l.b16 %v3910
  %v4845 = vunpack.c.h.b16 %v3910
  %v4846 = vunpack.c.l.b16 %v3911
  %v4847 = vunpack.c.h.b16 %v3911
  %v4848 = vunpack.c.l.b16 %v3912
  %v4849 = vunpack.c.h.b16 %v3912
  %v4850 = vunpack.c.l.b16 %v3913
  %v4851 = vunpack.c.h.b16 %v3913
  %v4852 = vunpack.c.l.b16 %v3914
  %v4853 = vunpack.c.h.b16 %v3914
  %v4854 = vunpack.c.l.b16 %v3915
  %v4855 = vunpack.c.h.b16 %v3915
  %v4856 = vunpack.c.l.b16 %v3916
  %v4857 = vunpack.c.h.b16 %v3916
  %v4858 = vunpack.c.l.b16 %v3917
  %v4859 = vunpack.c.h.b16 %v3917
  %v4860 = vunpack.c.l.b16 %v3918
  %v4861 = vunpack.c.h.b16 %v3918
  %v4862 = vunpack.c.l.b16 %v3919
  %v4863 = vunpack.c.h.b16 %v3919
  %v4864 = vunpack.c.l.b16 %v3920
  %v4865 = vunpack.c.h.b16 %v3920
  %v4866 = vunpack.c.l.b16 %v3921
  %v4867 = vunpack.c.h.b16 %v3921
  %v4868 = vunpack.c.l.b16 %v3922
  %v4869 = vunpack.c.h.b16 %v3922
  %v4870 = vunpack.c.l.b16 %v3923
  %v4871 = vunpack.c.h.b16 %v3923
  %v4872 = vunpack.c.l.b16 %v3924
  %v4873 = vunpack.c.h.b16 %v3924
  %v4874 = vunpack.c.l.b16 %v3925
  %v4875 = vunpack.c.h.b16 %v3925
  %v4876 = vunpack.c.l.b16 %v3926
  %v4877 = vunpack.c.h.b16 %v3926
  %v4878 = vunpack.c.l.b16 %v3927
  %v4879 = vunpack.c.h.b16 %v3927
  %v4880 = vunpack.c.l.b16 %v3928
  %v4881 = vunpack.c.h.b16 %v3928
  %v4882 = vunpack.c.l.b16 %v3929
  %v4883 = vunpack.c.h.b16 %v3929
  %v4884 = vunpack.c.l.b16 %v3930
  %v4885 = vunpack.c.h.b16 %v3930
  %v4886 = vunpack.c.l.b16 %v3931
  %v4887 = vunpack.c.h.b16 %v3931
  %v4888 = vunpack.c.l.b16 %v3932
  %v4889 = vunpack.c.h.b16 %v3932
  %v4890 = vunpack.c.l.b16 %v3933
  %v4891 = vunpack.c.h.b16 %v3933
  %v4892 = vunpack.c.l.b16 %v3934
  %v4893 = vunpack.c.h.b16 %v3934
  %v4894 = vunpack.c.l.b16 %v3935
  %v4895 = vunpack.c.h.b16 %v3935
  %v4896 = vunpack.c.l.b16 %v3936
  %v4897 = vunpack.c.h.b16 %v3936
  %v4898 = vunpack.c.l.b16 %v3937
  %v4899 = vunpack.c.h.b16 %v3937
  %v4900 = vunpack.c.l.b16 %v3938
  %v4901 = vunpack.c.h.b16 %v3938
  %v4902 = vunpack.c.l.b16 %v3939
  %v4903 = vunpack.c.h.b16 %v3939
  %v4904 = vunpack.c.l.b16 %v3940
  %v4905 = vunpack.c.h.b16 %v3940
  %v4906 = vunpack.c.l.b16 %v3941
  %v4907 = vunpack.c.h.b16 %v3941
  %v4908 = vunpack.c.l.b16 %v3942
  %v4909 = vunpack.c.h.b16 %v3942
  %v4910 = vunpack.c.l.b16 %v3943
  %v4911 = vunpack.c.h.b16 %v3943
  %v4912 = vunpack.c.l.b16 %v3944
  %v4913 = vunpack.c.h.b16 %v3944
  %v4914 = vunpack.c.l.b16 %v3945
  %v4915 = vunpack.c.h.b16 %v3945
  %v4916 = vunpack.c.l.b16 %v3946
  %v4917 = vunpack.c.h.b16 %v3946
  %v4918 = vunpack.c.l.b16 %v3947
  %v4919 = vunpack.c.h.b16 %v3947
  %v4920 = vunpack.c.l.b16 %v3948
  %v4921 = vunpack.c.h.b16 %v3948
  %v4922 = vunpack.c.l.b16 %v3949
  %v4923 = vunpack.c.h.b16 %v3949
  %v4924 = vunpack.c.l.b16 %v3950
  %v4925 = vunpack.c.h.b16 %v3950
  %v4926 = vunpack.c.l.b16 %v3951
  %v4927 = vunpack.c.h.b16 %v3951
  %v4928 = vunpack.c.l.b16 %v3952
  %v4929 = vunpack.c.h.b16 %v3952
  %v4930 = vunpack.c.l.b16 %v3953
  %v4931 = vunpack.c.h.b16 %v3953
  %v4932 = vunpack.c.l.b16 %v3954
  %v4933 = vunpack.c.h.b16 %v3954
  %v4934 = vunpack.c.l.b16 %v3955
  %v4935 = vunpack.c.h.b16 %v3955
  %v4936 = vunpack.c.l.b16 %v3956
  %v4937 = vunpack.c.h.b16 %v3956
  %v4938 = vunpack.c.l.b16 %v3957
  %v4939 = vunpack.c.h.b16 %v3957
  %v4940 = vunpack.c.l.b16 %v3958
  %v4941 = vunpack.c.h.b16 %v3958
  %v4942 = vunpack.c.l.b16 %v3959
  %v4943 = vunpack.c.h.b16 %v3959
  %v4944 = vunpack.c.l.b16 %v3960
  %v4945 = vunpack.c.h.b16 %v3960
  %v4946 = vunpack.c.l.b16 %v3961
  %v4947 = vunpack.c.h.b16 %v3961
  %v4948 = vunpack.c.l.b16 %v3962
  %v4949 = vunpack.c.h.b16 %v3962
  %v4950 = vunpack.c.l.b16 %v3963
  %v4951 = vunpack.c.h.b16 %v3963
  %v4952 = vunpack.c.l.b16 %v3964
  %v4953 = vunpack.c.h.b16 %v3964
  %v4954 = vunpack.c.l.b16 %v3965
  %v4955 = vunpack.c.h.b16 %v3965
  %v4956 = vunpack.c.l.b16 %v3966
  %v4957 = vunpack.c.h.b16 %v3966
  %v4958 = vunpack.c.l.b16 %v3967
  %v4959 = vunpack.c.h.b16 %v3967
  %v4960 = vunpack.c.l.b16 %v3968
  %v4961 = vunpack.c.h.b16 %v3968
  %v4962 = vunpack.c.l.b16 %v3969
  %v4963 = vunpack.c.h.b16 %v3969
  %v4964 = vunpack.c.l.b16 %v3970
  %v4965 = vunpack.c.h.b16 %v3970
  %v4966 = vunpack.c.l.b16 %v3971
  %v4967 = vunpack.c.h.b16 %v3971
  %v4968 = vunpack.c.l.b16 %v3972
  %v4969 = vunpack.c.h.b16 %v3972
  %v4970 = vunpack.c.l.b16 %v3973
  %v4971 = vunpack.c.h.b16 %v3973
  %v4972 = vunpack.c.l.b16 %v3974
  %v4973 = vunpack.c.h.b16 %v3974
  %v4974 = vunpack.c.l.b16 %v3975
  %v4975 = vunpack.c.h.b16 %v3975
  %v4976 = vunpack.c.l.b16 %v3976
  %v4977 = vunpack.c.h.b16 %v3976
  %v4978 = vunpack.c.l.b16 %v3977
  %v4979 = vunpack.c.h.b16 %v3977
  %v4980 = vunpack.c.l.b16 %v3978
  %v4981 = vunpack.c.h.b16 %v3978
  %v4982 = vunpack.c.l.b16 %v3979
  %v4983 = vunpack.c.h.b16 %v3979
  %v4984 = vunpack.c.l.b16 %v3980
  %v4985 = vunpack.c.h.b16 %v3980
  %v4986 = vunpack.c.l.b16 %v3981
  %v4987 = vunpack.c.h.b16 %v3981
  %v4988 = vunpack.c.l.b16 %v3982
  %v4989 = vunpack.c.h.b16 %v3982
  %v4990 = vunpack.c.l.b16 %v3983
  %v4991 = vunpack.c.h.b16 %v3983
  %v4992 = vunpack.c.l.b16 %v3984
  %v4993 = vunpack.c.h.b16 %v3984
  %v4994 = vunpack.c.l.b16 %v3985
  %v4995 = vunpack.c.h.b16 %v3985
  %v4996 = vunpack.c.l.b16 %v3986
  %v4997 = vunpack.c.h.b16 %v3986
  %v4998 = vunpack.c.l.b16 %v3987
  %v4999 = vunpack.c.h.b16 %v3987
  %v5000 = vunpack.c.l.b16 %v3988
  %v5001 = vunpack.c.h.b16 %v3988
  %v5002 = vunpack.c.l.b16 %v3989
  %v5003 = vunpack.c.h.b16 %v3989
  %v5004 = vunpack.c.l.b16 %v3990
  %v5005 = vunpack.c.h.b16 %v3990
  %v5006 = vunpack.c.l.b16 %v3991
  %v5007 = vunpack.c.h.b16 %v3991
  %v5008 = vunpack.c.l.b16 %v3992
  %v5009 = vunpack.c.h.b16 %v3992
  %v5010 = vunpack.c.l.b16 %v3993
  %v5011 = vunpack.c.h.b16 %v3993
  %v5012 = vunpack.c.l.b16 %v3994
  %v5013 = vunpack.c.h.b16 %v3994
  %v5014 = vunpack.c.l.b16 %v3995
  %v5015 = vunpack.c.h.b16 %v3995
  %v5016 = vunpack.c.l.b16 %v3996
  %v5017 = vunpack.c.h.b16 %v3996
  %v5018 = vunpack.c.l.b16 %v3997
  %v5019 = vunpack.c.h.b16 %v3997
  %v5020 = vunpack.c.l.b16 %v3998
  %v5021 = vunpack.c.h.b16 %v3998
  %v5022 = vunpack.c.l.b16 %v3999
  %v5023 = vunpack.c.h.b16 %v3999
  %v5024 = vunpack.c.l.b16 %v4000
  %v5025 = vunpack.c.h.b16 %v4000
  %v5026 = vunpack.c.l.b16 %v4001
  %v5027 = vunpack.c.h.b16 %v4001
  %v5028 = vunpack.c.l.b16 %v4002
  %v5029 = vunpack.c.h.b16 %v4002
  %v5030 = vunpack.c.l.b16 %v4003
  %v5031 = vunpack.c.h.b16 %v4003
  %v5032 = vunpack.c.l.b16 %v4004
  %v5033 = vunpack.c.h.b16 %v4004
  %v5034 = vunpack.c.l.b16 %v4005
  %v5035 = vunpack.c.h.b16 %v4005
  %v5036 = vunpack.c.l.b16 %v4006
  %v5037 = vunpack.c.h.b16 %v4006
  %v5038 = vunpack.c.l.b16 %v4007
  %v5039 = vunpack.c.h.b16 %v4007
  %v5040 = vunpack.c.l.b16 %v4008
  %v5041 = vunpack.c.h.b16 %v4008
  %v5042 = vunpack.c.l.b16 %v4009
  %v5043 = vunpack.c.h.b16 %v4009
  %v5044 = vunpack.c.l.b16 %v4010
  %v5045 = vunpack.c.h.b16 %v4010
  %v5046 = vunpack.c.l.b16 %v4011
  %v5047 = vunpack.c.h.b16 %v4011
  %v5048 = vunpack.c.l.b16 %v4012
  %v5049 = vunpack.c.h.b16 %v4012
  %v5050 = vunpack.c.l.b16 %v4013
  %v5051 = vunpack.c.h.b16 %v4013
  %v5052 = vunpack.c.l.b16 %v4014
  %v5053 = vunpack.c.h.b16 %v4014
  %v5054 = vunpack.c.l.b16 %v4015
  %v5055 = vunpack.c.h.b16 %v4015
  %v5056 = vunpack.c.l.b16 %v4016
  %v5057 = vunpack.c.h.b16 %v4016
  %v5058 = vunpack.c.l.b16 %v4017
  %v5059 = vunpack.c.h.b16 %v4017
  %v5060 = vunpack.c.l.b16 %v4018
  %v5061 = vunpack.c.h.b16 %v4018
  %v5062 = vunpack.c.l.b16 %v4019
  %v5063 = vunpack.c.h.b16 %v4019
  %v5064 = vunpack.c.l.b16 %v4020
  %v5065 = vunpack.c.h.b16 %v4020
  %v5066 = vunpack.c.l.b16 %v4021
  %v5067 = vunpack.c.h.b16 %v4021
  %v5068 = vunpack.c.l.b16 %v4022
  %v5069 = vunpack.c.h.b16 %v4022
  %v5070 = vunpack.c.l.b16 %v4023
  %v5071 = vunpack.c.h.b16 %v4023
  %v5072 = vunpack.c.l.b16 %v4024
  %v5073 = vunpack.c.h.b16 %v4024
  %v5074 = vunpack.c.l.b16 %v4025
  %v5075 = vunpack.c.h.b16 %v4025
  %v5076 = vunpack.c.l.b16 %v4026
  %v5077 = vunpack.c.h.b16 %v4026
  %v5078 = vunpack.c.l.b16 %v4027
  %v5079 = vunpack.c.h.b16 %v4027
  %v5080 = vunpack.c.l.b16 %v4028
  %v5081 = vunpack.c.h.b16 %v4028
  %v5082 = vunpack.c.l.b16 %v4029
  %v5083 = vunpack.c.h.b16 %v4029
  %v5084 = vunpack.c.l.b16 %v4030
  %v5085 = vunpack.c.h.b16 %v4030
  %v5086 = vunpack.c.l.b16 %v4031
  %v5087 = vunpack.c.h.b16 %v4031
  %v5088 = vunpack.c.l.b16 %v4032
  %v5089 = vunpack.c.h.b16 %v4032
  %v5090 = vunpack.c.l.b16 %v4033
  %v5091 = vunpack.c.h.b16 %v4033
  %v5092 = vunpack.c.l.b16 %v4034
  %v5093 = vunpack.c.h.b16 %v4034
  %v5094 = vunpack.c.l.b16 %v4035
  %v5095 = vunpack.c.h.b16 %v4035
  %v5096 = vunpack.c.l.b16 %v4036
  %v5097 = vunpack.c.h.b16 %v4036
  %v5098 = vunpack.c.l.b16 %v4037
  %v5099 = vunpack.c.h.b16 %v4037
  %v5100 = vunpack.c.l.b16 %v4038
  %v5101 = vunpack.c.h.b16 %v4038
  %v5102 = vunpack.c.l.b16 %v4039
  %v5103 = vunpack.c.h.b16 %v4039
  %v5104 = vunpack.c.l.b16 %v4040
  %v5105 = vunpack.c.h.b16 %v4040
  %v5106 = vunpack.c.l.b16 %v4041
  %v5107 = vunpack.c.h.b16 %v4041
  %v5108 = vunpack.c.l.b16 %v4042
  %v5109 = vunpack.c.h.b16 %v4042
  %v5110 = vunpack.c.l.b16 %v4043
  %v5111 = vunpack.c.h.b16 %v4043
  %v5112 = vunpack.c.l.b16 %v4044
  %v5113 = vunpack.c.h.b16 %v4044
  %v5114 = vunpack.c.l.b16 %v4045
  %v5115 = vunpack.c.h.b16 %v4045
  %v5116 = vunpack.c.l.b16 %v4046
  %v5117 = vunpack.c.h.b16 %v4046
  %v5118 = vunpack.c.l.b16 %v4047
  %v5119 = vunpack.c.h.b16 %v4047
  %v5120 = vunpack.c.l.b16 %v4048
  %v5121 = vunpack.c.h.b16 %v4048
  %v5122 = vunpack.c.l.b16 %v4049
  %v5123 = vunpack.c.h.b16 %v4049
  %v5124 = vunpack.c.l.b16 %v4050
  %v5125 = vunpack.c.h.b16 %v4050
  %v5126 = vunpack.c.l.b16 %v4051
  %v5127 = vunpack.c.h.b16 %v4051
  %v5128 = vunpack.c.l.b16 %v4052
  %v5129 = vunpack.c.h.b16 %v4052
  %v5130 = vunpack.c.l.b16 %v4053
  %v5131 = vunpack.c.h.b16 %v4053
  %v5132 = vunpack.c.l.b16 %v4054
  %v5133 = vunpack.c.h.b16 %v4054
  %v5134 = vunpack.c.l.b16 %v4055
  %v5135 = vunpack.c.h.b16 %v4055
  %v5136 = vunpack.c.l.b16 %v4056
  %v5137 = vunpack.c.h.b16 %v4056
  %v5138 = vunpack.c.l.b16 %v4057
  %v5139 = vunpack.c.h.b16 %v4057
  %v5140 = vunpack.c.l.b16 %v4058
  %v5141 = vunpack.c.h.b16 %v4058
  %v5142 = vunpack.c.l.b16 %v4059
  %v5143 = vunpack.c.h.b16 %v4059
  %v5144 = vunpack.c.l.b16 %v4060
  %v5145 = vunpack.c.h.b16 %v4060
  %v5146 = vunpack.c.l.b16 %v4061
  %v5147 = vunpack.c.h.b16 %v4061
  %v5148 = vunpack.c.l.b16 %v4062
  %v5149 = vunpack.c.h.b16 %v4062
  %v5150 = vunpack.c.l.b16 %v4063
  %v5151 = vunpack.c.h.b16 %v4063
  %v5152 = vunpack.c.l.b16 %v4064
  %v5153 = vunpack.c.h.b16 %v4064
  %v5154 = vunpack.c.l.b16 %v4065
  %v5155 = vunpack.c.h.b16 %v4065
  %v5156 = vunpack.c.l.b16 %v4066
  %v5157 = vunpack.c.h.b16 %v4066
  %v5158 = vunpack.c.l.b16 %v4067
  %v5159 = vunpack.c.h.b16 %v4067
  %v5160 = vunpack.c.l.b16 %v4068
  %v5161 = vunpack.c.h.b16 %v4068
  %v5162 = vunpack.c.l.b16 %v4069
  %v5163 = vunpack.c.h.b16 %v4069
  %v5164 = vunpack.c.l.b16 %v4070
  %v5165 = vunpack.c.h.b16 %v4070
  %v5166 = vunpack.c.l.b16 %v4071
  %v5167 = vunpack.c.h.b16 %v4071
  %v5168 = vunpack.c.l.b16 %v4072
  %v5169 = vunpack.c.h.b16 %v4072
  %v5170 = vunpack.c.l.b16 %v4073
  %v5171 = vunpack.c.h.b16 %v4073
  %v5172 = vunpack.c.l.b16 %v4074
  %v5173 = vunpack.c.h.b16 %v4074
  %v5174 = vunpack.c.l.b16 %v4075
  %v5175 = vunpack.c.h.b16 %v4075
  %v5176 = vunpack.c.l.b16 %v4076
  %v5177 = vunpack.c.h.b16 %v4076
  %v5178 = vunpack.c.l.b16 %v4077
  %v5179 = vunpack.c.h.b16 %v4077
  %v5180 = vpack.c.b16 %v4464, %v4460
  %v5181 = vpack.c.b16 %v4465, %v4461
  %v5182 = vpack.c.b16 %v4466, %v4462
  %v5183 = vpack.c.b16 %v4467, %v4463
  %v5184 = vpack.c.b16 %v4472, %v4468
  %v5185 = vpack.c.b16 %v4473, %v4469
  %v5186 = vpack.c.b16 %v4474, %v4470
  %v5187 = vpack.c.b16 %v4475, %v4471
  %v5188 = vpack.c.b16 %v4480, %v4476
  %v5189 = vpack.c.b16 %v4481, %v4477
  %v5190 = vpack.c.b16 %v4482, %v4478
  %v5191 = vpack.c.b16 %v4483, %v4479
  %v5192 = vpack.c.b16 %v4488, %v4484
  %v5193 = vpack.c.b16 %v4489, %v4485
  %v5194 = vpack.c.b16 %v4490, %v4486
  %v5195 = vpack.c.b16 %v4491, %v4487
  %v5196 = vpack.c.b16 %v4496, %v4492
  %v5197 = vpack.c.b16 %v4497, %v4493
  %v5198 = vpack.c.b16 %v4498, %v4494
  %v5199 = vpack.c.b16 %v4499, %v4495
  %v5200 = vpack.c.b16 %v4504, %v4500
  %v5201 = vpack.c.b16 %v4505, %v4501
  %v5202 = vpack.c.b16 %v4506, %v4502
  %v5203 = vpack.c.b16 %v4507, %v4503
  %v5204 = vpack.c.b16 %v4512, %v4508
  %v5205 = vpack.c.b16 %v4513, %v4509
  %v5206 = vpack.c.b16 %v4514, %v4510
  %v5207 = vpack.c.b16 %v4515, %v4511
  %v5208 = vpack.c.b16 %v4520, %v4516
  %v5209 = vpack.c.b16 %v4521, %v4517
  %v5210 = vpack.c.b16 %v4522, %v4518
  %v5211 = vpack.c.b16 %v4523, %v4519
  %v5212 = vpack.c.b16 %v4528, %v4524
  %v5213 = vpack.c.b16 %v4529, %v4525
  %v5214 = vpack.c.b16 %v4530, %v4526
  %v5215 = vpack.c.b16 %v4531, %v4527
  %v5216 = vpack.c.b16 %v4536, %v4532
  %v5217 = vpack.c.b16 %v4537, %v4533
  %v5218 = vpack.c.b16 %v4538, %v4534
  %v5219 = vpack.c.b16 %v4539, %v4535
  %v5220 = vpack.c.b16 %v4544, %v4540
  %v5221 = vpack.c.b16 %v4545, %v4541
  %v5222 = vpack.c.b16 %v4546, %v4542
  %v5223 = vpack.c.b16 %v4547, %v4543
  %v5224 = vpack.c.b16 %v4552, %v4548
  %v5225 = vpack.c.b16 %v4553, %v4549
  %v5226 = vpack.c.b16 %v4554, %v4550
  %v5227 = vpack.c.b16 %v4555, %v4551
  %v5228 = vpack.c.b16 %v4560, %v4556
  %v5229 = vpack.c.b16 %v4561, %v4557
  %v5230 = vpack.c.b16 %v4562, %v4558
  %v5231 = vpack.c.b16 %v4563, %v4559
  %v5232 = vpack.c.b16 %v4568, %v4564
  %v5233 = vpack.c.b16 %v4569, %v4565
  %v5234 = vpack.c.b16 %v4570, %v4566
  %v5235 = vpack.c.b16 %v4571, %v4567
  %v5236 = vpack.c.b16 %v4576, %v4572
  %v5237 = vpack.c.b16 %v4577, %v4573
  %v5238 = vpack.c.b16 %v4578, %v4574
  %v5239 = vpack.c.b16 %v4579, %v4575
  %v5240 = vpack.c.b16 %v4584, %v4580
  %v5241 = vpack.c.b16 %v4585, %v4581
  %v5242 = vpack.c.b16 %v4586, %v4582
  %v5243 = vpack.c.b16 %v4587, %v4583
  %v5244 = vpack.c.b16 %v4592, %v4588
  %v5245 = vpack.c.b16 %v4593, %v4589
  %v5246 = vpack.c.b16 %v4594, %v4590
  %v5247 = vpack.c.b16 %v4595, %v4591
  %v5248 = vpack.c.b16 %v4600, %v4596
  %v5249 = vpack.c.b16 %v4601, %v4597
  %v5250 = vpack.c.b16 %v4602, %v4598
  %v5251 = vpack.c.b16 %v4603, %v4599
  %v5252 = vpack.c.b16 %v4608, %v4604
  %v5253 = vpack.c.b16 %v4609, %v4605
  %v5254 = vpack.c.b16 %v4610, %v4606
  %v5255 = vpack.c.b16 %v4611, %v4607
  %v5256 = vpack.c.b16 %v4616, %v4612
  %v5257 = vpack.c.b16 %v4617, %v4613
  %v5258 = vpack.c.b16 %v4618, %v4614
  %v5259 = vpack.c.b16 %v4619, %v4615
  %v5260 = vpack.c.b16 %v4624, %v4620
  %v5261 = vpack.c.b16 %v4625, %v4621
  %v5262 = vpack.c.b16 %v4626, %v4622
  %v5263 = vpack.c.b16 %v4627, %v4623
  %v5264 = vpack.c.b16 %v4632, %v4628
  %v5265 = vpack.c.b16 %v4633, %v4629
  %v5266 = vpack.c.b16 %v4634, %v4630
  %v5267 = vpack.c.b16 %v4635, %v4631
  %v5268 = vpack.c.b16 %v4640, %v4636
  %v5269 = vpack.c.b16 %v4641, %v4637
  %v5270 = vpack.c.b16 %v4642, %v4638
  %v5271 = vpack.c.b16 %v4643, %v4639
  %v5272 = vpack.c.b16 %v4648, %v4644
  %v5273 = vpack.c.b16 %v4649, %v4645
  %v5274 = vpack.c.b16 %v4650, %v4646
  %v5275 = vpack.c.b16 %v4651, %v4647
  %v5276 = vpack.c.b16 %v4656, %v4652
  %v5277 = vpack.c.b16 %v4657, %v4653
  %v5278 = vpack.c.b16 %v4658, %v4654
  %v5279 = vpack.c.b16 %v4659, %v4655
  %v5280 = vpack.c.b16 %v4664, %v4660
  %v5281 = vpack.c.b16 %v4665, %v4661
  %v5282 = vpack.c.b16 %v4666, %v4662
  %v5283 = vpack.c.b16 %v4667, %v4663
  %v5284 = vpack.c.b16 %v4672, %v4668
  %v5285 = vpack.c.b16 %v4673, %v4669
  %v5286 = vpack.c.b16 %v4674, %v4670
  %v5287 = vpack.c.b16 %v4675, %v4671
  %v5288 = vpack.c.b16 %v4680, %v4676
  %v5289 = vpack.c.b16 %v4681, %v4677
  %v5290 = vpack.c.b16 %v4682, %v4678
  %v5291 = vpack.c.b16 %v4683, %v4679
  %v5292 = vpack.c.b16 %v4688, %v4684
  %v5293 = vpack.c.b16 %v4689, %v4685
  %v5294 = vpack.c.b16 %v4690, %v4686
  %v5295 = vpack.c.b16 %v4691, %v4687
  %v5296 = vpack.c.b16 %v4696, %v4692
  %v5297 = vpack.c.b16 %v4697, %v4693
  %v5298 = vpack.c.b16 %v4698, %v4694
  %v5299 = vpack.c.b16 %v4699, %v4695
  %v5300 = vpack.c.b16 %v4704, %v4700
  %v5301 = vpack.c.b16 %v4705, %v4701
  %v5302 = vpack.c.b16 %v4706, %v4702
  %v5303 = vpack.c.b16 %v4707, %v4703
  %v5304 = vpack.c.b16 %v4712, %v4708
  %v5305 = vpack.c.b16 %v4713, %v4709
  %v5306 = vpack.c.b16 %v4714, %v4710
  %v5307 = vpack.c.b16 %v4715, %v4711
  %v5308 = vpack.c.b16 %v4720, %v4716
  %v5309 = vpack.c.b16 %v4721, %v4717
  %v5310 = vpack.c.b16 %v4722, %v4718
  %v5311 = vpack.c.b16 %v4723, %v4719
  %v5312 = vpack.c.b16 %v4728, %v4724
  %v5313 = vpack.c.b16 %v4729, %v4725
  %v5314 = vpack.c.b16 %v4730, %v4726
  %v5315 = vpack.c.b16 %v4731, %v4727
  %v5316 = vpack.c.b16 %v4736, %v4732
  %v5317 = vpack.c.b16 %v4737, %v4733
  %v5318 = vpack.c.b16 %v4738, %v4734
  %v5319 = vpack.c.b16 %v4739, %v4735
  %v5320 = vpack.c.b16 %v4744, %v4740
  %v5321 = vpack.c.b16 %v4745, %v4741
  %v5322 = vpack.c.b16 %v4746, %v4742
  %v5323 = vpack.c.b16 %v4747, %v4743
  %v5324 = vpack.c.b16 %v4752, %v4748
  %v5325 = vpack.c.b16 %v4753, %v4749
  %v5326 = vpack.c.b16 %v4754, %v4750
  %v5327 = vpack.c.b16 %v4755, %v4751
  %v5328 = vpack.c.b16 %v4760, %v4756
  %v5329 = vpack.c.b16 %v4761, %v4757
  %v5330 = vpack.c.b16 %v4762, %v4758
  %v5331 = vpack.c.b16 %v4763, %v4759
  %v5332 = vpack.c.b16 %v4768, %v4764
  %v5333 = vpack.c.b16 %v4769, %v4765
  %v5334 = vpack.c.b16 %v4770, %v4766
  %v5335 = vpack.c.b16 %v4771, %v4767
  %v5336 = vpack.c.b16 %v4776, %v4772
  %v5337 = vpack.c.b16 %v4777, %v4773
  %v5338 = vpack.c.b16 %v4778, %v4774
  %v5339 = vpack.c.b16 %v4779, %v4775
  %v5340 = vpack.c.b16 %v4784, %v4780
  %v5341 = vpack.c.b16 %v4785, %v4781
  %v5342 = vpack.c.b16 %v4786, %v4782
  %v5343 = vpack.c.b16 %v4787, %v4783
  %v5344 = vpack.c.b16 %v4792, %v4788
  %v5345 = vpack.c.b16 %v4793, %v4789
  %v5346 = vpack.c.b16 %v4794, %v4790
  %v5347 = vpack.c.b16 %v4795, %v4791
  %v5348 = vpack.c.b16 %v4800, %v4796
  %v5349 = vpack.c.b16 %v4801, %v4797
  %v5350 = vpack.c.b16 %v4802, %v4798
  %v5351 = vpack.c.b16 %v4803, %v4799
  %v5352 = vpack.c.b16 %v4808, %v4804
  %v5353 = vpack.c.b16 %v4809, %v4805
  %v5354 = vpack.c.b16 %v4810, %v4806
  %v5355 = vpack.c.b16 %v4811, %v4807
  %v5356 = vpack.c.b16 %v4816, %v4812
  %v5357 = vpack.c.b16 %v4817, %v4813
  %v5358 = vpack.c.b16 %v4818, %v4814
  %v5359 = vpack.c.b16 %v4819, %v4815
  %v5360 = vpack.c.b16 %v4824, %v4820
  %v5361 = vpack.c.b16 %v4825, %v4821
  %v5362 = vpack.c.b16 %v4826, %v4822
  %v5363 = vpack.c.b16 %v4827, %v4823
  %v5364 = vpack.c.b16 %v4832, %v4828
  %v5365 = vpack.c.b16 %v4833, %v4829
  %v5366 = vpack.c.b16 %v4834, %v4830
  %v5367 = vpack.c.b16 %v4835, %v4831
  %v5368 = vpack.c.b16 %v4840, %v4836
  %v5369 = vpack.c.b16 %v4841, %v4837
  %v5370 = vpack.c.b16 %v4842, %v4838
  %v5371 = vpack.c.b16 %v4843, %v4839
  %v5372 = vpack.c.b16 %v4848, %v4844
  %v5373 = vpack.c.b16 %v4849, %v4845
  %v5374 = vpack.c.b16 %v4850, %v4846
  %v5375 = vpack.c.b16 %v4851, %v4847
  %v5376 = vpack.c.b16 %v4856, %v4852
  %v5377 = vpack.c.b16 %v4857, %v4853
  %v5378 = vpack.c.b16 %v4858, %v4854
  %v5379 = vpack.c.b16 %v4859, %v4855
  %v5380 = vpack.c.b16 %v4864, %v4860
  %v5381 = vpack.c.b16 %v4865, %v4861
  %v5382 = vpack.c.b16 %v4866, %v4862
  %v5383 = vpack.c.b16 %v4867, %v4863
  %v5384 = vpack.c.b16 %v4872, %v4868
  %v5385 = vpack.c.b16 %v4873, %v4869
  %v5386 = vpack.c.b16 %v4874, %v4870
  %v5387 = vpack.c.b16 %v4875, %v4871
  %v5388 = vpack.c.b16 %v4880, %v4876
  %v5389 = vpack.c.b16 %v4881, %v4877
  %v5390 = vpack.c.b16 %v4882, %v4878
  %v5391 = vpack.c.b16 %v4883, %v4879
  %v5392 = vpack.c.b16 %v4888, %v4884
  %v5393 = vpack.c.b16 %v4889, %v4885
  %v5394 = vpack.c.b16 %v4890, %v4886
  %v5395 = vpack.c.b16 %v4891, %v4887
  %v5396 = vpack.c.b16 %v4896, %v4892
  %v5397 = vpack.c.b16 %v4897, %v4893
  %v5398 = vpack.c.b16 %v4898, %v4894
  %v5399 = vpack.c.b16 %v4899, %v4895
  %v5400 = vpack.c.b16 %v4904, %v4900
  %v5401 = vpack.c.b16 %v4905, %v4901
  %v5402 = vpack.c.b16 %v4906, %v4902
  %v5403 = vpack.c.b16 %v4907, %v4903
  %v5404 = vpack.c.b16 %v4912, %v4908
  %v5405 = vpack.c.b16 %v4913, %v4909
  %v5406 = vpack.c.b16 %v4914, %v4910
  %v5407 = vpack.c.b16 %v4915, %v4911
  %v5408 = vpack.c.b16 %v4920, %v4916
  %v5409 = vpack.c.b16 %v4921, %v4917
  %v5410 = vpack.c.b16 %v4922, %v4918
  %v5411 = vpack.c.b16 %v4923, %v4919
  %v5412 = vpack.c.b16 %v4928, %v4924
  %v5413 = vpack.c.b16 %v4929, %v4925
  %v5414 = vpack.c.b16 %v4930, %v4926
  %v5415 = vpack.c.b16 %v4931, %v4927
  %v5416 = vpack.c.b16 %v4936, %v4932
  %v5417 = vpack.c.b16 %v4937, %v4933
  %v5418 = vpack.c.b16 %v4938, %v4934
  %v5419 = vpack.c.b16 %v4939, %v4935
  %v5420 = vpack.c.b16 %v4944, %v4940
  %v5421 = vpack.c.b16 %v4945, %v4941
  %v5422 = vpack.c.b16 %v4946, %v4942
  %v5423 = vpack.c.b16 %v4947, %v4943
  %v5424 = vpack.c.b16 %v4952, %v4948
  %v5425 = vpack.c.b16 %v4953, %v4949
  %v5426 = vpack.c.b16 %v4954, %v4950
  %v5427 = vpack.c.b16 %v4955, %v4951
  %v5428 = vpack.c.b16 %v4960, %v4956
  %v5429 = vpack.c.b16 %v4961, %v4957
  %v5430 = vpack.c.b16 %v4962, %v4958
  %v5431 = vpack.c.b16 %v4963, %v4959
  %v5432 = vpack.c.b16 %v4968, %v4964
  %v5433 = vpack.c.b16 %v4969, %v4965
  %v5434 = vpack.c.b16 %v4970, %v4966
  %v5435 = vpack.c.b16 %v4971, %v4967
  %v5436 = vpack.c.b16 %v4976, %v4972
  %v5437 = vpack.c.b16 %v4977, %v4973
  %v5438 = vpack.c.b16 %v4978, %v4974
  %v5439 = vpack.c.b16 %v4979, %v4975
  %v5440 = vpack.c.b16 %v4984, %v4980
  %v5441 = vpack.c.b16 %v4985, %v4981
  %v5442 = vpack.c.b16 %v4986, %v4982
  %v5443 = vpack.c.b16 %v4987, %v4983
  %v5444 = vpack.c.b16 %v4992, %v4988
  %v5445 = vpack.c.b16 %v4993, %v4989
  %v5446 = vpack.c.b16 %v4994, %v4990
  %v5447 = vpack.c.b16 %v4995, %v4991
  %v5448 = vpack.c.b16 %v5000, %v4996
  %v5449 = vpack.c.b16 %v5001, %v4997
  %v5450 = vpack.c.b16 %v5002, %v4998
  %v5451 = vpack.c.b16 %v5003, %v4999
  %v5452 = vpack.c.b16 %v5008, %v5004
  %v5453 = vpack.c.b16 %v5009, %v5005
  %v5454 = vpack.c.b16 %v5010, %v5006
  %v5455 = vpack.c.b16 %v5011, %v5007
  %v5456 = vpack.c.b16 %v5016, %v5012
  %v5457 = vpack.c.b16 %v5017, %v5013
  %v5458 = vpack.c.b16 %v5018, %v5014
  %v5459 = vpack.c.b16 %v5019, %v5015
  %v5460 = vpack.c.b16 %v5024, %v5020
  %v5461 = vpack.c.b16 %v5025, %v5021
  %v5462 = vpack.c.b16 %v5026, %v5022
  %v5463 = vpack.c.b16 %v5027, %v5023
  %v5464 = vpack.c.b16 %v5032, %v5028
  %v5465 = vpack.c.b16 %v5033, %v5029
  %v5466 = vpack.c.b16 %v5034, %v5030
  %v5467 = vpack.c.b16 %v5035, %v5031
  %v5468 = vpack.c.b16 %v5040, %v5036
  %v5469 = vpack.c.b16 %v5041, %v5037
  %v5470 = vpack.c.b16 %v5042, %v5038
  %v5471 = vpack.c.b16 %v5043, %v5039
  %v5472 = vpack.c.b16 %v5048, %v5044
  %v5473 = vpack.c.b16 %v5049, %v5045
  %v5474 = vpack.c.b16 %v5050, %v5046
  %v5475 = vpack.c.b16 %v5051, %v5047
  %v5476 = vpack.c.b16 %v5056, %v5052
  %v5477 = vpack.c.b16 %v5057, %v5053
  %v5478 = vpack.c.b16 %v5058, %v5054
  %v5479 = vpack.c.b16 %v5059, %v5055
  %v5480 = vpack.c.b16 %v5064, %v5060
  %v5481 = vpack.c.b16 %v5065, %v5061
  %v5482 = vpack.c.b16 %v5066, %v5062
  %v5483 = vpack.c.b16 %v5067, %v5063
  %v5484 = vpack.c.b16 %v5072, %v5068
  %v5485 = vpack.c.b16 %v5073, %v5069
  %v5486 = vpack.c.b16 %v5074, %v5070
  %v5487 = vpack.c.b16 %v5075, %v5071
  %v5488 = vpack.c.b16 %v5080, %v5076
  %v5489 = vpack.c.b16 %v5081, %v5077
  %v5490 = vpack.c.b16 %v5082, %v5078
  %v5491 = vpack.c.b16 %v5083, %v5079
  %v5492 = vpack.c.b16 %v5088, %v5084
  %v5493 = vpack.c.b16 %v5089, %v5085
  %v5494 = vpack.c.b16 %v5090, %v5086
  %v5495 = vpack.c.b16 %v5091, %v5087
  %v5496 = vpack.c.b16 %v5096, %v5092
  %v5497 = vpack.c.b16 %v5097, %v5093
  %v5498 = vpack.c.b16 %v5098, %v5094
  %v5499 = vpack.c.b16 %v5099, %v5095
  %v5500 = vpack.c.b16 %v5104, %v5100
  %v5501 = vpack.c.b16 %v5105, %v5101
  %v5502 = vpack.c.b16 %v5106, %v5102
  %v5503 = vpack.c.b16 %v5107, %v5103
  %v5504 = vpack.c.b16 %v5112, %v5108
  %v5505 = vpack.c.b16 %v5113, %v5109
  %v5506 = vpack.c.b16 %v5114, %v5110
  %v5507 = vpack.c.b16 %v5115, %v5111
  %v5508 = vpack.c.b16 %v5120, %v5116
  %v5509 = vpack.c.b16 %v5121, %v5117
  %v5510 = vpack.c.b16 %v5122, %v5118
  %v5511 = vpack.c.b16 %v5123, %v5119
  %v5512 = vpack.c.b16 %v5128, %v5124
  %v5513 = vpack.c.b16 %v5129, %v5125
  %v5514 = vpack.c.b16 %v5130, %v5126
  %v5515 = vpack.c.b16 %v5131, %v5127
  %v5516 = vpack.c.b16 %v5136, %v5132
  %v5517 = vpack.c.b16 %v5137, %v5133
  %v5518 = vpack.c.b16 %v5138, %v5134
  %v5519 = vpack.c.b16 %v5139, %v5135
  %v5520 = vpack.c.b16 %v5144, %v5140
  %v5521 = vpack.c.b16 %v5145, %v5141
  %v5522 = vpack.c.b16 %v5146, %v5142
  %v5523 = vpack.c.b16 %v5147, %v5143
  %v5524 = vpack.c.b16 %v5152, %v5148
  %v5525 = vpack.c.b16 %v5153, %v5149
  %v5526 = vpack.c.b16 %v5154, %v5150
  %v5527 = vpack.c.b16 %v5155, %v5151
  %v5528 = vpack.c.b16 %v5160, %v5156
  %v5529 = vpack.c.b16 %v5161, %v5157
  %v5530 = vpack.c.b16 %v5162, %v5158
  %v5531 = vpack.c.b16 %v5163, %v5159
  %v5532 = vpack.c.b16 %v5168, %v5164
  %v5533 = vpack.c.b16 %v5169, %v5165
  %v5534 = vpack.c.b16 %v5170, %v5166
  %v5535 = vpack.c.b16 %v5171, %v5167
  %v5536 = vpack.c.b16 %v5176, %v5172
  %v5537 = vpack.c.b16 %v5177, %v5173
  %v5538 = vpack.c.b16 %v5178, %v5174
  %v5539 = vpack.c.b16 %v5179, %v5175
  %v5901 = vsel %vm1809, %v3717, 0
  %5903 = vmatprep.subr.bf16.mxu0 %v5209
  %5904 = vmatpush1.bf16.msra.mxu0 %v5208
  %5905 = vmatprep.subr.bf16.mxu0 %v5205
  %5906 = vmatpush1.bf16.msra.mxu0 %v5204
  %5907 = vmatprep.subr.bf16.mxu0 %v5201
  %5908 = vmatpush1.bf16.msra.mxu0 %v5200
  %5909 = vmatprep.subr.bf16.mxu0 %v5197
  %5910 = vmatpush1.bf16.msra.mxu0 %v5196
  %5911 = vmatprep.subr.bf16.mxu0 %v5193
  %5912 = vmatpush1.bf16.msra.mxu0 %v5192
  %5913 = vmatprep.subr.bf16.mxu0 %v5189
  %5914 = vmatpush1.bf16.msra.mxu0 %v5188
  %5915 = vmatprep.subr.bf16.mxu0 %v5185
  %5916 = vmatpush1.bf16.msra.mxu0 %v5184
  %5917 = vmatprep.subr.bf16.mxu0 %v5181
  %5918 = vmatpush1.bf16.msra.mxu0 %v5180
  %5919 = vmatprep.subr.bf16.mxu0 %v5241
  %5920 = vmatpush2.bf16.msra.mxu0 %v5240
  %5921 = vmatprep.subr.bf16.mxu0 %v5237
  %5922 = vmatpush2.bf16.msra.mxu0 %v5236
  %5923 = vmatprep.subr.bf16.mxu0 %v5233
  %5924 = vmatpush2.bf16.msra.mxu0 %v5232
  %5925 = vmatprep.subr.bf16.mxu0 %v5229
  %5926 = vmatpush2.bf16.msra.mxu0 %v5228
  %5927 = vmatprep.subr.bf16.mxu0 %v5225
  %5928 = vmatpush2.bf16.msra.mxu0 %v5224
  %5929 = vmatprep.subr.bf16.mxu0 %v5221
  %5930 = vmatpush2.bf16.msra.mxu0 %v5220
  %5931 = vmatprep.subr.bf16.mxu0 %v5217
  %5932 = vmatpush2.bf16.msra.mxu0 %v5216
  %5933 = vmatprep.subr.bf16.mxu0 %v5213
  %5934 = vmatpush2.bf16.msra.mxu0 %v5212
  %5935 = vmatprep.mubr.bf16.mxu0 %v3707
  %5936 = vmatmul.mubr.bf16.gmra.mxu0 %v3706
  %v5937 = vpop.f32.mrf.mxu0
  %v5938 = vadd.f32 %v4083, %v5937
  %v5939 = vpop.f32.mrf.mxu0
  %v5940 = vadd.f32 %v4087, %v5939
  %v5941 = vpop.f32.mrf.mxu0
  %v5942 = vadd.f32 %v4083, %v5941
  %v5943 = vpop.f32.mrf.mxu0
  %v5944 = vadd.f32 %v4087, %v5943
  %5945 = vdwg.mxu0
  %5946 = vmatprep.subr.bf16.mxu0 %v5273
  %5947 = vmatpush1.bf16.msra.mxu0 %v5272
  %5948 = vmatprep.subr.bf16.mxu0 %v5269
  %5949 = vmatpush1.bf16.msra.mxu0 %v5268
  %5950 = vmatprep.subr.bf16.mxu0 %v5265
  %5951 = vmatpush1.bf16.msra.mxu0 %v5264
  %5952 = vmatprep.subr.bf16.mxu0 %v5261
  %5953 = vmatpush1.bf16.msra.mxu0 %v5260
  %5954 = vmatprep.subr.bf16.mxu0 %v5257
  %5955 = vmatpush1.bf16.msra.mxu0 %v5256
  %5956 = vmatprep.subr.bf16.mxu0 %v5253
  %5957 = vmatpush1.bf16.msra.mxu0 %v5252
  %5958 = vmatprep.subr.bf16.mxu0 %v5249
  %5959 = vmatpush1.bf16.msra.mxu0 %v5248
  %5960 = vmatprep.subr.bf16.mxu0 %v5245
  %5961 = vmatpush1.bf16.msra.mxu0 %v5244
  %5962 = vmatprep.subr.bf16.mxu0 %v5305
  %5963 = vmatpush2.bf16.msra.mxu0 %v5304
  %5964 = vmatprep.subr.bf16.mxu0 %v5301
  %5965 = vmatpush2.bf16.msra.mxu0 %v5300
  %5966 = vmatprep.subr.bf16.mxu0 %v5297
  %5967 = vmatpush2.bf16.msra.mxu0 %v5296
  %5968 = vmatprep.subr.bf16.mxu0 %v5293
  %5969 = vmatpush2.bf16.msra.mxu0 %v5292
  %5970 = vmatprep.subr.bf16.mxu0 %v5289
  %5971 = vmatpush2.bf16.msra.mxu0 %v5288
  %5972 = vmatprep.subr.bf16.mxu0 %v5285
  %5973 = vmatpush2.bf16.msra.mxu0 %v5284
  %5974 = vmatprep.subr.bf16.mxu0 %v5281
  %5975 = vmatpush2.bf16.msra.mxu0 %v5280
  %5976 = vmatprep.subr.bf16.mxu0 %v5277
  %5977 = vmatpush2.bf16.msra.mxu0 %v5276
  %5978 = vmatprep.mubr.bf16.mxu0 %v3709
  %5979 = vmatmul.mubr.bf16.gmra.mxu0 %v3708
  %v5980 = vpop.f32.mrf.mxu0
  %v5981 = vadd.f32 %v5938, %v5980
  %v5982 = vpop.f32.mrf.mxu0
  %v5983 = vadd.f32 %v5940, %v5982
  %v5984 = vpop.f32.mrf.mxu0
  %v5985 = vadd.f32 %v5942, %v5984
  %v5986 = vpop.f32.mrf.mxu0
  %v5987 = vadd.f32 %v5944, %v5986
  %5988 = vdwg.mxu0
  %5989 = vmatprep.subr.bf16.mxu0 %v5337
  %5990 = vmatpush1.bf16.msra.mxu0 %v5336
  %5991 = vmatprep.subr.bf16.mxu0 %v5333
  %5992 = vmatpush1.bf16.msra.mxu0 %v5332
  %5993 = vmatprep.subr.bf16.mxu0 %v5329
  %5994 = vmatpush1.bf16.msra.mxu0 %v5328
  %5995 = vmatprep.subr.bf16.mxu0 %v5325
  %5996 = vmatpush1.bf16.msra.mxu0 %v5324
  %5997 = vmatprep.subr.bf16.mxu0 %v5321
  %5998 = vmatpush1.bf16.msra.mxu0 %v5320
  %5999 = vmatprep.subr.bf16.mxu0 %v5317
  %6000 = vmatpush1.bf16.msra.mxu0 %v5316
  %6001 = vmatprep.subr.bf16.mxu0 %v5313
  %6002 = vmatpush1.bf16.msra.mxu0 %v5312
  %6003 = vmatprep.subr.bf16.mxu0 %v5309
  %6004 = vmatpush1.bf16.msra.mxu0 %v5308
  %6005 = vmatprep.subr.bf16.mxu0 %v5369
  %6006 = vmatpush2.bf16.msra.mxu0 %v5368
  %6007 = vmatprep.subr.bf16.mxu0 %v5365
  %6008 = vmatpush2.bf16.msra.mxu0 %v5364
  %6009 = vmatprep.subr.bf16.mxu0 %v5361
  %6010 = vmatpush2.bf16.msra.mxu0 %v5360
  %6011 = vmatprep.subr.bf16.mxu0 %v5357
  %6012 = vmatpush2.bf16.msra.mxu0 %v5356
  %6013 = vmatprep.subr.bf16.mxu0 %v5353
  %6014 = vmatpush2.bf16.msra.mxu0 %v5352
  %6015 = vmatprep.subr.bf16.mxu0 %v5349
  %6016 = vmatpush2.bf16.msra.mxu0 %v5348
  %6017 = vmatprep.subr.bf16.mxu0 %v5345
  %6018 = vmatpush2.bf16.msra.mxu0 %v5344
  %6019 = vmatprep.subr.bf16.mxu0 %v5341
  %6020 = vmatpush2.bf16.msra.mxu0 %v5340
  %6021 = vmatprep.mubr.bf16.mxu0 %v3711
  %6022 = vmatmul.mubr.bf16.gmra.mxu0 %v3710
  %v6023 = vpop.f32.mrf.mxu0
  %v6024 = vadd.f32 %v5981, %v6023
  %v6025 = vpop.f32.mrf.mxu0
  %v6026 = vadd.f32 %v5983, %v6025
  %v6027 = vpop.f32.mrf.mxu0
  %v6028 = vadd.f32 %v5985, %v6027
  %v6029 = vpop.f32.mrf.mxu0
  %v6030 = vadd.f32 %v5987, %v6029
  %6031 = vdwg.mxu0
  %6032 = vmatprep.subr.bf16.mxu0 %v5401
  %6033 = vmatpush1.bf16.msra.mxu0 %v5400
  %6034 = vmatprep.subr.bf16.mxu0 %v5397
  %6035 = vmatpush1.bf16.msra.mxu0 %v5396
  %6036 = vmatprep.subr.bf16.mxu0 %v5393
  %6037 = vmatpush1.bf16.msra.mxu0 %v5392
  %6038 = vmatprep.subr.bf16.mxu0 %v5389
  %6039 = vmatpush1.bf16.msra.mxu0 %v5388
  %6040 = vmatprep.subr.bf16.mxu0 %v5385
  %6041 = vmatpush1.bf16.msra.mxu0 %v5384
  %6042 = vmatprep.subr.bf16.mxu0 %v5381
  %6043 = vmatpush1.bf16.msra.mxu0 %v5380
  %6044 = vmatprep.subr.bf16.mxu0 %v5377
  %6045 = vmatpush1.bf16.msra.mxu0 %v5376
  %6046 = vmatprep.subr.bf16.mxu0 %v5373
  %6047 = vmatpush1.bf16.msra.mxu0 %v5372
  %6048 = vmatprep.subr.bf16.mxu0 %v5433
  %6049 = vmatpush2.bf16.msra.mxu0 %v5432
  %6050 = vmatprep.subr.bf16.mxu0 %v5429
  %6051 = vmatpush2.bf16.msra.mxu0 %v5428
  %6052 = vmatprep.subr.bf16.mxu0 %v5425
  %6053 = vmatpush2.bf16.msra.mxu0 %v5424
  %6054 = vmatprep.subr.bf16.mxu0 %v5421
  %6055 = vmatpush2.bf16.msra.mxu0 %v5420
  %6056 = vmatprep.subr.bf16.mxu0 %v5417
  %6057 = vmatpush2.bf16.msra.mxu0 %v5416
  %6058 = vmatprep.subr.bf16.mxu0 %v5413
  %6059 = vmatpush2.bf16.msra.mxu0 %v5412
  %6060 = vmatprep.subr.bf16.mxu0 %v5409
  %6061 = vmatpush2.bf16.msra.mxu0 %v5408
  %6062 = vmatprep.subr.bf16.mxu0 %v5405
  %6063 = vmatpush2.bf16.msra.mxu0 %v5404
  %6064 = vmatprep.mubr.bf16.mxu0 %v3713
  %6065 = vmatmul.mubr.bf16.gmra.mxu0 %v3712
  %v6066 = vpop.f32.mrf.mxu0
  %v6067 = vadd.f32 %v6024, %v6066
  %v6068 = vpop.f32.mrf.mxu0
  %v6069 = vadd.f32 %v6026, %v6068
  %v6070 = vpop.f32.mrf.mxu0
  %v6071 = vadd.f32 %v6028, %v6070
  %v6072 = vpop.f32.mrf.mxu0
  %v6073 = vadd.f32 %v6030, %v6072
  %6074 = vdwg.mxu0
  %6075 = vmatprep.subr.bf16.mxu0 %v5465
  %6076 = vmatpush1.bf16.msra.mxu0 %v5464
  %6077 = vmatprep.subr.bf16.mxu0 %v5461
  %6078 = vmatpush1.bf16.msra.mxu0 %v5460
  %6079 = vmatprep.subr.bf16.mxu0 %v5457
  %6080 = vmatpush1.bf16.msra.mxu0 %v5456
  %6081 = vmatprep.subr.bf16.mxu0 %v5453
  %6082 = vmatpush1.bf16.msra.mxu0 %v5452
  %6083 = vmatprep.subr.bf16.mxu0 %v5449
  %6084 = vmatpush1.bf16.msra.mxu0 %v5448
  %6085 = vmatprep.subr.bf16.mxu0 %v5445
  %6086 = vmatpush1.bf16.msra.mxu0 %v5444
  %6087 = vmatprep.subr.bf16.mxu0 %v5441
  %6088 = vmatpush1.bf16.msra.mxu0 %v5440
  %6089 = vmatprep.subr.bf16.mxu0 %v5437
  %6090 = vmatpush1.bf16.msra.mxu0 %v5436
  %6091 = vmatprep.subr.bf16.mxu0 %v5497
  %6092 = vmatpush2.bf16.msra.mxu0 %v5496
  %6093 = vmatprep.subr.bf16.mxu0 %v5493
  %6094 = vmatpush2.bf16.msra.mxu0 %v5492
  %6095 = vmatprep.subr.bf16.mxu0 %v5489
  %6096 = vmatpush2.bf16.msra.mxu0 %v5488
  %6097 = vmatprep.subr.bf16.mxu0 %v5485
  %6098 = vmatpush2.bf16.msra.mxu0 %v5484
  %6099 = vmatprep.subr.bf16.mxu0 %v5481
  %6100 = vmatpush2.bf16.msra.mxu0 %v5480
  %6101 = vmatprep.subr.bf16.mxu0 %v5477
  %6102 = vmatpush2.bf16.msra.mxu0 %v5476
  %6103 = vmatprep.subr.bf16.mxu0 %v5473
  %6104 = vmatpush2.bf16.msra.mxu0 %v5472
  %6105 = vmatprep.subr.bf16.mxu0 %v5469
  %6106 = vmatpush2.bf16.msra.mxu0 %v5468
  %6107 = vmatprep.mubr.bf16.mxu0 %v3715
  %6108 = vmatmul.mubr.bf16.gmra.mxu0 %v3714
  %v6109 = vpop.f32.mrf.mxu0
  %v6110 = vadd.f32 %v6067, %v6109
  %v6111 = vpop.f32.mrf.mxu0
  %v6112 = vadd.f32 %v6069, %v6111
  %v6113 = vpop.f32.mrf.mxu0
  %v6114 = vadd.f32 %v6071, %v6113
  %v6115 = vpop.f32.mrf.mxu0
  %v6116 = vadd.f32 %v6073, %v6115
  %6117 = vdwg.mxu0
  %6118 = vmatprep.subr.bf16.mxu0 %v5529
  %6119 = vmatpush1.bf16.msra.mxu0 %v5528
  %6120 = vmatprep.subr.bf16.mxu0 %v5525
  %6121 = vmatpush1.bf16.msra.mxu0 %v5524
  %6122 = vmatprep.subr.bf16.mxu0 %v5521
  %6123 = vmatpush1.bf16.msra.mxu0 %v5520
  %6124 = vmatprep.subr.bf16.mxu0 %v5517
  %6125 = vmatpush1.bf16.msra.mxu0 %v5516
  %6126 = vmatprep.subr.bf16.mxu0 %v5513
  %6127 = vmatpush1.bf16.msra.mxu0 %v5512
  %6128 = vmatprep.subr.bf16.mxu0 %v5509
  %6129 = vmatpush1.bf16.msra.mxu0 %v5508
  %6130 = vmatprep.subr.bf16.mxu0 %v5505
  %6131 = vmatpush1.bf16.msra.mxu0 %v5504
  %6132 = vmatprep.subr.bf16.mxu0 %v5501
  %6133 = vmatpush1.bf16.msra.mxu0 %v5500
  %6134 = vmatprep.subr.bf16.mxu0 0
  %6135 = vmatpush2.bf16.msra.mxu0 0
  %6136 = vmatprep.subr.bf16.mxu0 0
  %6137 = vmatpush2.bf16.msra.mxu0 0
  %6138 = vmatprep.subr.bf16.mxu0 0
  %6139 = vmatpush2.bf16.msra.mxu0 0
  %6140 = vmatprep.subr.bf16.mxu0 0
  %6141 = vmatpush2.bf16.msra.mxu0 0
  %6142 = vmatprep.subr.bf16.mxu0 0
  %6143 = vmatpush2.bf16.msra.mxu0 0
  %6144 = vmatprep.subr.bf16.mxu0 0
  %6145 = vmatpush2.bf16.msra.mxu0 0
  %6146 = vmatprep.subr.bf16.mxu0 %v5537
  %6147 = vmatpush2.bf16.msra.mxu0 %v5536
  %6148 = vmatprep.subr.bf16.mxu0 %v5533
  %6149 = vmatpush2.bf16.msra.mxu0 %v5532
  %6150 = vmatprep.mubr.bf16.mxu0 %v5901
  %6151 = vmatmul.mubr.bf16.gmra.mxu0 %v3716
  %v6152 = vpop.f32.mrf.mxu0
  %v6153 = vadd.f32 %v6110, %v6152
  %v6154 = vpop.f32.mrf.mxu0
  %v6155 = vadd.f32 %v6112, %v6154
  %v6156 = vpop.f32.mrf.mxu0
  %v6157 = vadd.f32 %v6114, %v6156
  %v6158 = vpop.f32.mrf.mxu0
  %v6159 = vadd.f32 %v6116, %v6158
  %6160 = vdwg.mxu0
  %6161 = vmatprep.subr.bf16.mxu0 %v5211
  %6162 = vmatpush1.bf16.msra.mxu0 %v5210
  %6163 = vmatprep.subr.bf16.mxu0 %v5207
  %6164 = vmatpush1.bf16.msra.mxu0 %v5206
  %6165 = vmatprep.subr.bf16.mxu0 %v5203
  %6166 = vmatpush1.bf16.msra.mxu0 %v5202
  %6167 = vmatprep.subr.bf16.mxu0 %v5199
  %6168 = vmatpush1.bf16.msra.mxu0 %v5198
  %6169 = vmatprep.subr.bf16.mxu0 %v5195
  %6170 = vmatpush1.bf16.msra.mxu0 %v5194
  %6171 = vmatprep.subr.bf16.mxu0 %v5191
  %6172 = vmatpush1.bf16.msra.mxu0 %v5190
  %6173 = vmatprep.subr.bf16.mxu0 %v5187
  %6174 = vmatpush1.bf16.msra.mxu0 %v5186
  %6175 = vmatprep.subr.bf16.mxu0 %v5183
  %6176 = vmatpush1.bf16.msra.mxu0 %v5182
  %6177 = vmatprep.subr.bf16.mxu0 %v5243
  %6178 = vmatpush2.bf16.msra.mxu0 %v5242
  %6179 = vmatprep.subr.bf16.mxu0 %v5239
  %6180 = vmatpush2.bf16.msra.mxu0 %v5238
  %6181 = vmatprep.subr.bf16.mxu0 %v5235
  %6182 = vmatpush2.bf16.msra.mxu0 %v5234
  %6183 = vmatprep.subr.bf16.mxu0 %v5231
  %6184 = vmatpush2.bf16.msra.mxu0 %v5230
  %6185 = vmatprep.subr.bf16.mxu0 %v5227
  %6186 = vmatpush2.bf16.msra.mxu0 %v5226
  %6187 = vmatprep.subr.bf16.mxu0 %v5223
  %6188 = vmatpush2.bf16.msra.mxu0 %v5222
  %6189 = vmatprep.subr.bf16.mxu0 %v5219
  %6190 = vmatpush2.bf16.msra.mxu0 %v5218
  %6191 = vmatprep.subr.bf16.mxu0 %v5215
  %6192 = vmatpush2.bf16.msra.mxu0 %v5214
  %6193 = vmatprep.mubr.bf16.mxu0 %v3707
  %6194 = vmatmul.mubr.bf16.gmra.mxu0 %v3706
  %v6195 = vpop.f32.mrf.mxu0
  %v6196 = vadd.f32 %v4091, %v6195
  %v6197 = vpop.f32.mrf.mxu0
  %v6198 = vadd.f32 %v4095, %v6197
  %v6199 = vpop.f32.mrf.mxu0
  %v6200 = vadd.f32 %v4091, %v6199
  %v6201 = vpop.f32.mrf.mxu0
  %v6202 = vadd.f32 %v4095, %v6201
  %6203 = vdwg.mxu0
  %6204 = vmatprep.subr.bf16.mxu0 %v5275
  %6205 = vmatpush1.bf16.msra.mxu0 %v5274
  %6206 = vmatprep.subr.bf16.mxu0 %v5271
  %6207 = vmatpush1.bf16.msra.mxu0 %v5270
  %6208 = vmatprep.subr.bf16.mxu0 %v5267
  %6209 = vmatpush1.bf16.msra.mxu0 %v5266
  %6210 = vmatprep.subr.bf16.mxu0 %v5263
  %6211 = vmatpush1.bf16.msra.mxu0 %v5262
  %6212 = vmatprep.subr.bf16.mxu0 %v5259
  %6213 = vmatpush1.bf16.msra.mxu0 %v5258
  %6214 = vmatprep.subr.bf16.mxu0 %v5255
  %6215 = vmatpush1.bf16.msra.mxu0 %v5254
  %6216 = vmatprep.subr.bf16.mxu0 %v5251
  %6217 = vmatpush1.bf16.msra.mxu0 %v5250
  %6218 = vmatprep.subr.bf16.mxu0 %v5247
  %6219 = vmatpush1.bf16.msra.mxu0 %v5246
  %6220 = vmatprep.subr.bf16.mxu0 %v5307
  %6221 = vmatpush2.bf16.msra.mxu0 %v5306
  %6222 = vmatprep.subr.bf16.mxu0 %v5303
  %6223 = vmatpush2.bf16.msra.mxu0 %v5302
  %6224 = vmatprep.subr.bf16.mxu0 %v5299
  %6225 = vmatpush2.bf16.msra.mxu0 %v5298
  %6226 = vmatprep.subr.bf16.mxu0 %v5295
  %6227 = vmatpush2.bf16.msra.mxu0 %v5294
  %6228 = vmatprep.subr.bf16.mxu0 %v5291
  %6229 = vmatpush2.bf16.msra.mxu0 %v5290
  %6230 = vmatprep.subr.bf16.mxu0 %v5287
  %6231 = vmatpush2.bf16.msra.mxu0 %v5286
  %6232 = vmatprep.subr.bf16.mxu0 %v5283
  %6233 = vmatpush2.bf16.msra.mxu0 %v5282
  %6234 = vmatprep.subr.bf16.mxu0 %v5279
  %6235 = vmatpush2.bf16.msra.mxu0 %v5278
  %6236 = vmatprep.mubr.bf16.mxu0 %v3709
  %6237 = vmatmul.mubr.bf16.gmra.mxu0 %v3708
  %v6238 = vpop.f32.mrf.mxu0
  %v6239 = vadd.f32 %v6196, %v6238
  %v6240 = vpop.f32.mrf.mxu0
  %v6241 = vadd.f32 %v6198, %v6240
  %v6242 = vpop.f32.mrf.mxu0
  %v6243 = vadd.f32 %v6200, %v6242
  %v6244 = vpop.f32.mrf.mxu0
  %v6245 = vadd.f32 %v6202, %v6244
  %6246 = vdwg.mxu0
  %6247 = vmatprep.subr.bf16.mxu0 %v5339
  %6248 = vmatpush1.bf16.msra.mxu0 %v5338
  %6249 = vmatprep.subr.bf16.mxu0 %v5335
  %6250 = vmatpush1.bf16.msra.mxu0 %v5334
  %6251 = vmatprep.subr.bf16.mxu0 %v5331
  %6252 = vmatpush1.bf16.msra.mxu0 %v5330
  %6253 = vmatprep.subr.bf16.mxu0 %v5327
  %6254 = vmatpush1.bf16.msra.mxu0 %v5326
  %6255 = vmatprep.subr.bf16.mxu0 %v5323
  %6256 = vmatpush1.bf16.msra.mxu0 %v5322
  %6257 = vmatprep.subr.bf16.mxu0 %v5319
  %6258 = vmatpush1.bf16.msra.mxu0 %v5318
  %6259 = vmatprep.subr.bf16.mxu0 %v5315
  %6260 = vmatpush1.bf16.msra.mxu0 %v5314
  %6261 = vmatprep.subr.bf16.mxu0 %v5311
  %6262 = vmatpush1.bf16.msra.mxu0 %v5310
  %6263 = vmatprep.subr.bf16.mxu0 %v5371
  %6264 = vmatpush2.bf16.msra.mxu0 %v5370
  %6265 = vmatprep.subr.bf16.mxu0 %v5367
  %6266 = vmatpush2.bf16.msra.mxu0 %v5366
  %6267 = vmatprep.subr.bf16.mxu0 %v5363
  %6268 = vmatpush2.bf16.msra.mxu0 %v5362
  %6269 = vmatprep.subr.bf16.mxu0 %v5359
  %6270 = vmatpush2.bf16.msra.mxu0 %v5358
  %6271 = vmatprep.subr.bf16.mxu0 %v5355
  %6272 = vmatpush2.bf16.msra.mxu0 %v5354
  %6273 = vmatprep.subr.bf16.mxu0 %v5351
  %6274 = vmatpush2.bf16.msra.mxu0 %v5350
  %6275 = vmatprep.subr.bf16.mxu0 %v5347
  %6276 = vmatpush2.bf16.msra.mxu0 %v5346
  %6277 = vmatprep.subr.bf16.mxu0 %v5343
  %6278 = vmatpush2.bf16.msra.mxu0 %v5342
  %6279 = vmatprep.mubr.bf16.mxu0 %v3711
  %6280 = vmatmul.mubr.bf16.gmra.mxu0 %v3710
  %v6281 = vpop.f32.mrf.mxu0
  %v6282 = vadd.f32 %v6239, %v6281
  %v6283 = vpop.f32.mrf.mxu0
  %v6284 = vadd.f32 %v6241, %v6283
  %v6285 = vpop.f32.mrf.mxu0
  %v6286 = vadd.f32 %v6243, %v6285
  %v6287 = vpop.f32.mrf.mxu0
  %v6288 = vadd.f32 %v6245, %v6287
  %6289 = vdwg.mxu0
  %6290 = vmatprep.subr.bf16.mxu0 %v5403
  %6291 = vmatpush1.bf16.msra.mxu0 %v5402
  %6292 = vmatprep.subr.bf16.mxu0 %v5399
  %6293 = vmatpush1.bf16.msra.mxu0 %v5398
  %6294 = vmatprep.subr.bf16.mxu0 %v5395
  %6295 = vmatpush1.bf16.msra.mxu0 %v5394
  %6296 = vmatprep.subr.bf16.mxu0 %v5391
  %6297 = vmatpush1.bf16.msra.mxu0 %v5390
  %6298 = vmatprep.subr.bf16.mxu0 %v5387
  %6299 = vmatpush1.bf16.msra.mxu0 %v5386
  %6300 = vmatprep.subr.bf16.mxu0 %v5383
  %6301 = vmatpush1.bf16.msra.mxu0 %v5382
  %6302 = vmatprep.subr.bf16.mxu0 %v5379
  %6303 = vmatpush1.bf16.msra.mxu0 %v5378
  %6304 = vmatprep.subr.bf16.mxu0 %v5375
  %6305 = vmatpush1.bf16.msra.mxu0 %v5374
  %6306 = vmatprep.subr.bf16.mxu0 %v5435
  %6307 = vmatpush2.bf16.msra.mxu0 %v5434
  %6308 = vmatprep.subr.bf16.mxu0 %v5431
  %6309 = vmatpush2.bf16.msra.mxu0 %v5430
  %6310 = vmatprep.subr.bf16.mxu0 %v5427
  %6311 = vmatpush2.bf16.msra.mxu0 %v5426
  %6312 = vmatprep.subr.bf16.mxu0 %v5423
  %6313 = vmatpush2.bf16.msra.mxu0 %v5422
  %6314 = vmatprep.subr.bf16.mxu0 %v5419
  %6315 = vmatpush2.bf16.msra.mxu0 %v5418
  %6316 = vmatprep.subr.bf16.mxu0 %v5415
  %6317 = vmatpush2.bf16.msra.mxu0 %v5414
  %6318 = vmatprep.subr.bf16.mxu0 %v5411
  %6319 = vmatpush2.bf16.msra.mxu0 %v5410
  %6320 = vmatprep.subr.bf16.mxu0 %v5407
  %6321 = vmatpush2.bf16.msra.mxu0 %v5406
  %6322 = vmatprep.mubr.bf16.mxu0 %v3713
  %6323 = vmatmul.mubr.bf16.gmra.mxu0 %v3712
  %v6324 = vpop.f32.mrf.mxu0
  %v6325 = vadd.f32 %v6282, %v6324
  %v6326 = vpop.f32.mrf.mxu0
  %v6327 = vadd.f32 %v6284, %v6326
  %v6328 = vpop.f32.mrf.mxu0
  %v6329 = vadd.f32 %v6286, %v6328
  %v6330 = vpop.f32.mrf.mxu0
  %v6331 = vadd.f32 %v6288, %v6330
  %6332 = vdwg.mxu0
  %6333 = vmatprep.subr.bf16.mxu0 %v5467
  %6334 = vmatpush1.bf16.msra.mxu0 %v5466
  %6335 = vmatprep.subr.bf16.mxu0 %v5463
  %6336 = vmatpush1.bf16.msra.mxu0 %v5462
  %6337 = vmatprep.subr.bf16.mxu0 %v5459
  %6338 = vmatpush1.bf16.msra.mxu0 %v5458
  %6339 = vmatprep.subr.bf16.mxu0 %v5455
  %6340 = vmatpush1.bf16.msra.mxu0 %v5454
  %6341 = vmatprep.subr.bf16.mxu0 %v5451
  %6342 = vmatpush1.bf16.msra.mxu0 %v5450
  %6343 = vmatprep.subr.bf16.mxu0 %v5447
  %6344 = vmatpush1.bf16.msra.mxu0 %v5446
  %6345 = vmatprep.subr.bf16.mxu0 %v5443
  %6346 = vmatpush1.bf16.msra.mxu0 %v5442
  %6347 = vmatprep.subr.bf16.mxu0 %v5439
  %6348 = vmatpush1.bf16.msra.mxu0 %v5438
  %6349 = vmatprep.subr.bf16.mxu0 %v5499
  %6350 = vmatpush2.bf16.msra.mxu0 %v5498
  %6351 = vmatprep.subr.bf16.mxu0 %v5495
  %6352 = vmatpush2.bf16.msra.mxu0 %v5494
  %6353 = vmatprep.subr.bf16.mxu0 %v5491
  %6354 = vmatpush2.bf16.msra.mxu0 %v5490
  %6355 = vmatprep.subr.bf16.mxu0 %v5487
  %6356 = vmatpush2.bf16.msra.mxu0 %v5486
  %6357 = vmatprep.subr.bf16.mxu0 %v5483
  %6358 = vmatpush2.bf16.msra.mxu0 %v5482
  %6359 = vmatprep.subr.bf16.mxu0 %v5479
  %6360 = vmatpush2.bf16.msra.mxu0 %v5478
  %6361 = vmatprep.subr.bf16.mxu0 %v5475
  %6362 = vmatpush2.bf16.msra.mxu0 %v5474
  %6363 = vmatprep.subr.bf16.mxu0 %v5471
  %6364 = vmatpush2.bf16.msra.mxu0 %v5470
  %6365 = vmatprep.mubr.bf16.mxu0 %v3715
  %6366 = vmatmul.mubr.bf16.gmra.mxu0 %v3714
  %v6367 = vpop.f32.mrf.mxu0
  %v6368 = vadd.f32 %v6325, %v6367
  %v6369 = vpop.f32.mrf.mxu0
  %v6370 = vadd.f32 %v6327, %v6369
  %v6371 = vpop.f32.mrf.mxu0
  %v6372 = vadd.f32 %v6329, %v6371
  %v6373 = vpop.f32.mrf.mxu0
  %v6374 = vadd.f32 %v6331, %v6373
  %6375 = vdwg.mxu0
  %6376 = vmatprep.subr.bf16.mxu0 %v5531
  %6377 = vmatpush1.bf16.msra.mxu0 %v5530
  %6378 = vmatprep.subr.bf16.mxu0 %v5527
  %6379 = vmatpush1.bf16.msra.mxu0 %v5526
  %6380 = vmatprep.subr.bf16.mxu0 %v5523
  %6381 = vmatpush1.bf16.msra.mxu0 %v5522
  %6382 = vmatprep.subr.bf16.mxu0 %v5519
  %6383 = vmatpush1.bf16.msra.mxu0 %v5518
  %6384 = vmatprep.subr.bf16.mxu0 %v5515
  %6385 = vmatpush1.bf16.msra.mxu0 %v5514
  %6386 = vmatprep.subr.bf16.mxu0 %v5511
  %6387 = vmatpush1.bf16.msra.mxu0 %v5510
  %6388 = vmatprep.subr.bf16.mxu0 %v5507
  %6389 = vmatpush1.bf16.msra.mxu0 %v5506
  %6390 = vmatprep.subr.bf16.mxu0 %v5503
  %6391 = vmatpush1.bf16.msra.mxu0 %v5502
  %6392 = vmatprep.subr.bf16.mxu0 0
  %6393 = vmatpush2.bf16.msra.mxu0 0
  %6394 = vmatprep.subr.bf16.mxu0 0
  %6395 = vmatpush2.bf16.msra.mxu0 0
  %6396 = vmatprep.subr.bf16.mxu0 0
  %6397 = vmatpush2.bf16.msra.mxu0 0
  %6398 = vmatprep.subr.bf16.mxu0 0
  %6399 = vmatpush2.bf16.msra.mxu0 0
  %6400 = vmatprep.subr.bf16.mxu0 0
  %6401 = vmatpush2.bf16.msra.mxu0 0
  %6402 = vmatprep.subr.bf16.mxu0 0
  %6403 = vmatpush2.bf16.msra.mxu0 0
  %6404 = vmatprep.subr.bf16.mxu0 %v5539
  %6405 = vmatpush2.bf16.msra.mxu0 %v5538
  %6406 = vmatprep.subr.bf16.mxu0 %v5535
  %6407 = vmatpush2.bf16.msra.mxu0 %v5534
  %6408 = vmatprep.mubr.bf16.mxu0 %v5901
  %6409 = vmatmul.mubr.bf16.gmra.mxu0 %v3716
  %v6410 = vpop.f32.mrf.mxu0
  %v6411 = vadd.f32 %v6368, %v6410
  %v6412 = vpop.f32.mrf.mxu0
  %v6413 = vadd.f32 %v6370, %v6412
  %v6414 = vpop.f32.mrf.mxu0
  %v6415 = vadd.f32 %v6372, %v6414
  %v6416 = vpop.f32.mrf.mxu0
  %v6417 = vadd.f32 %v6374, %v6416
  %6418 = vdwg.mxu0
  %v6419 = vmax.f32 %v6153, 0.0
  %v6420 = vmax.f32 %v6155, 0.0
  %v6421 = vmax.f32 %v6411, 0.0
  %v6422 = vmax.f32 %v6413, 0.0
  %v6423 = vmax.f32 %v6157, 0.0
  %v6424 = vmax.f32 %v6159, 0.0
  %v6425 = vmax.f32 %v6415, 0.0
  %v6426 = vmax.f32 %v6417, 0.0
  %v6427 = vpack.c.bf16 %v6423, %v6419
  %v6428 = vpack.c.bf16 %v6424, %v6420
  %v6429 = vpack.c.bf16 %v6425, %v6421
  %v6430 = vpack.c.bf16 %v6426, %v6422
  %v6431 = vld [vmem:[%s19] sm:$0xf]
  %v6432 = vld [vmem:[%s19 + $0x4] sm:$0xf]
  %v6433 = vld [vmem:[%s19 + $0x8] sm:$0xf]
  %v6434 = vld [vmem:[%s19 + $0xc] sm:$0xf]
  %v6435 = vld [vmem:[%s19 + $0x10] sm:$0xf]
  %v6436 = vld [vmem:[%s19 + $0x14] sm:$0xf]
  %v6437 = vld [vmem:[%s19 + $0x18] sm:$0xf]
  %v6438 = vld [vmem:[%s19 + $0x1c] sm:$0xf]
  %v6439 = vld [vmem:[%s19 + $0x20] sm:$0xf]
  %v6440 = vld [vmem:[%s19 + $0x24] sm:$0xf]
  %v6441 = vld [vmem:[%s19 + $0x28] sm:$0xf]
  %v6442 = vld [vmem:[%s19 + $0x2c] sm:$0xf]
  %v6443 = vld [vmem:[%s19 + $0x30] sm:$0xf]
  %v6444 = vld [vmem:[%s19 + $0x34] sm:$0xf]
  %v6445 = vld [vmem:[%s19 + $0x38] sm:$0xf]
  %v6446 = vld [vmem:[%s19 + $0x3c] sm:$0xf]
  %v6447 = vld [vmem:[%s19 + $0x40] sm:$0xf]
  %v6448 = vld [vmem:[%s19 + $0x44] sm:$0xf]
  %v6449 = vld [vmem:[%s19 + $0x48] sm:$0xf]
  %v6450 = vld [vmem:[%s19 + $0x4c] sm:$0xf]
  %v6451 = vld [vmem:[%s19 + $0x50] sm:$0xf]
  %v6452 = vld [vmem:[%s19 + $0x54] sm:$0xf]
  %v6453 = vld [vmem:[%s19 + $0x58] sm:$0xf]
  %v6454 = vld [vmem:[%s19 + $0x5c] sm:$0xf]
  %v6455 = vld [vmem:[%s19 + $0x60] sm:$0xf]
  %v6456 = vld [vmem:[%s19 + $0x64] sm:$0xf]
  %v6457 = vld [vmem:[%s19 + $0x68] sm:$0xf]
  %v6458 = vld [vmem:[%s19 + $0x6c] sm:$0xf]
  %v6459 = vld [vmem:[%s19 + $0x70] sm:$0xf]
  %v6460 = vld [vmem:[%s19 + $0x74] sm:$0xf]
  %v6461 = vld [vmem:[%s19 + $0x78] sm:$0xf]
  %v6462 = vld [vmem:[%s19 + $0x7c] sm:$0xf]
  %v6463 = vld [vmem:[%s19 + $0x80] sm:$0xf]
  %v6464 = vld [vmem:[%s19 + $0x84] sm:$0xf]
  %v6465 = vld [vmem:[%s19 + $0x88] sm:$0xf]
  %v6466 = vld [vmem:[%s19 + $0x8c] sm:$0xf]
  %v6467 = vld [vmem:[%s19 + $0x90] sm:$0xf]
  %v6468 = vld [vmem:[%s19 + $0x94] sm:$0xf]
  %v6469 = vld [vmem:[%s19 + $0x98] sm:$0xf]
  %v6470 = vld [vmem:[%s19 + $0x9c] sm:$0xf]
  %v6471 = vld [vmem:[%s19 + $0xa0] sm:$0xf]
  %v6472 = vld [vmem:[%s19 + $0xa4] sm:$0xf]
  %v6473 = vld [vmem:[%s19 + $0xa8] sm:$0xf]
  %v6474 = vld [vmem:[%s19 + $0xac] sm:$0xf]
  %v6475 = vld [vmem:[%s19 + $0xb0] sm:$0xf]
  %v6476 = vld [vmem:[%s19 + $0xb4] sm:$0xf]
  %v6477 = vld [vmem:[%s19 + $0xb8] sm:$0xf]
  %v6478 = vld [vmem:[%s19 + $0xbc] sm:$0xf]
  %v6479 = vld [vmem:[%s19 + $0xc0] sm:$0xf]
  %v6480 = vld [vmem:[%s19 + $0xc4] sm:$0xf]
  %v6481 = vld [vmem:[%s19 + $0xc8] sm:$0xf]
  %v6482 = vld [vmem:[%s19 + $0xcc] sm:$0xf]
  %v6483 = vld [vmem:[%s19 + $0xd0] sm:$0xf]
  %v6484 = vld [vmem:[%s19 + $0xd4] sm:$0xf]
  %v6485 = vld [vmem:[%s19 + $0xd8] sm:$0xf]
  %v6486 = vld [vmem:[%s19 + $0xdc] sm:$0xf]
  %v6487 = vld [vmem:[%s19 + $0xe0] sm:$0xf]
  %v6488 = vld [vmem:[%s19 + $0xe4] sm:$0xf]
  %v6489 = vld [vmem:[%s19 + $0xe8] sm:$0xf]
  %v6490 = vld [vmem:[%s19 + $0xec] sm:$0xf]
  %v6491 = vld [vmem:[%s19 + $0xf0] sm:$0xf]
  %v6492 = vld [vmem:[%s19 + $0xf4] sm:$0xf]
  %v6493 = vld [vmem:[%s19 + $0xf8] sm:$0xf]
  %v6494 = vld [vmem:[%s19 + $0xfc] sm:$0xf]
  %v6495 = vld [vmem:[%s3] sm:$0xff]
  %v6496 = vld [vmem:[%s3 + $0x8] sm:$0xff]
  %v6497 = vld [vmem:[%s3 + $0x10] sm:$0xff]
  %v6498 = vld [vmem:[%s3 + $0x18] sm:$0xff]
  %v6499 = vpack.c.bf16 %v6497, %v6495
  %v6500 = vpack.c.bf16 %v6498, %v6496
  %v6501 = vld [vmem:[%s20] sm:$0xf]
  %v6502 = vld [vmem:[%s20 + $0x4] sm:$0xf]
  %v6503 = vld [vmem:[%s20 + $0x8] sm:$0xf]
  %v6504 = vld [vmem:[%s20 + $0xc] sm:$0xf]
  %v6505 = vld [vmem:[%s20 + $0x10] sm:$0xf]
  %v6506 = vld [vmem:[%s20 + $0x14] sm:$0xf]
  %v6507 = vld [vmem:[%s20 + $0x18] sm:$0xf]
  %v6508 = vld [vmem:[%s20 + $0x1c] sm:$0xf]
  %v6509 = vld [vmem:[%s20 + $0x20] sm:$0xf]
  %v6510 = vld [vmem:[%s20 + $0x24] sm:$0xf]
  %v6511 = vld [vmem:[%s20 + $0x28] sm:$0xf]
  %v6512 = vld [vmem:[%s20 + $0x2c] sm:$0xf]
  %v6513 = vld [vmem:[%s20 + $0x30] sm:$0xf]
  %v6514 = vld [vmem:[%s20 + $0x34] sm:$0xf]
  %v6515 = vld [vmem:[%s20 + $0x38] sm:$0xf]
  %v6516 = vld [vmem:[%s20 + $0x3c] sm:$0xf]
  %v6517 = vld [vmem:[%s20 + $0x40] sm:$0xf]
  %v6518 = vld [vmem:[%s20 + $0x44] sm:$0xf]
  %v6519 = vld [vmem:[%s20 + $0x48] sm:$0x7]
  %v6539 = vunpack.c.l.b16 %v6501
  %v6540 = vunpack.c.l.b16 %v6502
  %v6541 = vunpack.c.l.b16 %v6503
  %v6542 = vunpack.c.l.b16 %v6504
  %v6543 = vunpack.c.l.b16 %v6505
  %v6544 = vunpack.c.l.b16 %v6506
  %v6545 = vunpack.c.l.b16 %v6507
  %v6546 = vunpack.c.l.b16 %v6508
  %v6547 = vunpack.c.l.b16 %v6509
  %v6548 = vunpack.c.l.b16 %v6510
  %v6549 = vunpack.c.l.b16 %v6511
  %v6550 = vunpack.c.l.b16 %v6512
  %v6551 = vunpack.c.l.b16 %v6513
  %v6552 = vunpack.c.l.b16 %v6514
  %v6553 = vunpack.c.l.b16 %v6515
  %v6554 = vunpack.c.l.b16 %v6516
  %v6555 = vunpack.c.l.b16 %v6517
  %v6556 = vunpack.c.l.b16 %v6518
  %v6557 = vunpack.c.l.b16 %v6519
  %v6558 = vpack.c.b16 %v6540, %v6539
  %v6559 = vpack.c.b16 %v6542, %v6541
  %v6560 = vpack.c.b16 %v6544, %v6543
  %v6561 = vpack.c.b16 %v6546, %v6545
  %v6562 = vpack.c.b16 %v6548, %v6547
  %v6563 = vpack.c.b16 %v6550, %v6549
  %v6564 = vpack.c.b16 %v6552, %v6551
  %v6565 = vpack.c.b16 %v6554, %v6553
  %v6566 = vpack.c.b16 %v6556, %v6555
  %v6567 = vpack.c.b16 %v6557, %v6557
  %vm6577 = vcmask 179200
  %v6579 = vsel %vm6577, %v6500, 0
  %vm6581 = vcmask 1042432
  %v6583 = vsel %vm6581, %v6567, 0
  %6585 = vmatprep.subr.bf16.mxu0 0
  %6586 = vmatpush1.bf16.msra.mxu0 %v6565
  %6587 = vmatprep.subr.bf16.mxu0 0
  %6588 = vmatpush1.bf16.msra.mxu0 %v6564
  %6589 = vmatprep.subr.bf16.mxu0 0
  %6590 = vmatpush1.bf16.msra.mxu0 %v6563
  %6591 = vmatprep.subr.bf16.mxu0 0
  %6592 = vmatpush1.bf16.msra.mxu0 %v6562
  %6593 = vmatprep.subr.bf16.mxu0 0
  %6594 = vmatpush1.bf16.msra.mxu0 %v6561
  %6595 = vmatprep.subr.bf16.mxu0 0
  %6596 = vmatpush1.bf16.msra.mxu0 %v6560
  %6597 = vmatprep.subr.bf16.mxu0 0
  %6598 = vmatpush1.bf16.msra.mxu0 %v6559
  %6599 = vmatprep.subr.bf16.mxu0 0
  %6600 = vmatpush1.bf16.msra.mxu0 %v6558
  %6601 = vmatprep.subr.bf16.mxu0 0
  %6602 = vmatpush2.bf16.msra.mxu0 0
  %6603 = vmatprep.subr.bf16.mxu0 0
  %6604 = vmatpush2.bf16.msra.mxu0 0
  %6605 = vmatprep.subr.bf16.mxu0 0
  %6606 = vmatpush2.bf16.msra.mxu0 0
  %6607 = vmatprep.subr.bf16.mxu0 0
  %6608 = vmatpush2.bf16.msra.mxu0 0
  %6609 = vmatprep.subr.bf16.mxu0 0
  %6610 = vmatpush2.bf16.msra.mxu0 0
  %6611 = vmatprep.subr.bf16.mxu0 0
  %6612 = vmatpush2.bf16.msra.mxu0 0
  %6613 = vmatprep.subr.bf16.mxu0 0
  %6614 = vmatpush2.bf16.msra.mxu0 %v6583
  %6615 = vmatprep.subr.bf16.mxu0 0
  %6616 = vmatpush2.bf16.msra.mxu0 %v6566
  %6617 = vmatprep.mubr.bf16.mxu0 %v6579
  %6618 = vmatmul.mubr.bf16.gmra.mxu0 %v6499
  %v6619 = vpop.f32.mrf.mxu0
  %v6620 = vadd.f32 0.0, %v6619
  %v6621 = vpop.f32.mrf.mxu0
  %v6622 = vpop.f32.mrf.mxu0
  %v6623 = vadd.f32 0.0, %v6622
  %v6624 = vpop.f32.mrf.mxu0
  %6625 = vdwg.mxu0
  %v6690 = vunpack.c.l.b16 %v6431
  %v6691 = vunpack.c.l.b16 %v6432
  %v6692 = vunpack.c.l.b16 %v6433
  %v6693 = vunpack.c.l.b16 %v6434
  %v6694 = vunpack.c.l.b16 %v6435
  %v6695 = vunpack.c.l.b16 %v6436
  %v6696 = vunpack.c.l.b16 %v6437
  %v6697 = vunpack.c.l.b16 %v6438
  %v6698 = vunpack.c.l.b16 %v6439
  %v6699 = vunpack.c.l.b16 %v6440
  %v6700 = vunpack.c.l.b16 %v6441
  %v6701 = vunpack.c.l.b16 %v6442
  %v6702 = vunpack.c.l.b16 %v6443
  %v6703 = vunpack.c.l.b16 %v6444
  %v6704 = vunpack.c.l.b16 %v6445
  %v6705 = vunpack.c.l.b16 %v6446
  %v6706 = vunpack.c.l.b16 %v6447
  %v6707 = vunpack.c.l.b16 %v6448
  %v6708 = vunpack.c.l.b16 %v6449
  %v6709 = vunpack.c.l.b16 %v6450
  %v6710 = vunpack.c.l.b16 %v6451
  %v6711 = vunpack.c.l.b16 %v6452
  %v6712 = vunpack.c.l.b16 %v6453
  %v6713 = vunpack.c.l.b16 %v6454
  %v6714 = vunpack.c.l.b16 %v6455
  %v6715 = vunpack.c.l.b16 %v6456
  %v6716 = vunpack.c.l.b16 %v6457
  %v6717 = vunpack.c.l.b16 %v6458
  %v6718 = vunpack.c.l.b16 %v6459
  %v6719 = vunpack.c.l.b16 %v6460
  %v6720 = vunpack.c.l.b16 %v6461
  %v6721 = vunpack.c.l.b16 %v6462
  %v6722 = vunpack.c.l.b16 %v6463
  %v6723 = vunpack.c.l.b16 %v6464
  %v6724 = vunpack.c.l.b16 %v6465
  %v6725 = vunpack.c.l.b16 %v6466
  %v6726 = vunpack.c.l.b16 %v6467
  %v6727 = vunpack.c.l.b16 %v6468
  %v6728 = vunpack.c.l.b16 %v6469
  %v6729 = vunpack.c.l.b16 %v6470
  %v6730 = vunpack.c.l.b16 %v6471
  %v6731 = vunpack.c.l.b16 %v6472
  %v6732 = vunpack.c.l.b16 %v6473
  %v6733 = vunpack.c.l.b16 %v6474
  %v6734 = vunpack.c.l.b16 %v6475
  %v6735 = vunpack.c.l.b16 %v6476
  %v6736 = vunpack.c.l.b16 %v6477
  %v6737 = vunpack.c.l.b16 %v6478
  %v6738 = vunpack.c.l.b16 %v6479
  %v6739 = vunpack.c.l.b16 %v6480
  %v6740 = vunpack.c.l.b16 %v6481
  %v6741 = vunpack.c.l.b16 %v6482
  %v6742 = vunpack.c.l.b16 %v6483
  %v6743 = vunpack.c.l.b16 %v6484
  %v6744 = vunpack.c.l.b16 %v6485
  %v6745 = vunpack.c.l.b16 %v6486
  %v6746 = vunpack.c.l.b16 %v6487
  %v6747 = vunpack.c.l.b16 %v6488
  %v6748 = vunpack.c.l.b16 %v6489
  %v6749 = vunpack.c.l.b16 %v6490
  %v6750 = vunpack.c.l.b16 %v6491
  %v6751 = vunpack.c.l.b16 %v6492
  %v6752 = vunpack.c.l.b16 %v6493
  %v6753 = vunpack.c.l.b16 %v6494
  %v6754 = vpack.c.b16 %v6691, %v6690
  %v6755 = vpack.c.b16 %v6693, %v6692
  %v6756 = vpack.c.b16 %v6695, %v6694
  %v6757 = vpack.c.b16 %v6697, %v6696
  %v6758 = vpack.c.b16 %v6699, %v6698
  %v6759 = vpack.c.b16 %v6701, %v6700
  %v6760 = vpack.c.b16 %v6703, %v6702
  %v6761 = vpack.c.b16 %v6705, %v6704
  %v6762 = vpack.c.b16 %v6707, %v6706
  %v6763 = vpack.c.b16 %v6709, %v6708
  %v6764 = vpack.c.b16 %v6711, %v6710
  %v6765 = vpack.c.b16 %v6713, %v6712
  %v6766 = vpack.c.b16 %v6715, %v6714
  %v6767 = vpack.c.b16 %v6717, %v6716
  %v6768 = vpack.c.b16 %v6719, %v6718
  %v6769 = vpack.c.b16 %v6721, %v6720
  %v6770 = vpack.c.b16 %v6723, %v6722
  %v6771 = vpack.c.b16 %v6725, %v6724
  %v6772 = vpack.c.b16 %v6727, %v6726
  %v6773 = vpack.c.b16 %v6729, %v6728
  %v6774 = vpack.c.b16 %v6731, %v6730
  %v6775 = vpack.c.b16 %v6733, %v6732
  %v6776 = vpack.c.b16 %v6735, %v6734
  %v6777 = vpack.c.b16 %v6737, %v6736
  %v6778 = vpack.c.b16 %v6739, %v6738
  %v6779 = vpack.c.b16 %v6741, %v6740
  %v6780 = vpack.c.b16 %v6743, %v6742
  %v6781 = vpack.c.b16 %v6745, %v6744
  %v6782 = vpack.c.b16 %v6747, %v6746
  %v6783 = vpack.c.b16 %v6749, %v6748
  %v6784 = vpack.c.b16 %v6751, %v6750
  %v6785 = vpack.c.b16 %v6753, %v6752
  %6818 = vmatprep.subr.bf16.mxu0 0
  %6819 = vmatpush1.bf16.msra.mxu0 %v6761
  %6820 = vmatprep.subr.bf16.mxu0 0
  %6821 = vmatpush1.bf16.msra.mxu0 %v6760
  %6822 = vmatprep.subr.bf16.mxu0 0
  %6823 = vmatpush1.bf16.msra.mxu0 %v6759
  %6824 = vmatprep.subr.bf16.mxu0 0
  %6825 = vmatpush1.bf16.msra.mxu0 %v6758
  %6826 = vmatprep.subr.bf16.mxu0 0
  %6827 = vmatpush1.bf16.msra.mxu0 %v6757
  %6828 = vmatprep.subr.bf16.mxu0 0
  %6829 = vmatpush1.bf16.msra.mxu0 %v6756
  %6830 = vmatprep.subr.bf16.mxu0 0
  %6831 = vmatpush1.bf16.msra.mxu0 %v6755
  %6832 = vmatprep.subr.bf16.mxu0 0
  %6833 = vmatpush1.bf16.msra.mxu0 %v6754
  %6834 = vmatprep.subr.bf16.mxu0 0
  %6835 = vmatpush2.bf16.msra.mxu0 %v6769
  %6836 = vmatprep.subr.bf16.mxu0 0
  %6837 = vmatpush2.bf16.msra.mxu0 %v6768
  %6838 = vmatprep.subr.bf16.mxu0 0
  %6839 = vmatpush2.bf16.msra.mxu0 %v6767
  %6840 = vmatprep.subr.bf16.mxu0 0
  %6841 = vmatpush2.bf16.msra.mxu0 %v6766
  %6842 = vmatprep.subr.bf16.mxu0 0
  %6843 = vmatpush2.bf16.msra.mxu0 %v6765
  %6844 = vmatprep.subr.bf16.mxu0 0
  %6845 = vmatpush2.bf16.msra.mxu0 %v6764
  %6846 = vmatprep.subr.bf16.mxu0 0
  %6847 = vmatpush2.bf16.msra.mxu0 %v6763
  %6848 = vmatprep.subr.bf16.mxu0 0
  %6849 = vmatpush2.bf16.msra.mxu0 %v6762
  %6850 = vmatprep.mubr.bf16.mxu0 %v6428
  %6851 = vmatmul.mubr.bf16.gmra.mxu0 %v6427
  %v6852 = vpop.f32.mrf.mxu0
  %v6853 = vadd.f32 %v6620, %v6852
  %v6854 = vpop.f32.mrf.mxu0
  %v6855 = vpop.f32.mrf.mxu0
  %v6856 = vadd.f32 %v6623, %v6855
  %v6857 = vpop.f32.mrf.mxu0
  %6858 = vdwg.mxu0
  %6859 = vmatprep.subr.bf16.mxu0 0
  %6860 = vmatpush1.bf16.msra.mxu0 %v6777
  %6861 = vmatprep.subr.bf16.mxu0 0
  %6862 = vmatpush1.bf16.msra.mxu0 %v6776
  %6863 = vmatprep.subr.bf16.mxu0 0
  %6864 = vmatpush1.bf16.msra.mxu0 %v6775
  %6865 = vmatprep.subr.bf16.mxu0 0
  %6866 = vmatpush1.bf16.msra.mxu0 %v6774
  %6867 = vmatprep.subr.bf16.mxu0 0
  %6868 = vmatpush1.bf16.msra.mxu0 %v6773
  %6869 = vmatprep.subr.bf16.mxu0 0
  %6870 = vmatpush1.bf16.msra.mxu0 %v6772
  %6871 = vmatprep.subr.bf16.mxu0 0
  %6872 = vmatpush1.bf16.msra.mxu0 %v6771
  %6873 = vmatprep.subr.bf16.mxu0 0
  %6874 = vmatpush1.bf16.msra.mxu0 %v6770
  %6875 = vmatprep.subr.bf16.mxu0 0
  %6876 = vmatpush2.bf16.msra.mxu0 %v6785
  %6877 = vmatprep.subr.bf16.mxu0 0
  %6878 = vmatpush2.bf16.msra.mxu0 %v6784
  %6879 = vmatprep.subr.bf16.mxu0 0
  %6880 = vmatpush2.bf16.msra.mxu0 %v6783
  %6881 = vmatprep.subr.bf16.mxu0 0
  %6882 = vmatpush2.bf16.msra.mxu0 %v6782
  %6883 = vmatprep.subr.bf16.mxu0 0
  %6884 = vmatpush2.bf16.msra.mxu0 %v6781
  %6885 = vmatprep.subr.bf16.mxu0 0
  %6886 = vmatpush2.bf16.msra.mxu0 %v6780
  %6887 = vmatprep.subr.bf16.mxu0 0
  %6888 = vmatpush2.bf16.msra.mxu0 %v6779
  %6889 = vmatprep.subr.bf16.mxu0 0
  %6890 = vmatpush2.bf16.msra.mxu0 %v6778
  %6891 = vmatprep.mubr.bf16.mxu0 %v6430
  %6892 = vmatmul.mubr.bf16.gmra.mxu0 %v6429
  %v6893 = vpop.f32.mrf.mxu0
  %v6894 = vadd.f32 %v6853, %v6893
  %v6895 = vpop.f32.mrf.mxu0
  %v6896 = vpop.f32.mrf.mxu0
  %v6897 = vadd.f32 %v6856, %v6896
  %v6898 = vpop.f32.mrf.mxu0
  %6899 = vdwg.mxu0
  %v6900 = vld [vmem:[%s21] sm:$0x1]
  %v6902 = vlaneseq
  %v6903 = vshrl.u32 %v6902, 7
  %v6904 = vsub.s32 0, %v6903
  %v6905 = vrot.slane %v6900, %v6904
  %v6907 = vadd.f32 %v6894, %v6905
  %v6908 = vadd.f32 %v6897, %v6905
  %v6909 = vmax.f32 %v6907, 0.0
  %v6910 = vmax.f32 %v6908, 0.0
  %v6911 = vld [vmem:[%s22] sm:$0xff]
  %v6912 = vld [vmem:[%s22 + $0x8] sm:$0xff]
  %v6913 = vld [vmem:[%s22 + $0x10] sm:$0xff]
  %v6914 = vld [vmem:[%s22 + $0x18] sm:$0xff]
  %v6915 = vld [vmem:[%s22 + $0x20] sm:$0xff]
  %v6916 = vld [vmem:[%s22 + $0x28] sm:$0xff]
  %v6917 = vld [vmem:[%s22 + $0x30] sm:$0xff]
  %v6918 = vld [vmem:[%s22 + $0x38] sm:$0xff]
  %v6919 = vld [vmem:[%s22 + $0x40] sm:$0xff]
  %v6920 = vld [vmem:[%s22 + $0x48] sm:$0xff]
  %v6921 = vld [vmem:[%s22 + $0x50] sm:$0xff]
  %v6922 = vld [vmem:[%s22 + $0x58] sm:$0xff]
  %v6923 = vld [vmem:[%s22 + $0x60] sm:$0xff]
  %v6924 = vld [vmem:[%s22 + $0x68] sm:$0xff]
  %v6925 = vld [vmem:[%s22 + $0x70] sm:$0xff]
  %v6926 = vld [vmem:[%s22 + $0x78] sm:$0xff]
  %v6927 = vld [vmem:[%s23] sm:$0x1]
  %v6929 = vlaneseq
  %v6930 = vshrl.u32 %v6929, 7
  %v6931 = vsub.s32 0, %v6930
  %v6932 = vrot.slane %v6927, %v6931
  %6934 = vmatprep.subr.mxu0 0.0
  %6935 = vmatpush1.msra.mxu0 %v6926
  %6936 = vmatprep.subr.mxu0 0.0
  %6937 = vmatpush1.msra.mxu0 %v6925
  %6938 = vmatprep.subr.mxu0 0.0
  %6939 = vmatpush1.msra.mxu0 %v6924
  %6940 = vmatprep.subr.mxu0 0.0
  %6941 = vmatpush1.msra.mxu0 %v6923
  %6942 = vmatprep.subr.mxu0 0.0
  %6943 = vmatpush1.msra.mxu0 %v6922
  %6944 = vmatprep.subr.mxu0 0.0
  %6945 = vmatpush1.msra.mxu0 %v6921
  %6946 = vmatprep.subr.mxu0 0.0
  %6947 = vmatpush1.msra.mxu0 %v6920
  %6948 = vmatprep.subr.mxu0 0.0
  %6949 = vmatpush1.msra.mxu0 %v6919
  %6950 = vmatprep.subr.mxu0 0.0
  %6951 = vmatpush1.msra.mxu0 %v6918
  %6952 = vmatprep.subr.mxu0 0.0
  %6953 = vmatpush1.msra.mxu0 %v6917
  %6954 = vmatprep.subr.mxu0 0.0
  %6955 = vmatpush1.msra.mxu0 %v6916
  %6956 = vmatprep.subr.mxu0 0.0
  %6957 = vmatpush1.msra.mxu0 %v6915
  %6958 = vmatprep.subr.mxu0 0.0
  %6959 = vmatpush1.msra.mxu0 %v6914
  %6960 = vmatprep.subr.mxu0 0.0
  %6961 = vmatpush1.msra.mxu0 %v6913
  %6962 = vmatprep.subr.mxu0 0.0
  %6963 = vmatpush1.msra.mxu0 %v6912
  %6964 = vmatprep.subr.mxu0 0.0
  %6965 = vmatpush1.msra.mxu0 %v6911
  %6966 = vmatprep.subr.mxu0 0.0
  %6967 = vmatpush2.msra.mxu0 0.0
  %6968 = vmatprep.subr.mxu0 0.0
  %6969 = vmatpush2.msra.mxu0 0.0
  %6970 = vmatprep.subr.mxu0 0.0
  %6971 = vmatpush2.msra.mxu0 0.0
  %6972 = vmatprep.subr.mxu0 0.0
  %6973 = vmatpush2.msra.mxu0 0.0
  %6974 = vmatprep.subr.mxu0 0.0
  %6975 = vmatpush2.msra.mxu0 0.0
  %6976 = vmatprep.subr.mxu0 0.0
  %6977 = vmatpush2.msra.mxu0 0.0
  %6978 = vmatprep.subr.mxu0 0.0
  %6979 = vmatpush2.msra.mxu0 0.0
  %6980 = vmatprep.subr.mxu0 0.0
  %6981 = vmatpush2.msra.mxu0 0.0
  %6982 = vmatprep.subr.mxu0 0.0
  %6983 = vmatpush2.msra.mxu0 0.0
  %6984 = vmatprep.subr.mxu0 0.0
  %6985 = vmatpush2.msra.mxu0 0.0
  %6986 = vmatprep.subr.mxu0 0.0
  %6987 = vmatpush2.msra.mxu0 0.0
  %6988 = vmatprep.subr.mxu0 0.0
  %6989 = vmatpush2.msra.mxu0 0.0
  %6990 = vmatprep.subr.mxu0 0.0
  %6991 = vmatpush2.msra.mxu0 0.0
  %6992 = vmatprep.subr.mxu0 0.0
  %6993 = vmatpush2.msra.mxu0 0.0
  %6994 = vmatprep.subr.mxu0 0.0
  %6995 = vmatpush2.msra.mxu0 0.0
  %6996 = vmatprep.subr.mxu0 0.0
  %6997 = vmatpush2.msra.mxu0 0.0
  %6998 = vmatprep.mubr.f32.mxu0 0.0
  %6999 = vmatmul.mubr.f32.gmra.mxu0 %v6909
  %v7000 = vpop.f32.mrf.mxu0
  %v7001 = vadd.f32 %v6932, %v7000
  %v7002 = vpop.f32.mrf.mxu0
  %7003 = vmatprep.mubr.f32.mxu0 0.0
  %7004 = vmatmul.mubr.f32.gmra.mxu0 %v6910
  %v7005 = vpop.f32.mrf.mxu0
  %v7006 = vadd.f32 %v6932, %v7005
  %v7007 = vpop.f32.mrf.mxu0
  %7008 = vdwg.mxu0
  %vm7009 = vcmask 15360
  %7010 = vst.msk [vmem:[%s24] sm:$0xff] %vm7009, %v7001
  %7011 = vst.msk [vmem:[%s24 + $0x8] sm:$0xff] %vm7009, %v7006
  // Predicated region
  $region98: #{vimsnet_forward.1} parent=0 // pred_check
    _
  $region99: #{vimsnet_forward.1} parent=0 // pred_check_branch
    %7013 = sbr.rel (0) target = $region101
  $region100: #{vimsnet_forward.1} parent=0 // pred_region
    _
  $region101: #{vimsnet_forward.1} parent=0 // pred_fallthru
    _
  // Predicated region
  $region102: #{vimsnet_forward.1} parent=0 // pred_check
    _
  $region103: #{vimsnet_forward.1} parent=0 // pred_check_branch
    %7015 = sbr.rel (0) target = $region105
  $region104: #{vimsnet_forward.1} parent=0 // pred_region
    _
  $region105: #{vimsnet_forward.1} parent=0 // pred_fallthru
    _

</llo_original>
